<compile_context>
chip_gen: v7x
topology: tpu7x:2x2x1
jax: 0.10.0
libtpu: 0.0.40
codegen_flags: <defaults>
</compile_context>

<pallas_src>
import functools
import math

import jax
import jax.numpy as jnp
from jax.experimental import pallas as pl
from jax.experimental.pallas import tpu as pltpu

_LN_EPS = 1e-12
_ACT_DTYPE = jnp.bfloat16          # inter-kernel activation dtype


# ------------------------------- helpers ------------------------------------

@functools.lru_cache(maxsize=None)
def _vmem_limit_bytes():
    """Generation-aware scoped-VMEM budget: ~75% of physical, <= 96 MiB.

    128 MiB chips (v5e/v6e) -> 96 MiB; 64 MiB chips (v7x) -> 48 MiB.
    """
    try:
        cap = int(pltpu.get_tpu_info().vmem_capacity_bytes)
    except Exception:
        cap = 64 * 1024 * 1024      # conservative (v7x-sized) fallback
    return min((cap * 3) // 4, 96 * 1024 * 1024)


def _compiler_params(semantics):
    return pltpu.CompilerParams(dimension_semantics=semantics,
                                vmem_limit_bytes=_vmem_limit_bytes())


def _pick_tile(dim, pref, align):
    """Largest tile <= pref that is `align`-aligned and divides dim, else dim."""
    if dim <= pref:
        return dim
    t = (pref // align) * align
    while t >= align:
        if dim % t == 0:
            return t
        t -= align
    return dim


def _isz(dt):
    return jnp.dtype(dt).itemsize


def _apply_act(y, activation):
    if activation == "gelu":
        # exact (erf) GELU, matching torch.nn.GELU() default
        return 0.5 * y * (1.0 + jax.lax.erf(y * (1.0 / math.sqrt(2.0))))
    if activation == "tanh":
        return jnp.tanh(y)
    return y


# --------------------------- dense matmul kernels ----------------------------

def _dense_kernel(x_ref, w_ref, b_ref, o_ref, acc_ref, *, activation):
    k = pl.program_id(2)

    @pl.when(k == 0)
    def _():
        acc_ref[...] = jnp.zeros_like(acc_ref)

    acc_ref[...] += jnp.dot(x_ref[...], w_ref[...],
                            preferred_element_type=jnp.float32)

    @pl.when(k == pl.num_programs(2) - 1)
    def _():
        y = acc_ref[...] + b_ref[...].astype(jnp.float32)
        o_ref[...] = _apply_act(y, activation).astype(o_ref.dtype)


def _dense_ln_kernel(x_ref, w_ref, b_ref, r_ref, g_ref, be_ref, o_ref, acc_ref,
                     *, activation, eps):
    k = pl.program_id(2)

    @pl.when(k == 0)
    def _():
        acc_ref[...] = jnp.zeros_like(acc_ref)

    acc_ref[...] += jnp.dot(x_ref[...], w_ref[...],
                            preferred_element_type=jnp.float32)

    @pl.when(k == pl.num_programs(2) - 1)
    def _():
        y = acc_ref[...] + b_ref[...].astype(jnp.float32)
        y = _apply_act(y, activation)
        y = y + r_ref[...].astype(jnp.float32)                  # residual add
        mu = jnp.mean(y, axis=-1, keepdims=True)
        var = jnp.mean(jnp.square(y - mu), axis=-1, keepdims=True)
        yn = (y - mu) * jax.lax.rsqrt(var + eps)
        o_ref[...] = (yn * g_ref[...].astype(jnp.float32)
                      + be_ref[...].astype(jnp.float32)).astype(o_ref.dtype)


def dense(x, w, b, activation=None, residual=None, gamma=None, beta=None,
          eps=_LN_EPS, out_dtype=_ACT_DTYPE,
          tm_pref=512, tn_pref=512, tk_pref=2048):
    """y = act(x @ w + b); optionally fused with LayerNorm(y + residual).

    x:(M,K) bf16, w:(K,N) bf16, b/gamma/beta:(1,N) f32, residual:(M,N) bf16.
    Output dtype `out_dtype` (bf16 by default).  K is left untiled when it
    fits; large tm amortizes the bf16 weight-slab streaming.
    """
    M, K = x.shape
    N = w.shape[1]
    fuse_ln = gamma is not None

    align_m = 16 if x.dtype == jnp.bfloat16 else 8
    tm = _pick_tile(M, tm_pref, align_m)
    tk = _pick_tile(K, tk_pref, 128)
    # LayerNorm reduces over the feature dim -> keep the full N in one tile.
    tn = N if fuse_ln else _pick_tile(N, tn_pref, 128)
    grid = (M // tm, N // tn, K // tk)

    x_spec = pl.BlockSpec((tm, tk), lambda i, j, k: (i, k))
    w_spec = pl.BlockSpec((tk, tn), lambda i, j, k: (k, j))
    vec_spec = pl.BlockSpec((1, tn), lambda i, j, k: (0, j))
    out_spec = pl.BlockSpec((tm, tn), lambda i, j, k: (i, j))

    flops = 2 * M * N * K
    transcendentals = M * N if activation in ("gelu", "tanh") else 0
    bytes_accessed = (M * K * _isz(x.dtype) + K * N * _isz(w.dtype)
                      + M * N * _isz(out_dtype) + N * 4)

    if fuse_ln:
        kernel = functools.partial(_dense_ln_kernel, activation=activation, eps=eps)
        in_specs = [x_spec, w_spec, vec_spec,
                    pl.BlockSpec((tm, tn), lambda i, j, k: (i, j)),
                    vec_spec, vec_spec]
        args = (x, w, b, residual, gamma, beta)
        bytes_accessed += M * N * _isz(residual.dtype) + 2 * N * 4
    else:
        kernel = functools.partial(_dense_kernel, activation=activation)
        in_specs = [x_spec, w_spec, vec_spec]
        args = (x, w, b)

    return pl.pallas_call(
        kernel,
        out_shape=jax.ShapeDtypeStruct((M, N), out_dtype),
        grid=grid,
        in_specs=in_specs,
        out_specs=out_spec,
        scratch_shapes=[pltpu.VMEM((tm, tn), jnp.float32)],
        compiler_params=_compiler_params(("parallel", "parallel", "arbitrary")),
        cost_estimate=pl.CostEstimate(flops=flops,
                                      transcendentals=transcendentals,
                                      bytes_accessed=bytes_accessed),
    )(*args)


# ------------------------- fused FFN (+ add & LN) kernel ----------------------

def _ffn_ln_kernel(x_ref, wi_ref, bi_ref, wf_ref, bf_ref, g_ref, be_ref, o_ref,
                   *, eps):
    x = x_ref[...]                                               # (tm, H) bf16
    h = jnp.dot(x, wi_ref[...], preferred_element_type=jnp.float32)
    h = _apply_act(h + bi_ref[...].astype(jnp.float32), "gelu")  # (tm, I) f32
    y = jnp.dot(h.astype(jnp.bfloat16), wf_ref[...],
                preferred_element_type=jnp.float32)
    y = y + bf_ref[...].astype(jnp.float32)
    y = y + x.astype(jnp.float32)                                # residual add
    mu = jnp.mean(y, axis=-1, keepdims=True)
    var = jnp.mean(jnp.square(y - mu), axis=-1, keepdims=True)
    yn = (y - mu) * jax.lax.rsqrt(var + eps)
    o_ref[...] = (yn * g_ref[...].astype(jnp.float32)
                  + be_ref[...].astype(jnp.float32)).astype(o_ref.dtype)


def ffn(x, wi, bi, wf, bf, gamma, beta, eps=_LN_EPS, out_dtype=_ACT_DTYPE,
        tm_pref=256):
    """LayerNorm(x + (GELU(x @ wi + bi) @ wf + bf)) in one kernel.

    The (tm, inter) intermediate stays in VMEM; both bf16 weight slabs are
    resident across the M grid (constant index_map -> no re-DMA).
    """
    M, H = x.shape
    inter = wi.shape[1]
    tm = _pick_tile(M, tm_pref, 16 if x.dtype == jnp.bfloat16 else 8)

    flops = 2 * M * inter * H * 2
    bytes_accessed = (M * H * _isz(x.dtype) + H * inter * _isz(wi.dtype)
                      + inter * H * _isz(wf.dtype) + M * H * _isz(out_dtype)
                      + (inter + 3 * H) * 4)

    return pl.pallas_call(
        functools.partial(_ffn_ln_kernel, eps=eps),
        out_shape=jax.ShapeDtypeStruct((M, H), out_dtype),
        grid=(M // tm,),
        in_specs=[pl.BlockSpec((tm, H), lambda i: (i, 0)),
                  pl.BlockSpec((H, inter), lambda i: (0, 0)),
                  pl.BlockSpec((1, inter), lambda i: (0, 0)),
                  pl.BlockSpec((inter, H), lambda i: (0, 0)),
                  pl.BlockSpec((1, H), lambda i: (0, 0)),
                  pl.BlockSpec((1, H), lambda i: (0, 0)),
                  pl.BlockSpec((1, H), lambda i: (0, 0))],
        out_specs=pl.BlockSpec((tm, H), lambda i: (i, 0)),
        compiler_params=_compiler_params(("parallel",)),
        cost_estimate=pl.CostEstimate(flops=flops,
                                      transcendentals=M * inter,
                                      bytes_accessed=bytes_accessed),
    )(x, wi, bi, wf, bf, gamma, beta)


# ------------------------------ layernorm kernel -----------------------------

def _layernorm_kernel(x_ref, g_ref, b_ref, o_ref, *, eps):
    x = x_ref[...].astype(jnp.float32)
    mu = jnp.mean(x, axis=-1, keepdims=True)
    var = jnp.mean(jnp.square(x - mu), axis=-1, keepdims=True)
    y = (x - mu) * jax.lax.rsqrt(var + eps)
    o_ref[...] = (y * g_ref[...].astype(jnp.float32)
                  + b_ref[...].astype(jnp.float32)).astype(o_ref.dtype)


def layernorm(x, gamma, beta, eps=_LN_EPS, out_dtype=_ACT_DTYPE, tm_pref=512):
    """Plain LayerNorm over the last dim; emits bf16 activations."""
    # TODO(synk): fold the word/pos/type embedding gather into this kernel via
    # PrefetchScalarGridSpec + pl.Element row indexing to save one (N*L, H)
    # f32 HBM round trip.
    M, H = x.shape
    tm = _pick_tile(M, tm_pref, 8)
    return pl.pallas_call(
        functools.partial(_layernorm_kernel, eps=eps),
        out_shape=jax.ShapeDtypeStruct((M, H), out_dtype),
        grid=(M // tm,),
        in_specs=[pl.BlockSpec((tm, H), lambda i: (i, 0)),
                  pl.BlockSpec((1, H), lambda i: (0, 0)),
                  pl.BlockSpec((1, H), lambda i: (0, 0))],
        out_specs=pl.BlockSpec((tm, H), lambda i: (i, 0)),
        compiler_params=_compiler_params(("parallel",)),
    )(x, gamma, beta)


# ------------------------------ attention kernel -----------------------------

def _attention_kernel(qkv_ref, m_ref, o_ref, *, nh, scale):
    # qkv_ref: (Nb, L, 3H) bf16 (Q|K|V concatenated), m_ref: (Nb, 1, L) f32,
    # o_ref:   (Nb, L, H)  bf16 -- written lane-dense, one full row per seq.
    nb_seq = qkv_ref.shape[0]
    H = qkv_ref.shape[2] // 3
    dh = H // nh
    for nb in range(nb_seq):
        bias = (1.0 - m_ref[nb].astype(jnp.float32)) * (-1e9)      # (1, L)
        ctxs = []
        for h in range(nh):
            c0 = h * dh
            # Ref-level per-head slices: no whole-(L,3H) value load + re-slice.
            qh = qkv_ref[nb, :, c0:c0 + dh]                        # (L, dh) bf16
            kh = qkv_ref[nb, :, H + c0:H + c0 + dh]
            vh = qkv_ref[nb, :, 2 * H + c0:2 * H + c0 + dh]
            s = jnp.einsum("qd,kd->qk", qh, kh,
                           preferred_element_type=jnp.float32) * scale
            s = s + bias
            s = s - jnp.max(s, axis=-1, keepdims=True)
            p = jnp.exp(s)
            p = p * pl.reciprocal(jnp.sum(p, axis=-1, keepdims=True), approx=True)
            ctxs.append(jnp.dot(p.astype(jnp.bfloat16), vh,
                                preferred_element_type=jnp.float32))
        # single lane-dense store of the full (L, H) row
        o_ref[nb] = jnp.concatenate(ctxs, axis=-1).astype(o_ref.dtype)


def _attn_seq_block(n, L, H, nh):
    """VMEM-aware sequence block: budget double-buffered qkv+out blocks plus
    the f32 score/context working set against ~1/4 of the scoped limit."""
    per_seq_io = (L * 3 * H + L * H) * _isz(_ACT_DTYPE)      # qkv + out blocks
    work = (L * L + L * H) * 4                                # f32 scores + ctx
    budget = max(_vmem_limit_bytes() // 4, 1 << 20)
    nb = max(1, min(n, budget // max(1, 2 * per_seq_io + work)))
    while nb > 1 and n % nb:
        nb -= 1
    return nb


def attention(qkv, mask, *, nh):
    """qkv:(N,L,3H) bf16, mask:(N,1,L) f32 -> (N,L,H) bf16."""
    # TODO(synk): for real BERT lengths (L=512) convert to a KV-tiled
    # online-softmax (flash) form; the dense (L,L) scores only fit at small L.
    N, L, H3 = qkv.shape
    H = H3 // 3
    dh = H // nh
    Nb = _attn_seq_block(N, L, H, nh)

    flops = N * nh * 4 * L * L * dh
    bytes_accessed = (N * L * H3 * _isz(qkv.dtype) + N * L * 4
                      + N * L * H * _isz(_ACT_DTYPE))

    return pl.pallas_call(
        functools.partial(_attention_kernel, nh=nh, scale=1.0 / math.sqrt(dh)),
        out_shape=jax.ShapeDtypeStruct((N, L, H), _ACT_DTYPE),
        grid=(N // Nb,),
        in_specs=[pl.BlockSpec((Nb, L, H3), lambda i: (i, 0, 0)),
                  pl.BlockSpec((Nb, 1, L), lambda i: (i, 0, 0))],
        out_specs=pl.BlockSpec((Nb, L, H), lambda i: (i, 0, 0)),
        compiler_params=_compiler_params(("parallel",)),
        cost_estimate=pl.CostEstimate(flops=flops,
                                      transcendentals=N * nh * L * L,
                                      bytes_accessed=bytes_accessed),
    )(qkv, mask)


# ------------------------- fused pooler + classifier -------------------------

def _head_kernel(x_ref, pw_ref, pb_ref, w1_ref, b1_ref, w2_ref, b2_ref, o_ref):
    x = x_ref[...].astype(jnp.bfloat16)
    pooled = jnp.tanh(
        jnp.dot(x, pw_ref[...].astype(jnp.bfloat16),
                preferred_element_type=jnp.float32) + pb_ref[...])
    h1 = jnp.dot(pooled.astype(jnp.bfloat16), w1_ref[...].astype(jnp.bfloat16),
                 preferred_element_type=jnp.float32) + b1_ref[...]
    h1 = _apply_act(h1, "gelu")
    o_ref[...] = jnp.dot(h1.astype(jnp.bfloat16), w2_ref[...].astype(jnp.bfloat16),
                         preferred_element_type=jnp.float32) + b2_ref[...]


def classifier_head(cls_hidden, params):
    """tanh pooler -> Linear(H,256) -> GELU -> Linear(256,1), one kernel."""
    N = cls_hidden.shape[0]
    vmem = pl.BlockSpec(memory_space=pltpu.MemorySpace.VMEM)
    return pl.pallas_call(
        _head_kernel,
        out_shape=jax.ShapeDtypeStruct((N, 1), jnp.float32),
        in_specs=[vmem] * 7,
        out_specs=vmem,
        compiler_params=pltpu.CompilerParams(vmem_limit_bytes=_vmem_limit_bytes()),
    )(cls_hidden, params["pool_w"], params["pool_b"],
      params["cls_w1"], params["cls_b1"], params["cls_w2"], params["cls_b2"])


# ------------------------------ model (glue) ---------------------------------

def bert_forward(params, input_ids, attention_mask, *, nh):
    N, L = input_ids.shape
    H = params["word_emb"].shape[1]

    # embeddings (gather + adds are glue; LN kernel emits bf16 activations)
    emb = (jnp.take(params["word_emb"], input_ids, axis=0)
           + params["pos_emb"][None, :L, :]
           + params["type_emb"][0][None, None, :])
    x = layernorm(emb.reshape(N * L, H), params["emb_ln_g"], params["emb_ln_b"])

    mask3 = attention_mask.astype(jnp.float32).reshape(N, 1, L)

    for lyr in params["layers"]:
        qkv = dense(x, lyr["qkv_w"], lyr["qkv_b"])                    # fused Q|K|V
        ctx = attention(qkv.reshape(N, L, 3 * H), mask3, nh=nh)       # (N, L, H)
        x = dense(ctx.reshape(N * L, H), lyr["o_w"], lyr["o_b"],
                  residual=x, gamma=lyr["ln1_g"], beta=lyr["ln1_b"])  # proj+add&LN
        x = ffn(x, lyr["i_w"], lyr["i_b"], lyr["f_w"], lyr["f_b"],
                lyr["ln2_g"], lyr["ln2_b"])                           # fused FFN+add&LN

    hidden = x.astype(jnp.float32).reshape(N, L, H)                   # last layer

    # pooler (tanh on [CLS]) + replaced classifier, fused (dropout = eval no-op)
    logits = classifier_head(x.reshape(N, L, H)[:, 0, :], params)     # (N, 1)
    return logits, hidden


def reranker_forward(params, input_ids, attention_mask, *, max_len, nh):
    B, S, L = input_ids.shape
    assert L == max_len
    ii = input_ids.reshape(-1, max_len)
    am = attention_mask.reshape(-1, max_len)
    logits, hidden = bert_forward(params, ii, am, nh=nh)
    logits = logits.reshape(-1, S)
    hidden = hidden.reshape(-1, S, max_len, hidden.shape[-1])
    return logits, hidden


# ------------------------------- init params ---------------------------------

def init_params(key, *, vocab, max_len, H, inter, n_layers, cls_hidden=256):
    wdt = jnp.bfloat16     # matmul weights in bf16 (bf16 MXU, halved HBM traffic)

    def normal(k, shape, dtype=wdt):
        return (0.02 * jax.random.normal(k, shape, jnp.float32)).astype(dtype)

    def xavier(k, shape, dtype=wdt):   # matches nn.init.xavier_uniform_
        bound = math.sqrt(6.0 / (shape[0] + shape[1]))
        return jax.random.uniform(k, shape, jnp.float32, -bound, bound).astype(dtype)

    keys = iter(jax.random.split(key, 16 + 8 * n_layers))
    p = {
        "word_emb": normal(next(keys), (vocab, H), jnp.float32),
        "pos_emb": normal(next(keys), (max_len, H), jnp.float32),
        "type_emb": normal(next(keys), (2, H), jnp.float32),
        "emb_ln_g": jnp.ones((1, H), jnp.float32),
        "emb_ln_b": jnp.zeros((1, H), jnp.float32),
        "pool_w": normal(next(keys), (H, H)),
        "pool_b": jnp.zeros((1, H), jnp.float32),
        # replaced classifier: xavier weights, zero biases (per init_params)
        "cls_w1": xavier(next(keys), (H, cls_hidden)),
        "cls_b1": jnp.zeros((1, cls_hidden), jnp.float32),
        "cls_w2": xavier(next(keys), (cls_hidden, 1)),
        "cls_b2": jnp.zeros((1, 1), jnp.float32),
        "layers": [],
    }
    for _ in range(n_layers):
        p["layers"].append({
            "qkv_w": normal(next(keys), (H, 3 * H)),     # fused Q|K|V projection
            "qkv_b": jnp.zeros((1, 3 * H), jnp.float32),
            "o_w": normal(next(keys), (H, H)),
            "o_b": jnp.zeros((1, H), jnp.float32),
            "ln1_g": jnp.ones((1, H), jnp.float32),
            "ln1_b": jnp.zeros((1, H), jnp.float32),
            "i_w": normal(next(keys), (H, inter)),
            "i_b": jnp.zeros((1, inter), jnp.float32),
            "f_w": normal(next(keys), (inter, H)),
            "f_b": jnp.zeros((1, H), jnp.float32),
            "ln2_g": jnp.ones((1, H), jnp.float32),
            "ln2_b": jnp.zeros((1, H), jnp.float32),
        })
    return p


# ----------------------------------- main -------------------------------------

if __name__ == "__main__":
    # small shapes: batch=2, num_example(sample_num)=3, max_len=16, hidden=32
    B, S, L = 2, 3, 16
    H, NH, INTER, VOCAB, N_LAYERS = 32, 4, 64, 100, 2

    key = jax.random.PRNGKey(0)
    k_par, k_ids, k_len = jax.random.split(key, 3)

    params = init_params(k_par, vocab=VOCAB, max_len=L, H=H,
                         inter=INTER, n_layers=N_LAYERS)

    input_ids = jax.random.randint(k_ids, (B, S, L), 0, VOCAB, dtype=jnp.int32)
    lens = jax.random.randint(k_len, (B, S), L // 2, L + 1)
    attention_mask = (jnp.arange(L)[None, None, :] < lens[..., None]).astype(jnp.int32)

    forward = jax.jit(functools.partial(reranker_forward, max_len=L, nh=NH))
    logits, hidden_states = forward(params, input_ids, attention_mask)
    jax.block_until_ready((logits, hidden_states))

    assert logits.shape == (B, S), logits.shape
    assert hidden_states.shape == (B, S, L, H), hidden_states.shape
    assert jnp.all(jnp.isfinite(logits)) and jnp.all(jnp.isfinite(hidden_states))

    # TODO(synk): loading a pretrained HF checkpoint (from_pretrained) has no
    # Pallas equivalent; weights are synthetic deterministic initializations.
    print("KERNEL_OK")
</pallas_src>

<mosaic_0001>
module attributes {stable_mosaic.version = 11 : i64} {
  func.func @_layernorm_kernel(%arg0: i32, %arg1: memref<96x32xf32, #tpu.memory_space<vmem>>, %arg2: memref<1x32xf32, #tpu.memory_space<vmem>>, %arg3: memref<1x32xf32, #tpu.memory_space<vmem>>, %arg4: memref<96x32xbf16, #tpu.memory_space<vmem>>) attributes {dimension_semantics = [#tpu.dimension_semantics<parallel>], iteration_bounds = array<i64: 1>, scalar_prefetch = 0 : i64, scratch_operands = 0 : i64, tpu.core_type = #tpu.core_type<tc>, window_params = [{transform_indices = @transform_0, window_bounds = array<i64: 96, 32>}, {pipeline_mode = #tpu.pipeline_mode<synchronous>, transform_indices = @transform_1, window_bounds = array<i64: 1, 32>}, {pipeline_mode = #tpu.pipeline_mode<synchronous>, transform_indices = @transform_2, window_bounds = array<i64: 1, 32>}, {transform_indices = @transform_3, window_bounds = array<i64: 96, 32>}]} {
    %c0 = arith.constant 0 : index
    %c0_0 = arith.constant 0 : index
    %0 = vector.load %arg1[%c0, %c0_0] : memref<96x32xf32, #tpu.memory_space<vmem>>, vector<96x32xf32>
    %cst = arith.constant dense<0.000000e+00> : vector<96xf32>
    %1 = vector.multi_reduction <add>, %0, %cst [1] : vector<96x32xf32> to vector<96xf32>
    %2 = vector.shape_cast %1 : vector<96xf32> to vector<96x1xf32>
    %cst_1 = arith.constant 3.200000e+01 : f32
    %3 = vector.broadcast %cst_1 : f32 to vector<96x1xf32>
    %4 = arith.divf %2, %3 : vector<96x1xf32>
    %5 = vector.broadcast %4 : vector<96x1xf32> to vector<96x32xf32>
    %6 = arith.subf %0, %5 : vector<96x32xf32>
    %7 = arith.mulf %6, %6 : vector<96x32xf32>
    %cst_2 = arith.constant dense<0.000000e+00> : vector<96xf32>
    %8 = vector.multi_reduction <add>, %7, %cst_2 [1] : vector<96x32xf32> to vector<96xf32>
    %9 = vector.shape_cast %8 : vector<96xf32> to vector<96x1xf32>
    %cst_3 = arith.constant 3.200000e+01 : f32
    %10 = vector.broadcast %cst_3 : f32 to vector<96x1xf32>
    %11 = arith.divf %9, %10 : vector<96x1xf32>
    %12 = vector.broadcast %4 : vector<96x1xf32> to vector<96x32xf32>
    %13 = arith.subf %0, %12 : vector<96x32xf32>
    %cst_4 = arith.constant 9.99999996E-13 : f32
    %14 = vector.broadcast %cst_4 : f32 to vector<96x1xf32>
    %15 = arith.addf %11, %14 : vector<96x1xf32>
    %16 = math.rsqrt %15 : vector<96x1xf32>
    %17 = vector.broadcast %16 : vector<96x1xf32> to vector<96x32xf32>
    %18 = arith.mulf %13, %17 : vector<96x32xf32>
    %c0_5 = arith.constant 0 : index
    %c0_6 = arith.constant 0 : index
    %19 = vector.load %arg2[%c0_5, %c0_6] : memref<1x32xf32, #tpu.memory_space<vmem>>, vector<1x32xf32>
    %20 = vector.broadcast %19 : vector<1x32xf32> to vector<96x32xf32>
    %21 = arith.mulf %18, %20 : vector<96x32xf32>
    %c0_7 = arith.constant 0 : index
    %c0_8 = arith.constant 0 : index
    %22 = vector.load %arg3[%c0_7, %c0_8] : memref<1x32xf32, #tpu.memory_space<vmem>>, vector<1x32xf32>
    %23 = vector.broadcast %22 : vector<1x32xf32> to vector<96x32xf32>
    %24 = arith.addf %21, %23 : vector<96x32xf32>
    %25 = arith.truncf %24 : vector<96x32xf32> to vector<96x32xbf16>
    %c0_9 = arith.constant 0 : index
    %c0_10 = arith.constant 0 : index
    %26 = vector.load %arg4[%c0_9, %c0_10] : memref<96x32xbf16, #tpu.memory_space<vmem>>, vector<96x32xbf16>
    tpu.vector_store %arg4[%c0_9, %c0_10], %25 {strides = array<i32>} : memref<96x32xbf16, #tpu.memory_space<vmem>>, vector<96x32xbf16>,
    return
  }
  func.func @transform_0(%arg0: i32) -> (i32, i32) {
    %c0_i32 = arith.constant 0 : i32
    %c0_i32_0 = arith.constant 0 : i32
    return %arg0, %c0_i32 : i32, i32
  }
  func.func @transform_1(%arg0: i32) -> (i32, i32) {
    %c0_i32 = arith.constant 0 : i32
    %c0_i32_0 = arith.constant 0 : i32
    %c0_i32_1 = arith.constant 0 : i32
    return %c0_i32, %c0_i32_0 : i32, i32
  }
  func.func @transform_2(%arg0: i32) -> (i32, i32) {
    %c0_i32 = arith.constant 0 : i32
    %c0_i32_0 = arith.constant 0 : i32
    %c0_i32_1 = arith.constant 0 : i32
    return %c0_i32, %c0_i32_0 : i32, i32
  }
  func.func @transform_3(%arg0: i32) -> (i32, i32) {
    %c0_i32 = arith.constant 0 : i32
    %c0_i32_0 = arith.constant 0 : i32
    return %arg0, %c0_i32 : i32, i32
  }
}

module attributes {stable_mosaic.version = 11 : i64} {
  func.func @_dense_kernel(%arg0: i32, %arg1: i32, %arg2: i32, %arg3: memref<96x32xbf16, #tpu.memory_space<vmem>>, %arg4: memref<32x96xbf16, #tpu.memory_space<vmem>>, %arg5: memref<1x96xf32, #tpu.memory_space<vmem>>, %arg6: memref<96x96xbf16, #tpu.memory_space<vmem>>, %arg7: memref<96x96xf32, #tpu.memory_space<vmem>>) attributes {dimension_semantics = [#tpu.dimension_semantics<parallel>, #tpu.dimension_semantics<parallel>, #tpu.dimension_semantics<arbitrary>], iteration_bounds = array<i64: 1, 1, 1>, scalar_prefetch = 0 : i64, scratch_operands = 1 : i64, tpu.core_type = #tpu.core_type<tc>, window_params = [{transform_indices = @transform_0, window_bounds = array<i64: 96, 32>}, {transform_indices = @transform_1, window_bounds = array<i64: 32, 96>}, {transform_indices = @transform_2, window_bounds = array<i64: 1, 96>}, {transform_indices = @transform_3, window_bounds = array<i64: 96, 96>}]} {
    %c0_i32 = arith.constant 0 : i32
    %0 = arith.cmpi eq, %arg2, %c0_i32 : i32
    %1 = arith.extui %0 : i1 to i32
    %c0_i32_0 = arith.constant 0 : i32
    %2 = arith.cmpi ne, %1, %c0_i32_0 : i32
    scf.if %2 {
      %cst_10 = arith.constant 0.000000e+00 : f32
      %12 = vector.broadcast %cst_10 : f32 to vector<96x96xf32>
      %c0_11 = arith.constant 0 : index
      %c0_12 = arith.constant 0 : index
      %13 = vector.load %arg7[%c0_11, %c0_12] : memref<96x96xf32, #tpu.memory_space<vmem>>, vector<96x96xf32>
      tpu.vector_store %arg7[%c0_11, %c0_12], %12 {strides = array<i32>} : memref<96x96xf32, #tpu.memory_space<vmem>>, vector<96x96xf32>,
    } else {
    }
    %c0 = arith.constant 0 : index
    %c0_1 = arith.constant 0 : index
    %3 = vector.load %arg7[%c0, %c0_1] : memref<96x96xf32, #tpu.memory_space<vmem>>, vector<96x96xf32>
    %c0_2 = arith.constant 0 : index
    %c0_3 = arith.constant 0 : index
    %4 = vector.load %arg3[%c0_2, %c0_3] : memref<96x32xbf16, #tpu.memory_space<vmem>>, vector<96x32xbf16>
    %c0_4 = arith.constant 0 : index
    %c0_5 = arith.constant 0 : index
    %5 = vector.load %arg4[%c0_4, %c0_5] : memref<32x96xbf16, #tpu.memory_space<vmem>>, vector<32x96xbf16>
    %cst = arith.constant dense<0.000000e+00> : vector<96x96xf32>
    %6 = tpu.matmul %4, %5, %cst {dimension_numbers = #tpu.dot_dimension_numbers<[1], [0], [0], [1], [0, 0, 1, 1], [], []>} : vector<96x32xbf16>, vector<32x96xbf16>, vector<96x96xf32> -> vector<96x96xf32>
    %7 = arith.addf %3, %6 : vector<96x96xf32>
    %c0_6 = arith.constant 0 : index
    %c0_7 = arith.constant 0 : index
    %8 = vector.load %arg7[%c0_6, %c0_7] : memref<96x96xf32, #tpu.memory_space<vmem>>, vector<96x96xf32>
    tpu.vector_store %arg7[%c0_6, %c0_7], %7 {strides = array<i32>} : memref<96x96xf32, #tpu.memory_space<vmem>>, vector<96x96xf32>,
    %c0_i32_8 = arith.constant 0 : i32
    %9 = arith.cmpi eq, %arg2, %c0_i32_8 : i32
    %10 = arith.extui %9 : i1 to i32
    %c0_i32_9 = arith.constant 0 : i32
    %11 = arith.cmpi ne, %10, %c0_i32_9 : i32
    scf.if %11 {
      %c0_10 = arith.constant 0 : index
      %c0_11 = arith.constant 0 : index
      %12 = vector.load %arg7[%c0_10, %c0_11] : memref<96x96xf32, #tpu.memory_space<vmem>>, vector<96x96xf32>
      %c0_12 = arith.constant 0 : index
      %c0_13 = arith.constant 0 : index
      %13 = vector.load %arg5[%c0_12, %c0_13] : memref<1x96xf32, #tpu.memory_space<vmem>>, vector<1x96xf32>
      %14 = vector.broadcast %13 : vector<1x96xf32> to vector<96x96xf32>
      %15 = arith.addf %12, %14 : vector<96x96xf32>
      %16 = arith.truncf %15 : vector<96x96xf32> to vector<96x96xbf16>
      %c0_14 = arith.constant 0 : index
      %c0_15 = arith.constant 0 : index
      %17 = vector.load %arg6[%c0_14, %c0_15] : memref<96x96xbf16, #tpu.memory_space<vmem>>, vector<96x96xbf16>
      tpu.vector_store %arg6[%c0_14, %c0_15], %16 {strides = array<i32>} : memref<96x96xbf16, #tpu.memory_space<vmem>>, vector<96x96xbf16>,
    } else {
    }
    return
  }
  func.func @transform_0(%arg0: i32, %arg1: i32, %arg2: i32) -> (i32, i32) {
    %c0_i32 = arith.constant 0 : i32
    return %arg0, %arg2 : i32, i32
  }
  func.func @transform_1(%arg0: i32, %arg1: i32, %arg2: i32) -> (i32, i32) {
    %c0_i32 = arith.constant 0 : i32
    return %arg2, %arg1 : i32, i32
  }
  func.func @transform_2(%arg0: i32, %arg1: i32, %arg2: i32) -> (i32, i32) {
    %c0_i32 = arith.constant 0 : i32
    %c0_i32_0 = arith.constant 0 : i32
    return %c0_i32, %arg1 : i32, i32
  }
  func.func @transform_3(%arg0: i32, %arg1: i32, %arg2: i32) -> (i32, i32) {
    %c0_i32 = arith.constant 0 : i32
    return %arg0, %arg1 : i32, i32
  }
}

module attributes {stable_mosaic.version = 11 : i64} {
  func.func @_attention_kernel(%arg0: i32, %arg1: memref<6x16x96xbf16, #tpu.memory_space<vmem>>, %arg2: memref<6x1x16xf32, #tpu.memory_space<vmem>>, %arg3: memref<6x16x32xbf16, #tpu.memory_space<vmem>>) attributes {dimension_semantics = [#tpu.dimension_semantics<parallel>], iteration_bounds = array<i64: 1>, scalar_prefetch = 0 : i64, scratch_operands = 0 : i64, tpu.core_type = #tpu.core_type<tc>, window_params = [{transform_indices = @transform_0, window_bounds = array<i64: 6, 16, 96>}, {transform_indices = @transform_1, window_bounds = array<i64: 6, 1, 16>}, {transform_indices = @transform_2, window_bounds = array<i64: 6, 16, 32>}]} {
    %c0 = arith.constant 0 : index
    %c0_0 = arith.constant 0 : index
    %c0_1 = arith.constant 0 : index
    %0 = vector.load %arg2[%c0, %c0_0, %c0_1] : memref<6x1x16xf32, #tpu.memory_space<vmem>>, vector<1x1x16xf32>
    %1 = vector.shape_cast %0 : vector<1x1x16xf32> to vector<1x16xf32>
    %cst = arith.constant 1.000000e+00 : f32
    %2 = vector.broadcast %cst : f32 to vector<1x16xf32>
    %3 = arith.subf %2, %1 : vector<1x16xf32>
    %cst_2 = arith.constant -1.000000e+09 : f32
    %4 = vector.broadcast %cst_2 : f32 to vector<1x16xf32>
    %5 = arith.mulf %3, %4 : vector<1x16xf32>
    %c0_3 = arith.constant 0 : index
    %c0_4 = arith.constant 0 : index
    %c0_5 = arith.constant 0 : index
    %6 = vector.load %arg1[%c0_3, %c0_4, %c0_5] : memref<6x16x96xbf16, #tpu.memory_space<vmem>>, vector<1x16x8xbf16>
    %7 = vector.shape_cast %6 : vector<1x16x8xbf16> to vector<16x8xbf16>
    %c0_6 = arith.constant 0 : index
    %c0_7 = arith.constant 0 : index
    %c32 = arith.constant 32 : index
    %8 = vector.load %arg1[%c0_6, %c0_7, %c32] : memref<6x16x96xbf16, #tpu.memory_space<vmem>>, vector<1x16x8xbf16>
    %9 = vector.shape_cast %8 : vector<1x16x8xbf16> to vector<16x8xbf16>
    %c0_8 = arith.constant 0 : index
    %c0_9 = arith.constant 0 : index
    %c64 = arith.constant 64 : index
    %10 = vector.load %arg1[%c0_8, %c0_9, %c64] : memref<6x16x96xbf16, #tpu.memory_space<vmem>>, vector<1x16x8xbf16>
    %11 = vector.shape_cast %10 : vector<1x16x8xbf16> to vector<16x8xbf16>
    "tpu.trace_start"() <{level = 10 : i32, message = "qd,kd->qk"}> : () -> ()
    %cst_10 = arith.constant dense<0.000000e+00> : vector<16x16xf32>
    %12 = tpu.matmul %7, %9, %cst_10 {dimension_numbers = #tpu.dot_dimension_numbers<[1], [1], [0], [0], [0, 0, 1, 0], [], []>} : vector<16x8xbf16>, vector<16x8xbf16>, vector<16x16xf32> -> vector<16x16xf32>
    "tpu.trace_stop"() : () -> ()
    %cst_11 = arith.constant 0.353553385 : f32
    %13 = vector.broadcast %cst_11 : f32 to vector<16x16xf32>
    %14 = arith.mulf %12, %13 : vector<16x16xf32>
    %15 = vector.broadcast %5 : vector<1x16xf32> to vector<16x16xf32>
    %16 = arith.addf %14, %15 : vector<16x16xf32>
    %cst_12 = arith.constant dense<0xFF800000> : vector<16xf32>
    %17 = vector.multi_reduction <maximumf>, %16, %cst_12 [1] : vector<16x16xf32> to vector<16xf32>
    %18 = vector.shape_cast %17 : vector<16xf32> to vector<16x1xf32>
    %19 = vector.broadcast %18 : vector<16x1xf32> to vector<16x16xf32>
    %20 = arith.subf %16, %19 : vector<16x16xf32>
    %21 = math.exp %20 : vector<16x16xf32>
    %cst_13 = arith.constant dense<0.000000e+00> : vector<16xf32>
    %22 = vector.multi_reduction <add>, %21, %cst_13 [1] : vector<16x16xf32> to vector<16xf32>
    %23 = vector.shape_cast %22 : vector<16xf32> to vector<16x1xf32>
    %24 = tpu.reciprocal %23 {approx = true} : vector<16x1xf32> -> vector<16x1xf32>
    %25 = vector.broadcast %24 : vector<16x1xf32> to vector<16x16xf32>
    %26 = arith.mulf %21, %25 : vector<16x16xf32>
    %27 = arith.truncf %26 : vector<16x16xf32> to vector<16x16xbf16>
    %cst_14 = arith.constant dense<0.000000e+00> : vector<16x8xf32>
    %28 = tpu.matmul %27, %11, %cst_14 {dimension_numbers = #tpu.dot_dimension_numbers<[1], [0], [0], [1], [0, 0, 1, 1], [], []>} : vector<16x16xbf16>, vector<16x8xbf16>, vector<16x8xf32> -> vector<16x8xf32>
    %c0_15 = arith.constant 0 : index
    %c0_16 = arith.constant 0 : index
    %c8 = arith.constant 8 : index
    %29 = vector.load %arg1[%c0_15, %c0_16, %c8] : memref<6x16x96xbf16, #tpu.memory_space<vmem>>, vector<1x16x8xbf16>
    %30 = vector.shape_cast %29 : vector<1x16x8xbf16> to vector<16x8xbf16>
    %c0_17 = arith.constant 0 : index
    %c0_18 = arith.constant 0 : index
    %c40 = arith.constant 40 : index
    %31 = vector.load %arg1[%c0_17, %c0_18, %c40] : memref<6x16x96xbf16, #tpu.memory_space<vmem>>, vector<1x16x8xbf16>
    %32 = vector.shape_cast %31 : vector<1x16x8xbf16> to vector<16x8xbf16>
    %c0_19 = arith.constant 0 : index
    %c0_20 = arith.constant 0 : index
    %c72 = arith.constant 72 : index
    %33 = vector.load %arg1[%c0_19, %c0_20, %c72] : memref<6x16x96xbf16, #tpu.memory_space<vmem>>, vector<1x16x8xbf16>
    %34 = vector.shape_cast %33 : vector<1x16x8xbf16> to vector<16x8xbf16>
    "tpu.trace_start"() <{level = 10 : i32, message = "qd,kd->qk"}> : () -> ()
    %cst_21 = arith.constant dense<0.000000e+00> : vector<16x16xf32>
    %35 = tpu.matmul %30, %32, %cst_21 {dimension_numbers = #tpu.dot_dimension_numbers<[1], [1], [0], [0], [0, 0, 1, 0], [], []>} : vector<16x8xbf16>, vector<16x8xbf16>, vector<16x16xf32> -> vector<16x16xf32>
    "tpu.trace_stop"() : () -> ()
    %cst_22 = arith.constant 0.353553385 : f32
    %36 = vector.broadcast %cst_22 : f32 to vector<16x16xf32>
    %37 = arith.mulf %35, %36 : vector<16x16xf32>
    %38 = vector.broadcast %5 : vector<1x16xf32> to vector<16x16xf32>
    %39 = arith.addf %37, %38 : vector<16x16xf32>
    %cst_23 = arith.constant dense<0xFF800000> : vector<16xf32>
    %40 = vector.multi_reduction <maximumf>, %39, %cst_23 [1] : vector<16x16xf32> to vector<16xf32>
    %41 = vector.shape_cast %40 : vector<16xf32> to vector<16x1xf32>
    %42 = vector.broadcast %41 : vector<16x1xf32> to vector<16x16xf32>
    %43 = arith.subf %39, %42 : vector<16x16xf32>
    %44 = math.exp %43 : vector<16x16xf32>
    %cst_24 = arith.constant dense<0.000000e+00> : vector<16xf32>
    %45 = vector.multi_reduction <add>, %44, %cst_24 [1] : vector<16x16xf32> to vector<16xf32>
    %46 = vector.shape_cast %45 : vector<16xf32> to vector<16x1xf32>
    %47 = tpu.reciprocal %46 {approx = true} : vector<16x1xf32> -> vector<16x1xf32>
    %48 = vector.broadcast %47 : vector<16x1xf32> to vector<16x16xf32>
    %49 = arith.mulf %44, %48 : vector<16x16xf32>
    %50 = arith.truncf %49 : vector<16x16xf32> to vector<16x16xbf16>
    %cst_25 = arith.constant dense<0.000000e+00> : vector<16x8xf32>
    %51 = tpu.matmul %50, %34, %cst_25 {dimension_numbers = #tpu.dot_dimension_numbers<[1], [0], [0], [1], [0, 0, 1, 1], [], []>} : vector<16x16xbf16>, vector<16x8xbf16>, vector<16x8xf32> -> vector<16x8xf32>
    %c0_26 = arith.constant 0 : index
    %c0_27 = arith.constant 0 : index
    %c16 = arith.constant 16 : index
    %52 = vector.load %arg1[%c0_26, %c0_27, %c16] : memref<6x16x96xbf16, #tpu.memory_space<vmem>>, vector<1x16x8xbf16>
    %53 = vector.shape_cast %52 : vector<1x16x8xbf16> to vector<16x8xbf16>
    %c0_28 = arith.constant 0 : index
    %c0_29 = arith.constant 0 : index
    %c48 = arith.constant 48 : index
    %54 = vector.load %arg1[%c0_28, %c0_29, %c48] : memref<6x16x96xbf16, #tpu.memory_space<vmem>>, vector<1x16x8xbf16>
    %55 = vector.shape_cast %54 : vector<1x16x8xbf16> to vector<16x8xbf16>
    %c0_30 = arith.constant 0 : index
    %c0_31 = arith.constant 0 : index
    %c80 = arith.constant 80 : index
    %56 = vector.load %arg1[%c0_30, %c0_31, %c80] : memref<6x16x96xbf16, #tpu.memory_space<vmem>>, vector<1x16x8xbf16>
    %57 = vector.shape_cast %56 : vector<1x16x8xbf16> to vector<16x8xbf16>
    "tpu.trace_start"() <{level = 10 : i32, message = "qd,kd->qk"}> : () -> ()
    %cst_32 = arith.constant dense<0.000000e+00> : vector<16x16xf32>
    %58 = tpu.matmul %53, %55, %cst_32 {dimension_numbers = #tpu.dot_dimension_numbers<[1], [1], [0], [0], [0, 0, 1, 0], [], []>} : vector<16x8xbf16>, vector<16x8xbf16>, vector<16x16xf32> -> vector<16x16xf32>
    "tpu.trace_stop"() : () -> ()
    %cst_33 = arith.constant 0.353553385 : f32
    %59 = vector.broadcast %cst_33 : f32 to vector<16x16xf32>
    %60 = arith.mulf %58, %59 : vector<16x16xf32>
    %61 = vector.broadcast %5 : vector<1x16xf32> to vector<16x16xf32>
    %62 = arith.addf %60, %61 : vector<16x16xf32>
    %cst_34 = arith.constant dense<0xFF800000> : vector<16xf32>
    %63 = vector.multi_reduction <maximumf>, %62, %cst_34 [1] : vector<16x16xf32> to vector<16xf32>
    %64 = vector.shape_cast %63 : vector<16xf32> to vector<16x1xf32>
    %65 = vector.broadcast %64 : vector<16x1xf32> to vector<16x16xf32>
    %66 = arith.subf %62, %65 : vector<16x16xf32>
    %67 = math.exp %66 : vector<16x16xf32>
    %cst_35 = arith.constant dense<0.000000e+00> : vector<16xf32>
    %68 = vector.multi_reduction <add>, %67, %cst_35 [1] : vector<16x16xf32> to vector<16xf32>
    %69 = vector.shape_cast %68 : vector<16xf32> to vector<16x1xf32>
    %70 = tpu.reciprocal %69 {approx = true} : vector<16x1xf32> -> vector<16x1xf32>
    %71 = vector.broadcast %70 : vector<16x1xf32> to vector<16x16xf32>
    %72 = arith.mulf %67, %71 : vector<16x16xf32>
    %73 = arith.truncf %72 : vector<16x16xf32> to vector<16x16xbf16>
    %cst_36 = arith.constant dense<0.000000e+00> : vector<16x8xf32>
    %74 = tpu.matmul %73, %57, %cst_36 {dimension_numbers = #tpu.dot_dimension_numbers<[1], [0], [0], [1], [0, 0, 1, 1], [], []>} : vector<16x16xbf16>, vector<16x8xbf16>, vector<16x8xf32> -> vector<16x8xf32>
    %c0_37 = arith.constant 0 : index
    %c0_38 = arith.constant 0 : index
    %c24 = arith.constant 24 : index
    %75 = vector.load %arg1[%c0_37, %c0_38, %c24] : memref<6x16x96xbf16, #tpu.memory_space<vmem>>, vector<1x16x8xbf16>
    %76 = vector.shape_cast %75 : vector<1x16x8xbf16> to vector<16x8xbf16>
    %c0_39 = arith.constant 0 : index
    %c0_40 = arith.constant 0 : index
    %c56 = arith.constant 56 : index
    %77 = vector.load %arg1[%c0_39, %c0_40, %c56] : memref<6x16x96xbf16, #tpu.memory_space<vmem>>, vector<1x16x8xbf16>
    %78 = vector.shape_cast %77 : vector<1x16x8xbf16> to vector<16x8xbf16>
    %c0_41 = arith.constant 0 : index
    %c0_42 = arith.constant 0 : index
    %c88 = arith.constant 88 : index
    %79 = vector.load %arg1[%c0_41, %c0_42, %c88] : memref<6x16x96xbf16, #tpu.memory_space<vmem>>, vector<1x16x8xbf16>
    %80 = vector.shape_cast %79 : vector<1x16x8xbf16> to vector<16x8xbf16>
    "tpu.trace_start"() <{level = 10 : i32, message = "qd,kd->qk"}> : () -> ()
    %cst_43 = arith.constant dense<0.000000e+00> : vector<16x16xf32>
    %81 = tpu.matmul %76, %78, %cst_43 {dimension_numbers = #tpu.dot_dimension_numbers<[1], [1], [0], [0], [0, 0, 1, 0], [], []>} : vector<16x8xbf16>, vector<16x8xbf16>, vector<16x16xf32> -> vector<16x16xf32>
    "tpu.trace_stop"() : () -> ()
    %cst_44 = arith.constant 0.353553385 : f32
    %82 = vector.broadcast %cst_44 : f32 to vector<16x16xf32>
    %83 = arith.mulf %81, %82 : vector<16x16xf32>
    %84 = vector.broadcast %5 : vector<1x16xf32> to vector<16x16xf32>
    %85 = arith.addf %83, %84 : vector<16x16xf32>
    %cst_45 = arith.constant dense<0xFF800000> : vector<16xf32>
    %86 = vector.multi_reduction <maximumf>, %85, %cst_45 [1] : vector<16x16xf32> to vector<16xf32>
    %87 = vector.shape_cast %86 : vector<16xf32> to vector<16x1xf32>
    %88 = vector.broadcast %87 : vector<16x1xf32> to vector<16x16xf32>
    %89 = arith.subf %85, %88 : vector<16x16xf32>
    %90 = math.exp %89 : vector<16x16xf32>
    %cst_46 = arith.constant dense<0.000000e+00> : vector<16xf32>
    %91 = vector.multi_reduction <add>, %90, %cst_46 [1] : vector<16x16xf32> to vector<16xf32>
    %92 = vector.shape_cast %91 : vector<16xf32> to vector<16x1xf32>
    %93 = tpu.reciprocal %92 {approx = true} : vector<16x1xf32> -> vector<16x1xf32>
    %94 = vector.broadcast %93 : vector<16x1xf32> to vector<16x16xf32>
    %95 = arith.mulf %90, %94 : vector<16x16xf32>
    %96 = arith.truncf %95 : vector<16x16xf32> to vector<16x16xbf16>
    %cst_47 = arith.constant dense<0.000000e+00> : vector<16x8xf32>
    %97 = tpu.matmul %96, %80, %cst_47 {dimension_numbers = #tpu.dot_dimension_numbers<[1], [0], [0], [1], [0, 0, 1, 1], [], []>} : vector<16x16xbf16>, vector<16x8xbf16>, vector<16x8xf32> -> vector<16x8xf32>
    %98 = tpu.concatenate %28, %51, %74, %97 in 1 : vector<16x8xf32>, vector<16x8xf32>, vector<16x8xf32>, vector<16x8xf32> -> vector<16x32xf32>
    %99 = arith.truncf %98 : vector<16x32xf32> to vector<16x32xbf16>
    %c0_48 = arith.constant 0 : index
    %c0_49 = arith.constant 0 : index
    %c0_50 = arith.constant 0 : index
    %100 = vector.load %arg3[%c0_48, %c0_49, %c0_50] : memref<6x16x32xbf16, #tpu.memory_space<vmem>>, vector<1x16x32xbf16>
    %101 = vector.shape_cast %100 : vector<1x16x32xbf16> to vector<16x32xbf16>
    %102 = vector.shape_cast %99 : vector<16x32xbf16> to vector<1x16x32xbf16>
    tpu.vector_store %arg3[%c0_48, %c0_49, %c0_50], %102 {strides = array<i32>} : memref<6x16x32xbf16, #tpu.memory_space<vmem>>, vector<1x16x32xbf16>,
    %c1 = arith.constant 1 : index
    %c0_51 = arith.constant 0 : index
    %c0_52 = arith.constant 0 : index
    %103 = vector.load %arg2[%c1, %c0_51, %c0_52] : memref<6x1x16xf32, #tpu.memory_space<vmem>>, vector<1x1x16xf32>
    %104 = vector.shape_cast %103 : vector<1x1x16xf32> to vector<1x16xf32>
    %cst_53 = arith.constant 1.000000e+00 : f32
    %105 = vector.broadcast %cst_53 : f32 to vector<1x16xf32>
    %106 = arith.subf %105, %104 : vector<1x16xf32>
    %cst_54 = arith.constant -1.000000e+09 : f32
    %107 = vector.broadcast %cst_54 : f32 to vector<1x16xf32>
    %108 = arith.mulf %106, %107 : vector<1x16xf32>
    %c1_55 = arith.constant 1 : index
    %c0_56 = arith.constant 0 : index
    %c0_57 = arith.constant 0 : index
    %109 = vector.load %arg1[%c1_55, %c0_56, %c0_57] : memref<6x16x96xbf16, #tpu.memory_space<vmem>>, vector<1x16x8xbf16>
    %110 = vector.shape_cast %109 : vector<1x16x8xbf16> to vector<16x8xbf16>
    %c1_58 = arith.constant 1 : index
    %c0_59 = arith.constant 0 : index
    %c32_60 = arith.constant 32 : index
    %111 = vector.load %arg1[%c1_58, %c0_59, %c32_60] : memref<6x16x96xbf16, #tpu.memory_space<vmem>>, vector<1x16x8xbf16>
    %112 = vector.shape_cast %111 : vector<1x16x8xbf16> to vector<16x8xbf16>
    %c1_61 = arith.constant 1 : index
    %c0_62 = arith.constant 0 : index
    %c64_63 = arith.constant 64 : index
    %113 = vector.load %arg1[%c1_61, %c0_62, %c64_63] : memref<6x16x96xbf16, #tpu.memory_space<vmem>>, vector<1x16x8xbf16>
    %114 = vector.shape_cast %113 : vector<1x16x8xbf16> to vector<16x8xbf16>
    "tpu.trace_start"() <{level = 10 : i32, message = "qd,kd->qk"}> : () -> ()
    %cst_64 = arith.constant dense<0.000000e+00> : vector<16x16xf32>
    %115 = tpu.matmul %110, %112, %cst_64 {dimension_numbers = #tpu.dot_dimension_numbers<[1], [1], [0], [0], [0, 0, 1, 0], [], []>} : vector<16x8xbf16>, vector<16x8xbf16>, vector<16x16xf32> -> vector<16x16xf32>
    "tpu.trace_stop"() : () -> ()
    %cst_65 = arith.constant 0.353553385 : f32
    %116 = vector.broadcast %cst_65 : f32 to vector<16x16xf32>
    %117 = arith.mulf %115, %116 : vector<16x16xf32>
    %118 = vector.broadcast %108 : vector<1x16xf32> to vector<16x16xf32>
    %119 = arith.addf %117, %118 : vector<16x16xf32>
    %cst_66 = arith.constant dense<0xFF800000> : vector<16xf32>
    %120 = vector.multi_reduction <maximumf>, %119, %cst_66 [1] : vector<16x16xf32> to vector<16xf32>
    %121 = vector.shape_cast %120 : vector<16xf32> to vector<16x1xf32>
    %122 = vector.broadcast %121 : vector<16x1xf32> to vector<16x16xf32>
    %123 = arith.subf %119, %122 : vector<16x16xf32>
    %124 = math.exp %123 : vector<16x16xf32>
    %cst_67 = arith.constant dense<0.000000e+00> : vector<16xf32>
    %125 = vector.multi_reduction <add>, %124, %cst_67 [1] : vector<16x16xf32> to vector<16xf32>
    %126 = vector.shape_cast %125 : vector<16xf32> to vector<16x1xf32>
    %127 = tpu.reciprocal %126 {approx = true} : vector<16x1xf32> -> vector<16x1xf32>
    %128 = vector.broadcast %127 : vector<16x1xf32> to vector<16x16xf32>
    %129 = arith.mulf %124, %128 : vector<16x16xf32>
    %130 = arith.truncf %129 : vector<16x16xf32> to vector<16x16xbf16>
    %cst_68 = arith.constant dense<0.000000e+00> : vector<16x8xf32>
    %131 = tpu.matmul %130, %114, %cst_68 {dimension_numbers = #tpu.dot_dimension_numbers<[1], [0], [0], [1], [0, 0, 1, 1], [], []>} : vector<16x16xbf16>, vector<16x8xbf16>, vector<16x8xf32> -> vector<16x8xf32>
    %c1_69 = arith.constant 1 : index
    %c0_70 = arith.constant 0 : index
    %c8_71 = arith.constant 8 : index
    %132 = vector.load %arg1[%c1_69, %c0_70, %c8_71] : memref<6x16x96xbf16, #tpu.memory_space<vmem>>, vector<1x16x8xbf16>
    %133 = vector.shape_cast %132 : vector<1x16x8xbf16> to vector<16x8xbf16>
    %c1_72 = arith.constant 1 : index
    %c0_73 = arith.constant 0 : index
    %c40_74 = arith.constant 40 : index
    %134 = vector.load %arg1[%c1_72, %c0_73, %c40_74] : memref<6x16x96xbf16, #tpu.memory_space<vmem>>, vector<1x16x8xbf16>
    %135 = vector.shape_cast %134 : vector<1x16x8xbf16> to vector<16x8xbf16>
    %c1_75 = arith.constant 1 : index
    %c0_76 = arith.constant 0 : index
    %c72_77 = arith.constant 72 : index
    %136 = vector.load %arg1[%c1_75, %c0_76, %c72_77] : memref<6x16x96xbf16, #tpu.memory_space<vmem>>, vector<1x16x8xbf16>
    %137 = vector.shape_cast %136 : vector<1x16x8xbf16> to vector<16x8xbf16>
    "tpu.trace_start"() <{level = 10 : i32, message = "qd,kd->qk"}> : () -> ()
    %cst_78 = arith.constant dense<0.000000e+00> : vector<16x16xf32>
    %138 = tpu.matmul %133, %135, %cst_78 {dimension_numbers = #tpu.dot_dimension_numbers<[1], [1], [0], [0], [0, 0, 1, 0], [], []>} : vector<16x8xbf16>, vector<16x8xbf16>, vector<16x16xf32> -> vector<16x16xf32>
    "tpu.trace_stop"() : () -> ()
    %cst_79 = arith.constant 0.353553385 : f32
    %139 = vector.broadcast %cst_79 : f32 to vector<16x16xf32>
    %140 = arith.mulf %138, %139 : vector<16x16xf32>
    %141 = vector.broadcast %108 : vector<1x16xf32> to vector<16x16xf32>
    %142 = arith.addf %140, %141 : vector<16x16xf32>
    %cst_80 = arith.constant dense<0xFF800000> : vector<16xf32>
    %143 = vector.multi_reduction <maximumf>, %142, %cst_80 [1] : vector<16x16xf32> to vector<16xf32>
    %144 = vector.shape_cast %143 : vector<16xf32> to vector<16x1xf32>
    %145 = vector.broadcast %144 : vector<16x1xf32> to vector<16x16xf32>
    %146 = arith.subf %142, %145 : vector<16x16xf32>
    %147 = math.exp %146 : vector<16x16xf32>
    %cst_81 = arith.constant dense<0.000000e+00> : vector<16xf32>
    %148 = vector.multi_reduction <add>, %147, %cst_81 [1] : vector<16x16xf32> to vector<16xf32>
    %149 = vector.shape_cast %148 : vector<16xf32> to vector<16x1xf32>
    %150 = tpu.reciprocal %149 {approx = true} : vector<16x1xf32> -> vector<16x1xf32>
    %151 = vector.broadcast %150 : vector<16x1xf32> to vector<16x16xf32>
    %152 = arith.mulf %147, %151 : vector<16x16xf32>
    %153 = arith.truncf %152 : vector<16x16xf32> to vector<16x16xbf16>
    %cst_82 = arith.constant dense<0.000000e+00> : vector<16x8xf32>
    %154 = tpu.matmul %153, %137, %cst_82 {dimension_numbers = #tpu.dot_dimension_numbers<[1], [0], [0], [1], [0, 0, 1, 1], [], []>} : vector<16x16xbf16>, vector<16x8xbf16>, vector<16x8xf32> -> vector<16x8xf32>
    %c1_83 = arith.constant 1 : index
    %c0_84 = arith.constant 0 : index
    %c16_85 = arith.constant 16 : index
    %155 = vector.load %arg1[%c1_83, %c0_84, %c16_85] : memref<6x16x96xbf16, #tpu.memory_space<vmem>>, vector<1x16x8xbf16>
    %156 = vector.shape_cast %155 : vector<1x16x8xbf16> to vector<16x8xbf16>
    %c1_86 = arith.constant 1 : index
    %c0_87 = arith.constant 0 : index
    %c48_88 = arith.constant 48 : index
    %157 = vector.load %arg1[%c1_86, %c0_87, %c48_88] : memref<6x16x96xbf16, #tpu.memory_space<vmem>>, vector<1x16x8xbf16>
    %158 = vector.shape_cast %157 : vector<1x16x8xbf16> to vector<16x8xbf16>
    %c1_89 = arith.constant 1 : index
    %c0_90 = arith.constant 0 : index
    %c80_91 = arith.constant 80 : index
    %159 = vector.load %arg1[%c1_89, %c0_90, %c80_91] : memref<6x16x96xbf16, #tpu.memory_space<vmem>>, vector<1x16x8xbf16>
    %160 = vector.shape_cast %159 : vector<1x16x8xbf16> to vector<16x8xbf16>
    "tpu.trace_start"() <{level = 10 : i32, message = "qd,kd->qk"}> : () -> ()
    %cst_92 = arith.constant dense<0.000000e+00> : vector<16x16xf32>
    %161 = tpu.matmul %156, %158, %cst_92 {dimension_numbers = #tpu.dot_dimension_numbers<[1], [1], [0], [0], [0, 0, 1, 0], [], []>} : vector<16x8xbf16>, vector<16x8xbf16>, vector<16x16xf32> -> vector<16x16xf32>
    "tpu.trace_stop"() : () -> ()
    %cst_93 = arith.constant 0.353553385 : f32
    %162 = vector.broadcast %cst_93 : f32 to vector<16x16xf32>
    %163 = arith.mulf %161, %162 : vector<16x16xf32>
    %164 = vector.broadcast %108 : vector<1x16xf32> to vector<16x16xf32>
    %165 = arith.addf %163, %164 : vector<16x16xf32>
    %cst_94 = arith.constant dense<0xFF800000> : vector<16xf32>
    %166 = vector.multi_reduction <maximumf>, %165, %cst_94 [1] : vector<16x16xf32> to vector<16xf32>
    %167 = vector.shape_cast %166 : vector<16xf32> to vector<16x1xf32>
    %168 = vector.broadcast %167 : vector<16x1xf32> to vector<16x16xf32>
    %169 = arith.subf %165, %168 : vector<16x16xf32>
    %170 = math.exp %169 : vector<16x16xf32>
    %cst_95 = arith.constant dense<0.000000e+00> : vector<16xf32>
    %171 = vector.multi_reduction <add>, %170, %cst_95 [1] : vector<16x16xf32> to vector<16xf32>
    %172 = vector.shape_cast %171 : vector<16xf32> to vector<16x1xf32>
    %173 = tpu.reciprocal %172 {approx = true} : vector<16x1xf32> -> vector<16x1xf32>
    %174 = vector.broadcast %173 : vector<16x1xf32> to vector<16x16xf32>
    %175 = arith.mulf %170, %174 : vector<16x16xf32>
    %176 = arith.truncf %175 : vector<16x16xf32> to vector<16x16xbf16>
    %cst_96 = arith.constant dense<0.000000e+00> : vector<16x8xf32>
    %177 = tpu.matmul %176, %160, %cst_96 {dimension_numbers = #tpu.dot_dimension_numbers<[1], [0], [0], [1], [0, 0, 1, 1], [], []>} : vector<16x16xbf16>, vector<16x8xbf16>, vector<16x8xf32> -> vector<16x8xf32>
    %c1_97 = arith.constant 1 : index
    %c0_98 = arith.constant 0 : index
    %c24_99 = arith.constant 24 : index
    %178 = vector.load %arg1[%c1_97, %c0_98, %c24_99] : memref<6x16x96xbf16, #tpu.memory_space<vmem>>, vector<1x16x8xbf16>
    %179 = vector.shape_cast %178 : vector<1x16x8xbf16> to vector<16x8xbf16>
    %c1_100 = arith.constant 1 : index
    %c0_101 = arith.constant 0 : index
    %c56_102 = arith.constant 56 : index
    %180 = vector.load %arg1[%c1_100, %c0_101, %c56_102] : memref<6x16x96xbf16, #tpu.memory_space<vmem>>, vector<1x16x8xbf16>
    %181 = vector.shape_cast %180 : vector<1x16x8xbf16> to vector<16x8xbf16>
    %c1_103 = arith.constant 1 : index
    %c0_104 = arith.constant 0 : index
    %c88_105 = arith.constant 88 : index
    %182 = vector.load %arg1[%c1_103, %c0_104, %c88_105] : memref<6x16x96xbf16, #tpu.memory_space<vmem>>, vector<1x16x8xbf16>
    %183 = vector.shape_cast %182 : vector<1x16x8xbf16> to vector<16x8xbf16>
    "tpu.trace_start"() <{level = 10 : i32, message = "qd,kd->qk"}> : () -> ()
    %cst_106 = arith.constant dense<0.000000e+00> : vector<16x16xf32>
    %184 = tpu.matmul %179, %181, %cst_106 {dimension_numbers = #tpu.dot_dimension_numbers<[1], [1], [0], [0], [0, 0, 1, 0], [], []>} : vector<16x8xbf16>, vector<16x8xbf16>, vector<16x16xf32> -> vector<16x16xf32>
    "tpu.trace_stop"() : () -> ()
    %cst_107 = arith.constant 0.353553385 : f32
    %185 = vector.broadcast %cst_107 : f32 to vector<16x16xf32>
    %186 = arith.mulf %184, %185 : vector<16x16xf32>
    %187 = vector.broadcast %108 : vector<1x16xf32> to vector<16x16xf32>
    %188 = arith.addf %186, %187 : vector<16x16xf32>
    %cst_108 = arith.constant dense<0xFF800000> : vector<16xf32>
    %189 = vector.multi_reduction <maximumf>, %188, %cst_108 [1] : vector<16x16xf32> to vector<16xf32>
    %190 = vector.shape_cast %189 : vector<16xf32> to vector<16x1xf32>
    %191 = vector.broadcast %190 : vector<16x1xf32> to vector<16x16xf32>
    %192 = arith.subf %188, %191 : vector<16x16xf32>
    %193 = math.exp %192 : vector<16x16xf32>
    %cst_109 = arith.constant dense<0.000000e+00> : vector<16xf32>
    %194 = vector.multi_reduction <add>, %193, %cst_109 [1] : vector<16x16xf32> to vector<16xf32>
    %195 = vector.shape_cast %194 : vector<16xf32> to vector<16x1xf32>
    %196 = tpu.reciprocal %195 {approx = true} : vector<16x1xf32> -> vector<16x1xf32>
    %197 = vector.broadcast %196 : vector<16x1xf32> to vector<16x16xf32>
    %198 = arith.mulf %193, %197 : vector<16x16xf32>
    %199 = arith.truncf %198 : vector<16x16xf32> to vector<16x16xbf16>
    %cst_110 = arith.constant dense<0.000000e+00> : vector<16x8xf32>
    %200 = tpu.matmul %199, %183, %cst_110 {dimension_numbers = #tpu.dot_dimension_numbers<[1], [0], [0], [1], [0, 0, 1, 1], [], []>} : vector<16x16xbf16>, vector<16x8xbf16>, vector<16x8xf32> -> vector<16x8xf32>
    %201 = tpu.concatenate %131, %154, %177, %200 in 1 : vector<16x8xf32>, vector<16x8xf32>, vector<16x8xf32>, vector<16x8xf32> -> vector<16x32xf32>
    %202 = arith.truncf %201 : vector<16x32xf32> to vector<16x32xbf16>
    %c1_111 = arith.constant 1 : index
    %c0_112 = arith.constant 0 : index
    %c0_113 = arith.constant 0 : index
    %203 = vector.load %arg3[%c1_111, %c0_112, %c0_113] : memref<6x16x32xbf16, #tpu.memory_space<vmem>>, vector<1x16x32xbf16>
    %204 = vector.shape_cast %203 : vector<1x16x32xbf16> to vector<16x32xbf16>
    %205 = vector.shape_cast %202 : vector<16x32xbf16> to vector<1x16x32xbf16>
    tpu.vector_store %arg3[%c1_111, %c0_112, %c0_113], %205 {strides = array<i32>} : memref<6x16x32xbf16, #tpu.memory_space<vmem>>, vector<1x16x32xbf16>,
    %c2 = arith.constant 2 : index
    %c0_114 = arith.constant 0 : index
    %c0_115 = arith.constant 0 : index
    %206 = vector.load %arg2[%c2, %c0_114, %c0_115] : memref<6x1x16xf32, #tpu.memory_space<vmem>>, vector<1x1x16xf32>
    %207 = vector.shape_cast %206 : vector<1x1x16xf32> to vector<1x16xf32>
    %cst_116 = arith.constant 1.000000e+00 : f32
    %208 = vector.broadcast %cst_116 : f32 to vector<1x16xf32>
    %209 = arith.subf %208, %207 : vector<1x16xf32>
    %cst_117 = arith.constant -1.000000e+09 : f32
    %210 = vector.broadcast %cst_117 : f32 to vector<1x16xf32>
    %211 = arith.mulf %209, %210 : vector<1x16xf32>
    %c2_118 = arith.constant 2 : index
    %c0_119 = arith.constant 0 : index
    %c0_120 = arith.constant 0 : index
    %212 = vector.load %arg1[%c2_118, %c0_119, %c0_120] : memref<6x16x96xbf16, #tpu.memory_space<vmem>>, vector<1x16x8xbf16>
    %213 = vector.shape_cast %212 : vector<1x16x8xbf16> to vector<16x8xbf16>
    %c2_121 = arith.constant 2 : index
    %c0_122 = arith.constant 0 : index
    %c32_123 = arith.constant 32 : index
    %214 = vector.load %arg1[%c2_121, %c0_122, %c32_123] : memref<6x16x96xbf16, #tpu.memory_space<vmem>>, vector<1x16x8xbf16>
    %215 = vector.shape_cast %214 : vector<1x16x8xbf16> to vector<16x8xbf16>
    %c2_124 = arith.constant 2 : index
    %c0_125 = arith.constant 0 : index
    %c64_126 = arith.constant 64 : index
    %216 = vector.load %arg1[%c2_124, %c0_125, %c64_126] : memref<6x16x96xbf16, #tpu.memory_space<vmem>>, vector<1x16x8xbf16>
    %217 = vector.shape_cast %216 : vector<1x16x8xbf16> to vector<16x8xbf16>
    "tpu.trace_start"() <{level = 10 : i32, message = "qd,kd->qk"}> : () -> ()
    %cst_127 = arith.constant dense<0.000000e+00> : vector<16x16xf32>
    %218 = tpu.matmul %213, %215, %cst_127 {dimension_numbers = #tpu.dot_dimension_numbers<[1], [1], [0], [0], [0, 0, 1, 0], [], []>} : vector<16x8xbf16>, vector<16x8xbf16>, vector<16x16xf32> -> vector<16x16xf32>
    "tpu.trace_stop"() : () -> ()
    %cst_128 = arith.constant 0.353553385 : f32
    %219 = vector.broadcast %cst_128 : f32 to vector<16x16xf32>
    %220 = arith.mulf %218, %219 : vector<16x16xf32>
    %221 = vector.broadcast %211 : vector<1x16xf32> to vector<16x16xf32>
    %222 = arith.addf %220, %221 : vector<16x16xf32>
    %cst_129 = arith.constant dense<0xFF800000> : vector<16xf32>
    %223 = vector.multi_reduction <maximumf>, %222, %cst_129 [1] : vector<16x16xf32> to vector<16xf32>
    %224 = vector.shape_cast %223 : vector<16xf32> to vector<16x1xf32>
    %225 = vector.broadcast %224 : vector<16x1xf32> to vector<16x16xf32>
    %226 = arith.subf %222, %225 : vector<16x16xf32>
    %227 = math.exp %226 : vector<16x16xf32>
    %cst_130 = arith.constant dense<0.000000e+00> : vector<16xf32>
    %228 = vector.multi_reduction <add>, %227, %cst_130 [1] : vector<16x16xf32> to vector<16xf32>
    %229 = vector.shape_cast %228 : vector<16xf32> to vector<16x1xf32>
    %230 = tpu.reciprocal %229 {approx = true} : vector<16x1xf32> -> vector<16x1xf32>
    %231 = vector.broadcast %230 : vector<16x1xf32> to vector<16x16xf32>
    %232 = arith.mulf %227, %231 : vector<16x16xf32>
    %233 = arith.truncf %232 : vector<16x16xf32> to vector<16x16xbf16>
    %cst_131 = arith.constant dense<0.000000e+00> : vector<16x8xf32>
    %234 = tpu.matmul %233, %217, %cst_131 {dimension_numbers = #tpu.dot_dimension_numbers<[1], [0], [0], [1], [0, 0, 1, 1], [], []>} : vector<16x16xbf16>, vector<16x8xbf16>, vector<16x8xf32> -> vector<16x8xf32>
    %c2_132 = arith.constant 2 : index
    %c0_133 = arith.constant 0 : index
    %c8_134 = arith.constant 8 : index
    %235 = vector.load %arg1[%c2_132, %c0_133, %c8_134] : memref<6x16x96xbf16, #tpu.memory_space<vmem>>, vector<1x16x8xbf16>
    %236 = vector.shape_cast %235 : vector<1x16x8xbf16> to vector<16x8xbf16>
    %c2_135 = arith.constant 2 : index
    %c0_136 = arith.constant 0 : index
    %c40_137 = arith.constant 40 : index
    %237 = vector.load %arg1[%c2_135, %c0_136, %c40_137] : memref<6x16x96xbf16, #tpu.memory_space<vmem>>, vector<1x16x8xbf16>
    %238 = vector.shape_cast %237 : vector<1x16x8xbf16> to vector<16x8xbf16>
    %c2_138 = arith.constant 2 : index
    %c0_139 = arith.constant 0 : index
    %c72_140 = arith.constant 72 : index
    %239 = vector.load %arg1[%c2_138, %c0_139, %c72_140] : memref<6x16x96xbf16, #tpu.memory_space<vmem>>, vector<1x16x8xbf16>
    %240 = vector.shape_cast %239 : vector<1x16x8xbf16> to vector<16x8xbf16>
    "tpu.trace_start"() <{level = 10 : i32, message = "qd,kd->qk"}> : () -> ()
    %cst_141 = arith.constant dense<0.000000e+00> : vector<16x16xf32>
    %241 = tpu.matmul %236, %238, %cst_141 {dimension_numbers = #tpu.dot_dimension_numbers<[1], [1], [0], [0], [0, 0, 1, 0], [], []>} : vector<16x8xbf16>, vector<16x8xbf16>, vector<16x16xf32> -> vector<16x16xf32>
    "tpu.trace_stop"() : () -> ()
    %cst_142 = arith.constant 0.353553385 : f32
    %242 = vector.broadcast %cst_142 : f32 to vector<16x16xf32>
    %243 = arith.mulf %241, %242 : vector<16x16xf32>
    %244 = vector.broadcast %211 : vector<1x16xf32> to vector<16x16xf32>
    %245 = arith.addf %243, %244 : vector<16x16xf32>
    %cst_143 = arith.constant dense<0xFF800000> : vector<16xf32>
    %246 = vector.multi_reduction <maximumf>, %245, %cst_143 [1] : vector<16x16xf32> to vector<16xf32>
    %247 = vector.shape_cast %246 : vector<16xf32> to vector<16x1xf32>
    %248 = vector.broadcast %247 : vector<16x1xf32> to vector<16x16xf32>
    %249 = arith.subf %245, %248 : vector<16x16xf32>
    %250 = math.exp %249 : vector<16x16xf32>
    %cst_144 = arith.constant dense<0.000000e+00> : vector<16xf32>
    %251 = vector.multi_reduction <add>, %250, %cst_144 [1] : vector<16x16xf32> to vector<16xf32>
    %252 = vector.shape_cast %251 : vector<16xf32> to vector<16x1xf32>
    %253 = tpu.reciprocal %252 {approx = true} : vector<16x1xf32> -> vector<16x1xf32>
    %254 = vector.broadcast %253 : vector<16x1xf32> to vector<16x16xf32>
    %255 = arith.mulf %250, %254 : vector<16x16xf32>
    %256 = arith.truncf %255 : vector<16x16xf32> to vector<16x16xbf16>
    %cst_145 = arith.constant dense<0.000000e+00> : vector<16x8xf32>
    %257 = tpu.matmul %256, %240, %cst_145 {dimension_numbers = #tpu.dot_dimension_numbers<[1], [0], [0], [1], [0, 0, 1, 1], [], []>} : vector<16x16xbf16>, vector<16x8xbf16>, vector<16x8xf32> -> vector<16x8xf32>
    %c2_146 = arith.constant 2 : index
    %c0_147 = arith.constant 0 : index
    %c16_148 = arith.constant 16 : index
    %258 = vector.load %arg1[%c2_146, %c0_147, %c16_148] : memref<6x16x96xbf16, #tpu.memory_space<vmem>>, vector<1x16x8xbf16>
    %259 = vector.shape_cast %258 : vector<1x16x8xbf16> to vector<16x8xbf16>
    %c2_149 = arith.constant 2 : index
    %c0_150 = arith.constant 0 : index
    %c48_151 = arith.constant 48 : index
    %260 = vector.load %arg1[%c2_149, %c0_150, %c48_151] : memref<6x16x96xbf16, #tpu.memory_space<vmem>>, vector<1x16x8xbf16>
    %261 = vector.shape_cast %260 : vector<1x16x8xbf16> to vector<16x8xbf16>
    %c2_152 = arith.constant 2 : index
    %c0_153 = arith.constant 0 : index
    %c80_154 = arith.constant 80 : index
    %262 = vector.load %arg1[%c2_152, %c0_153, %c80_154] : memref<6x16x96xbf16, #tpu.memory_space<vmem>>, vector<1x16x8xbf16>
    %263 = vector.shape_cast %262 : vector<1x16x8xbf16> to vector<16x8xbf16>
    "tpu.trace_start"() <{level = 10 : i32, message = "qd,kd->qk"}> : () -> ()
    %cst_155 = arith.constant dense<0.000000e+00> : vector<16x16xf32>
    %264 = tpu.matmul %259, %261, %cst_155 {dimension_numbers = #tpu.dot_dimension_numbers<[1], [1], [0], [0], [0, 0, 1, 0], [], []>} : vector<16x8xbf16>, vector<16x8xbf16>, vector<16x16xf32> -> vector<16x16xf32>
    "tpu.trace_stop"() : () -> ()
    %cst_156 = arith.constant 0.353553385 : f32
    %265 = vector.broadcast %cst_156 : f32 to vector<16x16xf32>
    %266 = arith.mulf %264, %265 : vector<16x16xf32>
    %267 = vector.broadcast %211 : vector<1x16xf32> to vector<16x16xf32>
    %268 = arith.addf %266, %267 : vector<16x16xf32>
    %cst_157 = arith.constant dense<0xFF800000> : vector<16xf32>
    %269 = vector.multi_reduction <maximumf>, %268, %cst_157 [1] : vector<16x16xf32> to vector<16xf32>
    %270 = vector.shape_cast %269 : vector<16xf32> to vector<16x1xf32>
    %271 = vector.broadcast %270 : vector<16x1xf32> to vector<16x16xf32>
    %272 = arith.subf %268, %271 : vector<16x16xf32>
    %273 = math.exp %272 : vector<16x16xf32>
    %cst_158 = arith.constant dense<0.000000e+00> : vector<16xf32>
    %274 = vector.multi_reduction <add>, %273, %cst_158 [1] : vector<16x16xf32> to vector<16xf32>
    %275 = vector.shape_cast %274 : vector<16xf32> to vector<16x1xf32>
    %276 = tpu.reciprocal %275 {approx = true} : vector<16x1xf32> -> vector<16x1xf32>
    %277 = vector.broadcast %276 : vector<16x1xf32> to vector<16x16xf32>
    %278 = arith.mulf %273, %277 : vector<16x16xf32>
    %279 = arith.truncf %278 : vector<16x16xf32> to vector<16x16xbf16>
    %cst_159 = arith.constant dense<0.000000e+00> : vector<16x8xf32>
    %280 = tpu.matmul %279, %263, %cst_159 {dimension_numbers = #tpu.dot_dimension_numbers<[1], [0], [0], [1], [0, 0, 1, 1], [], []>} : vector<16x16xbf16>, vector<16x8xbf16>, vector<16x8xf32> -> vector<16x8xf32>
    %c2_160 = arith.constant 2 : index
    %c0_161 = arith.constant 0 : index
    %c24_162 = arith.constant 24 : index
    %281 = vector.load %arg1[%c2_160, %c0_161, %c24_162] : memref<6x16x96xbf16, #tpu.memory_space<vmem>>, vector<1x16x8xbf16>
    %282 = vector.shape_cast %281 : vector<1x16x8xbf16> to vector<16x8xbf16>
    %c2_163 = arith.constant 2 : index
    %c0_164 = arith.constant 0 : index
    %c56_165 = arith.constant 56 : index
    %283 = vector.load %arg1[%c2_163, %c0_164, %c56_165] : memref<6x16x96xbf16, #tpu.memory_space<vmem>>, vector<1x16x8xbf16>
    %284 = vector.shape_cast %283 : vector<1x16x8xbf16> to vector<16x8xbf16>
    %c2_166 = arith.constant 2 : index
    %c0_167 = arith.constant 0 : index
    %c88_168 = arith.constant 88 : index
    %285 = vector.load %arg1[%c2_166, %c0_167, %c88_168] : memref<6x16x96xbf16, #tpu.memory_space<vmem>>, vector<1x16x8xbf16>
    %286 = vector.shape_cast %285 : vector<1x16x8xbf16> to vector<16x8xbf16>
    "tpu.trace_start"() <{level = 10 : i32, message = "qd,kd->qk"}> : () -> ()
    %cst_169 = arith.constant dense<0.000000e+00> : vector<16x16xf32>
    %287 = tpu.matmul %282, %284, %cst_169 {dimension_numbers = #tpu.dot_dimension_numbers<[1], [1], [0], [0], [0, 0, 1, 0], [], []>} : vector<16x8xbf16>, vector<16x8xbf16>, vector<16x16xf32> -> vector<16x16xf32>
    "tpu.trace_stop"() : () -> ()
    %cst_170 = arith.constant 0.353553385 : f32
    %288 = vector.broadcast %cst_170 : f32 to vector<16x16xf32>
    %289 = arith.mulf %287, %288 : vector<16x16xf32>
    %290 = vector.broadcast %211 : vector<1x16xf32> to vector<16x16xf32>
    %291 = arith.addf %289, %290 : vector<16x16xf32>
    %cst_171 = arith.constant dense<0xFF800000> : vector<16xf32>
    %292 = vector.multi_reduction <maximumf>, %291, %cst_171 [1] : vector<16x16xf32> to vector<16xf32>
    %293 = vector.shape_cast %292 : vector<16xf32> to vector<16x1xf32>
    %294 = vector.broadcast %293 : vector<16x1xf32> to vector<16x16xf32>
    %295 = arith.subf %291, %294 : vector<16x16xf32>
    %296 = math.exp %295 : vector<16x16xf32>
    %cst_172 = arith.constant dense<0.000000e+00> : vector<16xf32>
    %297 = vector.multi_reduction <add>, %296, %cst_172 [1] : vector<16x16xf32> to vector<16xf32>
    %298 = vector.shape_cast %297 : vector<16xf32> to vector<16x1xf32>
    %299 = tpu.reciprocal %298 {approx = true} : vector<16x1xf32> -> vector<16x1xf32>
    %300 = vector.broadcast %299 : vector<16x1xf32> to vector<16x16xf32>
    %301 = arith.mulf %296, %300 : vector<16x16xf32>
    %302 = arith.truncf %301 : vector<16x16xf32> to vector<16x16xbf16>
    %cst_173 = arith.constant dense<0.000000e+00> : vector<16x8xf32>
    %303 = tpu.matmul %302, %286, %cst_173 {dimension_numbers = #tpu.dot_dimension_numbers<[1], [0], [0], [1], [0, 0, 1, 1], [], []>} : vector<16x16xbf16>, vector<16x8xbf16>, vector<16x8xf32> -> vector<16x8xf32>
    %304 = tpu.concatenate %234, %257, %280, %303 in 1 : vector<16x8xf32>, vector<16x8xf32>, vector<16x8xf32>, vector<16x8xf32> -> vector<16x32xf32>
    %305 = arith.truncf %304 : vector<16x32xf32> to vector<16x32xbf16>
    %c2_174 = arith.constant 2 : index
    %c0_175 = arith.constant 0 : index
    %c0_176 = arith.constant 0 : index
    %306 = vector.load %arg3[%c2_174, %c0_175, %c0_176] : memref<6x16x32xbf16, #tpu.memory_space<vmem>>, vector<1x16x32xbf16>
    %307 = vector.shape_cast %306 : vector<1x16x32xbf16> to vector<16x32xbf16>
    %308 = vector.shape_cast %305 : vector<16x32xbf16> to vector<1x16x32xbf16>
    tpu.vector_store %arg3[%c2_174, %c0_175, %c0_176], %308 {strides = array<i32>} : memref<6x16x32xbf16, #tpu.memory_space<vmem>>, vector<1x16x32xbf16>,
    %c3 = arith.constant 3 : index
    %c0_177 = arith.constant 0 : index
    %c0_178 = arith.constant 0 : index
    %309 = vector.load %arg2[%c3, %c0_177, %c0_178] : memref<6x1x16xf32, #tpu.memory_space<vmem>>, vector<1x1x16xf32>
    %310 = vector.shape_cast %309 : vector<1x1x16xf32> to vector<1x16xf32>
    %cst_179 = arith.constant 1.000000e+00 : f32
    %311 = vector.broadcast %cst_179 : f32 to vector<1x16xf32>
    %312 = arith.subf %311, %310 : vector<1x16xf32>
    %cst_180 = arith.constant -1.000000e+09 : f32
    %313 = vector.broadcast %cst_180 : f32 to vector<1x16xf32>
    %314 = arith.mulf %312, %313 : vector<1x16xf32>
    %c3_181 = arith.constant 3 : index
    %c0_182 = arith.constant 0 : index
    %c0_183 = arith.constant 0 : index
    %315 = vector.load %arg1[%c3_181, %c0_182, %c0_183] : memref<6x16x96xbf16, #tpu.memory_space<vmem>>, vector<1x16x8xbf16>
    %316 = vector.shape_cast %315 : vector<1x16x8xbf16> to vector<16x8xbf16>
    %c3_184 = arith.constant 3 : index
    %c0_185 = arith.constant 0 : index
    %c32_186 = arith.constant 32 : index
    %317 = vector.load %arg1[%c3_184, %c0_185, %c32_186] : memref<6x16x96xbf16, #tpu.memory_space<vmem>>, vector<1x16x8xbf16>
    %318 = vector.shape_cast %317 : vector<1x16x8xbf16> to vector<16x8xbf16>
    %c3_187 = arith.constant 3 : index
    %c0_188 = arith.constant 0 : index
    %c64_189 = arith.constant 64 : index
    %319 = vector.load %arg1[%c3_187, %c0_188, %c64_189] : memref<6x16x96xbf16, #tpu.memory_space<vmem>>, vector<1x16x8xbf16>
    %320 = vector.shape_cast %319 : vector<1x16x8xbf16> to vector<16x8xbf16>
    "tpu.trace_start"() <{level = 10 : i32, message = "qd,kd->qk"}> : () -> ()
    %cst_190 = arith.constant dense<0.000000e+00> : vector<16x16xf32>
    %321 = tpu.matmul %316, %318, %cst_190 {dimension_numbers = #tpu.dot_dimension_numbers<[1], [1], [0], [0], [0, 0, 1, 0], [], []>} : vector<16x8xbf16>, vector<16x8xbf16>, vector<16x16xf32> -> vector<16x16xf32>
    "tpu.trace_stop"() : () -> ()
    %cst_191 = arith.constant 0.353553385 : f32
    %322 = vector.broadcast %cst_191 : f32 to vector<16x16xf32>
    %323 = arith.mulf %321, %322 : vector<16x16xf32>
    %324 = vector.broadcast %314 : vector<1x16xf32> to vector<16x16xf32>
    %325 = arith.addf %323, %324 : vector<16x16xf32>
    %cst_192 = arith.constant dense<0xFF800000> : vector<16xf32>
    %326 = vector.multi_reduction <maximumf>, %325, %cst_192 [1] : vector<16x16xf32> to vector<16xf32>
    %327 = vector.shape_cast %326 : vector<16xf32> to vector<16x1xf32>
    %328 = vector.broadcast %327 : vector<16x1xf32> to vector<16x16xf32>
    %329 = arith.subf %325, %328 : vector<16x16xf32>
    %330 = math.exp %329 : vector<16x16xf32>
    %cst_193 = arith.constant dense<0.000000e+00> : vector<16xf32>
    %331 = vector.multi_reduction <add>, %330, %cst_193 [1] : vector<16x16xf32> to vector<16xf32>
    %332 = vector.shape_cast %331 : vector<16xf32> to vector<16x1xf32>
    %333 = tpu.reciprocal %332 {approx = true} : vector<16x1xf32> -> vector<16x1xf32>
    %334 = vector.broadcast %333 : vector<16x1xf32> to vector<16x16xf32>
    %335 = arith.mulf %330, %334 : vector<16x16xf32>
    %336 = arith.truncf %335 : vector<16x16xf32> to vector<16x16xbf16>
    %cst_194 = arith.constant dense<0.000000e+00> : vector<16x8xf32>
    %337 = tpu.matmul %336, %320, %cst_194 {dimension_numbers = #tpu.dot_dimension_numbers<[1], [0], [0], [1], [0, 0, 1, 1], [], []>} : vector<16x16xbf16>, vector<16x8xbf16>, vector<16x8xf32> -> vector<16x8xf32>
    %c3_195 = arith.constant 3 : index
    %c0_196 = arith.constant 0 : index
    %c8_197 = arith.constant 8 : index
    %338 = vector.load %arg1[%c3_195, %c0_196, %c8_197] : memref<6x16x96xbf16, #tpu.memory_space<vmem>>, vector<1x16x8xbf16>
    %339 = vector.shape_cast %338 : vector<1x16x8xbf16> to vector<16x8xbf16>
    %c3_198 = arith.constant 3 : index
    %c0_199 = arith.constant 0 : index
    %c40_200 = arith.constant 40 : index
    %340 = vector.load %arg1[%c3_198, %c0_199, %c40_200] : memref<6x16x96xbf16, #tpu.memory_space<vmem>>, vector<1x16x8xbf16>
    %341 = vector.shape_cast %340 : vector<1x16x8xbf16> to vector<16x8xbf16>
    %c3_201 = arith.constant 3 : index
    %c0_202 = arith.constant 0 : index
    %c72_203 = arith.constant 72 : index
    %342 = vector.load %arg1[%c3_201, %c0_202, %c72_203] : memref<6x16x96xbf16, #tpu.memory_space<vmem>>, vector<1x16x8xbf16>
    %343 = vector.shape_cast %342 : vector<1x16x8xbf16> to vector<16x8xbf16>
    "tpu.trace_start"() <{level = 10 : i32, message = "qd,kd->qk"}> : () -> ()
    %cst_204 = arith.constant dense<0.000000e+00> : vector<16x16xf32>
    %344 = tpu.matmul %339, %341, %cst_204 {dimension_numbers = #tpu.dot_dimension_numbers<[1], [1], [0], [0], [0, 0, 1, 0], [], []>} : vector<16x8xbf16>, vector<16x8xbf16>, vector<16x16xf32> -> vector<16x16xf32>
    "tpu.trace_stop"() : () -> ()
    %cst_205 = arith.constant 0.353553385 : f32
    %345 = vector.broadcast %cst_205 : f32 to vector<16x16xf32>
    %346 = arith.mulf %344, %345 : vector<16x16xf32>
    %347 = vector.broadcast %314 : vector<1x16xf32> to vector<16x16xf32>
    %348 = arith.addf %346, %347 : vector<16x16xf32>
    %cst_206 = arith.constant dense<0xFF800000> : vector<16xf32>
    %349 = vector.multi_reduction <maximumf>, %348, %cst_206 [1] : vector<16x16xf32> to vector<16xf32>
    %350 = vector.shape_cast %349 : vector<16xf32> to vector<16x1xf32>
    %351 = vector.broadcast %350 : vector<16x1xf32> to vector<16x16xf32>
    %352 = arith.subf %348, %351 : vector<16x16xf32>
    %353 = math.exp %352 : vector<16x16xf32>
    %cst_207 = arith.constant dense<0.000000e+00> : vector<16xf32>
    %354 = vector.multi_reduction <add>, %353, %cst_207 [1] : vector<16x16xf32> to vector<16xf32>
    %355 = vector.shape_cast %354 : vector<16xf32> to vector<16x1xf32>
    %356 = tpu.reciprocal %355 {approx = true} : vector<16x1xf32> -> vector<16x1xf32>
    %357 = vector.broadcast %356 : vector<16x1xf32> to vector<16x16xf32>
    %358 = arith.mulf %353, %357 : vector<16x16xf32>
    %359 = arith.truncf %358 : vector<16x16xf32> to vector<16x16xbf16>
    %cst_208 = arith.constant dense<0.000000e+00> : vector<16x8xf32>
    %360 = tpu.matmul %359, %343, %cst_208 {dimension_numbers = #tpu.dot_dimension_numbers<[1], [0], [0], [1], [0, 0, 1, 1], [], []>} : vector<16x16xbf16>, vector<16x8xbf16>, vector<16x8xf32> -> vector<16x8xf32>
    %c3_209 = arith.constant 3 : index
    %c0_210 = arith.constant 0 : index
    %c16_211 = arith.constant 16 : index
    %361 = vector.load %arg1[%c3_209, %c0_210, %c16_211] : memref<6x16x96xbf16, #tpu.memory_space<vmem>>, vector<1x16x8xbf16>
    %362 = vector.shape_cast %361 : vector<1x16x8xbf16> to vector<16x8xbf16>
    %c3_212 = arith.constant 3 : index
    %c0_213 = arith.constant 0 : index
    %c48_214 = arith.constant 48 : index
    %363 = vector.load %arg1[%c3_212, %c0_213, %c48_214] : memref<6x16x96xbf16, #tpu.memory_space<vmem>>, vector<1x16x8xbf16>
    %364 = vector.shape_cast %363 : vector<1x16x8xbf16> to vector<16x8xbf16>
    %c3_215 = arith.constant 3 : index
    %c0_216 = arith.constant 0 : index
    %c80_217 = arith.constant 80 : index
    %365 = vector.load %arg1[%c3_215, %c0_216, %c80_217] : memref<6x16x96xbf16, #tpu.memory_space<vmem>>, vector<1x16x8xbf16>
    %366 = vector.shape_cast %365 : vector<1x16x8xbf16> to vector<16x8xbf16>
    "tpu.trace_start"() <{level = 10 : i32, message = "qd,kd->qk"}> : () -> ()
    %cst_218 = arith.constant dense<0.000000e+00> : vector<16x16xf32>
    %367 = tpu.matmul %362, %364, %cst_218 {dimension_numbers = #tpu.dot_dimension_numbers<[1], [1], [0], [0], [0, 0, 1, 0], [], []>} : vector<16x8xbf16>, vector<16x8xbf16>, vector<16x16xf32> -> vector<16x16xf32>
    "tpu.trace_stop"() : () -> ()
    %cst_219 = arith.constant 0.353553385 : f32
    %368 = vector.broadcast %cst_219 : f32 to vector<16x16xf32>
    %369 = arith.mulf %367, %368 : vector<16x16xf32>
    %370 = vector.broadcast %314 : vector<1x16xf32> to vector<16x16xf32>
    %371 = arith.addf %369, %370 : vector<16x16xf32>
    %cst_220 = arith.constant dense<0xFF800000> : vector<16xf32>
    %372 = vector.multi_reduction <maximumf>, %371, %cst_220 [1] : vector<16x16xf32> to vector<16xf32>
    %373 = vector.shape_cast %372 : vector<16xf32> to vector<16x1xf32>
    %374 = vector.broadcast %373 : vector<16x1xf32> to vector<16x16xf32>
    %375 = arith.subf %371, %374 : vector<16x16xf32>
    %376 = math.exp %375 : vector<16x16xf32>
    %cst_221 = arith.constant dense<0.000000e+00> : vector<16xf32>
    %377 = vector.multi_reduction <add>, %376, %cst_221 [1] : vector<16x16xf32> to vector<16xf32>
    %378 = vector.shape_cast %377 : vector<16xf32> to vector<16x1xf32>
    %379 = tpu.reciprocal %378 {approx = true} : vector<16x1xf32> -> vector<16x1xf32>
    %380 = vector.broadcast %379 : vector<16x1xf32> to vector<16x16xf32>
    %381 = arith.mulf %376, %380 : vector<16x16xf32>
    %382 = arith.truncf %381 : vector<16x16xf32> to vector<16x16xbf16>
    %cst_222 = arith.constant dense<0.000000e+00> : vector<16x8xf32>
    %383 = tpu.matmul %382, %366, %cst_222 {dimension_numbers = #tpu.dot_dimension_numbers<[1], [0], [0], [1], [0, 0, 1, 1], [], []>} : vector<16x16xbf16>, vector<16x8xbf16>, vector<16x8xf32> -> vector<16x8xf32>
    %c3_223 = arith.constant 3 : index
    %c0_224 = arith.constant 0 : index
    %c24_225 = arith.constant 24 : index
    %384 = vector.load %arg1[%c3_223, %c0_224, %c24_225] : memref<6x16x96xbf16, #tpu.memory_space<vmem>>, vector<1x16x8xbf16>
    %385 = vector.shape_cast %384 : vector<1x16x8xbf16> to vector<16x8xbf16>
    %c3_226 = arith.constant 3 : index
    %c0_227 = arith.constant 0 : index
    %c56_228 = arith.constant 56 : index
    %386 = vector.load %arg1[%c3_226, %c0_227, %c56_228] : memref<6x16x96xbf16, #tpu.memory_space<vmem>>, vector<1x16x8xbf16>
    %387 = vector.shape_cast %386 : vector<1x16x8xbf16> to vector<16x8xbf16>
    %c3_229 = arith.constant 3 : index
    %c0_230 = arith.constant 0 : index
    %c88_231 = arith.constant 88 : index
    %388 = vector.load %arg1[%c3_229, %c0_230, %c88_231] : memref<6x16x96xbf16, #tpu.memory_space<vmem>>, vector<1x16x8xbf16>
    %389 = vector.shape_cast %388 : vector<1x16x8xbf16> to vector<16x8xbf16>
    "tpu.trace_start"() <{level = 10 : i32, message = "qd,kd->qk"}> : () -> ()
    %cst_232 = arith.constant dense<0.000000e+00> : vector<16x16xf32>
    %390 = tpu.matmul %385, %387, %cst_232 {dimension_numbers = #tpu.dot_dimension_numbers<[1], [1], [0], [0], [0, 0, 1, 0], [], []>} : vector<16x8xbf16>, vector<16x8xbf16>, vector<16x16xf32> -> vector<16x16xf32>
    "tpu.trace_stop"() : () -> ()
    %cst_233 = arith.constant 0.353553385 : f32
    %391 = vector.broadcast %cst_233 : f32 to vector<16x16xf32>
    %392 = arith.mulf %390, %391 : vector<16x16xf32>
    %393 = vector.broadcast %314 : vector<1x16xf32> to vector<16x16xf32>
    %394 = arith.addf %392, %393 : vector<16x16xf32>
    %cst_234 = arith.constant dense<0xFF800000> : vector<16xf32>
    %395 = vector.multi_reduction <maximumf>, %394, %cst_234 [1] : vector<16x16xf32> to vector<16xf32>
    %396 = vector.shape_cast %395 : vector<16xf32> to vector<16x1xf32>
    %397 = vector.broadcast %396 : vector<16x1xf32> to vector<16x16xf32>
    %398 = arith.subf %394, %397 : vector<16x16xf32>
    %399 = math.exp %398 : vector<16x16xf32>
    %cst_235 = arith.constant dense<0.000000e+00> : vector<16xf32>
    %400 = vector.multi_reduction <add>, %399, %cst_235 [1] : vector<16x16xf32> to vector<16xf32>
    %401 = vector.shape_cast %400 : vector<16xf32> to vector<16x1xf32>
    %402 = tpu.reciprocal %401 {approx = true} : vector<16x1xf32> -> vector<16x1xf32>
    %403 = vector.broadcast %402 : vector<16x1xf32> to vector<16x16xf32>
    %404 = arith.mulf %399, %403 : vector<16x16xf32>
    %405 = arith.truncf %404 : vector<16x16xf32> to vector<16x16xbf16>
    %cst_236 = arith.constant dense<0.000000e+00> : vector<16x8xf32>
    %406 = tpu.matmul %405, %389, %cst_236 {dimension_numbers = #tpu.dot_dimension_numbers<[1], [0], [0], [1], [0, 0, 1, 1], [], []>} : vector<16x16xbf16>, vector<16x8xbf16>, vector<16x8xf32> -> vector<16x8xf32>
    %407 = tpu.concatenate %337, %360, %383, %406 in 1 : vector<16x8xf32>, vector<16x8xf32>, vector<16x8xf32>, vector<16x8xf32> -> vector<16x32xf32>
    %408 = arith.truncf %407 : vector<16x32xf32> to vector<16x32xbf16>
    %c3_237 = arith.constant 3 : index
    %c0_238 = arith.constant 0 : index
    %c0_239 = arith.constant 0 : index
    %409 = vector.load %arg3[%c3_237, %c0_238, %c0_239] : memref<6x16x32xbf16, #tpu.memory_space<vmem>>, vector<1x16x32xbf16>
    %410 = vector.shape_cast %409 : vector<1x16x32xbf16> to vector<16x32xbf16>
    %411 = vector.shape_cast %408 : vector<16x32xbf16> to vector<1x16x32xbf16>
    tpu.vector_store %arg3[%c3_237, %c0_238, %c0_239], %411 {strides = array<i32>} : memref<6x16x32xbf16, #tpu.memory_space<vmem>>, vector<1x16x32xbf16>,
    %c4 = arith.constant 4 : index
    %c0_240 = arith.constant 0 : index
    %c0_241 = arith.constant 0 : index
    %412 = vector.load %arg2[%c4, %c0_240, %c0_241] : memref<6x1x16xf32, #tpu.memory_space<vmem>>, vector<1x1x16xf32>
    %413 = vector.shape_cast %412 : vector<1x1x16xf32> to vector<1x16xf32>
    %cst_242 = arith.constant 1.000000e+00 : f32
    %414 = vector.broadcast %cst_242 : f32 to vector<1x16xf32>
    %415 = arith.subf %414, %413 : vector<1x16xf32>
    %cst_243 = arith.constant -1.000000e+09 : f32
    %416 = vector.broadcast %cst_243 : f32 to vector<1x16xf32>
    %417 = arith.mulf %415, %416 : vector<1x16xf32>
    %c4_244 = arith.constant 4 : index
    %c0_245 = arith.constant 0 : index
    %c0_246 = arith.constant 0 : index
    %418 = vector.load %arg1[%c4_244, %c0_245, %c0_246] : memref<6x16x96xbf16, #tpu.memory_space<vmem>>, vector<1x16x8xbf16>
    %419 = vector.shape_cast %418 : vector<1x16x8xbf16> to vector<16x8xbf16>
    %c4_247 = arith.constant 4 : index
    %c0_248 = arith.constant 0 : index
    %c32_249 = arith.constant 32 : index
    %420 = vector.load %arg1[%c4_247, %c0_248, %c32_249] : memref<6x16x96xbf16, #tpu.memory_space<vmem>>, vector<1x16x8xbf16>
    %421 = vector.shape_cast %420 : vector<1x16x8xbf16> to vector<16x8xbf16>
    %c4_250 = arith.constant 4 : index
    %c0_251 = arith.constant 0 : index
    %c64_252 = arith.constant 64 : index
    %422 = vector.load %arg1[%c4_250, %c0_251, %c64_252] : memref<6x16x96xbf16, #tpu.memory_space<vmem>>, vector<1x16x8xbf16>
    %423 = vector.shape_cast %422 : vector<1x16x8xbf16> to vector<16x8xbf16>
    "tpu.trace_start"() <{level = 10 : i32, message = "qd,kd->qk"}> : () -> ()
    %cst_253 = arith.constant dense<0.000000e+00> : vector<16x16xf32>
    %424 = tpu.matmul %419, %421, %cst_253 {dimension_numbers = #tpu.dot_dimension_numbers<[1], [1], [0], [0], [0, 0, 1, 0], [], []>} : vector<16x8xbf16>, vector<16x8xbf16>, vector<16x16xf32> -> vector<16x16xf32>
    "tpu.trace_stop"() : () -> ()
    %cst_254 = arith.constant 0.353553385 : f32
    %425 = vector.broadcast %cst_254 : f32 to vector<16x16xf32>
    %426 = arith.mulf %424, %425 : vector<16x16xf32>
    %427 = vector.broadcast %417 : vector<1x16xf32> to vector<16x16xf32>
    %428 = arith.addf %426, %427 : vector<16x16xf32>
    %cst_255 = arith.constant dense<0xFF800000> : vector<16xf32>
    %429 = vector.multi_reduction <maximumf>, %428, %cst_255 [1] : vector<16x16xf32> to vector<16xf32>
    %430 = vector.shape_cast %429 : vector<16xf32> to vector<16x1xf32>
    %431 = vector.broadcast %430 : vector<16x1xf32> to vector<16x16xf32>
    %432 = arith.subf %428, %431 : vector<16x16xf32>
    %433 = math.exp %432 : vector<16x16xf32>
    %cst_256 = arith.constant dense<0.000000e+00> : vector<16xf32>
    %434 = vector.multi_reduction <add>, %433, %cst_256 [1] : vector<16x16xf32> to vector<16xf32>
    %435 = vector.shape_cast %434 : vector<16xf32> to vector<16x1xf32>
    %436 = tpu.reciprocal %435 {approx = true} : vector<16x1xf32> -> vector<16x1xf32>
    %437 = vector.broadcast %436 : vector<16x1xf32> to vector<16x16xf32>
    %438 = arith.mulf %433, %437 : vector<16x16xf32>
    %439 = arith.truncf %438 : vector<16x16xf32> to vector<16x16xbf16>
    %cst_257 = arith.constant dense<0.000000e+00> : vector<16x8xf32>
    %440 = tpu.matmul %439, %423, %cst_257 {dimension_numbers = #tpu.dot_dimension_numbers<[1], [0], [0], [1], [0, 0, 1, 1], [], []>} : vector<16x16xbf16>, vector<16x8xbf16>, vector<16x8xf32> -> vector<16x8xf32>
    %c4_258 = arith.constant 4 : index
    %c0_259 = arith.constant 0 : index
    %c8_260 = arith.constant 8 : index
    %441 = vector.load %arg1[%c4_258, %c0_259, %c8_260] : memref<6x16x96xbf16, #tpu.memory_space<vmem>>, vector<1x16x8xbf16>
    %442 = vector.shape_cast %441 : vector<1x16x8xbf16> to vector<16x8xbf16>
    %c4_261 = arith.constant 4 : index
    %c0_262 = arith.constant 0 : index
    %c40_263 = arith.constant 40 : index
    %443 = vector.load %arg1[%c4_261, %c0_262, %c40_263] : memref<6x16x96xbf16, #tpu.memory_space<vmem>>, vector<1x16x8xbf16>
    %444 = vector.shape_cast %443 : vector<1x16x8xbf16> to vector<16x8xbf16>
    %c4_264 = arith.constant 4 : index
    %c0_265 = arith.constant 0 : index
    %c72_266 = arith.constant 72 : index
    %445 = vector.load %arg1[%c4_264, %c0_265, %c72_266] : memref<6x16x96xbf16, #tpu.memory_space<vmem>>, vector<1x16x8xbf16>
    %446 = vector.shape_cast %445 : vector<1x16x8xbf16> to vector<16x8xbf16>
    "tpu.trace_start"() <{level = 10 : i32, message = "qd,kd->qk"}> : () -> ()
    %cst_267 = arith.constant dense<0.000000e+00> : vector<16x16xf32>
    %447 = tpu.matmul %442, %444, %cst_267 {dimension_numbers = #tpu.dot_dimension_numbers<[1], [1], [0], [0], [0, 0, 1, 0], [], []>} : vector<16x8xbf16>, vector<16x8xbf16>, vector<16x16xf32> -> vector<16x16xf32>
    "tpu.trace_stop"() : () -> ()
    %cst_268 = arith.constant 0.353553385 : f32
    %448 = vector.broadcast %cst_268 : f32 to vector<16x16xf32>
    %449 = arith.mulf %447, %448 : vector<16x16xf32>
    %450 = vector.broadcast %417 : vector<1x16xf32> to vector<16x16xf32>
    %451 = arith.addf %449, %450 : vector<16x16xf32>
    %cst_269 = arith.constant dense<0xFF800000> : vector<16xf32>
    %452 = vector.multi_reduction <maximumf>, %451, %cst_269 [1] : vector<16x16xf32> to vector<16xf32>
    %453 = vector.shape_cast %452 : vector<16xf32> to vector<16x1xf32>
    %454 = vector.broadcast %453 : vector<16x1xf32> to vector<16x16xf32>
    %455 = arith.subf %451, %454 : vector<16x16xf32>
    %456 = math.exp %455 : vector<16x16xf32>
    %cst_270 = arith.constant dense<0.000000e+00> : vector<16xf32>
    %457 = vector.multi_reduction <add>, %456, %cst_270 [1] : vector<16x16xf32> to vector<16xf32>
    %458 = vector.shape_cast %457 : vector<16xf32> to vector<16x1xf32>
    %459 = tpu.reciprocal %458 {approx = true} : vector<16x1xf32> -> vector<16x1xf32>
    %460 = vector.broadcast %459 : vector<16x1xf32> to vector<16x16xf32>
    %461 = arith.mulf %456, %460 : vector<16x16xf32>
    %462 = arith.truncf %461 : vector<16x16xf32> to vector<16x16xbf16>
    %cst_271 = arith.constant dense<0.000000e+00> : vector<16x8xf32>
    %463 = tpu.matmul %462, %446, %cst_271 {dimension_numbers = #tpu.dot_dimension_numbers<[1], [0], [0], [1], [0, 0, 1, 1], [], []>} : vector<16x16xbf16>, vector<16x8xbf16>, vector<16x8xf32> -> vector<16x8xf32>
    %c4_272 = arith.constant 4 : index
    %c0_273 = arith.constant 0 : index
    %c16_274 = arith.constant 16 : index
    %464 = vector.load %arg1[%c4_272, %c0_273, %c16_274] : memref<6x16x96xbf16, #tpu.memory_space<vmem>>, vector<1x16x8xbf16>
    %465 = vector.shape_cast %464 : vector<1x16x8xbf16> to vector<16x8xbf16>
    %c4_275 = arith.constant 4 : index
    %c0_276 = arith.constant 0 : index
    %c48_277 = arith.constant 48 : index
    %466 = vector.load %arg1[%c4_275, %c0_276, %c48_277] : memref<6x16x96xbf16, #tpu.memory_space<vmem>>, vector<1x16x8xbf16>
    %467 = vector.shape_cast %466 : vector<1x16x8xbf16> to vector<16x8xbf16>
    %c4_278 = arith.constant 4 : index
    %c0_279 = arith.constant 0 : index
    %c80_280 = arith.constant 80 : index
    %468 = vector.load %arg1[%c4_278, %c0_279, %c80_280] : memref<6x16x96xbf16, #tpu.memory_space<vmem>>, vector<1x16x8xbf16>
    %469 = vector.shape_cast %468 : vector<1x16x8xbf16> to vector<16x8xbf16>
    "tpu.trace_start"() <{level = 10 : i32, message = "qd,kd->qk"}> : () -> ()
    %cst_281 = arith.constant dense<0.000000e+00> : vector<16x16xf32>
    %470 = tpu.matmul %465, %467, %cst_281 {dimension_numbers = #tpu.dot_dimension_numbers<[1], [1], [0], [0], [0, 0, 1, 0], [], []>} : vector<16x8xbf16>, vector<16x8xbf16>, vector<16x16xf32> -> vector<16x16xf32>
    "tpu.trace_stop"() : () -> ()
    %cst_282 = arith.constant 0.353553385 : f32
    %471 = vector.broadcast %cst_282 : f32 to vector<16x16xf32>
    %472 = arith.mulf %470, %471 : vector<16x16xf32>
    %473 = vector.broadcast %417 : vector<1x16xf32> to vector<16x16xf32>
    %474 = arith.addf %472, %473 : vector<16x16xf32>
    %cst_283 = arith.constant dense<0xFF800000> : vector<16xf32>
    %475 = vector.multi_reduction <maximumf>, %474, %cst_283 [1] : vector<16x16xf32> to vector<16xf32>
    %476 = vector.shape_cast %475 : vector<16xf32> to vector<16x1xf32>
    %477 = vector.broadcast %476 : vector<16x1xf32> to vector<16x16xf32>
    %478 = arith.subf %474, %477 : vector<16x16xf32>
    %479 = math.exp %478 : vector<16x16xf32>
    %cst_284 = arith.constant dense<0.000000e+00> : vector<16xf32>
    %480 = vector.multi_reduction <add>, %479, %cst_284 [1] : vector<16x16xf32> to vector<16xf32>
    %481 = vector.shape_cast %480 : vector<16xf32> to vector<16x1xf32>
    %482 = tpu.reciprocal %481 {approx = true} : vector<16x1xf32> -> vector<16x1xf32>
    %483 = vector.broadcast %482 : vector<16x1xf32> to vector<16x16xf32>
    %484 = arith.mulf %479, %483 : vector<16x16xf32>
    %485 = arith.truncf %484 : vector<16x16xf32> to vector<16x16xbf16>
    %cst_285 = arith.constant dense<0.000000e+00> : vector<16x8xf32>
    %486 = tpu.matmul %485, %469, %cst_285 {dimension_numbers = #tpu.dot_dimension_numbers<[1], [0], [0], [1], [0, 0, 1, 1], [], []>} : vector<16x16xbf16>, vector<16x8xbf16>, vector<16x8xf32> -> vector<16x8xf32>
    %c4_286 = arith.constant 4 : index
    %c0_287 = arith.constant 0 : index
    %c24_288 = arith.constant 24 : index
    %487 = vector.load %arg1[%c4_286, %c0_287, %c24_288] : memref<6x16x96xbf16, #tpu.memory_space<vmem>>, vector<1x16x8xbf16>
    %488 = vector.shape_cast %487 : vector<1x16x8xbf16> to vector<16x8xbf16>
    %c4_289 = arith.constant 4 : index
    %c0_290 = arith.constant 0 : index
    %c56_291 = arith.constant 56 : index
    %489 = vector.load %arg1[%c4_289, %c0_290, %c56_291] : memref<6x16x96xbf16, #tpu.memory_space<vmem>>, vector<1x16x8xbf16>
    %490 = vector.shape_cast %489 : vector<1x16x8xbf16> to vector<16x8xbf16>
    %c4_292 = arith.constant 4 : index
    %c0_293 = arith.constant 0 : index
    %c88_294 = arith.constant 88 : index
    %491 = vector.load %arg1[%c4_292, %c0_293, %c88_294] : memref<6x16x96xbf16, #tpu.memory_space<vmem>>, vector<1x16x8xbf16>
    %492 = vector.shape_cast %491 : vector<1x16x8xbf16> to vector<16x8xbf16>
    "tpu.trace_start"() <{level = 10 : i32, message = "qd,kd->qk"}> : () -> ()
    %cst_295 = arith.constant dense<0.000000e+00> : vector<16x16xf32>
    %493 = tpu.matmul %488, %490, %cst_295 {dimension_numbers = #tpu.dot_dimension_numbers<[1], [1], [0], [0], [0, 0, 1, 0], [], []>} : vector<16x8xbf16>, vector<16x8xbf16>, vector<16x16xf32> -> vector<16x16xf32>
    "tpu.trace_stop"() : () -> ()
    %cst_296 = arith.constant 0.353553385 : f32
    %494 = vector.broadcast %cst_296 : f32 to vector<16x16xf32>
    %495 = arith.mulf %493, %494 : vector<16x16xf32>
    %496 = vector.broadcast %417 : vector<1x16xf32> to vector<16x16xf32>
    %497 = arith.addf %495, %496 : vector<16x16xf32>
    %cst_297 = arith.constant dense<0xFF800000> : vector<16xf32>
    %498 = vector.multi_reduction <maximumf>, %497, %cst_297 [1] : vector<16x16xf32> to vector<16xf32>
    %499 = vector.shape_cast %498 : vector<16xf32> to vector<16x1xf32>
    %500 = vector.broadcast %499 : vector<16x1xf32> to vector<16x16xf32>
    %501 = arith.subf %497, %500 : vector<16x16xf32>
    %502 = math.exp %501 : vector<16x16xf32>
    %cst_298 = arith.constant dense<0.000000e+00> : vector<16xf32>
    %503 = vector.multi_reduction <add>, %502, %cst_298 [1] : vector<16x16xf32> to vector<16xf32>
    %504 = vector.shape_cast %503 : vector<16xf32> to vector<16x1xf32>
    %505 = tpu.reciprocal %504 {approx = true} : vector<16x1xf32> -> vector<16x1xf32>
    %506 = vector.broadcast %505 : vector<16x1xf32> to vector<16x16xf32>
    %507 = arith.mulf %502, %506 : vector<16x16xf32>
    %508 = arith.truncf %507 : vector<16x16xf32> to vector<16x16xbf16>
    %cst_299 = arith.constant dense<0.000000e+00> : vector<16x8xf32>
    %509 = tpu.matmul %508, %492, %cst_299 {dimension_numbers = #tpu.dot_dimension_numbers<[1], [0], [0], [1], [0, 0, 1, 1], [], []>} : vector<16x16xbf16>, vector<16x8xbf16>, vector<16x8xf32> -> vector<16x8xf32>
    %510 = tpu.concatenate %440, %463, %486, %509 in 1 : vector<16x8xf32>, vector<16x8xf32>, vector<16x8xf32>, vector<16x8xf32> -> vector<16x32xf32>
    %511 = arith.truncf %510 : vector<16x32xf32> to vector<16x32xbf16>
    %c4_300 = arith.constant 4 : index
    %c0_301 = arith.constant 0 : index
    %c0_302 = arith.constant 0 : index
    %512 = vector.load %arg3[%c4_300, %c0_301, %c0_302] : memref<6x16x32xbf16, #tpu.memory_space<vmem>>, vector<1x16x32xbf16>
    %513 = vector.shape_cast %512 : vector<1x16x32xbf16> to vector<16x32xbf16>
    %514 = vector.shape_cast %511 : vector<16x32xbf16> to vector<1x16x32xbf16>
    tpu.vector_store %arg3[%c4_300, %c0_301, %c0_302], %514 {strides = array<i32>} : memref<6x16x32xbf16, #tpu.memory_space<vmem>>, vector<1x16x32xbf16>,
    %c5 = arith.constant 5 : index
    %c0_303 = arith.constant 0 : index
    %c0_304 = arith.constant 0 : index
    %515 = vector.load %arg2[%c5, %c0_303, %c0_304] : memref<6x1x16xf32, #tpu.memory_space<vmem>>, vector<1x1x16xf32>
    %516 = vector.shape_cast %515 : vector<1x1x16xf32> to vector<1x16xf32>
    %cst_305 = arith.constant 1.000000e+00 : f32
    %517 = vector.broadcast %cst_305 : f32 to vector<1x16xf32>
    %518 = arith.subf %517, %516 : vector<1x16xf32>
    %cst_306 = arith.constant -1.000000e+09 : f32
    %519 = vector.broadcast %cst_306 : f32 to vector<1x16xf32>
    %520 = arith.mulf %518, %519 : vector<1x16xf32>
    %c5_307 = arith.constant 5 : index
    %c0_308 = arith.constant 0 : index
    %c0_309 = arith.constant 0 : index
    %521 = vector.load %arg1[%c5_307, %c0_308, %c0_309] : memref<6x16x96xbf16, #tpu.memory_space<vmem>>, vector<1x16x8xbf16>
    %522 = vector.shape_cast %521 : vector<1x16x8xbf16> to vector<16x8xbf16>
    %c5_310 = arith.constant 5 : index
    %c0_311 = arith.constant 0 : index
    %c32_312 = arith.constant 32 : index
    %523 = vector.load %arg1[%c5_310, %c0_311, %c32_312] : memref<6x16x96xbf16, #tpu.memory_space<vmem>>, vector<1x16x8xbf16>
    %524 = vector.shape_cast %523 : vector<1x16x8xbf16> to vector<16x8xbf16>
    %c5_313 = arith.constant 5 : index
    %c0_314 = arith.constant 0 : index
    %c64_315 = arith.constant 64 : index
    %525 = vector.load %arg1[%c5_313, %c0_314, %c64_315] : memref<6x16x96xbf16, #tpu.memory_space<vmem>>, vector<1x16x8xbf16>
    %526 = vector.shape_cast %525 : vector<1x16x8xbf16> to vector<16x8xbf16>
    "tpu.trace_start"() <{level = 10 : i32, message = "qd,kd->qk"}> : () -> ()
    %cst_316 = arith.constant dense<0.000000e+00> : vector<16x16xf32>
    %527 = tpu.matmul %522, %524, %cst_316 {dimension_numbers = #tpu.dot_dimension_numbers<[1], [1], [0], [0], [0, 0, 1, 0], [], []>} : vector<16x8xbf16>, vector<16x8xbf16>, vector<16x16xf32> -> vector<16x16xf32>
    "tpu.trace_stop"() : () -> ()
    %cst_317 = arith.constant 0.353553385 : f32
    %528 = vector.broadcast %cst_317 : f32 to vector<16x16xf32>
    %529 = arith.mulf %527, %528 : vector<16x16xf32>
    %530 = vector.broadcast %520 : vector<1x16xf32> to vector<16x16xf32>
    %531 = arith.addf %529, %530 : vector<16x16xf32>
    %cst_318 = arith.constant dense<0xFF800000> : vector<16xf32>
    %532 = vector.multi_reduction <maximumf>, %531, %cst_318 [1] : vector<16x16xf32> to vector<16xf32>
    %533 = vector.shape_cast %532 : vector<16xf32> to vector<16x1xf32>
    %534 = vector.broadcast %533 : vector<16x1xf32> to vector<16x16xf32>
    %535 = arith.subf %531, %534 : vector<16x16xf32>
    %536 = math.exp %535 : vector<16x16xf32>
    %cst_319 = arith.constant dense<0.000000e+00> : vector<16xf32>
    %537 = vector.multi_reduction <add>, %536, %cst_319 [1] : vector<16x16xf32> to vector<16xf32>
    %538 = vector.shape_cast %537 : vector<16xf32> to vector<16x1xf32>
    %539 = tpu.reciprocal %538 {approx = true} : vector<16x1xf32> -> vector<16x1xf32>
    %540 = vector.broadcast %539 : vector<16x1xf32> to vector<16x16xf32>
    %541 = arith.mulf %536, %540 : vector<16x16xf32>
    %542 = arith.truncf %541 : vector<16x16xf32> to vector<16x16xbf16>
    %cst_320 = arith.constant dense<0.000000e+00> : vector<16x8xf32>
    %543 = tpu.matmul %542, %526, %cst_320 {dimension_numbers = #tpu.dot_dimension_numbers<[1], [0], [0], [1], [0, 0, 1, 1], [], []>} : vector<16x16xbf16>, vector<16x8xbf16>, vector<16x8xf32> -> vector<16x8xf32>
    %c5_321 = arith.constant 5 : index
    %c0_322 = arith.constant 0 : index
    %c8_323 = arith.constant 8 : index
    %544 = vector.load %arg1[%c5_321, %c0_322, %c8_323] : memref<6x16x96xbf16, #tpu.memory_space<vmem>>, vector<1x16x8xbf16>
    %545 = vector.shape_cast %544 : vector<1x16x8xbf16> to vector<16x8xbf16>
    %c5_324 = arith.constant 5 : index
    %c0_325 = arith.constant 0 : index
    %c40_326 = arith.constant 40 : index
    %546 = vector.load %arg1[%c5_324, %c0_325, %c40_326] : memref<6x16x96xbf16, #tpu.memory_space<vmem>>, vector<1x16x8xbf16>
    %547 = vector.shape_cast %546 : vector<1x16x8xbf16> to vector<16x8xbf16>
    %c5_327 = arith.constant 5 : index
    %c0_328 = arith.constant 0 : index
    %c72_329 = arith.constant 72 : index
    %548 = vector.load %arg1[%c5_327, %c0_328, %c72_329] : memref<6x16x96xbf16, #tpu.memory_space<vmem>>, vector<1x16x8xbf16>
    %549 = vector.shape_cast %548 : vector<1x16x8xbf16> to vector<16x8xbf16>
    "tpu.trace_start"() <{level = 10 : i32, message = "qd,kd->qk"}> : () -> ()
    %cst_330 = arith.constant dense<0.000000e+00> : vector<16x16xf32>
    %550 = tpu.matmul %545, %547, %cst_330 {dimension_numbers = #tpu.dot_dimension_numbers<[1], [1], [0], [0], [0, 0, 1, 0], [], []>} : vector<16x8xbf16>, vector<16x8xbf16>, vector<16x16xf32> -> vector<16x16xf32>
    "tpu.trace_stop"() : () -> ()
    %cst_331 = arith.constant 0.353553385 : f32
    %551 = vector.broadcast %cst_331 : f32 to vector<16x16xf32>
    %552 = arith.mulf %550, %551 : vector<16x16xf32>
    %553 = vector.broadcast %520 : vector<1x16xf32> to vector<16x16xf32>
    %554 = arith.addf %552, %553 : vector<16x16xf32>
    %cst_332 = arith.constant dense<0xFF800000> : vector<16xf32>
    %555 = vector.multi_reduction <maximumf>, %554, %cst_332 [1] : vector<16x16xf32> to vector<16xf32>
    %556 = vector.shape_cast %555 : vector<16xf32> to vector<16x1xf32>
    %557 = vector.broadcast %556 : vector<16x1xf32> to vector<16x16xf32>
    %558 = arith.subf %554, %557 : vector<16x16xf32>
    %559 = math.exp %558 : vector<16x16xf32>
    %cst_333 = arith.constant dense<0.000000e+00> : vector<16xf32>
    %560 = vector.multi_reduction <add>, %559, %cst_333 [1] : vector<16x16xf32> to vector<16xf32>
    %561 = vector.shape_cast %560 : vector<16xf32> to vector<16x1xf32>
    %562 = tpu.reciprocal %561 {approx = true} : vector<16x1xf32> -> vector<16x1xf32>
    %563 = vector.broadcast %562 : vector<16x1xf32> to vector<16x16xf32>
    %564 = arith.mulf %559, %563 : vector<16x16xf32>
    %565 = arith.truncf %564 : vector<16x16xf32> to vector<16x16xbf16>
    %cst_334 = arith.constant dense<0.000000e+00> : vector<16x8xf32>
    %566 = tpu.matmul %565, %549, %cst_334 {dimension_numbers = #tpu.dot_dimension_numbers<[1], [0], [0], [1], [0, 0, 1, 1], [], []>} : vector<16x16xbf16>, vector<16x8xbf16>, vector<16x8xf32> -> vector<16x8xf32>
    %c5_335 = arith.constant 5 : index
    %c0_336 = arith.constant 0 : index
    %c16_337 = arith.constant 16 : index
    %567 = vector.load %arg1[%c5_335, %c0_336, %c16_337] : memref<6x16x96xbf16, #tpu.memory_space<vmem>>, vector<1x16x8xbf16>
    %568 = vector.shape_cast %567 : vector<1x16x8xbf16> to vector<16x8xbf16>
    %c5_338 = arith.constant 5 : index
    %c0_339 = arith.constant 0 : index
    %c48_340 = arith.constant 48 : index
    %569 = vector.load %arg1[%c5_338, %c0_339, %c48_340] : memref<6x16x96xbf16, #tpu.memory_space<vmem>>, vector<1x16x8xbf16>
    %570 = vector.shape_cast %569 : vector<1x16x8xbf16> to vector<16x8xbf16>
    %c5_341 = arith.constant 5 : index
    %c0_342 = arith.constant 0 : index
    %c80_343 = arith.constant 80 : index
    %571 = vector.load %arg1[%c5_341, %c0_342, %c80_343] : memref<6x16x96xbf16, #tpu.memory_space<vmem>>, vector<1x16x8xbf16>
    %572 = vector.shape_cast %571 : vector<1x16x8xbf16> to vector<16x8xbf16>
    "tpu.trace_start"() <{level = 10 : i32, message = "qd,kd->qk"}> : () -> ()
    %cst_344 = arith.constant dense<0.000000e+00> : vector<16x16xf32>
    %573 = tpu.matmul %568, %570, %cst_344 {dimension_numbers = #tpu.dot_dimension_numbers<[1], [1], [0], [0], [0, 0, 1, 0], [], []>} : vector<16x8xbf16>, vector<16x8xbf16>, vector<16x16xf32> -> vector<16x16xf32>
    "tpu.trace_stop"() : () -> ()
    %cst_345 = arith.constant 0.353553385 : f32
    %574 = vector.broadcast %cst_345 : f32 to vector<16x16xf32>
    %575 = arith.mulf %573, %574 : vector<16x16xf32>
    %576 = vector.broadcast %520 : vector<1x16xf32> to vector<16x16xf32>
    %577 = arith.addf %575, %576 : vector<16x16xf32>
    %cst_346 = arith.constant dense<0xFF800000> : vector<16xf32>
    %578 = vector.multi_reduction <maximumf>, %577, %cst_346 [1] : vector<16x16xf32> to vector<16xf32>
    %579 = vector.shape_cast %578 : vector<16xf32> to vector<16x1xf32>
    %580 = vector.broadcast %579 : vector<16x1xf32> to vector<16x16xf32>
    %581 = arith.subf %577, %580 : vector<16x16xf32>
    %582 = math.exp %581 : vector<16x16xf32>
    %cst_347 = arith.constant dense<0.000000e+00> : vector<16xf32>
    %583 = vector.multi_reduction <add>, %582, %cst_347 [1] : vector<16x16xf32> to vector<16xf32>
    %584 = vector.shape_cast %583 : vector<16xf32> to vector<16x1xf32>
    %585 = tpu.reciprocal %584 {approx = true} : vector<16x1xf32> -> vector<16x1xf32>
    %586 = vector.broadcast %585 : vector<16x1xf32> to vector<16x16xf32>
    %587 = arith.mulf %582, %586 : vector<16x16xf32>
    %588 = arith.truncf %587 : vector<16x16xf32> to vector<16x16xbf16>
    %cst_348 = arith.constant dense<0.000000e+00> : vector<16x8xf32>
    %589 = tpu.matmul %588, %572, %cst_348 {dimension_numbers = #tpu.dot_dimension_numbers<[1], [0], [0], [1], [0, 0, 1, 1], [], []>} : vector<16x16xbf16>, vector<16x8xbf16>, vector<16x8xf32> -> vector<16x8xf32>
    %c5_349 = arith.constant 5 : index
    %c0_350 = arith.constant 0 : index
    %c24_351 = arith.constant 24 : index
    %590 = vector.load %arg1[%c5_349, %c0_350, %c24_351] : memref<6x16x96xbf16, #tpu.memory_space<vmem>>, vector<1x16x8xbf16>
    %591 = vector.shape_cast %590 : vector<1x16x8xbf16> to vector<16x8xbf16>
    %c5_352 = arith.constant 5 : index
    %c0_353 = arith.constant 0 : index
    %c56_354 = arith.constant 56 : index
    %592 = vector.load %arg1[%c5_352, %c0_353, %c56_354] : memref<6x16x96xbf16, #tpu.memory_space<vmem>>, vector<1x16x8xbf16>
    %593 = vector.shape_cast %592 : vector<1x16x8xbf16> to vector<16x8xbf16>
    %c5_355 = arith.constant 5 : index
    %c0_356 = arith.constant 0 : index
    %c88_357 = arith.constant 88 : index
    %594 = vector.load %arg1[%c5_355, %c0_356, %c88_357] : memref<6x16x96xbf16, #tpu.memory_space<vmem>>, vector<1x16x8xbf16>
    %595 = vector.shape_cast %594 : vector<1x16x8xbf16> to vector<16x8xbf16>
    "tpu.trace_start"() <{level = 10 : i32, message = "qd,kd->qk"}> : () -> ()
    %cst_358 = arith.constant dense<0.000000e+00> : vector<16x16xf32>
    %596 = tpu.matmul %591, %593, %cst_358 {dimension_numbers = #tpu.dot_dimension_numbers<[1], [1], [0], [0], [0, 0, 1, 0], [], []>} : vector<16x8xbf16>, vector<16x8xbf16>, vector<16x16xf32> -> vector<16x16xf32>
    "tpu.trace_stop"() : () -> ()
    %cst_359 = arith.constant 0.353553385 : f32
    %597 = vector.broadcast %cst_359 : f32 to vector<16x16xf32>
    %598 = arith.mulf %596, %597 : vector<16x16xf32>
    %599 = vector.broadcast %520 : vector<1x16xf32> to vector<16x16xf32>
    %600 = arith.addf %598, %599 : vector<16x16xf32>
    %cst_360 = arith.constant dense<0xFF800000> : vector<16xf32>
    %601 = vector.multi_reduction <maximumf>, %600, %cst_360 [1] : vector<16x16xf32> to vector<16xf32>
    %602 = vector.shape_cast %601 : vector<16xf32> to vector<16x1xf32>
    %603 = vector.broadcast %602 : vector<16x1xf32> to vector<16x16xf32>
    %604 = arith.subf %600, %603 : vector<16x16xf32>
    %605 = math.exp %604 : vector<16x16xf32>
    %cst_361 = arith.constant dense<0.000000e+00> : vector<16xf32>
    %606 = vector.multi_reduction <add>, %605, %cst_361 [1] : vector<16x16xf32> to vector<16xf32>
    %607 = vector.shape_cast %606 : vector<16xf32> to vector<16x1xf32>
    %608 = tpu.reciprocal %607 {approx = true} : vector<16x1xf32> -> vector<16x1xf32>
    %609 = vector.broadcast %608 : vector<16x1xf32> to vector<16x16xf32>
    %610 = arith.mulf %605, %609 : vector<16x16xf32>
    %611 = arith.truncf %610 : vector<16x16xf32> to vector<16x16xbf16>
    %cst_362 = arith.constant dense<0.000000e+00> : vector<16x8xf32>
    %612 = tpu.matmul %611, %595, %cst_362 {dimension_numbers = #tpu.dot_dimension_numbers<[1], [0], [0], [1], [0, 0, 1, 1], [], []>} : vector<16x16xbf16>, vector<16x8xbf16>, vector<16x8xf32> -> vector<16x8xf32>
    %613 = tpu.concatenate %543, %566, %589, %612 in 1 : vector<16x8xf32>, vector<16x8xf32>, vector<16x8xf32>, vector<16x8xf32> -> vector<16x32xf32>
    %614 = arith.truncf %613 : vector<16x32xf32> to vector<16x32xbf16>
    %c5_363 = arith.constant 5 : index
    %c0_364 = arith.constant 0 : index
    %c0_365 = arith.constant 0 : index
    %615 = vector.load %arg3[%c5_363, %c0_364, %c0_365] : memref<6x16x32xbf16, #tpu.memory_space<vmem>>, vector<1x16x32xbf16>
    %616 = vector.shape_cast %615 : vector<1x16x32xbf16> to vector<16x32xbf16>
    %617 = vector.shape_cast %614 : vector<16x32xbf16> to vector<1x16x32xbf16>
    tpu.vector_store %arg3[%c5_363, %c0_364, %c0_365], %617 {strides = array<i32>} : memref<6x16x32xbf16, #tpu.memory_space<vmem>>, vector<1x16x32xbf16>,
    return
  }
  func.func @transform_0(%arg0: i32) -> (i32, i32, i32) {
    %c0_i32 = arith.constant 0 : i32
    %c0_i32_0 = arith.constant 0 : i32
    %c0_i32_1 = arith.constant 0 : i32
    return %arg0, %c0_i32, %c0_i32_0 : i32, i32, i32
  }
  func.func @transform_1(%arg0: i32) -> (i32, i32, i32) {
    %c0_i32 = arith.constant 0 : i32
    %c0_i32_0 = arith.constant 0 : i32
    %c0_i32_1 = arith.constant 0 : i32
    return %arg0, %c0_i32, %c0_i32_0 : i32, i32, i32
  }
  func.func @transform_2(%arg0: i32) -> (i32, i32, i32) {
    %c0_i32 = arith.constant 0 : i32
    %c0_i32_0 = arith.constant 0 : i32
    %c0_i32_1 = arith.constant 0 : i32
    return %arg0, %c0_i32, %c0_i32_0 : i32, i32, i32
  }
}

module attributes {stable_mosaic.version = 11 : i64} {
  func.func @_dense_ln_kernel(%arg0: i32, %arg1: i32, %arg2: i32, %arg3: memref<96x32xbf16, #tpu.memory_space<vmem>>, %arg4: memref<32x32xbf16, #tpu.memory_space<vmem>>, %arg5: memref<1x32xf32, #tpu.memory_space<vmem>>, %arg6: memref<96x32xbf16, #tpu.memory_space<vmem>>, %arg7: memref<1x32xf32, #tpu.memory_space<vmem>>, %arg8: memref<1x32xf32, #tpu.memory_space<vmem>>, %arg9: memref<96x32xbf16, #tpu.memory_space<vmem>>, %arg10: memref<96x32xf32, #tpu.memory_space<vmem>>) attributes {dimension_semantics = [#tpu.dimension_semantics<parallel>, #tpu.dimension_semantics<parallel>, #tpu.dimension_semantics<arbitrary>], iteration_bounds = array<i64: 1, 1, 1>, scalar_prefetch = 0 : i64, scratch_operands = 1 : i64, tpu.core_type = #tpu.core_type<tc>, window_params = [{transform_indices = @transform_0, window_bounds = array<i64: 96, 32>}, {transform_indices = @transform_1, window_bounds = array<i64: 32, 32>}, {transform_indices = @transform_2, window_bounds = array<i64: 1, 32>}, {transform_indices = @transform_3, window_bounds = array<i64: 96, 32>}, {transform_indices = @transform_4, window_bounds = array<i64: 1, 32>}, {transform_indices = @transform_5, window_bounds = array<i64: 1, 32>}, {transform_indices = @transform_6, window_bounds = array<i64: 96, 32>}]} {
    %c0_i32 = arith.constant 0 : i32
    %0 = arith.cmpi eq, %arg2, %c0_i32 : i32
    %1 = arith.extui %0 : i1 to i32
    %c0_i32_0 = arith.constant 0 : i32
    %2 = arith.cmpi ne, %1, %c0_i32_0 : i32
    scf.if %2 {
      %cst_10 = arith.constant 0.000000e+00 : f32
      %12 = vector.broadcast %cst_10 : f32 to vector<96x32xf32>
      %c0_11 = arith.constant 0 : index
      %c0_12 = arith.constant 0 : index
      %13 = vector.load %arg10[%c0_11, %c0_12] : memref<96x32xf32, #tpu.memory_space<vmem>>, vector<96x32xf32>
      tpu.vector_store %arg10[%c0_11, %c0_12], %12 {strides = array<i32>} : memref<96x32xf32, #tpu.memory_space<vmem>>, vector<96x32xf32>,
    } else {
    }
    %c0 = arith.constant 0 : index
    %c0_1 = arith.constant 0 : index
    %3 = vector.load %arg10[%c0, %c0_1] : memref<96x32xf32, #tpu.memory_space<vmem>>, vector<96x32xf32>
    %c0_2 = arith.constant 0 : index
    %c0_3 = arith.constant 0 : index
    %4 = vector.load %arg3[%c0_2, %c0_3] : memref<96x32xbf16, #tpu.memory_space<vmem>>, vector<96x32xbf16>
    %c0_4 = arith.constant 0 : index
    %c0_5 = arith.constant 0 : index
    %5 = vector.load %arg4[%c0_4, %c0_5] : memref<32x32xbf16, #tpu.memory_space<vmem>>, vector<32x32xbf16>
    %cst = arith.constant dense<0.000000e+00> : vector<96x32xf32>
    %6 = tpu.matmul %4, %5, %cst {dimension_numbers = #tpu.dot_dimension_numbers<[1], [0], [0], [1], [0, 0, 1, 1], [], []>} : vector<96x32xbf16>, vector<32x32xbf16>, vector<96x32xf32> -> vector<96x32xf32>
    %7 = arith.addf %3, %6 : vector<96x32xf32>
    %c0_6 = arith.constant 0 : index
    %c0_7 = arith.constant 0 : index
    %8 = vector.load %arg10[%c0_6, %c0_7] : memref<96x32xf32, #tpu.memory_space<vmem>>, vector<96x32xf32>
    tpu.vector_store %arg10[%c0_6, %c0_7], %7 {strides = array<i32>} : memref<96x32xf32, #tpu.memory_space<vmem>>, vector<96x32xf32>,
    %c0_i32_8 = arith.constant 0 : i32
    %9 = arith.cmpi eq, %arg2, %c0_i32_8 : i32
    %10 = arith.extui %9 : i1 to i32
    %c0_i32_9 = arith.constant 0 : i32
    %11 = arith.cmpi ne, %10, %c0_i32_9 : i32
    scf.if %11 {
      %c0_10 = arith.constant 0 : index
      %c0_11 = arith.constant 0 : index
      %12 = vector.load %arg10[%c0_10, %c0_11] : memref<96x32xf32, #tpu.memory_space<vmem>>, vector<96x32xf32>
      %c0_12 = arith.constant 0 : index
      %c0_13 = arith.constant 0 : index
      %13 = vector.load %arg5[%c0_12, %c0_13] : memref<1x32xf32, #tpu.memory_space<vmem>>, vector<1x32xf32>
      %14 = vector.broadcast %13 : vector<1x32xf32> to vector<96x32xf32>
      %15 = arith.addf %12, %14 : vector<96x32xf32>
      %c0_14 = arith.constant 0 : index
      %c0_15 = arith.constant 0 : index
      %16 = vector.load %arg6[%c0_14, %c0_15] : memref<96x32xbf16, #tpu.memory_space<vmem>>, vector<96x32xbf16>
      %17 = arith.extf %16 : vector<96x32xbf16> to vector<96x32xf32>
      %18 = arith.addf %15, %17 : vector<96x32xf32>
      %cst_16 = arith.constant dense<0.000000e+00> : vector<96xf32>
      %19 = vector.multi_reduction <add>, %18, %cst_16 [1] : vector<96x32xf32> to vector<96xf32>
      %20 = vector.shape_cast %19 : vector<96xf32> to vector<96x1xf32>
      %cst_17 = arith.constant 3.200000e+01 : f32
      %21 = vector.broadcast %cst_17 : f32 to vector<96x1xf32>
      %22 = arith.divf %20, %21 : vector<96x1xf32>
      %23 = vector.broadcast %22 : vector<96x1xf32> to vector<96x32xf32>
      %24 = arith.subf %18, %23 : vector<96x32xf32>
      %25 = arith.mulf %24, %24 : vector<96x32xf32>
      %cst_18 = arith.constant dense<0.000000e+00> : vector<96xf32>
      %26 = vector.multi_reduction <add>, %25, %cst_18 [1] : vector<96x32xf32> to vector<96xf32>
      %27 = vector.shape_cast %26 : vector<96xf32> to vector<96x1xf32>
      %cst_19 = arith.constant 3.200000e+01 : f32
      %28 = vector.broadcast %cst_19 : f32 to vector<96x1xf32>
      %29 = arith.divf %27, %28 : vector<96x1xf32>
      %30 = vector.broadcast %22 : vector<96x1xf32> to vector<96x32xf32>
      %31 = arith.subf %18, %30 : vector<96x32xf32>
      %cst_20 = arith.constant 9.99999996E-13 : f32
      %32 = vector.broadcast %cst_20 : f32 to vector<96x1xf32>
      %33 = arith.addf %29, %32 : vector<96x1xf32>
      %34 = math.rsqrt %33 : vector<96x1xf32>
      %35 = vector.broadcast %34 : vector<96x1xf32> to vector<96x32xf32>
      %36 = arith.mulf %31, %35 : vector<96x32xf32>
      %c0_21 = arith.constant 0 : index
      %c0_22 = arith.constant 0 : index
      %37 = vector.load %arg7[%c0_21, %c0_22] : memref<1x32xf32, #tpu.memory_space<vmem>>, vector<1x32xf32>
      %38 = vector.broadcast %37 : vector<1x32xf32> to vector<96x32xf32>
      %39 = arith.mulf %36, %38 : vector<96x32xf32>
      %c0_23 = arith.constant 0 : index
      %c0_24 = arith.constant 0 : index
      %40 = vector.load %arg8[%c0_23, %c0_24] : memref<1x32xf32, #tpu.memory_space<vmem>>, vector<1x32xf32>
      %41 = vector.broadcast %40 : vector<1x32xf32> to vector<96x32xf32>
      %42 = arith.addf %39, %41 : vector<96x32xf32>
      %43 = arith.truncf %42 : vector<96x32xf32> to vector<96x32xbf16>
      %c0_25 = arith.constant 0 : index
      %c0_26 = arith.constant 0 : index
      %44 = vector.load %arg9[%c0_25, %c0_26] : memref<96x32xbf16, #tpu.memory_space<vmem>>, vector<96x32xbf16>
      tpu.vector_store %arg9[%c0_25, %c0_26], %43 {strides = array<i32>} : memref<96x32xbf16, #tpu.memory_space<vmem>>, vector<96x32xbf16>,
    } else {
    }
    return
  }
  func.func @transform_0(%arg0: i32, %arg1: i32, %arg2: i32) -> (i32, i32) {
    %c0_i32 = arith.constant 0 : i32
    return %arg0, %arg2 : i32, i32
  }
  func.func @transform_1(%arg0: i32, %arg1: i32, %arg2: i32) -> (i32, i32) {
    %c0_i32 = arith.constant 0 : i32
    return %arg2, %arg1 : i32, i32
  }
  func.func @transform_2(%arg0: i32, %arg1: i32, %arg2: i32) -> (i32, i32) {
    %c0_i32 = arith.constant 0 : i32
    %c0_i32_0 = arith.constant 0 : i32
    return %c0_i32, %arg1 : i32, i32
  }
  func.func @transform_3(%arg0: i32, %arg1: i32, %arg2: i32) -> (i32, i32) {
    %c0_i32 = arith.constant 0 : i32
    return %arg0, %arg1 : i32, i32
  }
  func.func @transform_4(%arg0: i32, %arg1: i32, %arg2: i32) -> (i32, i32) {
    %c0_i32 = arith.constant 0 : i32
    %c0_i32_0 = arith.constant 0 : i32
    return %c0_i32, %arg1 : i32, i32
  }
  func.func @transform_5(%arg0: i32, %arg1: i32, %arg2: i32) -> (i32, i32) {
    %c0_i32 = arith.constant 0 : i32
    %c0_i32_0 = arith.constant 0 : i32
    return %c0_i32, %arg1 : i32, i32
  }
  func.func @transform_6(%arg0: i32, %arg1: i32, %arg2: i32) -> (i32, i32) {
    %c0_i32 = arith.constant 0 : i32
    return %arg0, %arg1 : i32, i32
  }
}

module attributes {stable_mosaic.version = 11 : i64} {
  func.func @_ffn_ln_kernel(%arg0: i32, %arg1: memref<96x32xbf16, #tpu.memory_space<vmem>>, %arg2: memref<32x64xbf16, #tpu.memory_space<vmem>>, %arg3: memref<1x64xf32, #tpu.memory_space<vmem>>, %arg4: memref<64x32xbf16, #tpu.memory_space<vmem>>, %arg5: memref<1x32xf32, #tpu.memory_space<vmem>>, %arg6: memref<1x32xf32, #tpu.memory_space<vmem>>, %arg7: memref<1x32xf32, #tpu.memory_space<vmem>>, %arg8: memref<96x32xbf16, #tpu.memory_space<vmem>>) attributes {dimension_semantics = [#tpu.dimension_semantics<parallel>], iteration_bounds = array<i64: 1>, scalar_prefetch = 0 : i64, scratch_operands = 0 : i64, tpu.core_type = #tpu.core_type<tc>, window_params = [{transform_indices = @transform_0, window_bounds = array<i64: 96, 32>}, {pipeline_mode = #tpu.pipeline_mode<synchronous>, transform_indices = @transform_1, window_bounds = array<i64: 32, 64>}, {pipeline_mode = #tpu.pipeline_mode<synchronous>, transform_indices = @transform_2, window_bounds = array<i64: 1, 64>}, {pipeline_mode = #tpu.pipeline_mode<synchronous>, transform_indices = @transform_3, window_bounds = array<i64: 64, 32>}, {pipeline_mode = #tpu.pipeline_mode<synchronous>, transform_indices = @transform_4, window_bounds = array<i64: 1, 32>}, {pipeline_mode = #tpu.pipeline_mode<synchronous>, transform_indices = @transform_5, window_bounds = array<i64: 1, 32>}, {pipeline_mode = #tpu.pipeline_mode<synchronous>, transform_indices = @transform_6, window_bounds = array<i64: 1, 32>}, {transform_indices = @transform_7, window_bounds = array<i64: 96, 32>}]} {
    %c0 = arith.constant 0 : index
    %c0_0 = arith.constant 0 : index
    %0 = vector.load %arg1[%c0, %c0_0] : memref<96x32xbf16, #tpu.memory_space<vmem>>, vector<96x32xbf16>
    %c0_1 = arith.constant 0 : index
    %c0_2 = arith.constant 0 : index
    %1 = vector.load %arg2[%c0_1, %c0_2] : memref<32x64xbf16, #tpu.memory_space<vmem>>, vector<32x64xbf16>
    %cst = arith.constant dense<0.000000e+00> : vector<96x64xf32>
    %2 = tpu.matmul %0, %1, %cst {dimension_numbers = #tpu.dot_dimension_numbers<[1], [0], [0], [1], [0, 0, 1, 1], [], []>} : vector<96x32xbf16>, vector<32x64xbf16>, vector<96x64xf32> -> vector<96x64xf32>
    %c0_3 = arith.constant 0 : index
    %c0_4 = arith.constant 0 : index
    %3 = vector.load %arg3[%c0_3, %c0_4] : memref<1x64xf32, #tpu.memory_space<vmem>>, vector<1x64xf32>
    %4 = vector.broadcast %3 : vector<1x64xf32> to vector<96x64xf32>
    %5 = arith.addf %2, %4 : vector<96x64xf32>
    %cst_5 = arith.constant 5.000000e-01 : f32
    %6 = vector.broadcast %cst_5 : f32 to vector<96x64xf32>
    %7 = arith.mulf %6, %5 : vector<96x64xf32>
    %cst_6 = arith.constant 0.707106769 : f32
    %8 = vector.broadcast %cst_6 : f32 to vector<96x64xf32>
    %9 = arith.mulf %5, %8 : vector<96x64xf32>
    %10 = math.erf %9 : vector<96x64xf32>
    %cst_7 = arith.constant 1.000000e+00 : f32
    %11 = vector.broadcast %cst_7 : f32 to vector<96x64xf32>
    %12 = arith.addf %11, %10 : vector<96x64xf32>
    %13 = arith.mulf %7, %12 : vector<96x64xf32>
    %14 = arith.truncf %13 : vector<96x64xf32> to vector<96x64xbf16>
    %c0_8 = arith.constant 0 : index
    %c0_9 = arith.constant 0 : index
    %15 = vector.load %arg4[%c0_8, %c0_9] : memref<64x32xbf16, #tpu.memory_space<vmem>>, vector<64x32xbf16>
    %cst_10 = arith.constant dense<0.000000e+00> : vector<96x32xf32>
    %16 = tpu.matmul %14, %15, %cst_10 {dimension_numbers = #tpu.dot_dimension_numbers<[1], [0], [0], [1], [0, 0, 1, 1], [], []>} : vector<96x64xbf16>, vector<64x32xbf16>, vector<96x32xf32> -> vector<96x32xf32>
    %c0_11 = arith.constant 0 : index
    %c0_12 = arith.constant 0 : index
    %17 = vector.load %arg5[%c0_11, %c0_12] : memref<1x32xf32, #tpu.memory_space<vmem>>, vector<1x32xf32>
    %18 = vector.broadcast %17 : vector<1x32xf32> to vector<96x32xf32>
    %19 = arith.addf %16, %18 : vector<96x32xf32>
    %20 = arith.extf %0 : vector<96x32xbf16> to vector<96x32xf32>
    %21 = arith.addf %19, %20 : vector<96x32xf32>
    %cst_13 = arith.constant dense<0.000000e+00> : vector<96xf32>
    %22 = vector.multi_reduction <add>, %21, %cst_13 [1] : vector<96x32xf32> to vector<96xf32>
    %23 = vector.shape_cast %22 : vector<96xf32> to vector<96x1xf32>
    %cst_14 = arith.constant 3.200000e+01 : f32
    %24 = vector.broadcast %cst_14 : f32 to vector<96x1xf32>
    %25 = arith.divf %23, %24 : vector<96x1xf32>
    %26 = vector.broadcast %25 : vector<96x1xf32> to vector<96x32xf32>
    %27 = arith.subf %21, %26 : vector<96x32xf32>
    %28 = arith.mulf %27, %27 : vector<96x32xf32>
    %cst_15 = arith.constant dense<0.000000e+00> : vector<96xf32>
    %29 = vector.multi_reduction <add>, %28, %cst_15 [1] : vector<96x32xf32> to vector<96xf32>
    %30 = vector.shape_cast %29 : vector<96xf32> to vector<96x1xf32>
    %cst_16 = arith.constant 3.200000e+01 : f32
    %31 = vector.broadcast %cst_16 : f32 to vector<96x1xf32>
    %32 = arith.divf %30, %31 : vector<96x1xf32>
    %33 = vector.broadcast %25 : vector<96x1xf32> to vector<96x32xf32>
    %34 = arith.subf %21, %33 : vector<96x32xf32>
    %cst_17 = arith.constant 9.99999996E-13 : f32
    %35 = vector.broadcast %cst_17 : f32 to vector<96x1xf32>
    %36 = arith.addf %32, %35 : vector<96x1xf32>
    %37 = math.rsqrt %36 : vector<96x1xf32>
    %38 = vector.broadcast %37 : vector<96x1xf32> to vector<96x32xf32>
    %39 = arith.mulf %34, %38 : vector<96x32xf32>
    %c0_18 = arith.constant 0 : index
    %c0_19 = arith.constant 0 : index
    %40 = vector.load %arg6[%c0_18, %c0_19] : memref<1x32xf32, #tpu.memory_space<vmem>>, vector<1x32xf32>
    %41 = vector.broadcast %40 : vector<1x32xf32> to vector<96x32xf32>
    %42 = arith.mulf %39, %41 : vector<96x32xf32>
    %c0_20 = arith.constant 0 : index
    %c0_21 = arith.constant 0 : index
    %43 = vector.load %arg7[%c0_20, %c0_21] : memref<1x32xf32, #tpu.memory_space<vmem>>, vector<1x32xf32>
    %44 = vector.broadcast %43 : vector<1x32xf32> to vector<96x32xf32>
    %45 = arith.addf %42, %44 : vector<96x32xf32>
    %46 = arith.truncf %45 : vector<96x32xf32> to vector<96x32xbf16>
    %c0_22 = arith.constant 0 : index
    %c0_23 = arith.constant 0 : index
    %47 = vector.load %arg8[%c0_22, %c0_23] : memref<96x32xbf16, #tpu.memory_space<vmem>>, vector<96x32xbf16>
    tpu.vector_store %arg8[%c0_22, %c0_23], %46 {strides = array<i32>} : memref<96x32xbf16, #tpu.memory_space<vmem>>, vector<96x32xbf16>,
    return
  }
  func.func @transform_0(%arg0: i32) -> (i32, i32) {
    %c0_i32 = arith.constant 0 : i32
    %c0_i32_0 = arith.constant 0 : i32
    return %arg0, %c0_i32 : i32, i32
  }
  func.func @transform_1(%arg0: i32) -> (i32, i32) {
    %c0_i32 = arith.constant 0 : i32
    %c0_i32_0 = arith.constant 0 : i32
    %c0_i32_1 = arith.constant 0 : i32
    return %c0_i32, %c0_i32_0 : i32, i32
  }
  func.func @transform_2(%arg0: i32) -> (i32, i32) {
    %c0_i32 = arith.constant 0 : i32
    %c0_i32_0 = arith.constant 0 : i32
    %c0_i32_1 = arith.constant 0 : i32
    return %c0_i32, %c0_i32_0 : i32, i32
  }
  func.func @transform_3(%arg0: i32) -> (i32, i32) {
    %c0_i32 = arith.constant 0 : i32
    %c0_i32_0 = arith.constant 0 : i32
    %c0_i32_1 = arith.constant 0 : i32
    return %c0_i32, %c0_i32_0 : i32, i32
  }
  func.func @transform_4(%arg0: i32) -> (i32, i32) {
    %c0_i32 = arith.constant 0 : i32
    %c0_i32_0 = arith.constant 0 : i32
    %c0_i32_1 = arith.constant 0 : i32
    return %c0_i32, %c0_i32_0 : i32, i32
  }
  func.func @transform_5(%arg0: i32) -> (i32, i32) {
    %c0_i32 = arith.constant 0 : i32
    %c0_i32_0 = arith.constant 0 : i32
    %c0_i32_1 = arith.constant 0 : i32
    return %c0_i32, %c0_i32_0 : i32, i32
  }
  func.func @transform_6(%arg0: i32) -> (i32, i32) {
    %c0_i32 = arith.constant 0 : i32
    %c0_i32_0 = arith.constant 0 : i32
    %c0_i32_1 = arith.constant 0 : i32
    return %c0_i32, %c0_i32_0 : i32, i32
  }
  func.func @transform_7(%arg0: i32) -> (i32, i32) {
    %c0_i32 = arith.constant 0 : i32
    %c0_i32_0 = arith.constant 0 : i32
    return %arg0, %c0_i32 : i32, i32
  }
}

module attributes {stable_mosaic.version = 11 : i64} {
  func.func @_head_kernel(%arg0: memref<6x32xbf16, #tpu.memory_space<vmem>>, %arg1: memref<32x32xbf16, #tpu.memory_space<vmem>>, %arg2: memref<1x32xf32, #tpu.memory_space<vmem>>, %arg3: memref<32x256xbf16, #tpu.memory_space<vmem>>, %arg4: memref<1x256xf32, #tpu.memory_space<vmem>>, %arg5: memref<256x1xbf16, #tpu.memory_space<vmem>>, %arg6: memref<1x1xf32, #tpu.memory_space<vmem>>, %arg7: memref<6x1xf32, #tpu.memory_space<vmem>>) attributes {dimension_semantics = [], scalar_prefetch = 0 : i64, scratch_operands = 0 : i64, tpu.core_type = #tpu.core_type<tc>} {
    %c0 = arith.constant 0 : index
    %c0_0 = arith.constant 0 : index
    %0 = vector.load %arg0[%c0, %c0_0] : memref<6x32xbf16, #tpu.memory_space<vmem>>, vector<6x32xbf16>
    %c0_1 = arith.constant 0 : index
    %c0_2 = arith.constant 0 : index
    %1 = vector.load %arg1[%c0_1, %c0_2] : memref<32x32xbf16, #tpu.memory_space<vmem>>, vector<32x32xbf16>
    %cst = arith.constant dense<0.000000e+00> : vector<6x32xf32>
    %2 = tpu.matmul %0, %1, %cst {dimension_numbers = #tpu.dot_dimension_numbers<[1], [0], [0], [1], [0, 0, 1, 1], [], []>} : vector<6x32xbf16>, vector<32x32xbf16>, vector<6x32xf32> -> vector<6x32xf32>
    %c0_3 = arith.constant 0 : index
    %c0_4 = arith.constant 0 : index
    %3 = vector.load %arg2[%c0_3, %c0_4] : memref<1x32xf32, #tpu.memory_space<vmem>>, vector<1x32xf32>
    %4 = vector.broadcast %3 : vector<1x32xf32> to vector<6x32xf32>
    %5 = arith.addf %2, %4 : vector<6x32xf32>
    %6 = math.tanh %5 : vector<6x32xf32>
    %7 = arith.truncf %6 : vector<6x32xf32> to vector<6x32xbf16>
    %c0_5 = arith.constant 0 : index
    %c0_6 = arith.constant 0 : index
    %8 = vector.load %arg3[%c0_5, %c0_6] : memref<32x256xbf16, #tpu.memory_space<vmem>>, vector<32x256xbf16>
    %cst_7 = arith.constant dense<0.000000e+00> : vector<6x256xf32>
    %9 = tpu.matmul %7, %8, %cst_7 {dimension_numbers = #tpu.dot_dimension_numbers<[1], [0], [0], [1], [0, 0, 1, 1], [], []>} : vector<6x32xbf16>, vector<32x256xbf16>, vector<6x256xf32> -> vector<6x256xf32>
    %c0_8 = arith.constant 0 : index
    %c0_9 = arith.constant 0 : index
    %10 = vector.load %arg4[%c0_8, %c0_9] : memref<1x256xf32, #tpu.memory_space<vmem>>, vector<1x256xf32>
    %11 = vector.broadcast %10 : vector<1x256xf32> to vector<6x256xf32>
    %12 = arith.addf %9, %11 : vector<6x256xf32>
    %cst_10 = arith.constant 5.000000e-01 : f32
    %13 = vector.broadcast %cst_10 : f32 to vector<6x256xf32>
    %14 = arith.mulf %13, %12 : vector<6x256xf32>
    %cst_11 = arith.constant 0.707106769 : f32
    %15 = vector.broadcast %cst_11 : f32 to vector<6x256xf32>
    %16 = arith.mulf %12, %15 : vector<6x256xf32>
    %17 = math.erf %16 : vector<6x256xf32>
    %cst_12 = arith.constant 1.000000e+00 : f32
    %18 = vector.broadcast %cst_12 : f32 to vector<6x256xf32>
    %19 = arith.addf %18, %17 : vector<6x256xf32>
    %20 = arith.mulf %14, %19 : vector<6x256xf32>
    %21 = arith.truncf %20 : vector<6x256xf32> to vector<6x256xbf16>
    %c0_13 = arith.constant 0 : index
    %c0_14 = arith.constant 0 : index
    %22 = vector.load %arg5[%c0_13, %c0_14] : memref<256x1xbf16, #tpu.memory_space<vmem>>, vector<256x1xbf16>
    %cst_15 = arith.constant dense<0.000000e+00> : vector<6x1xf32>
    %23 = tpu.matmul %21, %22, %cst_15 {dimension_numbers = #tpu.dot_dimension_numbers<[1], [0], [0], [1], [0, 0, 1, 1], [], []>} : vector<6x256xbf16>, vector<256x1xbf16>, vector<6x1xf32> -> vector<6x1xf32>
    %c0_16 = arith.constant 0 : index
    %c0_17 = arith.constant 0 : index
    %24 = vector.load %arg6[%c0_16, %c0_17] : memref<1x1xf32, #tpu.memory_space<vmem>>, vector<1x1xf32>
    %25 = vector.broadcast %24 : vector<1x1xf32> to vector<6x1xf32>
    %26 = arith.addf %23, %25 : vector<6x1xf32>
    %c0_18 = arith.constant 0 : index
    %c0_19 = arith.constant 0 : index
    %27 = vector.load %arg7[%c0_18, %c0_19] : memref<6x1xf32, #tpu.memory_space<vmem>>, vector<6x1xf32>
    tpu.vector_store %arg7[%c0_18, %c0_19], %26 {strides = array<i32>} : memref<6x1xf32, #tpu.memory_space<vmem>>, vector<6x1xf32>,
    return
  }
}

</mosaic_0001>

<llo_original>
// kernel: reranker_forward.10
$region0: #{reranker_forward.10}
  #allocation0 [shape = 'u32[]', space=smem, size = 0x4, offset = 0x4, fixed_abs, tag = 'smem constant byte address 0x4 - core index']
  #allocation1 [shape = 'u32[144,128]{1,0:T(1,128)}', space=vmem, size = 0x12000, scoped, tag = 'internal scratch']
  %s0 = inlined_call_operand.vmem [shape: f32[96,32], index: 0, kind: input, shape index: {}]
  %s1 = inlined_call_operand.vmem [shape: f32[1,32], index: 1, kind: input, shape index: {}]
  %s2 = inlined_call_operand.vmem [shape: f32[1,32], index: 2, kind: input, shape index: {}]
  %s3 = inlined_call_operand.vmem [shape: bf16[96,32], index: 3, kind: output, shape index: {}]
  %s4 = sld [smem:[#allocation0]]
  $region22: #{reranker_forward.10} parent=0
    _
  %s6 = ssub.s32 1, %s4
  %s7 = scalar_select 0, %s6, %s4
  // Predicated region
  $region2: #{reranker_forward.10} parent=0 // pred_check
    _
  $region3: #{reranker_forward.10} parent=0 // pred_check_branch
    %9 = sbr.rel (0) target = $region5
  $region4: #{reranker_forward.10} parent=0 // pred_region
    _
  $region5: #{reranker_forward.10} parent=0 // pred_fallthru
    _
  // Predicated region
  $region6: #{reranker_forward.10} parent=0 // pred_check
    _
  $region7: #{reranker_forward.10} parent=0 // pred_check_branch
    %11 = sbr.rel (0) target = $region9
  $region8: #{reranker_forward.10} parent=0 // pred_region
    _
  $region9: #{reranker_forward.10} parent=0 // pred_fallthru
    _
  // Predicated region
  $region10: #{reranker_forward.10} parent=0 // pred_check
    _
  $region11: #{reranker_forward.10} parent=0 // pred_check_branch
    %13 = sbr.rel (0) target = $region13
  $region12: #{reranker_forward.10} parent=0 // pred_region
    _
  $region13: #{reranker_forward.10} parent=0 // pred_fallthru
    _
  %v14 = vld [vmem:[%s0] sm:$0xff]
  %v15 = vld [vmem:[%s0 + $0x8] sm:$0xff]
  %v16 = vld [vmem:[%s0 + $0x10] sm:$0xff]
  %v17 = vld [vmem:[%s0 + $0x18] sm:$0xff]
  %v18 = vld [vmem:[%s0 + $0x20] sm:$0xff]
  %v19 = vld [vmem:[%s0 + $0x28] sm:$0xff]
  %v20 = vld [vmem:[%s0 + $0x30] sm:$0xff]
  %v21 = vld [vmem:[%s0 + $0x38] sm:$0xff]
  %v22 = vld [vmem:[%s0 + $0x40] sm:$0xff]
  %v23 = vld [vmem:[%s0 + $0x48] sm:$0xff]
  %v24 = vld [vmem:[%s0 + $0x50] sm:$0xff]
  %v25 = vld [vmem:[%s0 + $0x58] sm:$0xff]
  %vm26 = vcmask 261120
  %v27 = vsel %vm26, %v14, 0.0
  %28 = vadd.xlane.f32.xlu0 %v27
  %v29 = vpop.xlane.xlu0 %28
  %v30 = vsel %vm26, %v15, 0.0
  %31 = vadd.xlane.f32.xlu0 %v30
  %v32 = vpop.xlane.xlu0 %31
  %v33 = vsel %vm26, %v16, 0.0
  %34 = vadd.xlane.f32.xlu0 %v33
  %v35 = vpop.xlane.xlu0 %34
  %v36 = vsel %vm26, %v17, 0.0
  %37 = vadd.xlane.f32.xlu0 %v36
  %v38 = vpop.xlane.xlu0 %37
  %v39 = vsel %vm26, %v18, 0.0
  %40 = vadd.xlane.f32.xlu0 %v39
  %v41 = vpop.xlane.xlu0 %40
  %v42 = vsel %vm26, %v19, 0.0
  %43 = vadd.xlane.f32.xlu0 %v42
  %v44 = vpop.xlane.xlu0 %43
  %v45 = vsel %vm26, %v20, 0.0
  %46 = vadd.xlane.f32.xlu0 %v45
  %v47 = vpop.xlane.xlu0 %46
  %v48 = vsel %vm26, %v21, 0.0
  %49 = vadd.xlane.f32.xlu0 %v48
  %v50 = vpop.xlane.xlu0 %49
  %v51 = vsel %vm26, %v22, 0.0
  %52 = vadd.xlane.f32.xlu0 %v51
  %v53 = vpop.xlane.xlu0 %52
  %v54 = vsel %vm26, %v23, 0.0
  %55 = vadd.xlane.f32.xlu0 %v54
  %v56 = vpop.xlane.xlu0 %55
  %v57 = vsel %vm26, %v24, 0.0
  %58 = vadd.xlane.f32.xlu0 %v57
  %v59 = vpop.xlane.xlu0 %58
  %v60 = vsel %vm26, %v25, 0.0
  %61 = vadd.xlane.f32.xlu0 %v60
  %v62 = vpop.xlane.xlu0 %61
  %v63 = vrcp.pop 32.0
  %v64 = vmul.f32 %v29, %v63
  %v65 = vmul.f32 %v32, %v63
  %v66 = vmul.f32 %v35, %v63
  %v67 = vmul.f32 %v38, %v63
  %v68 = vmul.f32 %v41, %v63
  %v69 = vmul.f32 %v44, %v63
  %v70 = vmul.f32 %v47, %v63
  %v71 = vmul.f32 %v50, %v63
  %v72 = vmul.f32 %v53, %v63
  %v73 = vmul.f32 %v56, %v63
  %v74 = vmul.f32 %v59, %v63
  %v75 = vmul.f32 %v62, %v63
  %v76 = vsub.f32 %v14, %v64
  %v77 = vsub.f32 %v15, %v65
  %v78 = vsub.f32 %v16, %v66
  %v79 = vsub.f32 %v17, %v67
  %v80 = vsub.f32 %v18, %v68
  %v81 = vsub.f32 %v19, %v69
  %v82 = vsub.f32 %v20, %v70
  %v83 = vsub.f32 %v21, %v71
  %v84 = vsub.f32 %v22, %v72
  %v85 = vsub.f32 %v23, %v73
  %v86 = vsub.f32 %v24, %v74
  %v87 = vsub.f32 %v25, %v75
  %v88 = vmul.f32 %v76, %v76
  %v89 = vmul.f32 %v77, %v77
  %v90 = vmul.f32 %v78, %v78
  %v91 = vmul.f32 %v79, %v79
  %v92 = vmul.f32 %v80, %v80
  %v93 = vmul.f32 %v81, %v81
  %v94 = vmul.f32 %v82, %v82
  %v95 = vmul.f32 %v83, %v83
  %v96 = vmul.f32 %v84, %v84
  %v97 = vmul.f32 %v85, %v85
  %v98 = vmul.f32 %v86, %v86
  %v99 = vmul.f32 %v87, %v87
  %v100 = vsel %vm26, %v88, 0.0
  %101 = vadd.xlane.f32.xlu0 %v100
  %v102 = vpop.xlane.xlu0 %101
  %v103 = vsel %vm26, %v89, 0.0
  %104 = vadd.xlane.f32.xlu0 %v103
  %v105 = vpop.xlane.xlu0 %104
  %v106 = vsel %vm26, %v90, 0.0
  %107 = vadd.xlane.f32.xlu0 %v106
  %v108 = vpop.xlane.xlu0 %107
  %v109 = vsel %vm26, %v91, 0.0
  %110 = vadd.xlane.f32.xlu0 %v109
  %v111 = vpop.xlane.xlu0 %110
  %v112 = vsel %vm26, %v92, 0.0
  %113 = vadd.xlane.f32.xlu0 %v112
  %v114 = vpop.xlane.xlu0 %113
  %v115 = vsel %vm26, %v93, 0.0
  %116 = vadd.xlane.f32.xlu0 %v115
  %v117 = vpop.xlane.xlu0 %116
  %v118 = vsel %vm26, %v94, 0.0
  %119 = vadd.xlane.f32.xlu0 %v118
  %v120 = vpop.xlane.xlu0 %119
  %v121 = vsel %vm26, %v95, 0.0
  %122 = vadd.xlane.f32.xlu0 %v121
  %v123 = vpop.xlane.xlu0 %122
  %v124 = vsel %vm26, %v96, 0.0
  %125 = vadd.xlane.f32.xlu0 %v124
  %v126 = vpop.xlane.xlu0 %125
  %v127 = vsel %vm26, %v97, 0.0
  %128 = vadd.xlane.f32.xlu0 %v127
  %v129 = vpop.xlane.xlu0 %128
  %v130 = vsel %vm26, %v98, 0.0
  %131 = vadd.xlane.f32.xlu0 %v130
  %v132 = vpop.xlane.xlu0 %131
  %v133 = vsel %vm26, %v99, 0.0
  %134 = vadd.xlane.f32.xlu0 %v133
  %v135 = vpop.xlane.xlu0 %134
  %v136 = vmul.f32 %v102, %v63
  %v137 = vmul.f32 %v105, %v63
  %v138 = vmul.f32 %v108, %v63
  %v139 = vmul.f32 %v111, %v63
  %v140 = vmul.f32 %v114, %v63
  %v141 = vmul.f32 %v117, %v63
  %v142 = vmul.f32 %v120, %v63
  %v143 = vmul.f32 %v123, %v63
  %v144 = vmul.f32 %v126, %v63
  %v145 = vmul.f32 %v129, %v63
  %v146 = vmul.f32 %v132, %v63
  %v147 = vmul.f32 %v135, %v63
  %v148 = vadd.f32 %v136, 1e-12
  %v149 = vadd.f32 %v137, 1e-12
  %v150 = vadd.f32 %v138, 1e-12
  %v151 = vadd.f32 %v139, 1e-12
  %v152 = vadd.f32 %v140, 1e-12
  %v153 = vadd.f32 %v141, 1e-12
  %v154 = vadd.f32 %v142, 1e-12
  %v155 = vadd.f32 %v143, 1e-12
  %v156 = vadd.f32 %v144, 1e-12
  %v157 = vadd.f32 %v145, 1e-12
  %v158 = vadd.f32 %v146, 1e-12
  %v159 = vadd.f32 %v147, 1e-12
  %v160 = vrsqrt.pop %v148
  %v161 = vrsqrt.pop %v149
  %v162 = vrsqrt.pop %v150
  %v163 = vrsqrt.pop %v151
  %v164 = vrsqrt.pop %v152
  %v165 = vrsqrt.pop %v153
  %v166 = vrsqrt.pop %v154
  %v167 = vrsqrt.pop %v155
  %v168 = vrsqrt.pop %v156
  %v169 = vrsqrt.pop %v157
  %v170 = vrsqrt.pop %v158
  %v171 = vrsqrt.pop %v159
  %v172 = vmul.f32 %v76, %v160
  %v173 = vmul.f32 %v77, %v161
  %v174 = vmul.f32 %v78, %v162
  %v175 = vmul.f32 %v79, %v163
  %v176 = vmul.f32 %v80, %v164
  %v177 = vmul.f32 %v81, %v165
  %v178 = vmul.f32 %v82, %v166
  %v179 = vmul.f32 %v83, %v167
  %v180 = vmul.f32 %v84, %v168
  %v181 = vmul.f32 %v85, %v169
  %v182 = vmul.f32 %v86, %v170
  %v183 = vmul.f32 %v87, %v171
  %v184 = vld [vmem:[%s1] sm:$0x1]
  %v186 = vlaneseq
  %v187 = vshrl.u32 %v186, 7
  %v188 = vsub.s32 0, %v187
  %v189 = vrot.slane %v184, %v188
  %v191 = vmul.f32 %v172, %v189
  %v192 = vmul.f32 %v173, %v189
  %v193 = vmul.f32 %v174, %v189
  %v194 = vmul.f32 %v175, %v189
  %v195 = vmul.f32 %v176, %v189
  %v196 = vmul.f32 %v177, %v189
  %v197 = vmul.f32 %v178, %v189
  %v198 = vmul.f32 %v179, %v189
  %v199 = vmul.f32 %v180, %v189
  %v200 = vmul.f32 %v181, %v189
  %v201 = vmul.f32 %v182, %v189
  %v202 = vmul.f32 %v183, %v189
  %v203 = vld [vmem:[%s2] sm:$0x1]
  %v205 = vlaneseq
  %v206 = vshrl.u32 %v205, 7
  %v207 = vsub.s32 0, %v206
  %v208 = vrot.slane %v203, %v207
  %v210 = vadd.f32 %v191, %v208
  %v211 = vadd.f32 %v192, %v208
  %v212 = vadd.f32 %v193, %v208
  %v213 = vadd.f32 %v194, %v208
  %v214 = vadd.f32 %v195, %v208
  %v215 = vadd.f32 %v196, %v208
  %v216 = vadd.f32 %v197, %v208
  %v217 = vadd.f32 %v198, %v208
  %v218 = vadd.f32 %v199, %v208
  %v219 = vadd.f32 %v200, %v208
  %v220 = vadd.f32 %v201, %v208
  %v221 = vadd.f32 %v202, %v208
  %v222 = vpack.c.bf16 %v211, %v210
  %v223 = vpack.c.bf16 %v213, %v212
  %v224 = vpack.c.bf16 %v215, %v214
  %v225 = vpack.c.bf16 %v217, %v216
  %v226 = vpack.c.bf16 %v219, %v218
  %v227 = vpack.c.bf16 %v221, %v220
  %v234 = vunpack.c.l.b16 %v222
  %v235 = vunpack.c.h.b16 %v222
  %v236 = vunpack.c.l.b16 %v223
  %v237 = vunpack.c.h.b16 %v223
  %v238 = vunpack.c.l.b16 %v224
  %v239 = vunpack.c.h.b16 %v224
  %v240 = vunpack.c.l.b16 %v225
  %v241 = vunpack.c.h.b16 %v225
  %v242 = vunpack.c.l.b16 %v226
  %v243 = vunpack.c.h.b16 %v226
  %v244 = vunpack.c.l.b16 %v227
  %v245 = vunpack.c.h.b16 %v227
  %v246 = vpack.c.b16 %v234, %v234
  %v247 = vpack.c.b16 %v235, %v235
  %v248 = vpack.c.b16 %v236, %v236
  %v249 = vpack.c.b16 %v237, %v237
  %v250 = vpack.c.b16 %v238, %v238
  %v251 = vpack.c.b16 %v239, %v239
  %v252 = vpack.c.b16 %v240, %v240
  %v253 = vpack.c.b16 %v241, %v241
  %v254 = vpack.c.b16 %v242, %v242
  %v255 = vpack.c.b16 %v243, %v243
  %v256 = vpack.c.b16 %v244, %v244
  %v257 = vpack.c.b16 %v245, %v245
  %vm270 = vcmask 257024
  %271 = vst.msk [vmem:[%s3] sm:$0xf] %vm270, %v246
  %272 = vst.msk [vmem:[%s3 + $0x4] sm:$0xf] %vm270, %v247
  %273 = vst.msk [vmem:[%s3 + $0x8] sm:$0xf] %vm270, %v248
  %274 = vst.msk [vmem:[%s3 + $0xc] sm:$0xf] %vm270, %v249
  %275 = vst.msk [vmem:[%s3 + $0x10] sm:$0xf] %vm270, %v250
  %276 = vst.msk [vmem:[%s3 + $0x14] sm:$0xf] %vm270, %v251
  %277 = vst.msk [vmem:[%s3 + $0x18] sm:$0xf] %vm270, %v252
  %278 = vst.msk [vmem:[%s3 + $0x1c] sm:$0xf] %vm270, %v253
  %279 = vst.msk [vmem:[%s3 + $0x20] sm:$0xf] %vm270, %v254
  %280 = vst.msk [vmem:[%s3 + $0x24] sm:$0xf] %vm270, %v255
  %281 = vst.msk [vmem:[%s3 + $0x28] sm:$0xf] %vm270, %v256
  %282 = vst.msk [vmem:[%s3 + $0x2c] sm:$0xf] %vm270, %v257
  // Predicated region
  $region14: #{reranker_forward.10} parent=0 // pred_check
    _
  $region15: #{reranker_forward.10} parent=0 // pred_check_branch
    %284 = sbr.rel (0) target = $region17
  $region16: #{reranker_forward.10} parent=0 // pred_region
    _
  $region17: #{reranker_forward.10} parent=0 // pred_fallthru
    _
  // Predicated region
  $region18: #{reranker_forward.10} parent=0 // pred_check
    _
  $region19: #{reranker_forward.10} parent=0 // pred_check_branch
    %286 = sbr.rel (0) target = $region21
  $region20: #{reranker_forward.10} parent=0 // pred_region
    _
  $region21: #{reranker_forward.10} parent=0 // pred_fallthru
    _

// kernel: reranker_forward.13
$region0: #{reranker_forward.13}
  #allocation0 [shape = 'u32[]', space=smem, size = 0x4, offset = 0x4, fixed_abs, tag = 'smem constant byte address 0x4 - core index']
  #allocation1 [shape = 'u32[144,128]{1,0:T(1,128)}', space=vmem, size = 0x12000, scoped, tag = 'internal scratch']
  #allocation2 [shape = 'f32[96,32]{1,0:T(8,128)}', space=vmem, size = 0xc000, scoped, tag = 'scratch operand']
  %s0 = inlined_call_operand.vmem [shape: bf16[96,32], index: 0, kind: input, shape index: {}]
  %s1 = inlined_call_operand.vmem [shape: bf16[32,32], index: 1, kind: input, shape index: {}]
  %s2 = inlined_call_operand.vmem [shape: f32[1,32], index: 2, kind: input, shape index: {}]
  %s3 = inlined_call_operand.vmem [shape: bf16[96,32], index: 3, kind: input, shape index: {}]
  %s4 = inlined_call_operand.vmem [shape: f32[1,32], index: 4, kind: input, shape index: {}]
  %s5 = inlined_call_operand.vmem [shape: f32[1,32], index: 5, kind: input, shape index: {}]
  %s6 = inlined_call_operand.vmem [shape: bf16[96,32], index: 6, kind: output, shape index: {}]
  %s7 = sld [smem:[#allocation0]]
  $region42: #{reranker_forward.13} parent=0
    _
  %s9 = ssub.s32 1, %s7
  %s10 = scalar_select 0, %s9, %s7
  // Predicated region
  $region2: #{reranker_forward.13} parent=0 // pred_check
    _
  $region3: #{reranker_forward.13} parent=0 // pred_check_branch
    %12 = sbr.rel (0) target = $region5
  $region4: #{reranker_forward.13} parent=0 // pred_region
    _
  $region5: #{reranker_forward.13} parent=0 // pred_fallthru
    _
  // Predicated region
  $region6: #{reranker_forward.13} parent=0 // pred_check
    _
  $region7: #{reranker_forward.13} parent=0 // pred_check_branch
    %14 = sbr.rel (0) target = $region9
  $region8: #{reranker_forward.13} parent=0 // pred_region
    _
  $region9: #{reranker_forward.13} parent=0 // pred_fallthru
    _
  // Predicated region
  $region10: #{reranker_forward.13} parent=0 // pred_check
    _
  $region11: #{reranker_forward.13} parent=0 // pred_check_branch
    %16 = sbr.rel (0) target = $region13
  $region12: #{reranker_forward.13} parent=0 // pred_region
    _
  $region13: #{reranker_forward.13} parent=0 // pred_fallthru
    _
  // Predicated region
  $region14: #{reranker_forward.13} parent=0 // pred_check
    _
  $region15: #{reranker_forward.13} parent=0 // pred_check_branch
    %18 = sbr.rel (0) target = $region17
  $region16: #{reranker_forward.13} parent=0 // pred_region
    _
  $region17: #{reranker_forward.13} parent=0 // pred_fallthru
    _
  // Predicated region
  $region18: #{reranker_forward.13} parent=0 // pred_check
    _
  $region19: #{reranker_forward.13} parent=0 // pred_check_branch
    %20 = sbr.rel (0) target = $region21
  $region20: #{reranker_forward.13} parent=0 // pred_region
    _
  $region21: #{reranker_forward.13} parent=0 // pred_fallthru
    _
  // Predicated region
  $region22: #{reranker_forward.13} parent=0 // pred_check
    _
  $region23: #{reranker_forward.13} parent=0 // pred_check_branch
    %22 = sbr.rel (0) target = $region25
  $region24: #{reranker_forward.13} parent=0 // pred_region
    _
  $region25: #{reranker_forward.13} parent=0 // pred_fallthru
    _
  %p24 = scmp.eq.s32.totalorder 0, 0
  // Predicated region
  $region26: #{reranker_forward.13} parent=0 // pred_check
    %p25 = pneg %p24
  $region27: #{reranker_forward.13} parent=0 // pred_check_branch
    %27 = sbr.rel (%p25) target = $region29
  $region28: #{reranker_forward.13} parent=0 // pred_region
    %vm28 = vcmask 261120
    %29 = vst.msk [vmem:[#allocation2] sm:$0xff] %vm28, 0.0
    %30 = vst.msk [vmem:[#allocation2 + $0x8] sm:$0xff] %vm28, 0.0
    %31 = vst.msk [vmem:[#allocation2 + $0x10] sm:$0xff] %vm28, 0.0
    %32 = vst.msk [vmem:[#allocation2 + $0x18] sm:$0xff] %vm28, 0.0
    %33 = vst.msk [vmem:[#allocation2 + $0x20] sm:$0xff] %vm28, 0.0
    %34 = vst.msk [vmem:[#allocation2 + $0x28] sm:$0xff] %vm28, 0.0
    %35 = vst.msk [vmem:[#allocation2 + $0x30] sm:$0xff] %vm28, 0.0
    %36 = vst.msk [vmem:[#allocation2 + $0x38] sm:$0xff] %vm28, 0.0
    %37 = vst.msk [vmem:[#allocation2 + $0x40] sm:$0xff] %vm28, 0.0
    %38 = vst.msk [vmem:[#allocation2 + $0x48] sm:$0xff] %vm28, 0.0
    %39 = vst.msk [vmem:[#allocation2 + $0x50] sm:$0xff] %vm28, 0.0
    %40 = vst.msk [vmem:[#allocation2 + $0x58] sm:$0xff] %vm28, 0.0
  $region29: #{reranker_forward.13} parent=0 // pred_fallthru
    _
  %v41 = vld [vmem:[#allocation2] sm:$0xff]
  %v42 = vld [vmem:[#allocation2 + $0x8] sm:$0xff]
  %v43 = vld [vmem:[#allocation2 + $0x10] sm:$0xff]
  %v44 = vld [vmem:[#allocation2 + $0x18] sm:$0xff]
  %v45 = vld [vmem:[#allocation2 + $0x20] sm:$0xff]
  %v46 = vld [vmem:[#allocation2 + $0x28] sm:$0xff]
  %v47 = vld [vmem:[#allocation2 + $0x30] sm:$0xff]
  %v48 = vld [vmem:[#allocation2 + $0x38] sm:$0xff]
  %v49 = vld [vmem:[#allocation2 + $0x40] sm:$0xff]
  %v50 = vld [vmem:[#allocation2 + $0x48] sm:$0xff]
  %v51 = vld [vmem:[#allocation2 + $0x50] sm:$0xff]
  %v52 = vld [vmem:[#allocation2 + $0x58] sm:$0xff]
  %v53 = vld [vmem:[%s0] sm:$0xf]
  %v54 = vld [vmem:[%s0 + $0x4] sm:$0xf]
  %v55 = vld [vmem:[%s0 + $0x8] sm:$0xf]
  %v56 = vld [vmem:[%s0 + $0xc] sm:$0xf]
  %v57 = vld [vmem:[%s0 + $0x10] sm:$0xf]
  %v58 = vld [vmem:[%s0 + $0x14] sm:$0xf]
  %v59 = vld [vmem:[%s0 + $0x18] sm:$0xf]
  %v60 = vld [vmem:[%s0 + $0x1c] sm:$0xf]
  %v61 = vld [vmem:[%s0 + $0x20] sm:$0xf]
  %v62 = vld [vmem:[%s0 + $0x24] sm:$0xf]
  %v63 = vld [vmem:[%s0 + $0x28] sm:$0xf]
  %v64 = vld [vmem:[%s0 + $0x2c] sm:$0xf]
  %v65 = vld [vmem:[%s1] sm:$0xf]
  %v66 = vld [vmem:[%s1 + $0x4] sm:$0xf]
  %v67 = vld [vmem:[%s1 + $0x8] sm:$0xf]
  %v68 = vld [vmem:[%s1 + $0xc] sm:$0xf]
  %v81 = vunpack.c.l.b16 %v53
  %v82 = vunpack.c.l.b16 %v54
  %v83 = vunpack.c.l.b16 %v55
  %v84 = vunpack.c.l.b16 %v56
  %v85 = vunpack.c.l.b16 %v57
  %v86 = vunpack.c.l.b16 %v58
  %v87 = vunpack.c.l.b16 %v59
  %v88 = vunpack.c.l.b16 %v60
  %v89 = vunpack.c.l.b16 %v61
  %v90 = vunpack.c.l.b16 %v62
  %v91 = vunpack.c.l.b16 %v63
  %v92 = vunpack.c.l.b16 %v64
  %v93 = vpack.c.b16 %v82, %v81
  %v94 = vpack.c.b16 %v84, %v83
  %v95 = vpack.c.b16 %v86, %v85
  %v96 = vpack.c.b16 %v88, %v87
  %v97 = vpack.c.b16 %v90, %v89
  %v98 = vpack.c.b16 %v92, %v91
  %v103 = vunpack.c.l.b16 %v65
  %v104 = vunpack.c.l.b16 %v66
  %v105 = vunpack.c.l.b16 %v67
  %v106 = vunpack.c.l.b16 %v68
  %v107 = vpack.c.b16 %v104, %v103
  %v108 = vpack.c.b16 %v106, %v105
  %vm111 = vcmask 261120
  %v113 = vsel %vm111, %v93, 0
  %v116 = vsel %vm111, %v94, 0
  %v119 = vsel %vm111, %v95, 0
  %v122 = vsel %vm111, %v96, 0
  %v125 = vsel %vm111, %v97, 0
  %v128 = vsel %vm111, %v98, 0
  %130 = vmatprep.subr.bf16.mxu0 0
  %131 = vmatpush1.bf16.msra.mxu0 %v107
  %132 = vmatprep.subr.bf16.mxu0 0
  %133 = vmatpush1.bf16.msra.mxu0 %v108
  %134 = vmatprep.subr.bf16.mxu0 0
  %135 = vmatpush1.bf16.msra.mxu0 0
  %136 = vmatprep.subr.bf16.mxu0 0
  %137 = vmatpush1.bf16.msra.mxu0 0
  %138 = vmatprep.subr.bf16.mxu0 0
  %139 = vmatpush1.bf16.msra.mxu0 0
  %140 = vmatprep.subr.bf16.mxu0 0
  %141 = vmatpush1.bf16.msra.mxu0 0
  %142 = vmatprep.subr.bf16.mxu0 0
  %143 = vmatpush1.bf16.msra.mxu0 0
  %144 = vmatprep.subr.bf16.mxu0 0
  %145 = vmatpush1.bf16.msra.mxu0 0
  %146 = vmatprep.subr.bf16.mxu0 0
  %147 = vmatpush1.bf16.msra.mxu0 0
  %148 = vmatprep.subr.bf16.mxu0 0
  %149 = vmatpush1.bf16.msra.mxu0 0
  %150 = vmatprep.subr.bf16.mxu0 0
  %151 = vmatpush1.bf16.msra.mxu0 0
  %152 = vmatprep.subr.bf16.mxu0 0
  %153 = vmatpush1.bf16.msra.mxu0 0
  %154 = vmatprep.subr.bf16.mxu0 0
  %155 = vmatpush1.bf16.msra.mxu0 0
  %156 = vmatprep.subr.bf16.mxu0 0
  %157 = vmatpush1.bf16.msra.mxu0 0
  %158 = vmatprep.subr.bf16.mxu0 0
  %159 = vmatpush1.bf16.msra.mxu0 0
  %160 = vmatprep.subr.bf16.mxu0 0
  %161 = vmatpush1.bf16.msra.mxu0 0
  %162 = vmatprep.mubr.bf16.mxu0 0
  %163 = vmatmul.mubr.bf16.gmra.mrb[0].mxu0 %v113
  %v164 = vpop.f32.mrb[0].mxu0
  %v165 = vadd.f32 0.0, %v164
  %v166 = vpop.f32.mrb[0].mxu0
  %v167 = vpop.f32.mrb[0].mxu0
  %v168 = vadd.f32 0.0, %v167
  %v169 = vpop.f32.mrb[0].mxu0
  %170 = vmatprep.mubr.bf16.mxu0 0
  %171 = vmatmul.mubr.bf16.gmra.mrb[0].mxu0 %v116
  %v172 = vpop.f32.mrb[0].mxu0
  %v173 = vadd.f32 0.0, %v172
  %v174 = vpop.f32.mrb[0].mxu0
  %v175 = vpop.f32.mrb[0].mxu0
  %v176 = vadd.f32 0.0, %v175
  %v177 = vpop.f32.mrb[0].mxu0
  %178 = vmatprep.mubr.bf16.mxu0 0
  %179 = vmatmul.mubr.bf16.gmra.mrb[0].mxu0 %v119
  %v180 = vpop.f32.mrb[0].mxu0
  %v181 = vadd.f32 0.0, %v180
  %v182 = vpop.f32.mrb[0].mxu0
  %v183 = vpop.f32.mrb[0].mxu0
  %v184 = vadd.f32 0.0, %v183
  %v185 = vpop.f32.mrb[0].mxu0
  %186 = vmatprep.mubr.bf16.mxu0 0
  %187 = vmatmul.mubr.bf16.gmra.mrb[0].mxu0 %v122
  %v188 = vpop.f32.mrb[0].mxu0
  %v189 = vadd.f32 0.0, %v188
  %v190 = vpop.f32.mrb[0].mxu0
  %v191 = vpop.f32.mrb[0].mxu0
  %v192 = vadd.f32 0.0, %v191
  %v193 = vpop.f32.mrb[0].mxu0
  %194 = vmatprep.mubr.bf16.mxu0 0
  %195 = vmatmul.mubr.bf16.gmra.mrb[0].mxu0 %v125
  %v196 = vpop.f32.mrb[0].mxu0
  %v197 = vadd.f32 0.0, %v196
  %v198 = vpop.f32.mrb[0].mxu0
  %v199 = vpop.f32.mrb[0].mxu0
  %v200 = vadd.f32 0.0, %v199
  %v201 = vpop.f32.mrb[0].mxu0
  %202 = vmatprep.mubr.bf16.mxu0 0
  %203 = vmatmul.mubr.bf16.gmra.mrb[0].mxu0 %v128
  %v204 = vpop.f32.mrb[0].mxu0
  %v205 = vadd.f32 0.0, %v204
  %v206 = vpop.f32.mrb[0].mxu0
  %v207 = vpop.f32.mrb[0].mxu0
  %v208 = vadd.f32 0.0, %v207
  %v209 = vpop.f32.mrb[0].mxu0
  %210 = vdwg.mxu0
  %v211 = vadd.f32 %v41, %v165
  %v212 = vadd.f32 %v42, %v168
  %v213 = vadd.f32 %v43, %v173
  %v214 = vadd.f32 %v44, %v176
  %v215 = vadd.f32 %v45, %v181
  %v216 = vadd.f32 %v46, %v184
  %v217 = vadd.f32 %v47, %v189
  %v218 = vadd.f32 %v48, %v192
  %v219 = vadd.f32 %v49, %v197
  %v220 = vadd.f32 %v50, %v200
  %v221 = vadd.f32 %v51, %v205
  %v222 = vadd.f32 %v52, %v208
  %223 = vst.msk [vmem:[#allocation2] sm:$0xff] %vm111, %v211
  %224 = vst.msk [vmem:[#allocation2 + $0x8] sm:$0xff] %vm111, %v212
  %225 = vst.msk [vmem:[#allocation2 + $0x10] sm:$0xff] %vm111, %v213
  %226 = vst.msk [vmem:[#allocation2 + $0x18] sm:$0xff] %vm111, %v214
  %227 = vst.msk [vmem:[#allocation2 + $0x20] sm:$0xff] %vm111, %v215
  %228 = vst.msk [vmem:[#allocation2 + $0x28] sm:$0xff] %vm111, %v216
  %229 = vst.msk [vmem:[#allocation2 + $0x30] sm:$0xff] %vm111, %v217
  %230 = vst.msk [vmem:[#allocation2 + $0x38] sm:$0xff] %vm111, %v218
  %231 = vst.msk [vmem:[#allocation2 + $0x40] sm:$0xff] %vm111, %v219
  %232 = vst.msk [vmem:[#allocation2 + $0x48] sm:$0xff] %vm111, %v220
  %233 = vst.msk [vmem:[#allocation2 + $0x50] sm:$0xff] %vm111, %v221
  %234 = vst.msk [vmem:[#allocation2 + $0x58] sm:$0xff] %vm111, %v222
  // Predicated region
  $region30: #{reranker_forward.13} parent=0 // pred_check
    %p235 = pneg %p24
  $region31: #{reranker_forward.13} parent=0 // pred_check_branch
    %237 = sbr.rel (%p235) target = $region33
  $region32: #{reranker_forward.13} parent=0 // pred_region
    %v238 = vld [vmem:[#allocation2] sm:$0xff]
    %v239 = vld [vmem:[#allocation2 + $0x8] sm:$0xff]
    %v240 = vld [vmem:[#allocation2 + $0x10] sm:$0xff]
    %v241 = vld [vmem:[#allocation2 + $0x18] sm:$0xff]
    %v242 = vld [vmem:[#allocation2 + $0x20] sm:$0xff]
    %v243 = vld [vmem:[#allocation2 + $0x28] sm:$0xff]
    %v244 = vld [vmem:[#allocation2 + $0x30] sm:$0xff]
    %v245 = vld [vmem:[#allocation2 + $0x38] sm:$0xff]
    %v246 = vld [vmem:[#allocation2 + $0x40] sm:$0xff]
    %v247 = vld [vmem:[#allocation2 + $0x48] sm:$0xff]
    %v248 = vld [vmem:[#allocation2 + $0x50] sm:$0xff]
    %v249 = vld [vmem:[#allocation2 + $0x58] sm:$0xff]
    %v250 = vld [vmem:[%s2] sm:$0x1]
    %v252 = vlaneseq
    %v253 = vshrl.u32 %v252, 7
    %v254 = vsub.s32 0, %v253
    %v255 = vrot.slane %v250, %v254
    %v257 = vadd.f32 %v238, %v255
    %v258 = vadd.f32 %v239, %v255
    %v259 = vadd.f32 %v240, %v255
    %v260 = vadd.f32 %v241, %v255
    %v261 = vadd.f32 %v242, %v255
    %v262 = vadd.f32 %v243, %v255
    %v263 = vadd.f32 %v244, %v255
    %v264 = vadd.f32 %v245, %v255
    %v265 = vadd.f32 %v246, %v255
    %v266 = vadd.f32 %v247, %v255
    %v267 = vadd.f32 %v248, %v255
    %v268 = vadd.f32 %v249, %v255
    %v269 = vld [vmem:[%s3] sm:$0xf]
    %v270 = vld [vmem:[%s3 + $0x4] sm:$0xf]
    %v271 = vld [vmem:[%s3 + $0x8] sm:$0xf]
    %v272 = vld [vmem:[%s3 + $0xc] sm:$0xf]
    %v273 = vld [vmem:[%s3 + $0x10] sm:$0xf]
    %v274 = vld [vmem:[%s3 + $0x14] sm:$0xf]
    %v275 = vld [vmem:[%s3 + $0x18] sm:$0xf]
    %v276 = vld [vmem:[%s3 + $0x1c] sm:$0xf]
    %v277 = vld [vmem:[%s3 + $0x20] sm:$0xf]
    %v278 = vld [vmem:[%s3 + $0x24] sm:$0xf]
    %v279 = vld [vmem:[%s3 + $0x28] sm:$0xf]
    %v280 = vld [vmem:[%s3 + $0x2c] sm:$0xf]
    %v281 = vunpack.c.l.bf16 %v269
    %v282 = vunpack.c.l.bf16 %v270
    %v283 = vunpack.c.l.bf16 %v271
    %v284 = vunpack.c.l.bf16 %v272
    %v285 = vunpack.c.l.bf16 %v273
    %v286 = vunpack.c.l.bf16 %v274
    %v287 = vunpack.c.l.bf16 %v275
    %v288 = vunpack.c.l.bf16 %v276
    %v289 = vunpack.c.l.bf16 %v277
    %v290 = vunpack.c.l.bf16 %v278
    %v291 = vunpack.c.l.bf16 %v279
    %v292 = vunpack.c.l.bf16 %v280
    %v293 = vadd.f32 %v257, %v281
    %v294 = vadd.f32 %v258, %v282
    %v295 = vadd.f32 %v259, %v283
    %v296 = vadd.f32 %v260, %v284
    %v297 = vadd.f32 %v261, %v285
    %v298 = vadd.f32 %v262, %v286
    %v299 = vadd.f32 %v263, %v287
    %v300 = vadd.f32 %v264, %v288
    %v301 = vadd.f32 %v265, %v289
    %v302 = vadd.f32 %v266, %v290
    %v303 = vadd.f32 %v267, %v291
    %v304 = vadd.f32 %v268, %v292
    %v305 = vsel %vm111, %v293, 0.0
    %306 = vadd.xlane.f32.xlu0 %v305
    %v307 = vpop.xlane.xlu0 %306
    %v308 = vsel %vm111, %v294, 0.0
    %309 = vadd.xlane.f32.xlu0 %v308
    %v310 = vpop.xlane.xlu0 %309
    %v311 = vsel %vm111, %v295, 0.0
    %312 = vadd.xlane.f32.xlu0 %v311
    %v313 = vpop.xlane.xlu0 %312
    %v314 = vsel %vm111, %v296, 0.0
    %315 = vadd.xlane.f32.xlu0 %v314
    %v316 = vpop.xlane.xlu0 %315
    %v317 = vsel %vm111, %v297, 0.0
    %318 = vadd.xlane.f32.xlu0 %v317
    %v319 = vpop.xlane.xlu0 %318
    %v320 = vsel %vm111, %v298, 0.0
    %321 = vadd.xlane.f32.xlu0 %v320
    %v322 = vpop.xlane.xlu0 %321
    %v323 = vsel %vm111, %v299, 0.0
    %324 = vadd.xlane.f32.xlu0 %v323
    %v325 = vpop.xlane.xlu0 %324
    %v326 = vsel %vm111, %v300, 0.0
    %327 = vadd.xlane.f32.xlu0 %v326
    %v328 = vpop.xlane.xlu0 %327
    %v329 = vsel %vm111, %v301, 0.0
    %330 = vadd.xlane.f32.xlu0 %v329
    %v331 = vpop.xlane.xlu0 %330
    %v332 = vsel %vm111, %v302, 0.0
    %333 = vadd.xlane.f32.xlu0 %v332
    %v334 = vpop.xlane.xlu0 %333
    %v335 = vsel %vm111, %v303, 0.0
    %336 = vadd.xlane.f32.xlu0 %v335
    %v337 = vpop.xlane.xlu0 %336
    %v338 = vsel %vm111, %v304, 0.0
    %339 = vadd.xlane.f32.xlu0 %v338
    %v340 = vpop.xlane.xlu0 %339
    %v341 = vrcp.pop 32.0
    %v342 = vmul.f32 %v307, %v341
    %v343 = vmul.f32 %v310, %v341
    %v344 = vmul.f32 %v313, %v341
    %v345 = vmul.f32 %v316, %v341
    %v346 = vmul.f32 %v319, %v341
    %v347 = vmul.f32 %v322, %v341
    %v348 = vmul.f32 %v325, %v341
    %v349 = vmul.f32 %v328, %v341
    %v350 = vmul.f32 %v331, %v341
    %v351 = vmul.f32 %v334, %v341
    %v352 = vmul.f32 %v337, %v341
    %v353 = vmul.f32 %v340, %v341
    %v354 = vsub.f32 %v293, %v342
    %v355 = vsub.f32 %v294, %v343
    %v356 = vsub.f32 %v295, %v344
    %v357 = vsub.f32 %v296, %v345
    %v358 = vsub.f32 %v297, %v346
    %v359 = vsub.f32 %v298, %v347
    %v360 = vsub.f32 %v299, %v348
    %v361 = vsub.f32 %v300, %v349
    %v362 = vsub.f32 %v301, %v350
    %v363 = vsub.f32 %v302, %v351
    %v364 = vsub.f32 %v303, %v352
    %v365 = vsub.f32 %v304, %v353
    %v366 = vmul.f32 %v354, %v354
    %v367 = vmul.f32 %v355, %v355
    %v368 = vmul.f32 %v356, %v356
    %v369 = vmul.f32 %v357, %v357
    %v370 = vmul.f32 %v358, %v358
    %v371 = vmul.f32 %v359, %v359
    %v372 = vmul.f32 %v360, %v360
    %v373 = vmul.f32 %v361, %v361
    %v374 = vmul.f32 %v362, %v362
    %v375 = vmul.f32 %v363, %v363
    %v376 = vmul.f32 %v364, %v364
    %v377 = vmul.f32 %v365, %v365
    %v378 = vsel %vm111, %v366, 0.0
    %379 = vadd.xlane.f32.xlu0 %v378
    %v380 = vpop.xlane.xlu0 %379
    %v381 = vsel %vm111, %v367, 0.0
    %382 = vadd.xlane.f32.xlu0 %v381
    %v383 = vpop.xlane.xlu0 %382
    %v384 = vsel %vm111, %v368, 0.0
    %385 = vadd.xlane.f32.xlu0 %v384
    %v386 = vpop.xlane.xlu0 %385
    %v387 = vsel %vm111, %v369, 0.0
    %388 = vadd.xlane.f32.xlu0 %v387
    %v389 = vpop.xlane.xlu0 %388
    %v390 = vsel %vm111, %v370, 0.0
    %391 = vadd.xlane.f32.xlu0 %v390
    %v392 = vpop.xlane.xlu0 %391
    %v393 = vsel %vm111, %v371, 0.0
    %394 = vadd.xlane.f32.xlu0 %v393
    %v395 = vpop.xlane.xlu0 %394
    %v396 = vsel %vm111, %v372, 0.0
    %397 = vadd.xlane.f32.xlu0 %v396
    %v398 = vpop.xlane.xlu0 %397
    %v399 = vsel %vm111, %v373, 0.0
    %400 = vadd.xlane.f32.xlu0 %v399
    %v401 = vpop.xlane.xlu0 %400
    %v402 = vsel %vm111, %v374, 0.0
    %403 = vadd.xlane.f32.xlu0 %v402
    %v404 = vpop.xlane.xlu0 %403
    %v405 = vsel %vm111, %v375, 0.0
    %406 = vadd.xlane.f32.xlu0 %v405
    %v407 = vpop.xlane.xlu0 %406
    %v408 = vsel %vm111, %v376, 0.0
    %409 = vadd.xlane.f32.xlu0 %v408
    %v410 = vpop.xlane.xlu0 %409
    %v411 = vsel %vm111, %v377, 0.0
    %412 = vadd.xlane.f32.xlu0 %v411
    %v413 = vpop.xlane.xlu0 %412
    %v414 = vmul.f32 %v380, %v341
    %v415 = vmul.f32 %v383, %v341
    %v416 = vmul.f32 %v386, %v341
    %v417 = vmul.f32 %v389, %v341
    %v418 = vmul.f32 %v392, %v341
    %v419 = vmul.f32 %v395, %v341
    %v420 = vmul.f32 %v398, %v341
    %v421 = vmul.f32 %v401, %v341
    %v422 = vmul.f32 %v404, %v341
    %v423 = vmul.f32 %v407, %v341
    %v424 = vmul.f32 %v410, %v341
    %v425 = vmul.f32 %v413, %v341
    %v426 = vadd.f32 %v414, 1e-12
    %v427 = vadd.f32 %v415, 1e-12
    %v428 = vadd.f32 %v416, 1e-12
    %v429 = vadd.f32 %v417, 1e-12
    %v430 = vadd.f32 %v418, 1e-12
    %v431 = vadd.f32 %v419, 1e-12
    %v432 = vadd.f32 %v420, 1e-12
    %v433 = vadd.f32 %v421, 1e-12
    %v434 = vadd.f32 %v422, 1e-12
    %v435 = vadd.f32 %v423, 1e-12
    %v436 = vadd.f32 %v424, 1e-12
    %v437 = vadd.f32 %v425, 1e-12
    %v438 = vrsqrt.pop %v426
    %v439 = vrsqrt.pop %v427
    %v440 = vrsqrt.pop %v428
    %v441 = vrsqrt.pop %v429
    %v442 = vrsqrt.pop %v430
    %v443 = vrsqrt.pop %v431
    %v444 = vrsqrt.pop %v432
    %v445 = vrsqrt.pop %v433
    %v446 = vrsqrt.pop %v434
    %v447 = vrsqrt.pop %v435
    %v448 = vrsqrt.pop %v436
    %v449 = vrsqrt.pop %v437
    %v450 = vmul.f32 %v354, %v438
    %v451 = vmul.f32 %v355, %v439
    %v452 = vmul.f32 %v356, %v440
    %v453 = vmul.f32 %v357, %v441
    %v454 = vmul.f32 %v358, %v442
    %v455 = vmul.f32 %v359, %v443
    %v456 = vmul.f32 %v360, %v444
    %v457 = vmul.f32 %v361, %v445
    %v458 = vmul.f32 %v362, %v446
    %v459 = vmul.f32 %v363, %v447
    %v460 = vmul.f32 %v364, %v448
    %v461 = vmul.f32 %v365, %v449
    %v462 = vld [vmem:[%s4] sm:$0x1]
    %v464 = vlaneseq
    %v465 = vshrl.u32 %v464, 7
    %v466 = vsub.s32 0, %v465
    %v467 = vrot.slane %v462, %v466
    %v469 = vmul.f32 %v450, %v467
    %v470 = vmul.f32 %v451, %v467
    %v471 = vmul.f32 %v452, %v467
    %v472 = vmul.f32 %v453, %v467
    %v473 = vmul.f32 %v454, %v467
    %v474 = vmul.f32 %v455, %v467
    %v475 = vmul.f32 %v456, %v467
    %v476 = vmul.f32 %v457, %v467
    %v477 = vmul.f32 %v458, %v467
    %v478 = vmul.f32 %v459, %v467
    %v479 = vmul.f32 %v460, %v467
    %v480 = vmul.f32 %v461, %v467
    %v481 = vld [vmem:[%s5] sm:$0x1]
    %v483 = vlaneseq
    %v484 = vshrl.u32 %v483, 7
    %v485 = vsub.s32 0, %v484
    %v486 = vrot.slane %v481, %v485
    %v488 = vadd.f32 %v469, %v486
    %v489 = vadd.f32 %v470, %v486
    %v490 = vadd.f32 %v471, %v486
    %v491 = vadd.f32 %v472, %v486
    %v492 = vadd.f32 %v473, %v486
    %v493 = vadd.f32 %v474, %v486
    %v494 = vadd.f32 %v475, %v486
    %v495 = vadd.f32 %v476, %v486
    %v496 = vadd.f32 %v477, %v486
    %v497 = vadd.f32 %v478, %v486
    %v498 = vadd.f32 %v479, %v486
    %v499 = vadd.f32 %v480, %v486
    %v500 = vpack.c.bf16 %v489, %v488
    %v501 = vpack.c.bf16 %v491, %v490
    %v502 = vpack.c.bf16 %v493, %v492
    %v503 = vpack.c.bf16 %v495, %v494
    %v504 = vpack.c.bf16 %v497, %v496
    %v505 = vpack.c.bf16 %v499, %v498
    %v512 = vunpack.c.l.b16 %v500
    %v513 = vunpack.c.h.b16 %v500
    %v514 = vunpack.c.l.b16 %v501
    %v515 = vunpack.c.h.b16 %v501
    %v516 = vunpack.c.l.b16 %v502
    %v517 = vunpack.c.h.b16 %v502
    %v518 = vunpack.c.l.b16 %v503
    %v519 = vunpack.c.h.b16 %v503
    %v520 = vunpack.c.l.b16 %v504
    %v521 = vunpack.c.h.b16 %v504
    %v522 = vunpack.c.l.b16 %v505
    %v523 = vunpack.c.h.b16 %v505
    %v524 = vpack.c.b16 %v512, %v512
    %v525 = vpack.c.b16 %v513, %v513
    %v526 = vpack.c.b16 %v514, %v514
    %v527 = vpack.c.b16 %v515, %v515
    %v528 = vpack.c.b16 %v516, %v516
    %v529 = vpack.c.b16 %v517, %v517
    %v530 = vpack.c.b16 %v518, %v518
    %v531 = vpack.c.b16 %v519, %v519
    %v532 = vpack.c.b16 %v520, %v520
    %v533 = vpack.c.b16 %v521, %v521
    %v534 = vpack.c.b16 %v522, %v522
    %v535 = vpack.c.b16 %v523, %v523
    %vm548 = vcmask 257024
    %549 = vst.msk [vmem:[%s6] sm:$0xf] %vm548, %v524
    %550 = vst.msk [vmem:[%s6 + $0x4] sm:$0xf] %vm548, %v525
    %551 = vst.msk [vmem:[%s6 + $0x8] sm:$0xf] %vm548, %v526
    %552 = vst.msk [vmem:[%s6 + $0xc] sm:$0xf] %vm548, %v527
    %553 = vst.msk [vmem:[%s6 + $0x10] sm:$0xf] %vm548, %v528
    %554 = vst.msk [vmem:[%s6 + $0x14] sm:$0xf] %vm548, %v529
    %555 = vst.msk [vmem:[%s6 + $0x18] sm:$0xf] %vm548, %v530
    %556 = vst.msk [vmem:[%s6 + $0x1c] sm:$0xf] %vm548, %v531
    %557 = vst.msk [vmem:[%s6 + $0x20] sm:$0xf] %vm548, %v532
    %558 = vst.msk [vmem:[%s6 + $0x24] sm:$0xf] %vm548, %v533
    %559 = vst.msk [vmem:[%s6 + $0x28] sm:$0xf] %vm548, %v534
    %560 = vst.msk [vmem:[%s6 + $0x2c] sm:$0xf] %vm548, %v535
  $region33: #{reranker_forward.13} parent=0 // pred_fallthru
    _
  // Predicated region
  $region34: #{reranker_forward.13} parent=0 // pred_check
    _
  $region35: #{reranker_forward.13} parent=0 // pred_check_branch
    %562 = sbr.rel (0) target = $region37
  $region36: #{reranker_forward.13} parent=0 // pred_region
    _
  $region37: #{reranker_forward.13} parent=0 // pred_fallthru
    _
  // Predicated region
  $region38: #{reranker_forward.13} parent=0 // pred_check
    _
  $region39: #{reranker_forward.13} parent=0 // pred_check_branch
    %564 = sbr.rel (0) target = $region41
  $region40: #{reranker_forward.13} parent=0 // pred_region
    _
  $region41: #{reranker_forward.13} parent=0 // pred_fallthru
    _

// kernel: reranker_forward.11
$region0: #{reranker_forward.11}
  #allocation0 [shape = 'u32[]', space=smem, size = 0x4, offset = 0x4, fixed_abs, tag = 'smem constant byte address 0x4 - core index']
  #allocation1 [shape = 'u32[144,128]{1,0:T(1,128)}', space=vmem, size = 0x12000, scoped, tag = 'internal scratch']
  #allocation2 [shape = 'f32[96,96]{1,0:T(8,128)}', space=vmem, size = 0xc000, scoped, tag = 'scratch operand']
  %s0 = inlined_call_operand.vmem [shape: bf16[96,32], index: 0, kind: input, shape index: {}]
  %s1 = inlined_call_operand.vmem [shape: bf16[32,96], index: 1, kind: input, shape index: {}]
  %s2 = inlined_call_operand.vmem [shape: f32[1,96], index: 2, kind: input, shape index: {}]
  %s3 = inlined_call_operand.vmem [shape: bf16[96,96], index: 3, kind: output, shape index: {}]
  %s4 = sld [smem:[#allocation0]]
  $region30: #{reranker_forward.11} parent=0
    _
  %s6 = ssub.s32 1, %s4
  %s7 = scalar_select 0, %s6, %s4
  // Predicated region
  $region2: #{reranker_forward.11} parent=0 // pred_check
    _
  $region3: #{reranker_forward.11} parent=0 // pred_check_branch
    %9 = sbr.rel (0) target = $region5
  $region4: #{reranker_forward.11} parent=0 // pred_region
    _
  $region5: #{reranker_forward.11} parent=0 // pred_fallthru
    _
  // Predicated region
  $region6: #{reranker_forward.11} parent=0 // pred_check
    _
  $region7: #{reranker_forward.11} parent=0 // pred_check_branch
    %11 = sbr.rel (0) target = $region9
  $region8: #{reranker_forward.11} parent=0 // pred_region
    _
  $region9: #{reranker_forward.11} parent=0 // pred_fallthru
    _
  // Predicated region
  $region10: #{reranker_forward.11} parent=0 // pred_check
    _
  $region11: #{reranker_forward.11} parent=0 // pred_check_branch
    %13 = sbr.rel (0) target = $region13
  $region12: #{reranker_forward.11} parent=0 // pred_region
    _
  $region13: #{reranker_forward.11} parent=0 // pred_fallthru
    _
  %p15 = scmp.eq.s32.totalorder 0, 0
  // Predicated region
  $region14: #{reranker_forward.11} parent=0 // pred_check
    %p16 = pneg %p15
  $region15: #{reranker_forward.11} parent=0 // pred_check_branch
    %18 = sbr.rel (%p16) target = $region17
  $region16: #{reranker_forward.11} parent=0 // pred_region
    %vm19 = vcmask 785408
    %20 = vst.msk [vmem:[#allocation2] sm:$0xff] %vm19, 0.0
    %21 = vst.msk [vmem:[#allocation2 + $0x8] sm:$0xff] %vm19, 0.0
    %22 = vst.msk [vmem:[#allocation2 + $0x10] sm:$0xff] %vm19, 0.0
    %23 = vst.msk [vmem:[#allocation2 + $0x18] sm:$0xff] %vm19, 0.0
    %24 = vst.msk [vmem:[#allocation2 + $0x20] sm:$0xff] %vm19, 0.0
    %25 = vst.msk [vmem:[#allocation2 + $0x28] sm:$0xff] %vm19, 0.0
    %26 = vst.msk [vmem:[#allocation2 + $0x30] sm:$0xff] %vm19, 0.0
    %27 = vst.msk [vmem:[#allocation2 + $0x38] sm:$0xff] %vm19, 0.0
    %28 = vst.msk [vmem:[#allocation2 + $0x40] sm:$0xff] %vm19, 0.0
    %29 = vst.msk [vmem:[#allocation2 + $0x48] sm:$0xff] %vm19, 0.0
    %30 = vst.msk [vmem:[#allocation2 + $0x50] sm:$0xff] %vm19, 0.0
    %31 = vst.msk [vmem:[#allocation2 + $0x58] sm:$0xff] %vm19, 0.0
  $region17: #{reranker_forward.11} parent=0 // pred_fallthru
    _
  %v32 = vld [vmem:[#allocation2] sm:$0xff]
  %v33 = vld [vmem:[#allocation2 + $0x8] sm:$0xff]
  %v34 = vld [vmem:[#allocation2 + $0x10] sm:$0xff]
  %v35 = vld [vmem:[#allocation2 + $0x18] sm:$0xff]
  %v36 = vld [vmem:[#allocation2 + $0x20] sm:$0xff]
  %v37 = vld [vmem:[#allocation2 + $0x28] sm:$0xff]
  %v38 = vld [vmem:[#allocation2 + $0x30] sm:$0xff]
  %v39 = vld [vmem:[#allocation2 + $0x38] sm:$0xff]
  %v40 = vld [vmem:[#allocation2 + $0x40] sm:$0xff]
  %v41 = vld [vmem:[#allocation2 + $0x48] sm:$0xff]
  %v42 = vld [vmem:[#allocation2 + $0x50] sm:$0xff]
  %v43 = vld [vmem:[#allocation2 + $0x58] sm:$0xff]
  %v44 = vld [vmem:[%s0] sm:$0xf]
  %v45 = vld [vmem:[%s0 + $0x4] sm:$0xf]
  %v46 = vld [vmem:[%s0 + $0x8] sm:$0xf]
  %v47 = vld [vmem:[%s0 + $0xc] sm:$0xf]
  %v48 = vld [vmem:[%s0 + $0x10] sm:$0xf]
  %v49 = vld [vmem:[%s0 + $0x14] sm:$0xf]
  %v50 = vld [vmem:[%s0 + $0x18] sm:$0xf]
  %v51 = vld [vmem:[%s0 + $0x1c] sm:$0xf]
  %v52 = vld [vmem:[%s0 + $0x20] sm:$0xf]
  %v53 = vld [vmem:[%s0 + $0x24] sm:$0xf]
  %v54 = vld [vmem:[%s0 + $0x28] sm:$0xf]
  %v55 = vld [vmem:[%s0 + $0x2c] sm:$0xf]
  %v56 = vld [vmem:[%s1] sm:$0xf]
  %v57 = vld [vmem:[%s1 + $0x4] sm:$0xf]
  %v58 = vld [vmem:[%s1 + $0x8] sm:$0xf]
  %v59 = vld [vmem:[%s1 + $0xc] sm:$0xf]
  %v72 = vunpack.c.l.b16 %v44
  %v73 = vunpack.c.l.b16 %v45
  %v74 = vunpack.c.l.b16 %v46
  %v75 = vunpack.c.l.b16 %v47
  %v76 = vunpack.c.l.b16 %v48
  %v77 = vunpack.c.l.b16 %v49
  %v78 = vunpack.c.l.b16 %v50
  %v79 = vunpack.c.l.b16 %v51
  %v80 = vunpack.c.l.b16 %v52
  %v81 = vunpack.c.l.b16 %v53
  %v82 = vunpack.c.l.b16 %v54
  %v83 = vunpack.c.l.b16 %v55
  %v84 = vpack.c.b16 %v73, %v72
  %v85 = vpack.c.b16 %v75, %v74
  %v86 = vpack.c.b16 %v77, %v76
  %v87 = vpack.c.b16 %v79, %v78
  %v88 = vpack.c.b16 %v81, %v80
  %v89 = vpack.c.b16 %v83, %v82
  %v94 = vunpack.c.l.b16 %v56
  %v95 = vunpack.c.l.b16 %v57
  %v96 = vunpack.c.l.b16 %v58
  %v97 = vunpack.c.l.b16 %v59
  %v98 = vpack.c.b16 %v95, %v94
  %v99 = vpack.c.b16 %v97, %v96
  %vm102 = vcmask 261120
  %v104 = vsel %vm102, %v84, 0
  %v107 = vsel %vm102, %v85, 0
  %v110 = vsel %vm102, %v86, 0
  %v113 = vsel %vm102, %v87, 0
  %v116 = vsel %vm102, %v88, 0
  %v119 = vsel %vm102, %v89, 0
  %121 = vmatprep.subr.bf16.mxu0 0
  %122 = vmatpush1.bf16.msra.mxu0 %v98
  %123 = vmatprep.subr.bf16.mxu0 0
  %124 = vmatpush1.bf16.msra.mxu0 %v99
  %125 = vmatprep.subr.bf16.mxu0 0
  %126 = vmatpush1.bf16.msra.mxu0 0
  %127 = vmatprep.subr.bf16.mxu0 0
  %128 = vmatpush1.bf16.msra.mxu0 0
  %129 = vmatprep.subr.bf16.mxu0 0
  %130 = vmatpush1.bf16.msra.mxu0 0
  %131 = vmatprep.subr.bf16.mxu0 0
  %132 = vmatpush1.bf16.msra.mxu0 0
  %133 = vmatprep.subr.bf16.mxu0 0
  %134 = vmatpush1.bf16.msra.mxu0 0
  %135 = vmatprep.subr.bf16.mxu0 0
  %136 = vmatpush1.bf16.msra.mxu0 0
  %137 = vmatprep.subr.bf16.mxu0 0
  %138 = vmatpush1.bf16.msra.mxu0 0
  %139 = vmatprep.subr.bf16.mxu0 0
  %140 = vmatpush1.bf16.msra.mxu0 0
  %141 = vmatprep.subr.bf16.mxu0 0
  %142 = vmatpush1.bf16.msra.mxu0 0
  %143 = vmatprep.subr.bf16.mxu0 0
  %144 = vmatpush1.bf16.msra.mxu0 0
  %145 = vmatprep.subr.bf16.mxu0 0
  %146 = vmatpush1.bf16.msra.mxu0 0
  %147 = vmatprep.subr.bf16.mxu0 0
  %148 = vmatpush1.bf16.msra.mxu0 0
  %149 = vmatprep.subr.bf16.mxu0 0
  %150 = vmatpush1.bf16.msra.mxu0 0
  %151 = vmatprep.subr.bf16.mxu0 0
  %152 = vmatpush1.bf16.msra.mxu0 0
  %153 = vmatprep.mubr.bf16.mxu0 0
  %154 = vmatmul.mubr.bf16.gmra.mrb[0].mxu0 %v104
  %v155 = vpop.f32.mrb[0].mxu0
  %v156 = vadd.f32 0.0, %v155
  %v157 = vpop.f32.mrb[0].mxu0
  %v158 = vpop.f32.mrb[0].mxu0
  %v159 = vadd.f32 0.0, %v158
  %v160 = vpop.f32.mrb[0].mxu0
  %161 = vmatprep.mubr.bf16.mxu0 0
  %162 = vmatmul.mubr.bf16.gmra.mrb[0].mxu0 %v107
  %v163 = vpop.f32.mrb[0].mxu0
  %v164 = vadd.f32 0.0, %v163
  %v165 = vpop.f32.mrb[0].mxu0
  %v166 = vpop.f32.mrb[0].mxu0
  %v167 = vadd.f32 0.0, %v166
  %v168 = vpop.f32.mrb[0].mxu0
  %169 = vmatprep.mubr.bf16.mxu0 0
  %170 = vmatmul.mubr.bf16.gmra.mrb[0].mxu0 %v110
  %v171 = vpop.f32.mrb[0].mxu0
  %v172 = vadd.f32 0.0, %v171
  %v173 = vpop.f32.mrb[0].mxu0
  %v174 = vpop.f32.mrb[0].mxu0
  %v175 = vadd.f32 0.0, %v174
  %v176 = vpop.f32.mrb[0].mxu0
  %177 = vmatprep.mubr.bf16.mxu0 0
  %178 = vmatmul.mubr.bf16.gmra.mrb[0].mxu0 %v113
  %v179 = vpop.f32.mrb[0].mxu0
  %v180 = vadd.f32 0.0, %v179
  %v181 = vpop.f32.mrb[0].mxu0
  %v182 = vpop.f32.mrb[0].mxu0
  %v183 = vadd.f32 0.0, %v182
  %v184 = vpop.f32.mrb[0].mxu0
  %185 = vmatprep.mubr.bf16.mxu0 0
  %186 = vmatmul.mubr.bf16.gmra.mrb[0].mxu0 %v116
  %v187 = vpop.f32.mrb[0].mxu0
  %v188 = vadd.f32 0.0, %v187
  %v189 = vpop.f32.mrb[0].mxu0
  %v190 = vpop.f32.mrb[0].mxu0
  %v191 = vadd.f32 0.0, %v190
  %v192 = vpop.f32.mrb[0].mxu0
  %193 = vmatprep.mubr.bf16.mxu0 0
  %194 = vmatmul.mubr.bf16.gmra.mrb[0].mxu0 %v119
  %v195 = vpop.f32.mrb[0].mxu0
  %v196 = vadd.f32 0.0, %v195
  %v197 = vpop.f32.mrb[0].mxu0
  %v198 = vpop.f32.mrb[0].mxu0
  %v199 = vadd.f32 0.0, %v198
  %v200 = vpop.f32.mrb[0].mxu0
  %201 = vdwg.mxu0
  %v202 = vadd.f32 %v32, %v156
  %v203 = vadd.f32 %v33, %v159
  %v204 = vadd.f32 %v34, %v164
  %v205 = vadd.f32 %v35, %v167
  %v206 = vadd.f32 %v36, %v172
  %v207 = vadd.f32 %v37, %v175
  %v208 = vadd.f32 %v38, %v180
  %v209 = vadd.f32 %v39, %v183
  %v210 = vadd.f32 %v40, %v188
  %v211 = vadd.f32 %v41, %v191
  %v212 = vadd.f32 %v42, %v196
  %v213 = vadd.f32 %v43, %v199
  %vm214 = vcmask 785408
  %215 = vst.msk [vmem:[#allocation2] sm:$0xff] %vm214, %v202
  %216 = vst.msk [vmem:[#allocation2 + $0x8] sm:$0xff] %vm214, %v203
  %217 = vst.msk [vmem:[#allocation2 + $0x10] sm:$0xff] %vm214, %v204
  %218 = vst.msk [vmem:[#allocation2 + $0x18] sm:$0xff] %vm214, %v205
  %219 = vst.msk [vmem:[#allocation2 + $0x20] sm:$0xff] %vm214, %v206
  %220 = vst.msk [vmem:[#allocation2 + $0x28] sm:$0xff] %vm214, %v207
  %221 = vst.msk [vmem:[#allocation2 + $0x30] sm:$0xff] %vm214, %v208
  %222 = vst.msk [vmem:[#allocation2 + $0x38] sm:$0xff] %vm214, %v209
  %223 = vst.msk [vmem:[#allocation2 + $0x40] sm:$0xff] %vm214, %v210
  %224 = vst.msk [vmem:[#allocation2 + $0x48] sm:$0xff] %vm214, %v211
  %225 = vst.msk [vmem:[#allocation2 + $0x50] sm:$0xff] %vm214, %v212
  %226 = vst.msk [vmem:[#allocation2 + $0x58] sm:$0xff] %vm214, %v213
  // Predicated region
  $region18: #{reranker_forward.11} parent=0 // pred_check
    %p227 = pneg %p15
  $region19: #{reranker_forward.11} parent=0 // pred_check_branch
    %229 = sbr.rel (%p227) target = $region21
  $region20: #{reranker_forward.11} parent=0 // pred_region
    %v230 = vld [vmem:[#allocation2] sm:$0xff]
    %v231 = vld [vmem:[#allocation2 + $0x8] sm:$0xff]
    %v232 = vld [vmem:[#allocation2 + $0x10] sm:$0xff]
    %v233 = vld [vmem:[#allocation2 + $0x18] sm:$0xff]
    %v234 = vld [vmem:[#allocation2 + $0x20] sm:$0xff]
    %v235 = vld [vmem:[#allocation2 + $0x28] sm:$0xff]
    %v236 = vld [vmem:[#allocation2 + $0x30] sm:$0xff]
    %v237 = vld [vmem:[#allocation2 + $0x38] sm:$0xff]
    %v238 = vld [vmem:[#allocation2 + $0x40] sm:$0xff]
    %v239 = vld [vmem:[#allocation2 + $0x48] sm:$0xff]
    %v240 = vld [vmem:[#allocation2 + $0x50] sm:$0xff]
    %v241 = vld [vmem:[#allocation2 + $0x58] sm:$0xff]
    %v242 = vld [vmem:[%s2] sm:$0x1]
    %v244 = vlaneseq
    %v245 = vshrl.u32 %v244, 7
    %v246 = vsub.s32 0, %v245
    %v247 = vrot.slane %v242, %v246
    %v249 = vadd.f32 %v230, %v247
    %v250 = vadd.f32 %v231, %v247
    %v251 = vadd.f32 %v232, %v247
    %v252 = vadd.f32 %v233, %v247
    %v253 = vadd.f32 %v234, %v247
    %v254 = vadd.f32 %v235, %v247
    %v255 = vadd.f32 %v236, %v247
    %v256 = vadd.f32 %v237, %v247
    %v257 = vadd.f32 %v238, %v247
    %v258 = vadd.f32 %v239, %v247
    %v259 = vadd.f32 %v240, %v247
    %v260 = vadd.f32 %v241, %v247
    %v261 = vpack.c.bf16 %v250, %v249
    %v262 = vpack.c.bf16 %v252, %v251
    %v263 = vpack.c.bf16 %v254, %v253
    %v264 = vpack.c.bf16 %v256, %v255
    %v265 = vpack.c.bf16 %v258, %v257
    %v266 = vpack.c.bf16 %v260, %v259
    %v273 = vunpack.c.l.b16 %v261
    %v274 = vunpack.c.h.b16 %v261
    %v275 = vunpack.c.l.b16 %v262
    %v276 = vunpack.c.h.b16 %v262
    %v277 = vunpack.c.l.b16 %v263
    %v278 = vunpack.c.h.b16 %v263
    %v279 = vunpack.c.l.b16 %v264
    %v280 = vunpack.c.h.b16 %v264
    %v281 = vunpack.c.l.b16 %v265
    %v282 = vunpack.c.h.b16 %v265
    %v283 = vunpack.c.l.b16 %v266
    %v284 = vunpack.c.h.b16 %v266
    %v285 = vpack.c.b16 %v273, %v273
    %v286 = vpack.c.b16 %v274, %v274
    %v287 = vpack.c.b16 %v275, %v275
    %v288 = vpack.c.b16 %v276, %v276
    %v289 = vpack.c.b16 %v277, %v277
    %v290 = vpack.c.b16 %v278, %v278
    %v291 = vpack.c.b16 %v279, %v279
    %v292 = vpack.c.b16 %v280, %v280
    %v293 = vpack.c.b16 %v281, %v281
    %v294 = vpack.c.b16 %v282, %v282
    %v295 = vpack.c.b16 %v283, %v283
    %v296 = vpack.c.b16 %v284, %v284
    %vm309 = vcmask 781312
    %310 = vst.msk [vmem:[%s3] sm:$0xf] %vm309, %v285
    %311 = vst.msk [vmem:[%s3 + $0x4] sm:$0xf] %vm309, %v286
    %312 = vst.msk [vmem:[%s3 + $0x8] sm:$0xf] %vm309, %v287
    %313 = vst.msk [vmem:[%s3 + $0xc] sm:$0xf] %vm309, %v288
    %314 = vst.msk [vmem:[%s3 + $0x10] sm:$0xf] %vm309, %v289
    %315 = vst.msk [vmem:[%s3 + $0x14] sm:$0xf] %vm309, %v290
    %316 = vst.msk [vmem:[%s3 + $0x18] sm:$0xf] %vm309, %v291
    %317 = vst.msk [vmem:[%s3 + $0x1c] sm:$0xf] %vm309, %v292
    %318 = vst.msk [vmem:[%s3 + $0x20] sm:$0xf] %vm309, %v293
    %319 = vst.msk [vmem:[%s3 + $0x24] sm:$0xf] %vm309, %v294
    %320 = vst.msk [vmem:[%s3 + $0x28] sm:$0xf] %vm309, %v295
    %321 = vst.msk [vmem:[%s3 + $0x2c] sm:$0xf] %vm309, %v296
  $region21: #{reranker_forward.11} parent=0 // pred_fallthru
    _
  // Predicated region
  $region22: #{reranker_forward.11} parent=0 // pred_check
    _
  $region23: #{reranker_forward.11} parent=0 // pred_check_branch
    %323 = sbr.rel (0) target = $region25
  $region24: #{reranker_forward.11} parent=0 // pred_region
    _
  $region25: #{reranker_forward.11} parent=0 // pred_fallthru
    _
  // Predicated region
  $region26: #{reranker_forward.11} parent=0 // pred_check
    _
  $region27: #{reranker_forward.11} parent=0 // pred_check_branch
    %325 = sbr.rel (0) target = $region29
  $region28: #{reranker_forward.11} parent=0 // pred_region
    _
  $region29: #{reranker_forward.11} parent=0 // pred_fallthru
    _

// kernel: reranker_forward.19
$region0: #{reranker_forward.19}
  #allocation0 [shape = 'u32[]', space=smem, size = 0x4, offset = 0x4, fixed_abs, tag = 'smem constant byte address 0x4 - core index']
  #allocation1 [shape = 'u32[144,128]{1,0:T(1,128)}', space=vmem, size = 0x12000, scoped, tag = 'internal scratch']
  #allocation2 [shape = 'f32[1,1]{1,0:T(1,128)S(1)}', space=vmem, size = 0x200, scoped, tag = 'scoped memory for reranker_forward.19']
  %s0 = inlined_call_operand.vmem [shape: bf16[6,32], index: 0, kind: input, shape index: {}]
  %s1 = inlined_call_operand.vmem [shape: bf16[32,32], index: 1, kind: input, shape index: {}]
  %s2 = inlined_call_operand.vmem [shape: f32[1,32], index: 2, kind: input, shape index: {}]
  %s3 = inlined_call_operand.vmem [shape: bf16[32,256], index: 3, kind: input, shape index: {}]
  %s4 = inlined_call_operand.vmem [shape: f32[1,256], index: 4, kind: input, shape index: {}]
  %s5 = inlined_call_operand.vmem [shape: bf16[256,1], index: 5, kind: input, shape index: {}]
  %s6 = inlined_call_operand.<no memory space> [shape: f32[1,1], index: 6, kind: input, shape index: {}]
  %s7 = inlined_call_operand.vmem [shape: f32[6,1], index: 7, kind: output, shape index: {}]
  %s8 = sld [smem:[#allocation0]]
  $region38: #{reranker_forward.19} parent=0
    _
  %s10 = ssub.s32 1, %s8
  %s11 = scalar_select 0, %s10, %s8
  %v12 = vstv %s6
  %13 = vst [vmem:[#allocation2] sm:$0x1] %v12
  // Predicated region
  $region2: #{reranker_forward.19} parent=0 // pred_check
    _
  $region3: #{reranker_forward.19} parent=0 // pred_check_branch
    %15 = sbr.rel (0) target = $region5
  $region4: #{reranker_forward.19} parent=0 // pred_region
    _
  $region5: #{reranker_forward.19} parent=0 // pred_fallthru
    _
  // Predicated region
  $region6: #{reranker_forward.19} parent=0 // pred_check
    _
  $region7: #{reranker_forward.19} parent=0 // pred_check_branch
    %17 = sbr.rel (0) target = $region9
  $region8: #{reranker_forward.19} parent=0 // pred_region
    _
  $region9: #{reranker_forward.19} parent=0 // pred_fallthru
    _
  // Predicated region
  $region10: #{reranker_forward.19} parent=0 // pred_check
    _
  $region11: #{reranker_forward.19} parent=0 // pred_check_branch
    %19 = sbr.rel (0) target = $region13
  $region12: #{reranker_forward.19} parent=0 // pred_region
    _
  $region13: #{reranker_forward.19} parent=0 // pred_fallthru
    _
  // Predicated region
  $region14: #{reranker_forward.19} parent=0 // pred_check
    _
  $region15: #{reranker_forward.19} parent=0 // pred_check_branch
    %21 = sbr.rel (0) target = $region17
  $region16: #{reranker_forward.19} parent=0 // pred_region
    _
  $region17: #{reranker_forward.19} parent=0 // pred_fallthru
    _
  // Predicated region
  $region18: #{reranker_forward.19} parent=0 // pred_check
    _
  $region19: #{reranker_forward.19} parent=0 // pred_check_branch
    %23 = sbr.rel (0) target = $region21
  $region20: #{reranker_forward.19} parent=0 // pred_region
    _
  $region21: #{reranker_forward.19} parent=0 // pred_fallthru
    _
  // Predicated region
  $region22: #{reranker_forward.19} parent=0 // pred_check
    _
  $region23: #{reranker_forward.19} parent=0 // pred_check_branch
    %25 = sbr.rel (0) target = $region25
  $region24: #{reranker_forward.19} parent=0 // pred_region
    _
  $region25: #{reranker_forward.19} parent=0 // pred_fallthru
    _
  // Predicated region
  $region26: #{reranker_forward.19} parent=0 // pred_check
    _
  $region27: #{reranker_forward.19} parent=0 // pred_check_branch
    %27 = sbr.rel (0) target = $region29
  $region28: #{reranker_forward.19} parent=0 // pred_region
    _
  $region29: #{reranker_forward.19} parent=0 // pred_fallthru
    _
  %v29 = vld [vmem:[%s0] sm:$0x7]
  %v30 = vld [vmem:[%s1] sm:$0xf]
  %v31 = vld [vmem:[%s1 + $0x4] sm:$0xf]
  %v32 = vld [vmem:[%s1 + $0x8] sm:$0xf]
  %v33 = vld [vmem:[%s1 + $0xc] sm:$0xf]
  %v34 = vld [vmem:[%s2] sm:$0x1]
  %v36 = vlaneseq
  %v37 = vshrl.u32 %v36, 7
  %v38 = vsub.s32 0, %v37
  %v39 = vrot.slane %v34, %v38
  %v45 = vunpack.c.l.b16 %v30
  %v46 = vunpack.c.l.b16 %v31
  %v47 = vunpack.c.l.b16 %v32
  %v48 = vunpack.c.l.b16 %v33
  %v49 = vpack.c.b16 %v46, %v45
  %v50 = vpack.c.b16 %v48, %v47
  %vm53 = vcmask 261120
  %v55 = vsel %vm53, %v29, 0
  %57 = vmatprep.subr.bf16.mxu0 0
  %58 = vmatpush1.bf16.msra.mxu0 %v49
  %59 = vmatprep.subr.bf16.mxu0 0
  %60 = vmatpush1.bf16.msra.mxu0 %v50
  %61 = vmatprep.subr.bf16.mxu0 0
  %62 = vmatpush1.bf16.msra.mxu0 0
  %63 = vmatprep.subr.bf16.mxu0 0
  %64 = vmatpush1.bf16.msra.mxu0 0
  %65 = vmatprep.subr.bf16.mxu0 0
  %66 = vmatpush1.bf16.msra.mxu0 0
  %67 = vmatprep.subr.bf16.mxu0 0
  %68 = vmatpush1.bf16.msra.mxu0 0
  %69 = vmatprep.subr.bf16.mxu0 0
  %70 = vmatpush1.bf16.msra.mxu0 0
  %71 = vmatprep.subr.bf16.mxu0 0
  %72 = vmatpush1.bf16.msra.mxu0 0
  %73 = vmatprep.subr.bf16.mxu0 0
  %74 = vmatpush1.bf16.msra.mxu0 0
  %75 = vmatprep.subr.bf16.mxu0 0
  %76 = vmatpush1.bf16.msra.mxu0 0
  %77 = vmatprep.subr.bf16.mxu0 0
  %78 = vmatpush1.bf16.msra.mxu0 0
  %79 = vmatprep.subr.bf16.mxu0 0
  %80 = vmatpush1.bf16.msra.mxu0 0
  %81 = vmatprep.subr.bf16.mxu0 0
  %82 = vmatpush1.bf16.msra.mxu0 0
  %83 = vmatprep.subr.bf16.mxu0 0
  %84 = vmatpush1.bf16.msra.mxu0 0
  %85 = vmatprep.subr.bf16.mxu0 0
  %86 = vmatpush1.bf16.msra.mxu0 0
  %87 = vmatprep.subr.bf16.mxu0 0
  %88 = vmatpush1.bf16.msra.mxu0 0
  %89 = vmatprep.mubr.bf16.mxu0 0
  %90 = vmatmul.mubr.bf16.gmra.mrb[0].mxu0 %v55
  %v91 = vpop.f32.mrb[0].mxu0
  %v92 = vadd.f32 %v39, %v91
  %v93 = vpop.f32.mrb[0].mxu0
  %v94 = vpop.f32.mrb[0].mxu0
  %v95 = vpop.f32.mrb[0].mxu0
  %96 = vdwg.mxu0
  %v97 = vtanh.pop %v92
  %v98 = vpack.c.bf16 %v97, %v97
  %v99 = vld [vmem:[%s3] sm:$0xff]
  %v100 = vld [vmem:[%s3 + $0x8] sm:$0xff]
  %v101 = vld [vmem:[%s3 + $0x10] sm:$0xff]
  %v102 = vld [vmem:[%s3 + $0x18] sm:$0xff]
  %v103 = vld [vmem:[%s4] sm:$0x3]
  %v105 = vlaneseq
  %v106 = vshrl.u32 %v105, 7
  %v107 = vsub.s32 0, %v106
  %v108 = vrot.slane %v103, %v107
  %v109 = vlaneseq
  %v110 = vshrl.u32 %v109, 7
  %v111 = vsub.s32 1, %v110
  %v112 = vrot.slane %v103, %v111
  %v119 = vunpack.c.l.b16 %v99
  %v120 = vunpack.c.h.b16 %v99
  %v121 = vunpack.c.l.b16 %v100
  %v122 = vunpack.c.h.b16 %v100
  %v123 = vunpack.c.l.b16 %v101
  %v124 = vunpack.c.h.b16 %v101
  %v125 = vunpack.c.l.b16 %v102
  %v126 = vunpack.c.h.b16 %v102
  %v127 = vpack.c.b16 %v121, %v119
  %v128 = vpack.c.b16 %v122, %v120
  %v129 = vpack.c.b16 %v125, %v123
  %v130 = vpack.c.b16 %v126, %v124
  %v136 = vsel %vm53, %v98, 0
  %138 = vmatprep.subr.bf16.mxu0 %v128
  %139 = vmatpush1.bf16.msra.mxu0 %v127
  %140 = vmatprep.subr.bf16.mxu0 %v130
  %141 = vmatpush1.bf16.msra.mxu0 %v129
  %142 = vmatprep.subr.bf16.mxu0 0
  %143 = vmatpush1.bf16.msra.mxu0 0
  %144 = vmatprep.subr.bf16.mxu0 0
  %145 = vmatpush1.bf16.msra.mxu0 0
  %146 = vmatprep.subr.bf16.mxu0 0
  %147 = vmatpush1.bf16.msra.mxu0 0
  %148 = vmatprep.subr.bf16.mxu0 0
  %149 = vmatpush1.bf16.msra.mxu0 0
  %150 = vmatprep.subr.bf16.mxu0 0
  %151 = vmatpush1.bf16.msra.mxu0 0
  %152 = vmatprep.subr.bf16.mxu0 0
  %153 = vmatpush1.bf16.msra.mxu0 0
  %154 = vmatprep.subr.bf16.mxu0 0
  %155 = vmatpush1.bf16.msra.mxu0 0
  %156 = vmatprep.subr.bf16.mxu0 0
  %157 = vmatpush1.bf16.msra.mxu0 0
  %158 = vmatprep.subr.bf16.mxu0 0
  %159 = vmatpush1.bf16.msra.mxu0 0
  %160 = vmatprep.subr.bf16.mxu0 0
  %161 = vmatpush1.bf16.msra.mxu0 0
  %162 = vmatprep.subr.bf16.mxu0 0
  %163 = vmatpush1.bf16.msra.mxu0 0
  %164 = vmatprep.subr.bf16.mxu0 0
  %165 = vmatpush1.bf16.msra.mxu0 0
  %166 = vmatprep.subr.bf16.mxu0 0
  %167 = vmatpush1.bf16.msra.mxu0 0
  %168 = vmatprep.subr.bf16.mxu0 0
  %169 = vmatpush1.bf16.msra.mxu0 0
  %170 = vmatprep.mubr.bf16.mxu0 0
  %171 = vmatmul.mubr.bf16.gmra.mrb[0].mxu0 %v136
  %v172 = vpop.f32.mrb[0].mxu0
  %v173 = vadd.f32 %v108, %v172
  %v174 = vpop.f32.mrb[0].mxu0
  %v175 = vadd.f32 %v112, %v174
  %v176 = vpop.f32.mrb[0].mxu0
  %v177 = vpop.f32.mrb[0].mxu0
  %178 = vdwg.mxu0
  %v179 = vmul.f32 %v173, 0.5
  %v180 = vmul.f32 %v175, 0.5
  %v181 = vmul.f32 %v173, 0.70710677
  %v182 = vmul.f32 %v175, 0.70710677
  %v183 = verf.f32.pop %v181
  %v184 = verf.f32.pop %v182
  %v185 = vadd.f32 %v183, 1.0
  %v186 = vadd.f32 %v184, 1.0
  %v187 = vmul.f32 %v179, %v185
  %v188 = vmul.f32 %v180, %v186
  %v189 = vpack.c.bf16 %v187, %v187
  %v190 = vpack.c.bf16 %v188, %v188
  %v191 = vld [vmem:[%s5] sm:$0xf]
  %v192 = vld [vmem:[%s5 + $0x4] sm:$0xf]
  %v193 = vld [vmem:[%s5 + $0x8] sm:$0xf]
  %v194 = vld [vmem:[%s5 + $0xc] sm:$0xf]
  %v195 = vld [vmem:[%s5 + $0x10] sm:$0xf]
  %v196 = vld [vmem:[%s5 + $0x14] sm:$0xf]
  %v197 = vld [vmem:[%s5 + $0x18] sm:$0xf]
  %v198 = vld [vmem:[%s5 + $0x1c] sm:$0xf]
  %v199 = vld [vmem:[%s5 + $0x20] sm:$0xf]
  %v200 = vld [vmem:[%s5 + $0x24] sm:$0xf]
  %v201 = vld [vmem:[%s5 + $0x28] sm:$0xf]
  %v202 = vld [vmem:[%s5 + $0x2c] sm:$0xf]
  %v203 = vld [vmem:[%s5 + $0x30] sm:$0xf]
  %v204 = vld [vmem:[%s5 + $0x34] sm:$0xf]
  %v205 = vld [vmem:[%s5 + $0x38] sm:$0xf]
  %v206 = vld [vmem:[%s5 + $0x3c] sm:$0xf]
  %v207 = vld [vmem:[%s5 + $0x40] sm:$0xf]
  %v208 = vld [vmem:[%s5 + $0x44] sm:$0xf]
  %v209 = vld [vmem:[%s5 + $0x48] sm:$0xf]
  %v210 = vld [vmem:[%s5 + $0x4c] sm:$0xf]
  %v211 = vld [vmem:[%s5 + $0x50] sm:$0xf]
  %v212 = vld [vmem:[%s5 + $0x54] sm:$0xf]
  %v213 = vld [vmem:[%s5 + $0x58] sm:$0xf]
  %v214 = vld [vmem:[%s5 + $0x5c] sm:$0xf]
  %v215 = vld [vmem:[%s5 + $0x60] sm:$0xf]
  %v216 = vld [vmem:[%s5 + $0x64] sm:$0xf]
  %v217 = vld [vmem:[%s5 + $0x68] sm:$0xf]
  %v218 = vld [vmem:[%s5 + $0x6c] sm:$0xf]
  %v219 = vld [vmem:[%s5 + $0x70] sm:$0xf]
  %v220 = vld [vmem:[%s5 + $0x74] sm:$0xf]
  %v221 = vld [vmem:[%s5 + $0x78] sm:$0xf]
  %v222 = vld [vmem:[%s5 + $0x7c] sm:$0xf]
  %v223 = vld [vmem:[#allocation2] sm:$0x1]
  %v225 = vlaneseq
  %v226 = vshrl.u32 %v225, 7
  %v227 = vsub.s32 0, %v226
  %v228 = vrot.slane %v223, %v227
  %v262 = vunpack.c.l.b16 %v191
  %v263 = vunpack.c.l.b16 %v192
  %v264 = vunpack.c.l.b16 %v193
  %v265 = vunpack.c.l.b16 %v194
  %v266 = vunpack.c.l.b16 %v195
  %v267 = vunpack.c.l.b16 %v196
  %v268 = vunpack.c.l.b16 %v197
  %v269 = vunpack.c.l.b16 %v198
  %v270 = vunpack.c.l.b16 %v199
  %v271 = vunpack.c.l.b16 %v200
  %v272 = vunpack.c.l.b16 %v201
  %v273 = vunpack.c.l.b16 %v202
  %v274 = vunpack.c.l.b16 %v203
  %v275 = vunpack.c.l.b16 %v204
  %v276 = vunpack.c.l.b16 %v205
  %v277 = vunpack.c.l.b16 %v206
  %v278 = vunpack.c.l.b16 %v207
  %v279 = vunpack.c.l.b16 %v208
  %v280 = vunpack.c.l.b16 %v209
  %v281 = vunpack.c.l.b16 %v210
  %v282 = vunpack.c.l.b16 %v211
  %v283 = vunpack.c.l.b16 %v212
  %v284 = vunpack.c.l.b16 %v213
  %v285 = vunpack.c.l.b16 %v214
  %v286 = vunpack.c.l.b16 %v215
  %v287 = vunpack.c.l.b16 %v216
  %v288 = vunpack.c.l.b16 %v217
  %v289 = vunpack.c.l.b16 %v218
  %v290 = vunpack.c.l.b16 %v219
  %v291 = vunpack.c.l.b16 %v220
  %v292 = vunpack.c.l.b16 %v221
  %v293 = vunpack.c.l.b16 %v222
  %v294 = vpack.c.b16 %v263, %v262
  %v295 = vpack.c.b16 %v265, %v264
  %v296 = vpack.c.b16 %v267, %v266
  %v297 = vpack.c.b16 %v269, %v268
  %v298 = vpack.c.b16 %v271, %v270
  %v299 = vpack.c.b16 %v273, %v272
  %v300 = vpack.c.b16 %v275, %v274
  %v301 = vpack.c.b16 %v277, %v276
  %v302 = vpack.c.b16 %v279, %v278
  %v303 = vpack.c.b16 %v281, %v280
  %v304 = vpack.c.b16 %v283, %v282
  %v305 = vpack.c.b16 %v285, %v284
  %v306 = vpack.c.b16 %v287, %v286
  %v307 = vpack.c.b16 %v289, %v288
  %v308 = vpack.c.b16 %v291, %v290
  %v309 = vpack.c.b16 %v293, %v292
  %326 = vmatprep.subr.bf16.mxu0 0
  %327 = vmatpush1.bf16.msra.mxu0 %v294
  %328 = vmatprep.subr.bf16.mxu0 0
  %329 = vmatpush1.bf16.msra.mxu0 %v295
  %330 = vmatprep.subr.bf16.mxu0 0
  %331 = vmatpush1.bf16.msra.mxu0 %v296
  %332 = vmatprep.subr.bf16.mxu0 0
  %333 = vmatpush1.bf16.msra.mxu0 %v297
  %334 = vmatprep.subr.bf16.mxu0 0
  %335 = vmatpush1.bf16.msra.mxu0 %v298
  %336 = vmatprep.subr.bf16.mxu0 0
  %337 = vmatpush1.bf16.msra.mxu0 %v299
  %338 = vmatprep.subr.bf16.mxu0 0
  %339 = vmatpush1.bf16.msra.mxu0 %v300
  %340 = vmatprep.subr.bf16.mxu0 0
  %341 = vmatpush1.bf16.msra.mxu0 %v301
  %342 = vmatprep.subr.bf16.mxu0 0
  %343 = vmatpush1.bf16.msra.mxu0 %v302
  %344 = vmatprep.subr.bf16.mxu0 0
  %345 = vmatpush1.bf16.msra.mxu0 %v303
  %346 = vmatprep.subr.bf16.mxu0 0
  %347 = vmatpush1.bf16.msra.mxu0 %v304
  %348 = vmatprep.subr.bf16.mxu0 0
  %349 = vmatpush1.bf16.msra.mxu0 %v305
  %350 = vmatprep.subr.bf16.mxu0 0
  %351 = vmatpush1.bf16.msra.mxu0 %v306
  %352 = vmatprep.subr.bf16.mxu0 0
  %353 = vmatpush1.bf16.msra.mxu0 %v307
  %354 = vmatprep.subr.bf16.mxu0 0
  %355 = vmatpush1.bf16.msra.mxu0 %v308
  %356 = vmatprep.subr.bf16.mxu0 0
  %357 = vmatpush1.bf16.msra.mxu0 %v309
  %358 = vmatprep.mubr.bf16.mxu0 %v190
  %359 = vmatmul.mubr.bf16.gmra.mrb[0].mxu0 %v189
  %v360 = vpop.f32.mrb[0].mxu0
  %v361 = vadd.f32 %v228, %v360
  %v362 = vpop.f32.mrb[0].mxu0
  %v363 = vpop.f32.mrb[0].mxu0
  %v364 = vpop.f32.mrb[0].mxu0
  %365 = vdwg.mxu0
  %vm366 = vcmask 5120
  %367 = vst.msk [vmem:[%s7] sm:$0x3f] %vm366, %v361
  // Predicated region
  $region30: #{reranker_forward.19} parent=0 // pred_check
    _
  $region31: #{reranker_forward.19} parent=0 // pred_check_branch
    %369 = sbr.rel (0) target = $region33
  $region32: #{reranker_forward.19} parent=0 // pred_region
    _
  $region33: #{reranker_forward.19} parent=0 // pred_fallthru
    _
  // Predicated region
  $region34: #{reranker_forward.19} parent=0 // pred_check
    _
  $region35: #{reranker_forward.19} parent=0 // pred_check_branch
    %371 = sbr.rel (0) target = $region37
  $region36: #{reranker_forward.19} parent=0 // pred_region
    _
  $region37: #{reranker_forward.19} parent=0 // pred_fallthru
    _

// kernel: reranker_forward.14
$region0: #{reranker_forward.14}
  #allocation0 [shape = 'u32[]', space=smem, size = 0x4, offset = 0x4, fixed_abs, tag = 'smem constant byte address 0x4 - core index']
  #allocation1 [shape = 'u32[144,128]{1,0:T(1,128)}', space=vmem, size = 0x12000, scoped, tag = 'internal scratch']
  %s0 = inlined_call_operand.vmem [shape: bf16[96,32], index: 0, kind: input, shape index: {}]
  %s1 = inlined_call_operand.vmem [shape: bf16[32,64], index: 1, kind: input, shape index: {}]
  %s2 = inlined_call_operand.vmem [shape: f32[1,64], index: 2, kind: input, shape index: {}]
  %s3 = inlined_call_operand.vmem [shape: bf16[64,32], index: 3, kind: input, shape index: {}]
  %s4 = inlined_call_operand.vmem [shape: f32[1,32], index: 4, kind: input, shape index: {}]
  %s5 = inlined_call_operand.vmem [shape: f32[1,32], index: 5, kind: input, shape index: {}]
  %s6 = inlined_call_operand.vmem [shape: f32[1,32], index: 6, kind: input, shape index: {}]
  %s7 = inlined_call_operand.vmem [shape: bf16[96,32], index: 7, kind: output, shape index: {}]
  %s8 = sld [smem:[#allocation0]]
  $region38: #{reranker_forward.14} parent=0
    _
  %s10 = ssub.s32 1, %s8
  %s11 = scalar_select 0, %s10, %s8
  // Predicated region
  $region2: #{reranker_forward.14} parent=0 // pred_check
    _
  $region3: #{reranker_forward.14} parent=0 // pred_check_branch
    %13 = sbr.rel (0) target = $region5
  $region4: #{reranker_forward.14} parent=0 // pred_region
    _
  $region5: #{reranker_forward.14} parent=0 // pred_fallthru
    _
  // Predicated region
  $region6: #{reranker_forward.14} parent=0 // pred_check
    _
  $region7: #{reranker_forward.14} parent=0 // pred_check_branch
    %15 = sbr.rel (0) target = $region9
  $region8: #{reranker_forward.14} parent=0 // pred_region
    _
  $region9: #{reranker_forward.14} parent=0 // pred_fallthru
    _
  // Predicated region
  $region10: #{reranker_forward.14} parent=0 // pred_check
    _
  $region11: #{reranker_forward.14} parent=0 // pred_check_branch
    %17 = sbr.rel (0) target = $region13
  $region12: #{reranker_forward.14} parent=0 // pred_region
    _
  $region13: #{reranker_forward.14} parent=0 // pred_fallthru
    _
  // Predicated region
  $region14: #{reranker_forward.14} parent=0 // pred_check
    _
  $region15: #{reranker_forward.14} parent=0 // pred_check_branch
    %19 = sbr.rel (0) target = $region17
  $region16: #{reranker_forward.14} parent=0 // pred_region
    _
  $region17: #{reranker_forward.14} parent=0 // pred_fallthru
    _
  // Predicated region
  $region18: #{reranker_forward.14} parent=0 // pred_check
    _
  $region19: #{reranker_forward.14} parent=0 // pred_check_branch
    %21 = sbr.rel (0) target = $region21
  $region20: #{reranker_forward.14} parent=0 // pred_region
    _
  $region21: #{reranker_forward.14} parent=0 // pred_fallthru
    _
  // Predicated region
  $region22: #{reranker_forward.14} parent=0 // pred_check
    _
  $region23: #{reranker_forward.14} parent=0 // pred_check_branch
    %23 = sbr.rel (0) target = $region25
  $region24: #{reranker_forward.14} parent=0 // pred_region
    _
  $region25: #{reranker_forward.14} parent=0 // pred_fallthru
    _
  // Predicated region
  $region26: #{reranker_forward.14} parent=0 // pred_check
    _
  $region27: #{reranker_forward.14} parent=0 // pred_check_branch
    %25 = sbr.rel (0) target = $region29
  $region28: #{reranker_forward.14} parent=0 // pred_region
    _
  $region29: #{reranker_forward.14} parent=0 // pred_fallthru
    _
  %v27 = vld [vmem:[%s0] sm:$0xf]
  %v28 = vld [vmem:[%s0 + $0x4] sm:$0xf]
  %v29 = vld [vmem:[%s0 + $0x8] sm:$0xf]
  %v30 = vld [vmem:[%s0 + $0xc] sm:$0xf]
  %v31 = vld [vmem:[%s0 + $0x10] sm:$0xf]
  %v32 = vld [vmem:[%s0 + $0x14] sm:$0xf]
  %v33 = vld [vmem:[%s0 + $0x18] sm:$0xf]
  %v34 = vld [vmem:[%s0 + $0x1c] sm:$0xf]
  %v35 = vld [vmem:[%s0 + $0x20] sm:$0xf]
  %v36 = vld [vmem:[%s0 + $0x24] sm:$0xf]
  %v37 = vld [vmem:[%s0 + $0x28] sm:$0xf]
  %v38 = vld [vmem:[%s0 + $0x2c] sm:$0xf]
  %v39 = vld [vmem:[%s1] sm:$0xf]
  %v40 = vld [vmem:[%s1 + $0x4] sm:$0xf]
  %v41 = vld [vmem:[%s1 + $0x8] sm:$0xf]
  %v42 = vld [vmem:[%s1 + $0xc] sm:$0xf]
  %v43 = vld [vmem:[%s2] sm:$0x1]
  %v45 = vlaneseq
  %v46 = vshrl.u32 %v45, 7
  %v47 = vsub.s32 0, %v46
  %v48 = vrot.slane %v43, %v47
  %v62 = vunpack.c.l.b16 %v27
  %v63 = vunpack.c.l.b16 %v28
  %v64 = vunpack.c.l.b16 %v29
  %v65 = vunpack.c.l.b16 %v30
  %v66 = vunpack.c.l.b16 %v31
  %v67 = vunpack.c.l.b16 %v32
  %v68 = vunpack.c.l.b16 %v33
  %v69 = vunpack.c.l.b16 %v34
  %v70 = vunpack.c.l.b16 %v35
  %v71 = vunpack.c.l.b16 %v36
  %v72 = vunpack.c.l.b16 %v37
  %v73 = vunpack.c.l.b16 %v38
  %v74 = vpack.c.b16 %v63, %v62
  %v75 = vpack.c.b16 %v65, %v64
  %v76 = vpack.c.b16 %v67, %v66
  %v77 = vpack.c.b16 %v69, %v68
  %v78 = vpack.c.b16 %v71, %v70
  %v79 = vpack.c.b16 %v73, %v72
  %v84 = vunpack.c.l.b16 %v39
  %v85 = vunpack.c.l.b16 %v40
  %v86 = vunpack.c.l.b16 %v41
  %v87 = vunpack.c.l.b16 %v42
  %v88 = vpack.c.b16 %v85, %v84
  %v89 = vpack.c.b16 %v87, %v86
  %vm92 = vcmask 261120
  %v94 = vsel %vm92, %v74, 0
  %v97 = vsel %vm92, %v75, 0
  %v100 = vsel %vm92, %v76, 0
  %v103 = vsel %vm92, %v77, 0
  %v106 = vsel %vm92, %v78, 0
  %v109 = vsel %vm92, %v79, 0
  %111 = vmatprep.subr.bf16.mxu0 0
  %112 = vmatpush1.bf16.msra.mxu0 %v88
  %113 = vmatprep.subr.bf16.mxu0 0
  %114 = vmatpush1.bf16.msra.mxu0 %v89
  %115 = vmatprep.subr.bf16.mxu0 0
  %116 = vmatpush1.bf16.msra.mxu0 0
  %117 = vmatprep.subr.bf16.mxu0 0
  %118 = vmatpush1.bf16.msra.mxu0 0
  %119 = vmatprep.subr.bf16.mxu0 0
  %120 = vmatpush1.bf16.msra.mxu0 0
  %121 = vmatprep.subr.bf16.mxu0 0
  %122 = vmatpush1.bf16.msra.mxu0 0
  %123 = vmatprep.subr.bf16.mxu0 0
  %124 = vmatpush1.bf16.msra.mxu0 0
  %125 = vmatprep.subr.bf16.mxu0 0
  %126 = vmatpush1.bf16.msra.mxu0 0
  %127 = vmatprep.subr.bf16.mxu0 0
  %128 = vmatpush1.bf16.msra.mxu0 0
  %129 = vmatprep.subr.bf16.mxu0 0
  %130 = vmatpush1.bf16.msra.mxu0 0
  %131 = vmatprep.subr.bf16.mxu0 0
  %132 = vmatpush1.bf16.msra.mxu0 0
  %133 = vmatprep.subr.bf16.mxu0 0
  %134 = vmatpush1.bf16.msra.mxu0 0
  %135 = vmatprep.subr.bf16.mxu0 0
  %136 = vmatpush1.bf16.msra.mxu0 0
  %137 = vmatprep.subr.bf16.mxu0 0
  %138 = vmatpush1.bf16.msra.mxu0 0
  %139 = vmatprep.subr.bf16.mxu0 0
  %140 = vmatpush1.bf16.msra.mxu0 0
  %141 = vmatprep.subr.bf16.mxu0 0
  %142 = vmatpush1.bf16.msra.mxu0 0
  %143 = vmatprep.mubr.bf16.mxu0 0
  %144 = vmatmul.mubr.bf16.gmra.mrb[0].mxu0 %v94
  %v145 = vpop.f32.mrb[0].mxu0
  %v146 = vadd.f32 %v48, %v145
  %v147 = vpop.f32.mrb[0].mxu0
  %v148 = vpop.f32.mrb[0].mxu0
  %v149 = vadd.f32 %v48, %v148
  %v150 = vpop.f32.mrb[0].mxu0
  %151 = vmatprep.mubr.bf16.mxu0 0
  %152 = vmatmul.mubr.bf16.gmra.mrb[0].mxu0 %v97
  %v153 = vpop.f32.mrb[0].mxu0
  %v154 = vadd.f32 %v48, %v153
  %v155 = vpop.f32.mrb[0].mxu0
  %v156 = vpop.f32.mrb[0].mxu0
  %v157 = vadd.f32 %v48, %v156
  %v158 = vpop.f32.mrb[0].mxu0
  %159 = vmatprep.mubr.bf16.mxu0 0
  %160 = vmatmul.mubr.bf16.gmra.mrb[0].mxu0 %v100
  %v161 = vpop.f32.mrb[0].mxu0
  %v162 = vadd.f32 %v48, %v161
  %v163 = vpop.f32.mrb[0].mxu0
  %v164 = vpop.f32.mrb[0].mxu0
  %v165 = vadd.f32 %v48, %v164
  %v166 = vpop.f32.mrb[0].mxu0
  %167 = vmatprep.mubr.bf16.mxu0 0
  %168 = vmatmul.mubr.bf16.gmra.mrb[0].mxu0 %v103
  %v169 = vpop.f32.mrb[0].mxu0
  %v170 = vadd.f32 %v48, %v169
  %v171 = vpop.f32.mrb[0].mxu0
  %v172 = vpop.f32.mrb[0].mxu0
  %v173 = vadd.f32 %v48, %v172
  %v174 = vpop.f32.mrb[0].mxu0
  %175 = vmatprep.mubr.bf16.mxu0 0
  %176 = vmatmul.mubr.bf16.gmra.mrb[0].mxu0 %v106
  %v177 = vpop.f32.mrb[0].mxu0
  %v178 = vadd.f32 %v48, %v177
  %v179 = vpop.f32.mrb[0].mxu0
  %v180 = vpop.f32.mrb[0].mxu0
  %v181 = vadd.f32 %v48, %v180
  %v182 = vpop.f32.mrb[0].mxu0
  %183 = vmatprep.mubr.bf16.mxu0 0
  %184 = vmatmul.mubr.bf16.gmra.mrb[0].mxu0 %v109
  %v185 = vpop.f32.mrb[0].mxu0
  %v186 = vadd.f32 %v48, %v185
  %v187 = vpop.f32.mrb[0].mxu0
  %v188 = vpop.f32.mrb[0].mxu0
  %v189 = vadd.f32 %v48, %v188
  %v190 = vpop.f32.mrb[0].mxu0
  %191 = vdwg.mxu0
  %v192 = vmul.f32 %v146, 0.5
  %v193 = vmul.f32 %v149, 0.5
  %v194 = vmul.f32 %v154, 0.5
  %v195 = vmul.f32 %v157, 0.5
  %v196 = vmul.f32 %v162, 0.5
  %v197 = vmul.f32 %v165, 0.5
  %v198 = vmul.f32 %v170, 0.5
  %v199 = vmul.f32 %v173, 0.5
  %v200 = vmul.f32 %v178, 0.5
  %v201 = vmul.f32 %v181, 0.5
  %v202 = vmul.f32 %v186, 0.5
  %v203 = vmul.f32 %v189, 0.5
  %v204 = vmul.f32 %v146, 0.70710677
  %v205 = vmul.f32 %v149, 0.70710677
  %v206 = vmul.f32 %v154, 0.70710677
  %v207 = vmul.f32 %v157, 0.70710677
  %v208 = vmul.f32 %v162, 0.70710677
  %v209 = vmul.f32 %v165, 0.70710677
  %v210 = vmul.f32 %v170, 0.70710677
  %v211 = vmul.f32 %v173, 0.70710677
  %v212 = vmul.f32 %v178, 0.70710677
  %v213 = vmul.f32 %v181, 0.70710677
  %v214 = vmul.f32 %v186, 0.70710677
  %v215 = vmul.f32 %v189, 0.70710677
  %v216 = verf.f32.pop %v204
  %v217 = verf.f32.pop %v205
  %v218 = verf.f32.pop %v206
  %v219 = verf.f32.pop %v207
  %v220 = verf.f32.pop %v208
  %v221 = verf.f32.pop %v209
  %v222 = verf.f32.pop %v210
  %v223 = verf.f32.pop %v211
  %v224 = verf.f32.pop %v212
  %v225 = verf.f32.pop %v213
  %v226 = verf.f32.pop %v214
  %v227 = verf.f32.pop %v215
  %v228 = vadd.f32 %v216, 1.0
  %v229 = vadd.f32 %v217, 1.0
  %v230 = vadd.f32 %v218, 1.0
  %v231 = vadd.f32 %v219, 1.0
  %v232 = vadd.f32 %v220, 1.0
  %v233 = vadd.f32 %v221, 1.0
  %v234 = vadd.f32 %v222, 1.0
  %v235 = vadd.f32 %v223, 1.0
  %v236 = vadd.f32 %v224, 1.0
  %v237 = vadd.f32 %v225, 1.0
  %v238 = vadd.f32 %v226, 1.0
  %v239 = vadd.f32 %v227, 1.0
  %v240 = vmul.f32 %v192, %v228
  %v241 = vmul.f32 %v193, %v229
  %v242 = vmul.f32 %v194, %v230
  %v243 = vmul.f32 %v195, %v231
  %v244 = vmul.f32 %v196, %v232
  %v245 = vmul.f32 %v197, %v233
  %v246 = vmul.f32 %v198, %v234
  %v247 = vmul.f32 %v199, %v235
  %v248 = vmul.f32 %v200, %v236
  %v249 = vmul.f32 %v201, %v237
  %v250 = vmul.f32 %v202, %v238
  %v251 = vmul.f32 %v203, %v239
  %v252 = vpack.c.bf16 %v241, %v240
  %v253 = vpack.c.bf16 %v243, %v242
  %v254 = vpack.c.bf16 %v245, %v244
  %v255 = vpack.c.bf16 %v247, %v246
  %v256 = vpack.c.bf16 %v249, %v248
  %v257 = vpack.c.bf16 %v251, %v250
  %v258 = vld [vmem:[%s3] sm:$0xf]
  %v259 = vld [vmem:[%s3 + $0x4] sm:$0xf]
  %v260 = vld [vmem:[%s3 + $0x8] sm:$0xf]
  %v261 = vld [vmem:[%s3 + $0xc] sm:$0xf]
  %v262 = vld [vmem:[%s3 + $0x10] sm:$0xf]
  %v263 = vld [vmem:[%s3 + $0x14] sm:$0xf]
  %v264 = vld [vmem:[%s3 + $0x18] sm:$0xf]
  %v265 = vld [vmem:[%s3 + $0x1c] sm:$0xf]
  %v266 = vld [vmem:[%s4] sm:$0x1]
  %v268 = vlaneseq
  %v269 = vshrl.u32 %v268, 7
  %v270 = vsub.s32 0, %v269
  %v271 = vrot.slane %v266, %v270
  %v281 = vunpack.c.l.b16 %v258
  %v282 = vunpack.c.l.b16 %v259
  %v283 = vunpack.c.l.b16 %v260
  %v284 = vunpack.c.l.b16 %v261
  %v285 = vunpack.c.l.b16 %v262
  %v286 = vunpack.c.l.b16 %v263
  %v287 = vunpack.c.l.b16 %v264
  %v288 = vunpack.c.l.b16 %v265
  %v289 = vpack.c.b16 %v282, %v281
  %v290 = vpack.c.b16 %v284, %v283
  %v291 = vpack.c.b16 %v286, %v285
  %v292 = vpack.c.b16 %v288, %v287
  %vm297 = vcmask 523264
  %v299 = vsel %vm297, %v252, 0
  %v302 = vsel %vm297, %v253, 0
  %v305 = vsel %vm297, %v254, 0
  %v308 = vsel %vm297, %v255, 0
  %v311 = vsel %vm297, %v256, 0
  %v314 = vsel %vm297, %v257, 0
  %316 = vmatprep.subr.bf16.mxu0 0
  %317 = vmatpush1.bf16.msra.mxu0 %v289
  %318 = vmatprep.subr.bf16.mxu0 0
  %319 = vmatpush1.bf16.msra.mxu0 %v290
  %320 = vmatprep.subr.bf16.mxu0 0
  %321 = vmatpush1.bf16.msra.mxu0 %v291
  %322 = vmatprep.subr.bf16.mxu0 0
  %323 = vmatpush1.bf16.msra.mxu0 %v292
  %324 = vmatprep.subr.bf16.mxu0 0
  %325 = vmatpush1.bf16.msra.mxu0 0
  %326 = vmatprep.subr.bf16.mxu0 0
  %327 = vmatpush1.bf16.msra.mxu0 0
  %328 = vmatprep.subr.bf16.mxu0 0
  %329 = vmatpush1.bf16.msra.mxu0 0
  %330 = vmatprep.subr.bf16.mxu0 0
  %331 = vmatpush1.bf16.msra.mxu0 0
  %332 = vmatprep.subr.bf16.mxu0 0
  %333 = vmatpush1.bf16.msra.mxu0 0
  %334 = vmatprep.subr.bf16.mxu0 0
  %335 = vmatpush1.bf16.msra.mxu0 0
  %336 = vmatprep.subr.bf16.mxu0 0
  %337 = vmatpush1.bf16.msra.mxu0 0
  %338 = vmatprep.subr.bf16.mxu0 0
  %339 = vmatpush1.bf16.msra.mxu0 0
  %340 = vmatprep.subr.bf16.mxu0 0
  %341 = vmatpush1.bf16.msra.mxu0 0
  %342 = vmatprep.subr.bf16.mxu0 0
  %343 = vmatpush1.bf16.msra.mxu0 0
  %344 = vmatprep.subr.bf16.mxu0 0
  %345 = vmatpush1.bf16.msra.mxu0 0
  %346 = vmatprep.subr.bf16.mxu0 0
  %347 = vmatpush1.bf16.msra.mxu0 0
  %348 = vmatprep.mubr.bf16.mxu0 0
  %349 = vmatmul.mubr.bf16.gmra.mrb[0].mxu0 %v299
  %v350 = vpop.f32.mrb[0].mxu0
  %v351 = vadd.f32 %v271, %v350
  %v352 = vpop.f32.mrb[0].mxu0
  %v353 = vpop.f32.mrb[0].mxu0
  %v354 = vadd.f32 %v271, %v353
  %v355 = vpop.f32.mrb[0].mxu0
  %356 = vmatprep.mubr.bf16.mxu0 0
  %357 = vmatmul.mubr.bf16.gmra.mrb[0].mxu0 %v302
  %v358 = vpop.f32.mrb[0].mxu0
  %v359 = vadd.f32 %v271, %v358
  %v360 = vpop.f32.mrb[0].mxu0
  %v361 = vpop.f32.mrb[0].mxu0
  %v362 = vadd.f32 %v271, %v361
  %v363 = vpop.f32.mrb[0].mxu0
  %364 = vmatprep.mubr.bf16.mxu0 0
  %365 = vmatmul.mubr.bf16.gmra.mrb[0].mxu0 %v305
  %v366 = vpop.f32.mrb[0].mxu0
  %v367 = vadd.f32 %v271, %v366
  %v368 = vpop.f32.mrb[0].mxu0
  %v369 = vpop.f32.mrb[0].mxu0
  %v370 = vadd.f32 %v271, %v369
  %v371 = vpop.f32.mrb[0].mxu0
  %372 = vmatprep.mubr.bf16.mxu0 0
  %373 = vmatmul.mubr.bf16.gmra.mrb[0].mxu0 %v308
  %v374 = vpop.f32.mrb[0].mxu0
  %v375 = vadd.f32 %v271, %v374
  %v376 = vpop.f32.mrb[0].mxu0
  %v377 = vpop.f32.mrb[0].mxu0
  %v378 = vadd.f32 %v271, %v377
  %v379 = vpop.f32.mrb[0].mxu0
  %380 = vmatprep.mubr.bf16.mxu0 0
  %381 = vmatmul.mubr.bf16.gmra.mrb[0].mxu0 %v311
  %v382 = vpop.f32.mrb[0].mxu0
  %v383 = vadd.f32 %v271, %v382
  %v384 = vpop.f32.mrb[0].mxu0
  %v385 = vpop.f32.mrb[0].mxu0
  %v386 = vadd.f32 %v271, %v385
  %v387 = vpop.f32.mrb[0].mxu0
  %388 = vmatprep.mubr.bf16.mxu0 0
  %389 = vmatmul.mubr.bf16.gmra.mrb[0].mxu0 %v314
  %v390 = vpop.f32.mrb[0].mxu0
  %v391 = vadd.f32 %v271, %v390
  %v392 = vpop.f32.mrb[0].mxu0
  %v393 = vpop.f32.mrb[0].mxu0
  %v394 = vadd.f32 %v271, %v393
  %v395 = vpop.f32.mrb[0].mxu0
  %396 = vdwg.mxu0
  %v397 = vunpack.c.l.bf16 %v27
  %v398 = vunpack.c.l.bf16 %v28
  %v399 = vunpack.c.l.bf16 %v29
  %v400 = vunpack.c.l.bf16 %v30
  %v401 = vunpack.c.l.bf16 %v31
  %v402 = vunpack.c.l.bf16 %v32
  %v403 = vunpack.c.l.bf16 %v33
  %v404 = vunpack.c.l.bf16 %v34
  %v405 = vunpack.c.l.bf16 %v35
  %v406 = vunpack.c.l.bf16 %v36
  %v407 = vunpack.c.l.bf16 %v37
  %v408 = vunpack.c.l.bf16 %v38
  %v409 = vadd.f32 %v351, %v397
  %v410 = vadd.f32 %v354, %v398
  %v411 = vadd.f32 %v359, %v399
  %v412 = vadd.f32 %v362, %v400
  %v413 = vadd.f32 %v367, %v401
  %v414 = vadd.f32 %v370, %v402
  %v415 = vadd.f32 %v375, %v403
  %v416 = vadd.f32 %v378, %v404
  %v417 = vadd.f32 %v383, %v405
  %v418 = vadd.f32 %v386, %v406
  %v419 = vadd.f32 %v391, %v407
  %v420 = vadd.f32 %v394, %v408
  %v421 = vsel %vm92, %v409, 0.0
  %422 = vadd.xlane.f32.xlu0 %v421
  %v423 = vpop.xlane.xlu0 %422
  %v424 = vsel %vm92, %v410, 0.0
  %425 = vadd.xlane.f32.xlu0 %v424
  %v426 = vpop.xlane.xlu0 %425
  %v427 = vsel %vm92, %v411, 0.0
  %428 = vadd.xlane.f32.xlu0 %v427
  %v429 = vpop.xlane.xlu0 %428
  %v430 = vsel %vm92, %v412, 0.0
  %431 = vadd.xlane.f32.xlu0 %v430
  %v432 = vpop.xlane.xlu0 %431
  %v433 = vsel %vm92, %v413, 0.0
  %434 = vadd.xlane.f32.xlu0 %v433
  %v435 = vpop.xlane.xlu0 %434
  %v436 = vsel %vm92, %v414, 0.0
  %437 = vadd.xlane.f32.xlu0 %v436
  %v438 = vpop.xlane.xlu0 %437
  %v439 = vsel %vm92, %v415, 0.0
  %440 = vadd.xlane.f32.xlu0 %v439
  %v441 = vpop.xlane.xlu0 %440
  %v442 = vsel %vm92, %v416, 0.0
  %443 = vadd.xlane.f32.xlu0 %v442
  %v444 = vpop.xlane.xlu0 %443
  %v445 = vsel %vm92, %v417, 0.0
  %446 = vadd.xlane.f32.xlu0 %v445
  %v447 = vpop.xlane.xlu0 %446
  %v448 = vsel %vm92, %v418, 0.0
  %449 = vadd.xlane.f32.xlu0 %v448
  %v450 = vpop.xlane.xlu0 %449
  %v451 = vsel %vm92, %v419, 0.0
  %452 = vadd.xlane.f32.xlu0 %v451
  %v453 = vpop.xlane.xlu0 %452
  %v454 = vsel %vm92, %v420, 0.0
  %455 = vadd.xlane.f32.xlu0 %v454
  %v456 = vpop.xlane.xlu0 %455
  %v457 = vrcp.pop 32.0
  %v458 = vmul.f32 %v423, %v457
  %v459 = vmul.f32 %v426, %v457
  %v460 = vmul.f32 %v429, %v457
  %v461 = vmul.f32 %v432, %v457
  %v462 = vmul.f32 %v435, %v457
  %v463 = vmul.f32 %v438, %v457
  %v464 = vmul.f32 %v441, %v457
  %v465 = vmul.f32 %v444, %v457
  %v466 = vmul.f32 %v447, %v457
  %v467 = vmul.f32 %v450, %v457
  %v468 = vmul.f32 %v453, %v457
  %v469 = vmul.f32 %v456, %v457
  %v470 = vsub.f32 %v409, %v458
  %v471 = vsub.f32 %v410, %v459
  %v472 = vsub.f32 %v411, %v460
  %v473 = vsub.f32 %v412, %v461
  %v474 = vsub.f32 %v413, %v462
  %v475 = vsub.f32 %v414, %v463
  %v476 = vsub.f32 %v415, %v464
  %v477 = vsub.f32 %v416, %v465
  %v478 = vsub.f32 %v417, %v466
  %v479 = vsub.f32 %v418, %v467
  %v480 = vsub.f32 %v419, %v468
  %v481 = vsub.f32 %v420, %v469
  %v482 = vmul.f32 %v470, %v470
  %v483 = vmul.f32 %v471, %v471
  %v484 = vmul.f32 %v472, %v472
  %v485 = vmul.f32 %v473, %v473
  %v486 = vmul.f32 %v474, %v474
  %v487 = vmul.f32 %v475, %v475
  %v488 = vmul.f32 %v476, %v476
  %v489 = vmul.f32 %v477, %v477
  %v490 = vmul.f32 %v478, %v478
  %v491 = vmul.f32 %v479, %v479
  %v492 = vmul.f32 %v480, %v480
  %v493 = vmul.f32 %v481, %v481
  %v494 = vsel %vm92, %v482, 0.0
  %495 = vadd.xlane.f32.xlu0 %v494
  %v496 = vpop.xlane.xlu0 %495
  %v497 = vsel %vm92, %v483, 0.0
  %498 = vadd.xlane.f32.xlu0 %v497
  %v499 = vpop.xlane.xlu0 %498
  %v500 = vsel %vm92, %v484, 0.0
  %501 = vadd.xlane.f32.xlu0 %v500
  %v502 = vpop.xlane.xlu0 %501
  %v503 = vsel %vm92, %v485, 0.0
  %504 = vadd.xlane.f32.xlu0 %v503
  %v505 = vpop.xlane.xlu0 %504
  %v506 = vsel %vm92, %v486, 0.0
  %507 = vadd.xlane.f32.xlu0 %v506
  %v508 = vpop.xlane.xlu0 %507
  %v509 = vsel %vm92, %v487, 0.0
  %510 = vadd.xlane.f32.xlu0 %v509
  %v511 = vpop.xlane.xlu0 %510
  %v512 = vsel %vm92, %v488, 0.0
  %513 = vadd.xlane.f32.xlu0 %v512
  %v514 = vpop.xlane.xlu0 %513
  %v515 = vsel %vm92, %v489, 0.0
  %516 = vadd.xlane.f32.xlu0 %v515
  %v517 = vpop.xlane.xlu0 %516
  %v518 = vsel %vm92, %v490, 0.0
  %519 = vadd.xlane.f32.xlu0 %v518
  %v520 = vpop.xlane.xlu0 %519
  %v521 = vsel %vm92, %v491, 0.0
  %522 = vadd.xlane.f32.xlu0 %v521
  %v523 = vpop.xlane.xlu0 %522
  %v524 = vsel %vm92, %v492, 0.0
  %525 = vadd.xlane.f32.xlu0 %v524
  %v526 = vpop.xlane.xlu0 %525
  %v527 = vsel %vm92, %v493, 0.0
  %528 = vadd.xlane.f32.xlu0 %v527
  %v529 = vpop.xlane.xlu0 %528
  %v530 = vmul.f32 %v496, %v457
  %v531 = vmul.f32 %v499, %v457
  %v532 = vmul.f32 %v502, %v457
  %v533 = vmul.f32 %v505, %v457
  %v534 = vmul.f32 %v508, %v457
  %v535 = vmul.f32 %v511, %v457
  %v536 = vmul.f32 %v514, %v457
  %v537 = vmul.f32 %v517, %v457
  %v538 = vmul.f32 %v520, %v457
  %v539 = vmul.f32 %v523, %v457
  %v540 = vmul.f32 %v526, %v457
  %v541 = vmul.f32 %v529, %v457
  %v542 = vadd.f32 %v530, 1e-12
  %v543 = vadd.f32 %v531, 1e-12
  %v544 = vadd.f32 %v532, 1e-12
  %v545 = vadd.f32 %v533, 1e-12
  %v546 = vadd.f32 %v534, 1e-12
  %v547 = vadd.f32 %v535, 1e-12
  %v548 = vadd.f32 %v536, 1e-12
  %v549 = vadd.f32 %v537, 1e-12
  %v550 = vadd.f32 %v538, 1e-12
  %v551 = vadd.f32 %v539, 1e-12
  %v552 = vadd.f32 %v540, 1e-12
  %v553 = vadd.f32 %v541, 1e-12
  %v554 = vrsqrt.pop %v542
  %v555 = vrsqrt.pop %v543
  %v556 = vrsqrt.pop %v544
  %v557 = vrsqrt.pop %v545
  %v558 = vrsqrt.pop %v546
  %v559 = vrsqrt.pop %v547
  %v560 = vrsqrt.pop %v548
  %v561 = vrsqrt.pop %v549
  %v562 = vrsqrt.pop %v550
  %v563 = vrsqrt.pop %v551
  %v564 = vrsqrt.pop %v552
  %v565 = vrsqrt.pop %v553
  %v566 = vmul.f32 %v470, %v554
  %v567 = vmul.f32 %v471, %v555
  %v568 = vmul.f32 %v472, %v556
  %v569 = vmul.f32 %v473, %v557
  %v570 = vmul.f32 %v474, %v558
  %v571 = vmul.f32 %v475, %v559
  %v572 = vmul.f32 %v476, %v560
  %v573 = vmul.f32 %v477, %v561
  %v574 = vmul.f32 %v478, %v562
  %v575 = vmul.f32 %v479, %v563
  %v576 = vmul.f32 %v480, %v564
  %v577 = vmul.f32 %v481, %v565
  %v578 = vld [vmem:[%s5] sm:$0x1]
  %v580 = vlaneseq
  %v581 = vshrl.u32 %v580, 7
  %v582 = vsub.s32 0, %v581
  %v583 = vrot.slane %v578, %v582
  %v585 = vmul.f32 %v566, %v583
  %v586 = vmul.f32 %v567, %v583
  %v587 = vmul.f32 %v568, %v583
  %v588 = vmul.f32 %v569, %v583
  %v589 = vmul.f32 %v570, %v583
  %v590 = vmul.f32 %v571, %v583
  %v591 = vmul.f32 %v572, %v583
  %v592 = vmul.f32 %v573, %v583
  %v593 = vmul.f32 %v574, %v583
  %v594 = vmul.f32 %v575, %v583
  %v595 = vmul.f32 %v576, %v583
  %v596 = vmul.f32 %v577, %v583
  %v597 = vld [vmem:[%s6] sm:$0x1]
  %v599 = vlaneseq
  %v600 = vshrl.u32 %v599, 7
  %v601 = vsub.s32 0, %v600
  %v602 = vrot.slane %v597, %v601
  %v604 = vadd.f32 %v585, %v602
  %v605 = vadd.f32 %v586, %v602
  %v606 = vadd.f32 %v587, %v602
  %v607 = vadd.f32 %v588, %v602
  %v608 = vadd.f32 %v589, %v602
  %v609 = vadd.f32 %v590, %v602
  %v610 = vadd.f32 %v591, %v602
  %v611 = vadd.f32 %v592, %v602
  %v612 = vadd.f32 %v593, %v602
  %v613 = vadd.f32 %v594, %v602
  %v614 = vadd.f32 %v595, %v602
  %v615 = vadd.f32 %v596, %v602
  %v616 = vpack.c.bf16 %v605, %v604
  %v617 = vpack.c.bf16 %v607, %v606
  %v618 = vpack.c.bf16 %v609, %v608
  %v619 = vpack.c.bf16 %v611, %v610
  %v620 = vpack.c.bf16 %v613, %v612
  %v621 = vpack.c.bf16 %v615, %v614
  %v628 = vunpack.c.l.b16 %v616
  %v629 = vunpack.c.h.b16 %v616
  %v630 = vunpack.c.l.b16 %v617
  %v631 = vunpack.c.h.b16 %v617
  %v632 = vunpack.c.l.b16 %v618
  %v633 = vunpack.c.h.b16 %v618
  %v634 = vunpack.c.l.b16 %v619
  %v635 = vunpack.c.h.b16 %v619
  %v636 = vunpack.c.l.b16 %v620
  %v637 = vunpack.c.h.b16 %v620
  %v638 = vunpack.c.l.b16 %v621
  %v639 = vunpack.c.h.b16 %v621
  %v640 = vpack.c.b16 %v628, %v628
  %v641 = vpack.c.b16 %v629, %v629
  %v642 = vpack.c.b16 %v630, %v630
  %v643 = vpack.c.b16 %v631, %v631
  %v644 = vpack.c.b16 %v632, %v632
  %v645 = vpack.c.b16 %v633, %v633
  %v646 = vpack.c.b16 %v634, %v634
  %v647 = vpack.c.b16 %v635, %v635
  %v648 = vpack.c.b16 %v636, %v636
  %v649 = vpack.c.b16 %v637, %v637
  %v650 = vpack.c.b16 %v638, %v638
  %v651 = vpack.c.b16 %v639, %v639
  %vm664 = vcmask 257024
  %665 = vst.msk [vmem:[%s7] sm:$0xf] %vm664, %v640
  %666 = vst.msk [vmem:[%s7 + $0x4] sm:$0xf] %vm664, %v641
  %667 = vst.msk [vmem:[%s7 + $0x8] sm:$0xf] %vm664, %v642
  %668 = vst.msk [vmem:[%s7 + $0xc] sm:$0xf] %vm664, %v643
  %669 = vst.msk [vmem:[%s7 + $0x10] sm:$0xf] %vm664, %v644
  %670 = vst.msk [vmem:[%s7 + $0x14] sm:$0xf] %vm664, %v645
  %671 = vst.msk [vmem:[%s7 + $0x18] sm:$0xf] %vm664, %v646
  %672 = vst.msk [vmem:[%s7 + $0x1c] sm:$0xf] %vm664, %v647
  %673 = vst.msk [vmem:[%s7 + $0x20] sm:$0xf] %vm664, %v648
  %674 = vst.msk [vmem:[%s7 + $0x24] sm:$0xf] %vm664, %v649
  %675 = vst.msk [vmem:[%s7 + $0x28] sm:$0xf] %vm664, %v650
  %676 = vst.msk [vmem:[%s7 + $0x2c] sm:$0xf] %vm664, %v651
  // Predicated region
  $region30: #{reranker_forward.14} parent=0 // pred_check
    _
  $region31: #{reranker_forward.14} parent=0 // pred_check_branch
    %678 = sbr.rel (0) target = $region33
  $region32: #{reranker_forward.14} parent=0 // pred_region
    _
  $region33: #{reranker_forward.14} parent=0 // pred_fallthru
    _
  // Predicated region
  $region34: #{reranker_forward.14} parent=0 // pred_check
    _
  $region35: #{reranker_forward.14} parent=0 // pred_check_branch
    %680 = sbr.rel (0) target = $region37
  $region36: #{reranker_forward.14} parent=0 // pred_region
    _
  $region37: #{reranker_forward.14} parent=0 // pred_fallthru
    _

// kernel: reranker_forward.12
$region0: #{reranker_forward.12}
  #allocation0 [shape = 'u32[]', space=smem, size = 0x4, offset = 0x4, fixed_abs, tag = 'smem constant byte address 0x4 - core index']
  #allocation1 [shape = 'u32[144,128]{1,0:T(1,128)}', space=vmem, size = 0x12000, scoped, tag = 'internal scratch']
  %s0 = inlined_call_operand.vmem [shape: bf16[6,16,96], index: 0, kind: input, shape index: {}]
  %s1 = inlined_call_operand.vmem [shape: f32[6,1,16], index: 1, kind: input, shape index: {}]
  %s2 = inlined_call_operand.vmem [shape: bf16[6,16,32], index: 2, kind: output, shape index: {}]
  %s3 = sld [smem:[#allocation0]]
  $region18: #{reranker_forward.12} parent=0
    _
  %s5 = ssub.s32 1, %s3
  %s6 = scalar_select 0, %s5, %s3
  // Predicated region
  $region2: #{reranker_forward.12} parent=0 // pred_check
    _
  $region3: #{reranker_forward.12} parent=0 // pred_check_branch
    %8 = sbr.rel (0) target = $region5
  $region4: #{reranker_forward.12} parent=0 // pred_region
    _
  $region5: #{reranker_forward.12} parent=0 // pred_fallthru
    _
  // Predicated region
  $region6: #{reranker_forward.12} parent=0 // pred_check
    _
  $region7: #{reranker_forward.12} parent=0 // pred_check_branch
    %10 = sbr.rel (0) target = $region9
  $region8: #{reranker_forward.12} parent=0 // pred_region
    _
  $region9: #{reranker_forward.12} parent=0 // pred_fallthru
    _
  %v12 = vld [vmem:[%s1] sm:$0x1]
  %v13 = vsub.f32 1.0, %v12
  %v14 = vmul.f32 %v13, -1e+09
  %v15 = vld [vmem:[%s0] sm:$0xf]
  %v16 = vld [vmem:[%s0 + $0x4] sm:$0xf]
  %v19 = vunpack.c.l.b16 %v15
  %v20 = vunpack.c.l.b16 %v16
  %v21 = vpack.c.b16 %v20, %v19
  %22 = vrot.lane.b32.xlu0 %v21, 96
  %v23 = vpop.permute.xlu0 %22
  %vm24 = vcmask 64512
  %v26 = vsel %vm24, %v21, 0
  %v29 = vsel %vm24, %v23, 0
  %31 = vmatprep.subr.bf16.mxu0 0
  %32 = vmatpush1.bf16.xpose.msra.mxu0 %v29
  %33 = vmatprep.subr.bf16.mxu0 0
  %34 = vmatpush1.bf16.xpose.msra.mxu0 0
  %35 = vmatprep.subr.bf16.mxu0 0
  %36 = vmatpush1.bf16.xpose.msra.mxu0 0
  %37 = vmatprep.subr.bf16.mxu0 0
  %38 = vmatpush1.bf16.xpose.msra.mxu0 0
  %39 = vmatprep.subr.bf16.mxu0 0
  %40 = vmatpush1.bf16.xpose.msra.mxu0 0
  %41 = vmatprep.subr.bf16.mxu0 0
  %42 = vmatpush1.bf16.xpose.msra.mxu0 0
  %43 = vmatprep.subr.bf16.mxu0 0
  %44 = vmatpush1.bf16.xpose.msra.mxu0 0
  %45 = vmatprep.subr.bf16.mxu0 0
  %46 = vmatpush1.bf16.xpose.msra.mxu0 0
  %47 = vmatprep.subr.bf16.mxu0 0
  %48 = vmatpush1.bf16.xpose.msra.mxu0 0
  %49 = vmatprep.subr.bf16.mxu0 0
  %50 = vmatpush1.bf16.xpose.msra.mxu0 0
  %51 = vmatprep.subr.bf16.mxu0 0
  %52 = vmatpush1.bf16.xpose.msra.mxu0 0
  %53 = vmatprep.subr.bf16.mxu0 0
  %54 = vmatpush1.bf16.xpose.msra.mxu0 0
  %55 = vmatprep.subr.bf16.mxu0 0
  %56 = vmatpush1.bf16.xpose.msra.mxu0 0
  %57 = vmatprep.subr.bf16.mxu0 0
  %58 = vmatpush1.bf16.xpose.msra.mxu0 0
  %59 = vmatprep.subr.bf16.mxu0 0
  %60 = vmatpush1.bf16.xpose.msra.mxu0 0
  %61 = vmatprep.subr.bf16.mxu0 0
  %62 = vmatpush1.bf16.xpose.msra.mxu0 0
  %63 = vmatprep.mubr.bf16.mxu0 0
  %64 = vmatmul.mubr.bf16.gmra.mrb[0].mxu0 %v26
  %v65 = vpop.f32.mrb[0].mxu0
  %v66 = vadd.f32 0.0, %v65
  %v67 = vpop.f32.mrb[0].mxu0
  %v68 = vpop.f32.mrb[0].mxu0
  %v69 = vadd.f32 0.0, %v68
  %v70 = vpop.f32.mrb[0].mxu0
  %71 = vdwg.mxu0
  %v72 = vmul.f32 %v66, 0.35355338
  %v73 = vmul.f32 %v69, 0.35355338
  %v75 = vlaneseq
  %v76 = vshrl.u32 %v75, 7
  %v77 = vsub.s32 0, %v76
  %v78 = vrot.slane %v14, %v77
  %v80 = vadd.f32 %v72, %v78
  %v81 = vadd.f32 %v73, %v78
  %vm82 = vcmask 130048
  %v83 = vsel %vm82, %v80, -inf
  %84 = vmax.xlane.f32.xlu0 %v83
  %v85 = vpop.xlane.xlu0 %84
  %v86 = vsel %vm82, %v81, -inf
  %87 = vmax.xlane.f32.xlu0 %v86
  %v88 = vpop.xlane.xlu0 %87
  %v89 = vsub.f32 %v80, %v85
  %v90 = vsub.f32 %v81, %v88
  %v91 = vmul.f32 %v89, 1.442695
  %v92 = vpow.pop %v91
  %v93 = vmul.f32 %v90, 1.442695
  %v94 = vpow.pop %v93
  %v95 = vsel %vm82, %v92, 0.0
  %96 = vadd.xlane.f32.xlu0 %v95
  %v97 = vpop.xlane.xlu0 %96
  %v98 = vsel %vm82, %v94, 0.0
  %99 = vadd.xlane.f32.xlu0 %v98
  %v100 = vpop.xlane.xlu0 %99
  %v101 = vrcp.pop %v97
  %v102 = vrcp.pop %v100
  %v103 = vmul.f32 %v92, %v101
  %v104 = vmul.f32 %v94, %v102
  %v105 = vpack.c.bf16 %v104, %v103
  %106 = vrot.lane.b32.xlu0 %v21, 64
  %v107 = vpop.permute.xlu0 %106
  %v110 = vsel %vm82, %v105, 0
  %112 = vmatprep.subr.bf16.mxu0 0
  %113 = vmatpush1.bf16.msra.mxu0 %v107
  %114 = vmatprep.subr.bf16.mxu0 0
  %115 = vmatpush1.bf16.msra.mxu0 0
  %116 = vmatprep.subr.bf16.mxu0 0
  %117 = vmatpush1.bf16.msra.mxu0 0
  %118 = vmatprep.subr.bf16.mxu0 0
  %119 = vmatpush1.bf16.msra.mxu0 0
  %120 = vmatprep.subr.bf16.mxu0 0
  %121 = vmatpush1.bf16.msra.mxu0 0
  %122 = vmatprep.subr.bf16.mxu0 0
  %123 = vmatpush1.bf16.msra.mxu0 0
  %124 = vmatprep.subr.bf16.mxu0 0
  %125 = vmatpush1.bf16.msra.mxu0 0
  %126 = vmatprep.subr.bf16.mxu0 0
  %127 = vmatpush1.bf16.msra.mxu0 0
  %128 = vmatprep.subr.bf16.mxu0 0
  %129 = vmatpush1.bf16.msra.mxu0 0
  %130 = vmatprep.subr.bf16.mxu0 0
  %131 = vmatpush1.bf16.msra.mxu0 0
  %132 = vmatprep.subr.bf16.mxu0 0
  %133 = vmatpush1.bf16.msra.mxu0 0
  %134 = vmatprep.subr.bf16.mxu0 0
  %135 = vmatpush1.bf16.msra.mxu0 0
  %136 = vmatprep.subr.bf16.mxu0 0
  %137 = vmatpush1.bf16.msra.mxu0 0
  %138 = vmatprep.subr.bf16.mxu0 0
  %139 = vmatpush1.bf16.msra.mxu0 0
  %140 = vmatprep.subr.bf16.mxu0 0
  %141 = vmatpush1.bf16.msra.mxu0 0
  %142 = vmatprep.subr.bf16.mxu0 0
  %143 = vmatpush1.bf16.msra.mxu0 0
  %144 = vmatprep.mubr.bf16.mxu0 0
  %145 = vmatmul.mubr.bf16.gmra.mrb[0].mxu0 %v110
  %v146 = vpop.f32.mrb[0].mxu0
  %v147 = vadd.f32 0.0, %v146
  %v148 = vpop.f32.mrb[0].mxu0
  %v149 = vpop.f32.mrb[0].mxu0
  %v150 = vadd.f32 0.0, %v149
  %v151 = vpop.f32.mrb[0].mxu0
  %152 = vdwg.mxu0
  %v153 = vld [vmem:[%s0] sm:$0xf]
  %v154 = vld [vmem:[%s0 + $0x4] sm:$0xf]
  %v157 = vunpack.c.l.b16 %v153
  %v158 = vunpack.c.l.b16 %v154
  %v159 = vpack.c.b16 %v158, %v157
  %160 = vrot.lane.b32.xlu0 %v159, 120
  %v161 = vpop.permute.xlu0 %160
  %162 = vrot.lane.b32.xlu0 %v159, 88
  %v163 = vpop.permute.xlu0 %162
  %v165 = vsel %vm24, %v161, 0
  %v168 = vsel %vm24, %v163, 0
  %170 = vmatprep.subr.bf16.mxu0 0
  %171 = vmatpush1.bf16.xpose.msra.mxu0 %v168
  %172 = vmatprep.subr.bf16.mxu0 0
  %173 = vmatpush1.bf16.xpose.msra.mxu0 0
  %174 = vmatprep.subr.bf16.mxu0 0
  %175 = vmatpush1.bf16.xpose.msra.mxu0 0
  %176 = vmatprep.subr.bf16.mxu0 0
  %177 = vmatpush1.bf16.xpose.msra.mxu0 0
  %178 = vmatprep.subr.bf16.mxu0 0
  %179 = vmatpush1.bf16.xpose.msra.mxu0 0
  %180 = vmatprep.subr.bf16.mxu0 0
  %181 = vmatpush1.bf16.xpose.msra.mxu0 0
  %182 = vmatprep.subr.bf16.mxu0 0
  %183 = vmatpush1.bf16.xpose.msra.mxu0 0
  %184 = vmatprep.subr.bf16.mxu0 0
  %185 = vmatpush1.bf16.xpose.msra.mxu0 0
  %186 = vmatprep.subr.bf16.mxu0 0
  %187 = vmatpush1.bf16.xpose.msra.mxu0 0
  %188 = vmatprep.subr.bf16.mxu0 0
  %189 = vmatpush1.bf16.xpose.msra.mxu0 0
  %190 = vmatprep.subr.bf16.mxu0 0
  %191 = vmatpush1.bf16.xpose.msra.mxu0 0
  %192 = vmatprep.subr.bf16.mxu0 0
  %193 = vmatpush1.bf16.xpose.msra.mxu0 0
  %194 = vmatprep.subr.bf16.mxu0 0
  %195 = vmatpush1.bf16.xpose.msra.mxu0 0
  %196 = vmatprep.subr.bf16.mxu0 0
  %197 = vmatpush1.bf16.xpose.msra.mxu0 0
  %198 = vmatprep.subr.bf16.mxu0 0
  %199 = vmatpush1.bf16.xpose.msra.mxu0 0
  %200 = vmatprep.subr.bf16.mxu0 0
  %201 = vmatpush1.bf16.xpose.msra.mxu0 0
  %202 = vmatprep.mubr.bf16.mxu0 0
  %203 = vmatmul.mubr.bf16.gmra.mrb[0].mxu0 %v165
  %v204 = vpop.f32.mrb[0].mxu0
  %v205 = vadd.f32 0.0, %v204
  %v206 = vpop.f32.mrb[0].mxu0
  %v207 = vpop.f32.mrb[0].mxu0
  %v208 = vadd.f32 0.0, %v207
  %v209 = vpop.f32.mrb[0].mxu0
  %210 = vdwg.mxu0
  %v211 = vmul.f32 %v205, 0.35355338
  %v212 = vmul.f32 %v208, 0.35355338
  %v213 = vadd.f32 %v211, %v78
  %v214 = vadd.f32 %v212, %v78
  %v215 = vsel %vm82, %v213, -inf
  %216 = vmax.xlane.f32.xlu0 %v215
  %v217 = vpop.xlane.xlu0 %216
  %v218 = vsel %vm82, %v214, -inf
  %219 = vmax.xlane.f32.xlu0 %v218
  %v220 = vpop.xlane.xlu0 %219
  %v221 = vsub.f32 %v213, %v217
  %v222 = vsub.f32 %v214, %v220
  %v223 = vmul.f32 %v221, 1.442695
  %v224 = vpow.pop %v223
  %v225 = vmul.f32 %v222, 1.442695
  %v226 = vpow.pop %v225
  %v227 = vsel %vm82, %v224, 0.0
  %228 = vadd.xlane.f32.xlu0 %v227
  %v229 = vpop.xlane.xlu0 %228
  %v230 = vsel %vm82, %v226, 0.0
  %231 = vadd.xlane.f32.xlu0 %v230
  %v232 = vpop.xlane.xlu0 %231
  %v233 = vrcp.pop %v229
  %v234 = vrcp.pop %v232
  %v235 = vmul.f32 %v224, %v233
  %v236 = vmul.f32 %v226, %v234
  %v237 = vpack.c.bf16 %v236, %v235
  %238 = vrot.lane.b32.xlu0 %v159, 56
  %v239 = vpop.permute.xlu0 %238
  %v242 = vsel %vm82, %v237, 0
  %244 = vmatprep.subr.bf16.mxu0 0
  %245 = vmatpush1.bf16.msra.mxu0 %v239
  %246 = vmatprep.subr.bf16.mxu0 0
  %247 = vmatpush1.bf16.msra.mxu0 0
  %248 = vmatprep.subr.bf16.mxu0 0
  %249 = vmatpush1.bf16.msra.mxu0 0
  %250 = vmatprep.subr.bf16.mxu0 0
  %251 = vmatpush1.bf16.msra.mxu0 0
  %252 = vmatprep.subr.bf16.mxu0 0
  %253 = vmatpush1.bf16.msra.mxu0 0
  %254 = vmatprep.subr.bf16.mxu0 0
  %255 = vmatpush1.bf16.msra.mxu0 0
  %256 = vmatprep.subr.bf16.mxu0 0
  %257 = vmatpush1.bf16.msra.mxu0 0
  %258 = vmatprep.subr.bf16.mxu0 0
  %259 = vmatpush1.bf16.msra.mxu0 0
  %260 = vmatprep.subr.bf16.mxu0 0
  %261 = vmatpush1.bf16.msra.mxu0 0
  %262 = vmatprep.subr.bf16.mxu0 0
  %263 = vmatpush1.bf16.msra.mxu0 0
  %264 = vmatprep.subr.bf16.mxu0 0
  %265 = vmatpush1.bf16.msra.mxu0 0
  %266 = vmatprep.subr.bf16.mxu0 0
  %267 = vmatpush1.bf16.msra.mxu0 0
  %268 = vmatprep.subr.bf16.mxu0 0
  %269 = vmatpush1.bf16.msra.mxu0 0
  %270 = vmatprep.subr.bf16.mxu0 0
  %271 = vmatpush1.bf16.msra.mxu0 0
  %272 = vmatprep.subr.bf16.mxu0 0
  %273 = vmatpush1.bf16.msra.mxu0 0
  %274 = vmatprep.subr.bf16.mxu0 0
  %275 = vmatpush1.bf16.msra.mxu0 0
  %276 = vmatprep.mubr.bf16.mxu0 0
  %277 = vmatmul.mubr.bf16.gmra.mrb[0].mxu0 %v242
  %v278 = vpop.f32.mrb[0].mxu0
  %v279 = vadd.f32 0.0, %v278
  %v280 = vpop.f32.mrb[0].mxu0
  %v281 = vpop.f32.mrb[0].mxu0
  %v282 = vadd.f32 0.0, %v281
  %v283 = vpop.f32.mrb[0].mxu0
  %284 = vdwg.mxu0
  %v285 = vld [vmem:[%s0] sm:$0xf]
  %v286 = vld [vmem:[%s0 + $0x4] sm:$0xf]
  %v289 = vunpack.c.l.b16 %v285
  %v290 = vunpack.c.l.b16 %v286
  %v291 = vpack.c.b16 %v290, %v289
  %292 = vrot.lane.b32.xlu0 %v291, 112
  %v293 = vpop.permute.xlu0 %292
  %294 = vrot.lane.b32.xlu0 %v291, 80
  %v295 = vpop.permute.xlu0 %294
  %v297 = vsel %vm24, %v293, 0
  %v300 = vsel %vm24, %v295, 0
  %302 = vmatprep.subr.bf16.mxu0 0
  %303 = vmatpush1.bf16.xpose.msra.mxu0 %v300
  %304 = vmatprep.subr.bf16.mxu0 0
  %305 = vmatpush1.bf16.xpose.msra.mxu0 0
  %306 = vmatprep.subr.bf16.mxu0 0
  %307 = vmatpush1.bf16.xpose.msra.mxu0 0
  %308 = vmatprep.subr.bf16.mxu0 0
  %309 = vmatpush1.bf16.xpose.msra.mxu0 0
  %310 = vmatprep.subr.bf16.mxu0 0
  %311 = vmatpush1.bf16.xpose.msra.mxu0 0
  %312 = vmatprep.subr.bf16.mxu0 0
  %313 = vmatpush1.bf16.xpose.msra.mxu0 0
  %314 = vmatprep.subr.bf16.mxu0 0
  %315 = vmatpush1.bf16.xpose.msra.mxu0 0
  %316 = vmatprep.subr.bf16.mxu0 0
  %317 = vmatpush1.bf16.xpose.msra.mxu0 0
  %318 = vmatprep.subr.bf16.mxu0 0
  %319 = vmatpush1.bf16.xpose.msra.mxu0 0
  %320 = vmatprep.subr.bf16.mxu0 0
  %321 = vmatpush1.bf16.xpose.msra.mxu0 0
  %322 = vmatprep.subr.bf16.mxu0 0
  %323 = vmatpush1.bf16.xpose.msra.mxu0 0
  %324 = vmatprep.subr.bf16.mxu0 0
  %325 = vmatpush1.bf16.xpose.msra.mxu0 0
  %326 = vmatprep.subr.bf16.mxu0 0
  %327 = vmatpush1.bf16.xpose.msra.mxu0 0
  %328 = vmatprep.subr.bf16.mxu0 0
  %329 = vmatpush1.bf16.xpose.msra.mxu0 0
  %330 = vmatprep.subr.bf16.mxu0 0
  %331 = vmatpush1.bf16.xpose.msra.mxu0 0
  %332 = vmatprep.subr.bf16.mxu0 0
  %333 = vmatpush1.bf16.xpose.msra.mxu0 0
  %334 = vmatprep.mubr.bf16.mxu0 0
  %335 = vmatmul.mubr.bf16.gmra.mrb[0].mxu0 %v297
  %v336 = vpop.f32.mrb[0].mxu0
  %v337 = vadd.f32 0.0, %v336
  %v338 = vpop.f32.mrb[0].mxu0
  %v339 = vpop.f32.mrb[0].mxu0
  %v340 = vadd.f32 0.0, %v339
  %v341 = vpop.f32.mrb[0].mxu0
  %342 = vdwg.mxu0
  %v343 = vmul.f32 %v337, 0.35355338
  %v344 = vmul.f32 %v340, 0.35355338
  %v345 = vadd.f32 %v343, %v78
  %v346 = vadd.f32 %v344, %v78
  %v347 = vsel %vm82, %v345, -inf
  %348 = vmax.xlane.f32.xlu0 %v347
  %v349 = vpop.xlane.xlu0 %348
  %v350 = vsel %vm82, %v346, -inf
  %351 = vmax.xlane.f32.xlu0 %v350
  %v352 = vpop.xlane.xlu0 %351
  %v353 = vsub.f32 %v345, %v349
  %v354 = vsub.f32 %v346, %v352
  %v355 = vmul.f32 %v353, 1.442695
  %v356 = vpow.pop %v355
  %v357 = vmul.f32 %v354, 1.442695
  %v358 = vpow.pop %v357
  %v359 = vsel %vm82, %v356, 0.0
  %360 = vadd.xlane.f32.xlu0 %v359
  %v361 = vpop.xlane.xlu0 %360
  %v362 = vsel %vm82, %v358, 0.0
  %363 = vadd.xlane.f32.xlu0 %v362
  %v364 = vpop.xlane.xlu0 %363
  %v365 = vrcp.pop %v361
  %v366 = vrcp.pop %v364
  %v367 = vmul.f32 %v356, %v365
  %v368 = vmul.f32 %v358, %v366
  %v369 = vpack.c.bf16 %v368, %v367
  %370 = vrot.lane.b32.xlu0 %v291, 48
  %v371 = vpop.permute.xlu0 %370
  %v374 = vsel %vm82, %v369, 0
  %376 = vmatprep.subr.bf16.mxu0 0
  %377 = vmatpush1.bf16.msra.mxu0 %v371
  %378 = vmatprep.subr.bf16.mxu0 0
  %379 = vmatpush1.bf16.msra.mxu0 0
  %380 = vmatprep.subr.bf16.mxu0 0
  %381 = vmatpush1.bf16.msra.mxu0 0
  %382 = vmatprep.subr.bf16.mxu0 0
  %383 = vmatpush1.bf16.msra.mxu0 0
  %384 = vmatprep.subr.bf16.mxu0 0
  %385 = vmatpush1.bf16.msra.mxu0 0
  %386 = vmatprep.subr.bf16.mxu0 0
  %387 = vmatpush1.bf16.msra.mxu0 0
  %388 = vmatprep.subr.bf16.mxu0 0
  %389 = vmatpush1.bf16.msra.mxu0 0
  %390 = vmatprep.subr.bf16.mxu0 0
  %391 = vmatpush1.bf16.msra.mxu0 0
  %392 = vmatprep.subr.bf16.mxu0 0
  %393 = vmatpush1.bf16.msra.mxu0 0
  %394 = vmatprep.subr.bf16.mxu0 0
  %395 = vmatpush1.bf16.msra.mxu0 0
  %396 = vmatprep.subr.bf16.mxu0 0
  %397 = vmatpush1.bf16.msra.mxu0 0
  %398 = vmatprep.subr.bf16.mxu0 0
  %399 = vmatpush1.bf16.msra.mxu0 0
  %400 = vmatprep.subr.bf16.mxu0 0
  %401 = vmatpush1.bf16.msra.mxu0 0
  %402 = vmatprep.subr.bf16.mxu0 0
  %403 = vmatpush1.bf16.msra.mxu0 0
  %404 = vmatprep.subr.bf16.mxu0 0
  %405 = vmatpush1.bf16.msra.mxu0 0
  %406 = vmatprep.subr.bf16.mxu0 0
  %407 = vmatpush1.bf16.msra.mxu0 0
  %408 = vmatprep.mubr.bf16.mxu0 0
  %409 = vmatmul.mubr.bf16.gmra.mrb[0].mxu0 %v374
  %v410 = vpop.f32.mrb[0].mxu0
  %v411 = vadd.f32 0.0, %v410
  %v412 = vpop.f32.mrb[0].mxu0
  %v413 = vpop.f32.mrb[0].mxu0
  %v414 = vadd.f32 0.0, %v413
  %v415 = vpop.f32.mrb[0].mxu0
  %416 = vdwg.mxu0
  %v417 = vld [vmem:[%s0] sm:$0xf]
  %v418 = vld [vmem:[%s0 + $0x4] sm:$0xf]
  %v421 = vunpack.c.l.b16 %v417
  %v422 = vunpack.c.l.b16 %v418
  %v423 = vpack.c.b16 %v422, %v421
  %424 = vrot.lane.b32.xlu0 %v423, 104
  %v425 = vpop.permute.xlu0 %424
  %426 = vrot.lane.b32.xlu0 %v423, 72
  %v427 = vpop.permute.xlu0 %426
  %v429 = vsel %vm24, %v425, 0
  %v432 = vsel %vm24, %v427, 0
  %434 = vmatprep.subr.bf16.mxu0 0
  %435 = vmatpush1.bf16.xpose.msra.mxu0 %v432
  %436 = vmatprep.subr.bf16.mxu0 0
  %437 = vmatpush1.bf16.xpose.msra.mxu0 0
  %438 = vmatprep.subr.bf16.mxu0 0
  %439 = vmatpush1.bf16.xpose.msra.mxu0 0
  %440 = vmatprep.subr.bf16.mxu0 0
  %441 = vmatpush1.bf16.xpose.msra.mxu0 0
  %442 = vmatprep.subr.bf16.mxu0 0
  %443 = vmatpush1.bf16.xpose.msra.mxu0 0
  %444 = vmatprep.subr.bf16.mxu0 0
  %445 = vmatpush1.bf16.xpose.msra.mxu0 0
  %446 = vmatprep.subr.bf16.mxu0 0
  %447 = vmatpush1.bf16.xpose.msra.mxu0 0
  %448 = vmatprep.subr.bf16.mxu0 0
  %449 = vmatpush1.bf16.xpose.msra.mxu0 0
  %450 = vmatprep.subr.bf16.mxu0 0
  %451 = vmatpush1.bf16.xpose.msra.mxu0 0
  %452 = vmatprep.subr.bf16.mxu0 0
  %453 = vmatpush1.bf16.xpose.msra.mxu0 0
  %454 = vmatprep.subr.bf16.mxu0 0
  %455 = vmatpush1.bf16.xpose.msra.mxu0 0
  %456 = vmatprep.subr.bf16.mxu0 0
  %457 = vmatpush1.bf16.xpose.msra.mxu0 0
  %458 = vmatprep.subr.bf16.mxu0 0
  %459 = vmatpush1.bf16.xpose.msra.mxu0 0
  %460 = vmatprep.subr.bf16.mxu0 0
  %461 = vmatpush1.bf16.xpose.msra.mxu0 0
  %462 = vmatprep.subr.bf16.mxu0 0
  %463 = vmatpush1.bf16.xpose.msra.mxu0 0
  %464 = vmatprep.subr.bf16.mxu0 0
  %465 = vmatpush1.bf16.xpose.msra.mxu0 0
  %466 = vmatprep.mubr.bf16.mxu0 0
  %467 = vmatmul.mubr.bf16.gmra.mrb[0].mxu0 %v429
  %v468 = vpop.f32.mrb[0].mxu0
  %v469 = vadd.f32 0.0, %v468
  %v470 = vpop.f32.mrb[0].mxu0
  %v471 = vpop.f32.mrb[0].mxu0
  %v472 = vadd.f32 0.0, %v471
  %v473 = vpop.f32.mrb[0].mxu0
  %474 = vdwg.mxu0
  %v475 = vmul.f32 %v469, 0.35355338
  %v476 = vmul.f32 %v472, 0.35355338
  %v477 = vadd.f32 %v475, %v78
  %v478 = vadd.f32 %v476, %v78
  %v479 = vsel %vm82, %v477, -inf
  %480 = vmax.xlane.f32.xlu0 %v479
  %v481 = vpop.xlane.xlu0 %480
  %v482 = vsel %vm82, %v478, -inf
  %483 = vmax.xlane.f32.xlu0 %v482
  %v484 = vpop.xlane.xlu0 %483
  %v485 = vsub.f32 %v477, %v481
  %v486 = vsub.f32 %v478, %v484
  %v487 = vmul.f32 %v485, 1.442695
  %v488 = vpow.pop %v487
  %v489 = vmul.f32 %v486, 1.442695
  %v490 = vpow.pop %v489
  %v491 = vsel %vm82, %v488, 0.0
  %492 = vadd.xlane.f32.xlu0 %v491
  %v493 = vpop.xlane.xlu0 %492
  %v494 = vsel %vm82, %v490, 0.0
  %495 = vadd.xlane.f32.xlu0 %v494
  %v496 = vpop.xlane.xlu0 %495
  %v497 = vrcp.pop %v493
  %v498 = vrcp.pop %v496
  %v499 = vmul.f32 %v488, %v497
  %v500 = vmul.f32 %v490, %v498
  %v501 = vpack.c.bf16 %v500, %v499
  %502 = vrot.lane.b32.xlu0 %v423, 40
  %v503 = vpop.permute.xlu0 %502
  %v506 = vsel %vm82, %v501, 0
  %508 = vmatprep.subr.bf16.mxu0 0
  %509 = vmatpush1.bf16.msra.mxu0 %v503
  %510 = vmatprep.subr.bf16.mxu0 0
  %511 = vmatpush1.bf16.msra.mxu0 0
  %512 = vmatprep.subr.bf16.mxu0 0
  %513 = vmatpush1.bf16.msra.mxu0 0
  %514 = vmatprep.subr.bf16.mxu0 0
  %515 = vmatpush1.bf16.msra.mxu0 0
  %516 = vmatprep.subr.bf16.mxu0 0
  %517 = vmatpush1.bf16.msra.mxu0 0
  %518 = vmatprep.subr.bf16.mxu0 0
  %519 = vmatpush1.bf16.msra.mxu0 0
  %520 = vmatprep.subr.bf16.mxu0 0
  %521 = vmatpush1.bf16.msra.mxu0 0
  %522 = vmatprep.subr.bf16.mxu0 0
  %523 = vmatpush1.bf16.msra.mxu0 0
  %524 = vmatprep.subr.bf16.mxu0 0
  %525 = vmatpush1.bf16.msra.mxu0 0
  %526 = vmatprep.subr.bf16.mxu0 0
  %527 = vmatpush1.bf16.msra.mxu0 0
  %528 = vmatprep.subr.bf16.mxu0 0
  %529 = vmatpush1.bf16.msra.mxu0 0
  %530 = vmatprep.subr.bf16.mxu0 0
  %531 = vmatpush1.bf16.msra.mxu0 0
  %532 = vmatprep.subr.bf16.mxu0 0
  %533 = vmatpush1.bf16.msra.mxu0 0
  %534 = vmatprep.subr.bf16.mxu0 0
  %535 = vmatpush1.bf16.msra.mxu0 0
  %536 = vmatprep.subr.bf16.mxu0 0
  %537 = vmatpush1.bf16.msra.mxu0 0
  %538 = vmatprep.subr.bf16.mxu0 0
  %539 = vmatpush1.bf16.msra.mxu0 0
  %540 = vmatprep.mubr.bf16.mxu0 0
  %541 = vmatmul.mubr.bf16.gmra.mrb[0].mxu0 %v506
  %v542 = vpop.f32.mrb[0].mxu0
  %v543 = vadd.f32 0.0, %v542
  %v544 = vpop.f32.mrb[0].mxu0
  %v545 = vpop.f32.mrb[0].mxu0
  %v546 = vadd.f32 0.0, %v545
  %v547 = vpop.f32.mrb[0].mxu0
  %548 = vdwg.mxu0
  %551 = vrot.lane.b32.xlu0 %v279, 8
  %v552 = vpop.permute.xlu0 %551
  %553 = vrot.lane.b32.xlu0 %v282, 8
  %v554 = vpop.permute.xlu0 %553
  %559 = vrot.lane.b32.xlu0 %v411, 16
  %v560 = vpop.permute.xlu0 %559
  %561 = vrot.lane.b32.xlu0 %v414, 16
  %v562 = vpop.permute.xlu0 %561
  %567 = vrot.lane.b32.xlu0 %v543, 24
  %v568 = vpop.permute.xlu0 %567
  %569 = vrot.lane.b32.xlu0 %v546, 24
  %v570 = vpop.permute.xlu0 %569
  %v573 = vsel %vm24, %v147, %v552
  %v574 = vsel %vm24, %v150, %v554
  %v575 = vsel %vm82, %v573, %v560
  %v576 = vsel %vm82, %v574, %v562
  %vm577 = vcmask 195584
  %v578 = vsel %vm577, %v575, %v568
  %v579 = vsel %vm577, %v576, %v570
  %v580 = vpack.c.bf16 %v579, %v578
  %v582 = vunpack.c.l.b16 %v580
  %v583 = vunpack.c.h.b16 %v580
  %v584 = vpack.c.b16 %v582, %v582
  %v585 = vpack.c.b16 %v583, %v583
  %vm588 = vcmask 257024
  %589 = vst.msk [vmem:[%s2] sm:$0xf] %vm588, %v584
  %590 = vst.msk [vmem:[%s2 + $0x4] sm:$0xf] %vm588, %v585
  %s591 = scalar_lea.vmem %s1, 1
  %v592 = vld [vmem:[%s591] sm:$0x1]
  %v593 = vsub.f32 1.0, %v592
  %v594 = vmul.f32 %v593, -1e+09
  %s595 = scalar_lea.vmem %s0, 8
  %v596 = vld [vmem:[%s595] sm:$0xf]
  %v597 = vld [vmem:[%s595 + $0x4] sm:$0xf]
  %v600 = vunpack.c.l.b16 %v596
  %v601 = vunpack.c.l.b16 %v597
  %v602 = vpack.c.b16 %v601, %v600
  %603 = vrot.lane.b32.xlu0 %v602, 96
  %v604 = vpop.permute.xlu0 %603
  %v606 = vsel %vm24, %v602, 0
  %v609 = vsel %vm24, %v604, 0
  %611 = vmatprep.subr.bf16.mxu0 0
  %612 = vmatpush1.bf16.xpose.msra.mxu0 %v609
  %613 = vmatprep.subr.bf16.mxu0 0
  %614 = vmatpush1.bf16.xpose.msra.mxu0 0
  %615 = vmatprep.subr.bf16.mxu0 0
  %616 = vmatpush1.bf16.xpose.msra.mxu0 0
  %617 = vmatprep.subr.bf16.mxu0 0
  %618 = vmatpush1.bf16.xpose.msra.mxu0 0
  %619 = vmatprep.subr.bf16.mxu0 0
  %620 = vmatpush1.bf16.xpose.msra.mxu0 0
  %621 = vmatprep.subr.bf16.mxu0 0
  %622 = vmatpush1.bf16.xpose.msra.mxu0 0
  %623 = vmatprep.subr.bf16.mxu0 0
  %624 = vmatpush1.bf16.xpose.msra.mxu0 0
  %625 = vmatprep.subr.bf16.mxu0 0
  %626 = vmatpush1.bf16.xpose.msra.mxu0 0
  %627 = vmatprep.subr.bf16.mxu0 0
  %628 = vmatpush1.bf16.xpose.msra.mxu0 0
  %629 = vmatprep.subr.bf16.mxu0 0
  %630 = vmatpush1.bf16.xpose.msra.mxu0 0
  %631 = vmatprep.subr.bf16.mxu0 0
  %632 = vmatpush1.bf16.xpose.msra.mxu0 0
  %633 = vmatprep.subr.bf16.mxu0 0
  %634 = vmatpush1.bf16.xpose.msra.mxu0 0
  %635 = vmatprep.subr.bf16.mxu0 0
  %636 = vmatpush1.bf16.xpose.msra.mxu0 0
  %637 = vmatprep.subr.bf16.mxu0 0
  %638 = vmatpush1.bf16.xpose.msra.mxu0 0
  %639 = vmatprep.subr.bf16.mxu0 0
  %640 = vmatpush1.bf16.xpose.msra.mxu0 0
  %641 = vmatprep.subr.bf16.mxu0 0
  %642 = vmatpush1.bf16.xpose.msra.mxu0 0
  %643 = vmatprep.mubr.bf16.mxu0 0
  %644 = vmatmul.mubr.bf16.gmra.mrb[0].mxu0 %v606
  %v645 = vpop.f32.mrb[0].mxu0
  %v646 = vadd.f32 0.0, %v645
  %v647 = vpop.f32.mrb[0].mxu0
  %v648 = vpop.f32.mrb[0].mxu0
  %v649 = vadd.f32 0.0, %v648
  %v650 = vpop.f32.mrb[0].mxu0
  %651 = vdwg.mxu0
  %v652 = vmul.f32 %v646, 0.35355338
  %v653 = vmul.f32 %v649, 0.35355338
  %v655 = vlaneseq
  %v656 = vshrl.u32 %v655, 7
  %v657 = vsub.s32 0, %v656
  %v658 = vrot.slane %v594, %v657
  %v660 = vadd.f32 %v652, %v658
  %v661 = vadd.f32 %v653, %v658
  %v662 = vsel %vm82, %v660, -inf
  %663 = vmax.xlane.f32.xlu0 %v662
  %v664 = vpop.xlane.xlu0 %663
  %v665 = vsel %vm82, %v661, -inf
  %666 = vmax.xlane.f32.xlu0 %v665
  %v667 = vpop.xlane.xlu0 %666
  %v668 = vsub.f32 %v660, %v664
  %v669 = vsub.f32 %v661, %v667
  %v670 = vmul.f32 %v668, 1.442695
  %v671 = vpow.pop %v670
  %v672 = vmul.f32 %v669, 1.442695
  %v673 = vpow.pop %v672
  %v674 = vsel %vm82, %v671, 0.0
  %675 = vadd.xlane.f32.xlu0 %v674
  %v676 = vpop.xlane.xlu0 %675
  %v677 = vsel %vm82, %v673, 0.0
  %678 = vadd.xlane.f32.xlu0 %v677
  %v679 = vpop.xlane.xlu0 %678
  %v680 = vrcp.pop %v676
  %v681 = vrcp.pop %v679
  %v682 = vmul.f32 %v671, %v680
  %v683 = vmul.f32 %v673, %v681
  %v684 = vpack.c.bf16 %v683, %v682
  %685 = vrot.lane.b32.xlu0 %v602, 64
  %v686 = vpop.permute.xlu0 %685
  %v689 = vsel %vm82, %v684, 0
  %691 = vmatprep.subr.bf16.mxu0 0
  %692 = vmatpush1.bf16.msra.mxu0 %v686
  %693 = vmatprep.subr.bf16.mxu0 0
  %694 = vmatpush1.bf16.msra.mxu0 0
  %695 = vmatprep.subr.bf16.mxu0 0
  %696 = vmatpush1.bf16.msra.mxu0 0
  %697 = vmatprep.subr.bf16.mxu0 0
  %698 = vmatpush1.bf16.msra.mxu0 0
  %699 = vmatprep.subr.bf16.mxu0 0
  %700 = vmatpush1.bf16.msra.mxu0 0
  %701 = vmatprep.subr.bf16.mxu0 0
  %702 = vmatpush1.bf16.msra.mxu0 0
  %703 = vmatprep.subr.bf16.mxu0 0
  %704 = vmatpush1.bf16.msra.mxu0 0
  %705 = vmatprep.subr.bf16.mxu0 0
  %706 = vmatpush1.bf16.msra.mxu0 0
  %707 = vmatprep.subr.bf16.mxu0 0
  %708 = vmatpush1.bf16.msra.mxu0 0
  %709 = vmatprep.subr.bf16.mxu0 0
  %710 = vmatpush1.bf16.msra.mxu0 0
  %711 = vmatprep.subr.bf16.mxu0 0
  %712 = vmatpush1.bf16.msra.mxu0 0
  %713 = vmatprep.subr.bf16.mxu0 0
  %714 = vmatpush1.bf16.msra.mxu0 0
  %715 = vmatprep.subr.bf16.mxu0 0
  %716 = vmatpush1.bf16.msra.mxu0 0
  %717 = vmatprep.subr.bf16.mxu0 0
  %718 = vmatpush1.bf16.msra.mxu0 0
  %719 = vmatprep.subr.bf16.mxu0 0
  %720 = vmatpush1.bf16.msra.mxu0 0
  %721 = vmatprep.subr.bf16.mxu0 0
  %722 = vmatpush1.bf16.msra.mxu0 0
  %723 = vmatprep.mubr.bf16.mxu0 0
  %724 = vmatmul.mubr.bf16.gmra.mrb[0].mxu0 %v689
  %v725 = vpop.f32.mrb[0].mxu0
  %v726 = vadd.f32 0.0, %v725
  %v727 = vpop.f32.mrb[0].mxu0
  %v728 = vpop.f32.mrb[0].mxu0
  %v729 = vadd.f32 0.0, %v728
  %v730 = vpop.f32.mrb[0].mxu0
  %731 = vdwg.mxu0
  %v732 = vld [vmem:[%s595] sm:$0xf]
  %v733 = vld [vmem:[%s595 + $0x4] sm:$0xf]
  %v736 = vunpack.c.l.b16 %v732
  %v737 = vunpack.c.l.b16 %v733
  %v738 = vpack.c.b16 %v737, %v736
  %739 = vrot.lane.b32.xlu0 %v738, 120
  %v740 = vpop.permute.xlu0 %739
  %741 = vrot.lane.b32.xlu0 %v738, 88
  %v742 = vpop.permute.xlu0 %741
  %v744 = vsel %vm24, %v740, 0
  %v747 = vsel %vm24, %v742, 0
  %749 = vmatprep.subr.bf16.mxu0 0
  %750 = vmatpush1.bf16.xpose.msra.mxu0 %v747
  %751 = vmatprep.subr.bf16.mxu0 0
  %752 = vmatpush1.bf16.xpose.msra.mxu0 0
  %753 = vmatprep.subr.bf16.mxu0 0
  %754 = vmatpush1.bf16.xpose.msra.mxu0 0
  %755 = vmatprep.subr.bf16.mxu0 0
  %756 = vmatpush1.bf16.xpose.msra.mxu0 0
  %757 = vmatprep.subr.bf16.mxu0 0
  %758 = vmatpush1.bf16.xpose.msra.mxu0 0
  %759 = vmatprep.subr.bf16.mxu0 0
  %760 = vmatpush1.bf16.xpose.msra.mxu0 0
  %761 = vmatprep.subr.bf16.mxu0 0
  %762 = vmatpush1.bf16.xpose.msra.mxu0 0
  %763 = vmatprep.subr.bf16.mxu0 0
  %764 = vmatpush1.bf16.xpose.msra.mxu0 0
  %765 = vmatprep.subr.bf16.mxu0 0
  %766 = vmatpush1.bf16.xpose.msra.mxu0 0
  %767 = vmatprep.subr.bf16.mxu0 0
  %768 = vmatpush1.bf16.xpose.msra.mxu0 0
  %769 = vmatprep.subr.bf16.mxu0 0
  %770 = vmatpush1.bf16.xpose.msra.mxu0 0
  %771 = vmatprep.subr.bf16.mxu0 0
  %772 = vmatpush1.bf16.xpose.msra.mxu0 0
  %773 = vmatprep.subr.bf16.mxu0 0
  %774 = vmatpush1.bf16.xpose.msra.mxu0 0
  %775 = vmatprep.subr.bf16.mxu0 0
  %776 = vmatpush1.bf16.xpose.msra.mxu0 0
  %777 = vmatprep.subr.bf16.mxu0 0
  %778 = vmatpush1.bf16.xpose.msra.mxu0 0
  %779 = vmatprep.subr.bf16.mxu0 0
  %780 = vmatpush1.bf16.xpose.msra.mxu0 0
  %781 = vmatprep.mubr.bf16.mxu0 0
  %782 = vmatmul.mubr.bf16.gmra.mrb[0].mxu0 %v744
  %v783 = vpop.f32.mrb[0].mxu0
  %v784 = vadd.f32 0.0, %v783
  %v785 = vpop.f32.mrb[0].mxu0
  %v786 = vpop.f32.mrb[0].mxu0
  %v787 = vadd.f32 0.0, %v786
  %v788 = vpop.f32.mrb[0].mxu0
  %789 = vdwg.mxu0
  %v790 = vmul.f32 %v784, 0.35355338
  %v791 = vmul.f32 %v787, 0.35355338
  %v792 = vadd.f32 %v790, %v658
  %v793 = vadd.f32 %v791, %v658
  %v794 = vsel %vm82, %v792, -inf
  %795 = vmax.xlane.f32.xlu0 %v794
  %v796 = vpop.xlane.xlu0 %795
  %v797 = vsel %vm82, %v793, -inf
  %798 = vmax.xlane.f32.xlu0 %v797
  %v799 = vpop.xlane.xlu0 %798
  %v800 = vsub.f32 %v792, %v796
  %v801 = vsub.f32 %v793, %v799
  %v802 = vmul.f32 %v800, 1.442695
  %v803 = vpow.pop %v802
  %v804 = vmul.f32 %v801, 1.442695
  %v805 = vpow.pop %v804
  %v806 = vsel %vm82, %v803, 0.0
  %807 = vadd.xlane.f32.xlu0 %v806
  %v808 = vpop.xlane.xlu0 %807
  %v809 = vsel %vm82, %v805, 0.0
  %810 = vadd.xlane.f32.xlu0 %v809
  %v811 = vpop.xlane.xlu0 %810
  %v812 = vrcp.pop %v808
  %v813 = vrcp.pop %v811
  %v814 = vmul.f32 %v803, %v812
  %v815 = vmul.f32 %v805, %v813
  %v816 = vpack.c.bf16 %v815, %v814
  %817 = vrot.lane.b32.xlu0 %v738, 56
  %v818 = vpop.permute.xlu0 %817
  %v821 = vsel %vm82, %v816, 0
  %823 = vmatprep.subr.bf16.mxu0 0
  %824 = vmatpush1.bf16.msra.mxu0 %v818
  %825 = vmatprep.subr.bf16.mxu0 0
  %826 = vmatpush1.bf16.msra.mxu0 0
  %827 = vmatprep.subr.bf16.mxu0 0
  %828 = vmatpush1.bf16.msra.mxu0 0
  %829 = vmatprep.subr.bf16.mxu0 0
  %830 = vmatpush1.bf16.msra.mxu0 0
  %831 = vmatprep.subr.bf16.mxu0 0
  %832 = vmatpush1.bf16.msra.mxu0 0
  %833 = vmatprep.subr.bf16.mxu0 0
  %834 = vmatpush1.bf16.msra.mxu0 0
  %835 = vmatprep.subr.bf16.mxu0 0
  %836 = vmatpush1.bf16.msra.mxu0 0
  %837 = vmatprep.subr.bf16.mxu0 0
  %838 = vmatpush1.bf16.msra.mxu0 0
  %839 = vmatprep.subr.bf16.mxu0 0
  %840 = vmatpush1.bf16.msra.mxu0 0
  %841 = vmatprep.subr.bf16.mxu0 0
  %842 = vmatpush1.bf16.msra.mxu0 0
  %843 = vmatprep.subr.bf16.mxu0 0
  %844 = vmatpush1.bf16.msra.mxu0 0
  %845 = vmatprep.subr.bf16.mxu0 0
  %846 = vmatpush1.bf16.msra.mxu0 0
  %847 = vmatprep.subr.bf16.mxu0 0
  %848 = vmatpush1.bf16.msra.mxu0 0
  %849 = vmatprep.subr.bf16.mxu0 0
  %850 = vmatpush1.bf16.msra.mxu0 0
  %851 = vmatprep.subr.bf16.mxu0 0
  %852 = vmatpush1.bf16.msra.mxu0 0
  %853 = vmatprep.subr.bf16.mxu0 0
  %854 = vmatpush1.bf16.msra.mxu0 0
  %855 = vmatprep.mubr.bf16.mxu0 0
  %856 = vmatmul.mubr.bf16.gmra.mrb[0].mxu0 %v821
  %v857 = vpop.f32.mrb[0].mxu0
  %v858 = vadd.f32 0.0, %v857
  %v859 = vpop.f32.mrb[0].mxu0
  %v860 = vpop.f32.mrb[0].mxu0
  %v861 = vadd.f32 0.0, %v860
  %v862 = vpop.f32.mrb[0].mxu0
  %863 = vdwg.mxu0
  %v864 = vld [vmem:[%s595] sm:$0xf]
  %v865 = vld [vmem:[%s595 + $0x4] sm:$0xf]
  %v868 = vunpack.c.l.b16 %v864
  %v869 = vunpack.c.l.b16 %v865
  %v870 = vpack.c.b16 %v869, %v868
  %871 = vrot.lane.b32.xlu0 %v870, 112
  %v872 = vpop.permute.xlu0 %871
  %873 = vrot.lane.b32.xlu0 %v870, 80
  %v874 = vpop.permute.xlu0 %873
  %v876 = vsel %vm24, %v872, 0
  %v879 = vsel %vm24, %v874, 0
  %881 = vmatprep.subr.bf16.mxu0 0
  %882 = vmatpush1.bf16.xpose.msra.mxu0 %v879
  %883 = vmatprep.subr.bf16.mxu0 0
  %884 = vmatpush1.bf16.xpose.msra.mxu0 0
  %885 = vmatprep.subr.bf16.mxu0 0
  %886 = vmatpush1.bf16.xpose.msra.mxu0 0
  %887 = vmatprep.subr.bf16.mxu0 0
  %888 = vmatpush1.bf16.xpose.msra.mxu0 0
  %889 = vmatprep.subr.bf16.mxu0 0
  %890 = vmatpush1.bf16.xpose.msra.mxu0 0
  %891 = vmatprep.subr.bf16.mxu0 0
  %892 = vmatpush1.bf16.xpose.msra.mxu0 0
  %893 = vmatprep.subr.bf16.mxu0 0
  %894 = vmatpush1.bf16.xpose.msra.mxu0 0
  %895 = vmatprep.subr.bf16.mxu0 0
  %896 = vmatpush1.bf16.xpose.msra.mxu0 0
  %897 = vmatprep.subr.bf16.mxu0 0
  %898 = vmatpush1.bf16.xpose.msra.mxu0 0
  %899 = vmatprep.subr.bf16.mxu0 0
  %900 = vmatpush1.bf16.xpose.msra.mxu0 0
  %901 = vmatprep.subr.bf16.mxu0 0
  %902 = vmatpush1.bf16.xpose.msra.mxu0 0
  %903 = vmatprep.subr.bf16.mxu0 0
  %904 = vmatpush1.bf16.xpose.msra.mxu0 0
  %905 = vmatprep.subr.bf16.mxu0 0
  %906 = vmatpush1.bf16.xpose.msra.mxu0 0
  %907 = vmatprep.subr.bf16.mxu0 0
  %908 = vmatpush1.bf16.xpose.msra.mxu0 0
  %909 = vmatprep.subr.bf16.mxu0 0
  %910 = vmatpush1.bf16.xpose.msra.mxu0 0
  %911 = vmatprep.subr.bf16.mxu0 0
  %912 = vmatpush1.bf16.xpose.msra.mxu0 0
  %913 = vmatprep.mubr.bf16.mxu0 0
  %914 = vmatmul.mubr.bf16.gmra.mrb[0].mxu0 %v876
  %v915 = vpop.f32.mrb[0].mxu0
  %v916 = vadd.f32 0.0, %v915
  %v917 = vpop.f32.mrb[0].mxu0
  %v918 = vpop.f32.mrb[0].mxu0
  %v919 = vadd.f32 0.0, %v918
  %v920 = vpop.f32.mrb[0].mxu0
  %921 = vdwg.mxu0
  %v922 = vmul.f32 %v916, 0.35355338
  %v923 = vmul.f32 %v919, 0.35355338
  %v924 = vadd.f32 %v922, %v658
  %v925 = vadd.f32 %v923, %v658
  %v926 = vsel %vm82, %v924, -inf
  %927 = vmax.xlane.f32.xlu0 %v926
  %v928 = vpop.xlane.xlu0 %927
  %v929 = vsel %vm82, %v925, -inf
  %930 = vmax.xlane.f32.xlu0 %v929
  %v931 = vpop.xlane.xlu0 %930
  %v932 = vsub.f32 %v924, %v928
  %v933 = vsub.f32 %v925, %v931
  %v934 = vmul.f32 %v932, 1.442695
  %v935 = vpow.pop %v934
  %v936 = vmul.f32 %v933, 1.442695
  %v937 = vpow.pop %v936
  %v938 = vsel %vm82, %v935, 0.0
  %939 = vadd.xlane.f32.xlu0 %v938
  %v940 = vpop.xlane.xlu0 %939
  %v941 = vsel %vm82, %v937, 0.0
  %942 = vadd.xlane.f32.xlu0 %v941
  %v943 = vpop.xlane.xlu0 %942
  %v944 = vrcp.pop %v940
  %v945 = vrcp.pop %v943
  %v946 = vmul.f32 %v935, %v944
  %v947 = vmul.f32 %v937, %v945
  %v948 = vpack.c.bf16 %v947, %v946
  %949 = vrot.lane.b32.xlu0 %v870, 48
  %v950 = vpop.permute.xlu0 %949
  %v953 = vsel %vm82, %v948, 0
  %955 = vmatprep.subr.bf16.mxu0 0
  %956 = vmatpush1.bf16.msra.mxu0 %v950
  %957 = vmatprep.subr.bf16.mxu0 0
  %958 = vmatpush1.bf16.msra.mxu0 0
  %959 = vmatprep.subr.bf16.mxu0 0
  %960 = vmatpush1.bf16.msra.mxu0 0
  %961 = vmatprep.subr.bf16.mxu0 0
  %962 = vmatpush1.bf16.msra.mxu0 0
  %963 = vmatprep.subr.bf16.mxu0 0
  %964 = vmatpush1.bf16.msra.mxu0 0
  %965 = vmatprep.subr.bf16.mxu0 0
  %966 = vmatpush1.bf16.msra.mxu0 0
  %967 = vmatprep.subr.bf16.mxu0 0
  %968 = vmatpush1.bf16.msra.mxu0 0
  %969 = vmatprep.subr.bf16.mxu0 0
  %970 = vmatpush1.bf16.msra.mxu0 0
  %971 = vmatprep.subr.bf16.mxu0 0
  %972 = vmatpush1.bf16.msra.mxu0 0
  %973 = vmatprep.subr.bf16.mxu0 0
  %974 = vmatpush1.bf16.msra.mxu0 0
  %975 = vmatprep.subr.bf16.mxu0 0
  %976 = vmatpush1.bf16.msra.mxu0 0
  %977 = vmatprep.subr.bf16.mxu0 0
  %978 = vmatpush1.bf16.msra.mxu0 0
  %979 = vmatprep.subr.bf16.mxu0 0
  %980 = vmatpush1.bf16.msra.mxu0 0
  %981 = vmatprep.subr.bf16.mxu0 0
  %982 = vmatpush1.bf16.msra.mxu0 0
  %983 = vmatprep.subr.bf16.mxu0 0
  %984 = vmatpush1.bf16.msra.mxu0 0
  %985 = vmatprep.subr.bf16.mxu0 0
  %986 = vmatpush1.bf16.msra.mxu0 0
  %987 = vmatprep.mubr.bf16.mxu0 0
  %988 = vmatmul.mubr.bf16.gmra.mrb[0].mxu0 %v953
  %v989 = vpop.f32.mrb[0].mxu0
  %v990 = vadd.f32 0.0, %v989
  %v991 = vpop.f32.mrb[0].mxu0
  %v992 = vpop.f32.mrb[0].mxu0
  %v993 = vadd.f32 0.0, %v992
  %v994 = vpop.f32.mrb[0].mxu0
  %995 = vdwg.mxu0
  %v996 = vld [vmem:[%s595] sm:$0xf]
  %v997 = vld [vmem:[%s595 + $0x4] sm:$0xf]
  %v1000 = vunpack.c.l.b16 %v996
  %v1001 = vunpack.c.l.b16 %v997
  %v1002 = vpack.c.b16 %v1001, %v1000
  %1003 = vrot.lane.b32.xlu0 %v1002, 104
  %v1004 = vpop.permute.xlu0 %1003
  %1005 = vrot.lane.b32.xlu0 %v1002, 72
  %v1006 = vpop.permute.xlu0 %1005
  %v1008 = vsel %vm24, %v1004, 0
  %v1011 = vsel %vm24, %v1006, 0
  %1013 = vmatprep.subr.bf16.mxu0 0
  %1014 = vmatpush1.bf16.xpose.msra.mxu0 %v1011
  %1015 = vmatprep.subr.bf16.mxu0 0
  %1016 = vmatpush1.bf16.xpose.msra.mxu0 0
  %1017 = vmatprep.subr.bf16.mxu0 0
  %1018 = vmatpush1.bf16.xpose.msra.mxu0 0
  %1019 = vmatprep.subr.bf16.mxu0 0
  %1020 = vmatpush1.bf16.xpose.msra.mxu0 0
  %1021 = vmatprep.subr.bf16.mxu0 0
  %1022 = vmatpush1.bf16.xpose.msra.mxu0 0
  %1023 = vmatprep.subr.bf16.mxu0 0
  %1024 = vmatpush1.bf16.xpose.msra.mxu0 0
  %1025 = vmatprep.subr.bf16.mxu0 0
  %1026 = vmatpush1.bf16.xpose.msra.mxu0 0
  %1027 = vmatprep.subr.bf16.mxu0 0
  %1028 = vmatpush1.bf16.xpose.msra.mxu0 0
  %1029 = vmatprep.subr.bf16.mxu0 0
  %1030 = vmatpush1.bf16.xpose.msra.mxu0 0
  %1031 = vmatprep.subr.bf16.mxu0 0
  %1032 = vmatpush1.bf16.xpose.msra.mxu0 0
  %1033 = vmatprep.subr.bf16.mxu0 0
  %1034 = vmatpush1.bf16.xpose.msra.mxu0 0
  %1035 = vmatprep.subr.bf16.mxu0 0
  %1036 = vmatpush1.bf16.xpose.msra.mxu0 0
  %1037 = vmatprep.subr.bf16.mxu0 0
  %1038 = vmatpush1.bf16.xpose.msra.mxu0 0
  %1039 = vmatprep.subr.bf16.mxu0 0
  %1040 = vmatpush1.bf16.xpose.msra.mxu0 0
  %1041 = vmatprep.subr.bf16.mxu0 0
  %1042 = vmatpush1.bf16.xpose.msra.mxu0 0
  %1043 = vmatprep.subr.bf16.mxu0 0
  %1044 = vmatpush1.bf16.xpose.msra.mxu0 0
  %1045 = vmatprep.mubr.bf16.mxu0 0
  %1046 = vmatmul.mubr.bf16.gmra.mrb[0].mxu0 %v1008
  %v1047 = vpop.f32.mrb[0].mxu0
  %v1048 = vadd.f32 0.0, %v1047
  %v1049 = vpop.f32.mrb[0].mxu0
  %v1050 = vpop.f32.mrb[0].mxu0
  %v1051 = vadd.f32 0.0, %v1050
  %v1052 = vpop.f32.mrb[0].mxu0
  %1053 = vdwg.mxu0
  %v1054 = vmul.f32 %v1048, 0.35355338
  %v1055 = vmul.f32 %v1051, 0.35355338
  %v1056 = vadd.f32 %v1054, %v658
  %v1057 = vadd.f32 %v1055, %v658
  %v1058 = vsel %vm82, %v1056, -inf
  %1059 = vmax.xlane.f32.xlu0 %v1058
  %v1060 = vpop.xlane.xlu0 %1059
  %v1061 = vsel %vm82, %v1057, -inf
  %1062 = vmax.xlane.f32.xlu0 %v1061
  %v1063 = vpop.xlane.xlu0 %1062
  %v1064 = vsub.f32 %v1056, %v1060
  %v1065 = vsub.f32 %v1057, %v1063
  %v1066 = vmul.f32 %v1064, 1.442695
  %v1067 = vpow.pop %v1066
  %v1068 = vmul.f32 %v1065, 1.442695
  %v1069 = vpow.pop %v1068
  %v1070 = vsel %vm82, %v1067, 0.0
  %1071 = vadd.xlane.f32.xlu0 %v1070
  %v1072 = vpop.xlane.xlu0 %1071
  %v1073 = vsel %vm82, %v1069, 0.0
  %1074 = vadd.xlane.f32.xlu0 %v1073
  %v1075 = vpop.xlane.xlu0 %1074
  %v1076 = vrcp.pop %v1072
  %v1077 = vrcp.pop %v1075
  %v1078 = vmul.f32 %v1067, %v1076
  %v1079 = vmul.f32 %v1069, %v1077
  %v1080 = vpack.c.bf16 %v1079, %v1078
  %1081 = vrot.lane.b32.xlu0 %v1002, 40
  %v1082 = vpop.permute.xlu0 %1081
  %v1085 = vsel %vm82, %v1080, 0
  %1087 = vmatprep.subr.bf16.mxu0 0
  %1088 = vmatpush1.bf16.msra.mxu0 %v1082
  %1089 = vmatprep.subr.bf16.mxu0 0
  %1090 = vmatpush1.bf16.msra.mxu0 0
  %1091 = vmatprep.subr.bf16.mxu0 0
  %1092 = vmatpush1.bf16.msra.mxu0 0
  %1093 = vmatprep.subr.bf16.mxu0 0
  %1094 = vmatpush1.bf16.msra.mxu0 0
  %1095 = vmatprep.subr.bf16.mxu0 0
  %1096 = vmatpush1.bf16.msra.mxu0 0
  %1097 = vmatprep.subr.bf16.mxu0 0
  %1098 = vmatpush1.bf16.msra.mxu0 0
  %1099 = vmatprep.subr.bf16.mxu0 0
  %1100 = vmatpush1.bf16.msra.mxu0 0
  %1101 = vmatprep.subr.bf16.mxu0 0
  %1102 = vmatpush1.bf16.msra.mxu0 0
  %1103 = vmatprep.subr.bf16.mxu0 0
  %1104 = vmatpush1.bf16.msra.mxu0 0
  %1105 = vmatprep.subr.bf16.mxu0 0
  %1106 = vmatpush1.bf16.msra.mxu0 0
  %1107 = vmatprep.subr.bf16.mxu0 0
  %1108 = vmatpush1.bf16.msra.mxu0 0
  %1109 = vmatprep.subr.bf16.mxu0 0
  %1110 = vmatpush1.bf16.msra.mxu0 0
  %1111 = vmatprep.subr.bf16.mxu0 0
  %1112 = vmatpush1.bf16.msra.mxu0 0
  %1113 = vmatprep.subr.bf16.mxu0 0
  %1114 = vmatpush1.bf16.msra.mxu0 0
  %1115 = vmatprep.subr.bf16.mxu0 0
  %1116 = vmatpush1.bf16.msra.mxu0 0
  %1117 = vmatprep.subr.bf16.mxu0 0
  %1118 = vmatpush1.bf16.msra.mxu0 0
  %1119 = vmatprep.mubr.bf16.mxu0 0
  %1120 = vmatmul.mubr.bf16.gmra.mrb[0].mxu0 %v1085
  %v1121 = vpop.f32.mrb[0].mxu0
  %v1122 = vadd.f32 0.0, %v1121
  %v1123 = vpop.f32.mrb[0].mxu0
  %v1124 = vpop.f32.mrb[0].mxu0
  %v1125 = vadd.f32 0.0, %v1124
  %v1126 = vpop.f32.mrb[0].mxu0
  %1127 = vdwg.mxu0
  %1130 = vrot.lane.b32.xlu0 %v858, 8
  %v1131 = vpop.permute.xlu0 %1130
  %1132 = vrot.lane.b32.xlu0 %v861, 8
  %v1133 = vpop.permute.xlu0 %1132
  %1138 = vrot.lane.b32.xlu0 %v990, 16
  %v1139 = vpop.permute.xlu0 %1138
  %1140 = vrot.lane.b32.xlu0 %v993, 16
  %v1141 = vpop.permute.xlu0 %1140
  %1146 = vrot.lane.b32.xlu0 %v1122, 24
  %v1147 = vpop.permute.xlu0 %1146
  %1148 = vrot.lane.b32.xlu0 %v1125, 24
  %v1149 = vpop.permute.xlu0 %1148
  %v1152 = vsel %vm24, %v726, %v1131
  %v1153 = vsel %vm24, %v729, %v1133
  %v1154 = vsel %vm82, %v1152, %v1139
  %v1155 = vsel %vm82, %v1153, %v1141
  %v1156 = vsel %vm577, %v1154, %v1147
  %v1157 = vsel %vm577, %v1155, %v1149
  %v1158 = vpack.c.bf16 %v1157, %v1156
  %v1160 = vunpack.c.l.b16 %v1158
  %v1161 = vunpack.c.h.b16 %v1158
  %v1162 = vpack.c.b16 %v1160, %v1160
  %v1163 = vpack.c.b16 %v1161, %v1161
  %s1166 = scalar_lea.vmem %s2, 8
  %1167 = vst.msk [vmem:[%s1166] sm:$0xf] %vm588, %v1162
  %1168 = vst.msk [vmem:[%s1166 + $0x4] sm:$0xf] %vm588, %v1163
  %s1169 = scalar_lea.vmem %s1, 2
  %v1170 = vld [vmem:[%s1169] sm:$0x1]
  %v1171 = vsub.f32 1.0, %v1170
  %v1172 = vmul.f32 %v1171, -1e+09
  %s1173 = scalar_lea.vmem %s0, 16
  %v1174 = vld [vmem:[%s1173] sm:$0xf]
  %v1175 = vld [vmem:[%s1173 + $0x4] sm:$0xf]
  %v1178 = vunpack.c.l.b16 %v1174
  %v1179 = vunpack.c.l.b16 %v1175
  %v1180 = vpack.c.b16 %v1179, %v1178
  %1181 = vrot.lane.b32.xlu0 %v1180, 96
  %v1182 = vpop.permute.xlu0 %1181
  %v1184 = vsel %vm24, %v1180, 0
  %v1187 = vsel %vm24, %v1182, 0
  %1189 = vmatprep.subr.bf16.mxu0 0
  %1190 = vmatpush1.bf16.xpose.msra.mxu0 %v1187
  %1191 = vmatprep.subr.bf16.mxu0 0
  %1192 = vmatpush1.bf16.xpose.msra.mxu0 0
  %1193 = vmatprep.subr.bf16.mxu0 0
  %1194 = vmatpush1.bf16.xpose.msra.mxu0 0
  %1195 = vmatprep.subr.bf16.mxu0 0
  %1196 = vmatpush1.bf16.xpose.msra.mxu0 0
  %1197 = vmatprep.subr.bf16.mxu0 0
  %1198 = vmatpush1.bf16.xpose.msra.mxu0 0
  %1199 = vmatprep.subr.bf16.mxu0 0
  %1200 = vmatpush1.bf16.xpose.msra.mxu0 0
  %1201 = vmatprep.subr.bf16.mxu0 0
  %1202 = vmatpush1.bf16.xpose.msra.mxu0 0
  %1203 = vmatprep.subr.bf16.mxu0 0
  %1204 = vmatpush1.bf16.xpose.msra.mxu0 0
  %1205 = vmatprep.subr.bf16.mxu0 0
  %1206 = vmatpush1.bf16.xpose.msra.mxu0 0
  %1207 = vmatprep.subr.bf16.mxu0 0
  %1208 = vmatpush1.bf16.xpose.msra.mxu0 0
  %1209 = vmatprep.subr.bf16.mxu0 0
  %1210 = vmatpush1.bf16.xpose.msra.mxu0 0
  %1211 = vmatprep.subr.bf16.mxu0 0
  %1212 = vmatpush1.bf16.xpose.msra.mxu0 0
  %1213 = vmatprep.subr.bf16.mxu0 0
  %1214 = vmatpush1.bf16.xpose.msra.mxu0 0
  %1215 = vmatprep.subr.bf16.mxu0 0
  %1216 = vmatpush1.bf16.xpose.msra.mxu0 0
  %1217 = vmatprep.subr.bf16.mxu0 0
  %1218 = vmatpush1.bf16.xpose.msra.mxu0 0
  %1219 = vmatprep.subr.bf16.mxu0 0
  %1220 = vmatpush1.bf16.xpose.msra.mxu0 0
  %1221 = vmatprep.mubr.bf16.mxu0 0
  %1222 = vmatmul.mubr.bf16.gmra.mrb[0].mxu0 %v1184
  %v1223 = vpop.f32.mrb[0].mxu0
  %v1224 = vadd.f32 0.0, %v1223
  %v1225 = vpop.f32.mrb[0].mxu0
  %v1226 = vpop.f32.mrb[0].mxu0
  %v1227 = vadd.f32 0.0, %v1226
  %v1228 = vpop.f32.mrb[0].mxu0
  %1229 = vdwg.mxu0
  %v1230 = vmul.f32 %v1224, 0.35355338
  %v1231 = vmul.f32 %v1227, 0.35355338
  %v1233 = vlaneseq
  %v1234 = vshrl.u32 %v1233, 7
  %v1235 = vsub.s32 0, %v1234
  %v1236 = vrot.slane %v1172, %v1235
  %v1238 = vadd.f32 %v1230, %v1236
  %v1239 = vadd.f32 %v1231, %v1236
  %v1240 = vsel %vm82, %v1238, -inf
  %1241 = vmax.xlane.f32.xlu0 %v1240
  %v1242 = vpop.xlane.xlu0 %1241
  %v1243 = vsel %vm82, %v1239, -inf
  %1244 = vmax.xlane.f32.xlu0 %v1243
  %v1245 = vpop.xlane.xlu0 %1244
  %v1246 = vsub.f32 %v1238, %v1242
  %v1247 = vsub.f32 %v1239, %v1245
  %v1248 = vmul.f32 %v1246, 1.442695
  %v1249 = vpow.pop %v1248
  %v1250 = vmul.f32 %v1247, 1.442695
  %v1251 = vpow.pop %v1250
  %v1252 = vsel %vm82, %v1249, 0.0
  %1253 = vadd.xlane.f32.xlu0 %v1252
  %v1254 = vpop.xlane.xlu0 %1253
  %v1255 = vsel %vm82, %v1251, 0.0
  %1256 = vadd.xlane.f32.xlu0 %v1255
  %v1257 = vpop.xlane.xlu0 %1256
  %v1258 = vrcp.pop %v1254
  %v1259 = vrcp.pop %v1257
  %v1260 = vmul.f32 %v1249, %v1258
  %v1261 = vmul.f32 %v1251, %v1259
  %v1262 = vpack.c.bf16 %v1261, %v1260
  %1263 = vrot.lane.b32.xlu0 %v1180, 64
  %v1264 = vpop.permute.xlu0 %1263
  %v1267 = vsel %vm82, %v1262, 0
  %1269 = vmatprep.subr.bf16.mxu0 0
  %1270 = vmatpush1.bf16.msra.mxu0 %v1264
  %1271 = vmatprep.subr.bf16.mxu0 0
  %1272 = vmatpush1.bf16.msra.mxu0 0
  %1273 = vmatprep.subr.bf16.mxu0 0
  %1274 = vmatpush1.bf16.msra.mxu0 0
  %1275 = vmatprep.subr.bf16.mxu0 0
  %1276 = vmatpush1.bf16.msra.mxu0 0
  %1277 = vmatprep.subr.bf16.mxu0 0
  %1278 = vmatpush1.bf16.msra.mxu0 0
  %1279 = vmatprep.subr.bf16.mxu0 0
  %1280 = vmatpush1.bf16.msra.mxu0 0
  %1281 = vmatprep.subr.bf16.mxu0 0
  %1282 = vmatpush1.bf16.msra.mxu0 0
  %1283 = vmatprep.subr.bf16.mxu0 0
  %1284 = vmatpush1.bf16.msra.mxu0 0
  %1285 = vmatprep.subr.bf16.mxu0 0
  %1286 = vmatpush1.bf16.msra.mxu0 0
  %1287 = vmatprep.subr.bf16.mxu0 0
  %1288 = vmatpush1.bf16.msra.mxu0 0
  %1289 = vmatprep.subr.bf16.mxu0 0
  %1290 = vmatpush1.bf16.msra.mxu0 0
  %1291 = vmatprep.subr.bf16.mxu0 0
  %1292 = vmatpush1.bf16.msra.mxu0 0
  %1293 = vmatprep.subr.bf16.mxu0 0
  %1294 = vmatpush1.bf16.msra.mxu0 0
  %1295 = vmatprep.subr.bf16.mxu0 0
  %1296 = vmatpush1.bf16.msra.mxu0 0
  %1297 = vmatprep.subr.bf16.mxu0 0
  %1298 = vmatpush1.bf16.msra.mxu0 0
  %1299 = vmatprep.subr.bf16.mxu0 0
  %1300 = vmatpush1.bf16.msra.mxu0 0
  %1301 = vmatprep.mubr.bf16.mxu0 0
  %1302 = vmatmul.mubr.bf16.gmra.mrb[0].mxu0 %v1267
  %v1303 = vpop.f32.mrb[0].mxu0
  %v1304 = vadd.f32 0.0, %v1303
  %v1305 = vpop.f32.mrb[0].mxu0
  %v1306 = vpop.f32.mrb[0].mxu0
  %v1307 = vadd.f32 0.0, %v1306
  %v1308 = vpop.f32.mrb[0].mxu0
  %1309 = vdwg.mxu0
  %v1310 = vld [vmem:[%s1173] sm:$0xf]
  %v1311 = vld [vmem:[%s1173 + $0x4] sm:$0xf]
  %v1314 = vunpack.c.l.b16 %v1310
  %v1315 = vunpack.c.l.b16 %v1311
  %v1316 = vpack.c.b16 %v1315, %v1314
  %1317 = vrot.lane.b32.xlu0 %v1316, 120
  %v1318 = vpop.permute.xlu0 %1317
  %1319 = vrot.lane.b32.xlu0 %v1316, 88
  %v1320 = vpop.permute.xlu0 %1319
  %v1322 = vsel %vm24, %v1318, 0
  %v1325 = vsel %vm24, %v1320, 0
  %1327 = vmatprep.subr.bf16.mxu0 0
  %1328 = vmatpush1.bf16.xpose.msra.mxu0 %v1325
  %1329 = vmatprep.subr.bf16.mxu0 0
  %1330 = vmatpush1.bf16.xpose.msra.mxu0 0
  %1331 = vmatprep.subr.bf16.mxu0 0
  %1332 = vmatpush1.bf16.xpose.msra.mxu0 0
  %1333 = vmatprep.subr.bf16.mxu0 0
  %1334 = vmatpush1.bf16.xpose.msra.mxu0 0
  %1335 = vmatprep.subr.bf16.mxu0 0
  %1336 = vmatpush1.bf16.xpose.msra.mxu0 0
  %1337 = vmatprep.subr.bf16.mxu0 0
  %1338 = vmatpush1.bf16.xpose.msra.mxu0 0
  %1339 = vmatprep.subr.bf16.mxu0 0
  %1340 = vmatpush1.bf16.xpose.msra.mxu0 0
  %1341 = vmatprep.subr.bf16.mxu0 0
  %1342 = vmatpush1.bf16.xpose.msra.mxu0 0
  %1343 = vmatprep.subr.bf16.mxu0 0
  %1344 = vmatpush1.bf16.xpose.msra.mxu0 0
  %1345 = vmatprep.subr.bf16.mxu0 0
  %1346 = vmatpush1.bf16.xpose.msra.mxu0 0
  %1347 = vmatprep.subr.bf16.mxu0 0
  %1348 = vmatpush1.bf16.xpose.msra.mxu0 0
  %1349 = vmatprep.subr.bf16.mxu0 0
  %1350 = vmatpush1.bf16.xpose.msra.mxu0 0
  %1351 = vmatprep.subr.bf16.mxu0 0
  %1352 = vmatpush1.bf16.xpose.msra.mxu0 0
  %1353 = vmatprep.subr.bf16.mxu0 0
  %1354 = vmatpush1.bf16.xpose.msra.mxu0 0
  %1355 = vmatprep.subr.bf16.mxu0 0
  %1356 = vmatpush1.bf16.xpose.msra.mxu0 0
  %1357 = vmatprep.subr.bf16.mxu0 0
  %1358 = vmatpush1.bf16.xpose.msra.mxu0 0
  %1359 = vmatprep.mubr.bf16.mxu0 0
  %1360 = vmatmul.mubr.bf16.gmra.mrb[0].mxu0 %v1322
  %v1361 = vpop.f32.mrb[0].mxu0
  %v1362 = vadd.f32 0.0, %v1361
  %v1363 = vpop.f32.mrb[0].mxu0
  %v1364 = vpop.f32.mrb[0].mxu0
  %v1365 = vadd.f32 0.0, %v1364
  %v1366 = vpop.f32.mrb[0].mxu0
  %1367 = vdwg.mxu0
  %v1368 = vmul.f32 %v1362, 0.35355338
  %v1369 = vmul.f32 %v1365, 0.35355338
  %v1370 = vadd.f32 %v1368, %v1236
  %v1371 = vadd.f32 %v1369, %v1236
  %v1372 = vsel %vm82, %v1370, -inf
  %1373 = vmax.xlane.f32.xlu0 %v1372
  %v1374 = vpop.xlane.xlu0 %1373
  %v1375 = vsel %vm82, %v1371, -inf
  %1376 = vmax.xlane.f32.xlu0 %v1375
  %v1377 = vpop.xlane.xlu0 %1376
  %v1378 = vsub.f32 %v1370, %v1374
  %v1379 = vsub.f32 %v1371, %v1377
  %v1380 = vmul.f32 %v1378, 1.442695
  %v1381 = vpow.pop %v1380
  %v1382 = vmul.f32 %v1379, 1.442695
  %v1383 = vpow.pop %v1382
  %v1384 = vsel %vm82, %v1381, 0.0
  %1385 = vadd.xlane.f32.xlu0 %v1384
  %v1386 = vpop.xlane.xlu0 %1385
  %v1387 = vsel %vm82, %v1383, 0.0
  %1388 = vadd.xlane.f32.xlu0 %v1387
  %v1389 = vpop.xlane.xlu0 %1388
  %v1390 = vrcp.pop %v1386
  %v1391 = vrcp.pop %v1389
  %v1392 = vmul.f32 %v1381, %v1390
  %v1393 = vmul.f32 %v1383, %v1391
  %v1394 = vpack.c.bf16 %v1393, %v1392
  %1395 = vrot.lane.b32.xlu0 %v1316, 56
  %v1396 = vpop.permute.xlu0 %1395
  %v1399 = vsel %vm82, %v1394, 0
  %1401 = vmatprep.subr.bf16.mxu0 0
  %1402 = vmatpush1.bf16.msra.mxu0 %v1396
  %1403 = vmatprep.subr.bf16.mxu0 0
  %1404 = vmatpush1.bf16.msra.mxu0 0
  %1405 = vmatprep.subr.bf16.mxu0 0
  %1406 = vmatpush1.bf16.msra.mxu0 0
  %1407 = vmatprep.subr.bf16.mxu0 0
  %1408 = vmatpush1.bf16.msra.mxu0 0
  %1409 = vmatprep.subr.bf16.mxu0 0
  %1410 = vmatpush1.bf16.msra.mxu0 0
  %1411 = vmatprep.subr.bf16.mxu0 0
  %1412 = vmatpush1.bf16.msra.mxu0 0
  %1413 = vmatprep.subr.bf16.mxu0 0
  %1414 = vmatpush1.bf16.msra.mxu0 0
  %1415 = vmatprep.subr.bf16.mxu0 0
  %1416 = vmatpush1.bf16.msra.mxu0 0
  %1417 = vmatprep.subr.bf16.mxu0 0
  %1418 = vmatpush1.bf16.msra.mxu0 0
  %1419 = vmatprep.subr.bf16.mxu0 0
  %1420 = vmatpush1.bf16.msra.mxu0 0
  %1421 = vmatprep.subr.bf16.mxu0 0
  %1422 = vmatpush1.bf16.msra.mxu0 0
  %1423 = vmatprep.subr.bf16.mxu0 0
  %1424 = vmatpush1.bf16.msra.mxu0 0
  %1425 = vmatprep.subr.bf16.mxu0 0
  %1426 = vmatpush1.bf16.msra.mxu0 0
  %1427 = vmatprep.subr.bf16.mxu0 0
  %1428 = vmatpush1.bf16.msra.mxu0 0
  %1429 = vmatprep.subr.bf16.mxu0 0
  %1430 = vmatpush1.bf16.msra.mxu0 0
  %1431 = vmatprep.subr.bf16.mxu0 0
  %1432 = vmatpush1.bf16.msra.mxu0 0
  %1433 = vmatprep.mubr.bf16.mxu0 0
  %1434 = vmatmul.mubr.bf16.gmra.mrb[0].mxu0 %v1399
  %v1435 = vpop.f32.mrb[0].mxu0
  %v1436 = vadd.f32 0.0, %v1435
  %v1437 = vpop.f32.mrb[0].mxu0
  %v1438 = vpop.f32.mrb[0].mxu0
  %v1439 = vadd.f32 0.0, %v1438
  %v1440 = vpop.f32.mrb[0].mxu0
  %1441 = vdwg.mxu0
  %v1442 = vld [vmem:[%s1173] sm:$0xf]
  %v1443 = vld [vmem:[%s1173 + $0x4] sm:$0xf]
  %v1446 = vunpack.c.l.b16 %v1442
  %v1447 = vunpack.c.l.b16 %v1443
  %v1448 = vpack.c.b16 %v1447, %v1446
  %1449 = vrot.lane.b32.xlu0 %v1448, 112
  %v1450 = vpop.permute.xlu0 %1449
  %1451 = vrot.lane.b32.xlu0 %v1448, 80
  %v1452 = vpop.permute.xlu0 %1451
  %v1454 = vsel %vm24, %v1450, 0
  %v1457 = vsel %vm24, %v1452, 0
  %1459 = vmatprep.subr.bf16.mxu0 0
  %1460 = vmatpush1.bf16.xpose.msra.mxu0 %v1457
  %1461 = vmatprep.subr.bf16.mxu0 0
  %1462 = vmatpush1.bf16.xpose.msra.mxu0 0
  %1463 = vmatprep.subr.bf16.mxu0 0
  %1464 = vmatpush1.bf16.xpose.msra.mxu0 0
  %1465 = vmatprep.subr.bf16.mxu0 0
  %1466 = vmatpush1.bf16.xpose.msra.mxu0 0
  %1467 = vmatprep.subr.bf16.mxu0 0
  %1468 = vmatpush1.bf16.xpose.msra.mxu0 0
  %1469 = vmatprep.subr.bf16.mxu0 0
  %1470 = vmatpush1.bf16.xpose.msra.mxu0 0
  %1471 = vmatprep.subr.bf16.mxu0 0
  %1472 = vmatpush1.bf16.xpose.msra.mxu0 0
  %1473 = vmatprep.subr.bf16.mxu0 0
  %1474 = vmatpush1.bf16.xpose.msra.mxu0 0
  %1475 = vmatprep.subr.bf16.mxu0 0
  %1476 = vmatpush1.bf16.xpose.msra.mxu0 0
  %1477 = vmatprep.subr.bf16.mxu0 0
  %1478 = vmatpush1.bf16.xpose.msra.mxu0 0
  %1479 = vmatprep.subr.bf16.mxu0 0
  %1480 = vmatpush1.bf16.xpose.msra.mxu0 0
  %1481 = vmatprep.subr.bf16.mxu0 0
  %1482 = vmatpush1.bf16.xpose.msra.mxu0 0
  %1483 = vmatprep.subr.bf16.mxu0 0
  %1484 = vmatpush1.bf16.xpose.msra.mxu0 0
  %1485 = vmatprep.subr.bf16.mxu0 0
  %1486 = vmatpush1.bf16.xpose.msra.mxu0 0
  %1487 = vmatprep.subr.bf16.mxu0 0
  %1488 = vmatpush1.bf16.xpose.msra.mxu0 0
  %1489 = vmatprep.subr.bf16.mxu0 0
  %1490 = vmatpush1.bf16.xpose.msra.mxu0 0
  %1491 = vmatprep.mubr.bf16.mxu0 0
  %1492 = vmatmul.mubr.bf16.gmra.mrb[0].mxu0 %v1454
  %v1493 = vpop.f32.mrb[0].mxu0
  %v1494 = vadd.f32 0.0, %v1493
  %v1495 = vpop.f32.mrb[0].mxu0
  %v1496 = vpop.f32.mrb[0].mxu0
  %v1497 = vadd.f32 0.0, %v1496
  %v1498 = vpop.f32.mrb[0].mxu0
  %1499 = vdwg.mxu0
  %v1500 = vmul.f32 %v1494, 0.35355338
  %v1501 = vmul.f32 %v1497, 0.35355338
  %v1502 = vadd.f32 %v1500, %v1236
  %v1503 = vadd.f32 %v1501, %v1236
  %v1504 = vsel %vm82, %v1502, -inf
  %1505 = vmax.xlane.f32.xlu0 %v1504
  %v1506 = vpop.xlane.xlu0 %1505
  %v1507 = vsel %vm82, %v1503, -inf
  %1508 = vmax.xlane.f32.xlu0 %v1507
  %v1509 = vpop.xlane.xlu0 %1508
  %v1510 = vsub.f32 %v1502, %v1506
  %v1511 = vsub.f32 %v1503, %v1509
  %v1512 = vmul.f32 %v1510, 1.442695
  %v1513 = vpow.pop %v1512
  %v1514 = vmul.f32 %v1511, 1.442695
  %v1515 = vpow.pop %v1514
  %v1516 = vsel %vm82, %v1513, 0.0
  %1517 = vadd.xlane.f32.xlu0 %v1516
  %v1518 = vpop.xlane.xlu0 %1517
  %v1519 = vsel %vm82, %v1515, 0.0
  %1520 = vadd.xlane.f32.xlu0 %v1519
  %v1521 = vpop.xlane.xlu0 %1520
  %v1522 = vrcp.pop %v1518
  %v1523 = vrcp.pop %v1521
  %v1524 = vmul.f32 %v1513, %v1522
  %v1525 = vmul.f32 %v1515, %v1523
  %v1526 = vpack.c.bf16 %v1525, %v1524
  %1527 = vrot.lane.b32.xlu0 %v1448, 48
  %v1528 = vpop.permute.xlu0 %1527
  %v1531 = vsel %vm82, %v1526, 0
  %1533 = vmatprep.subr.bf16.mxu0 0
  %1534 = vmatpush1.bf16.msra.mxu0 %v1528
  %1535 = vmatprep.subr.bf16.mxu0 0
  %1536 = vmatpush1.bf16.msra.mxu0 0
  %1537 = vmatprep.subr.bf16.mxu0 0
  %1538 = vmatpush1.bf16.msra.mxu0 0
  %1539 = vmatprep.subr.bf16.mxu0 0
  %1540 = vmatpush1.bf16.msra.mxu0 0
  %1541 = vmatprep.subr.bf16.mxu0 0
  %1542 = vmatpush1.bf16.msra.mxu0 0
  %1543 = vmatprep.subr.bf16.mxu0 0
  %1544 = vmatpush1.bf16.msra.mxu0 0
  %1545 = vmatprep.subr.bf16.mxu0 0
  %1546 = vmatpush1.bf16.msra.mxu0 0
  %1547 = vmatprep.subr.bf16.mxu0 0
  %1548 = vmatpush1.bf16.msra.mxu0 0
  %1549 = vmatprep.subr.bf16.mxu0 0
  %1550 = vmatpush1.bf16.msra.mxu0 0
  %1551 = vmatprep.subr.bf16.mxu0 0
  %1552 = vmatpush1.bf16.msra.mxu0 0
  %1553 = vmatprep.subr.bf16.mxu0 0
  %1554 = vmatpush1.bf16.msra.mxu0 0
  %1555 = vmatprep.subr.bf16.mxu0 0
  %1556 = vmatpush1.bf16.msra.mxu0 0
  %1557 = vmatprep.subr.bf16.mxu0 0
  %1558 = vmatpush1.bf16.msra.mxu0 0
  %1559 = vmatprep.subr.bf16.mxu0 0
  %1560 = vmatpush1.bf16.msra.mxu0 0
  %1561 = vmatprep.subr.bf16.mxu0 0
  %1562 = vmatpush1.bf16.msra.mxu0 0
  %1563 = vmatprep.subr.bf16.mxu0 0
  %1564 = vmatpush1.bf16.msra.mxu0 0
  %1565 = vmatprep.mubr.bf16.mxu0 0
  %1566 = vmatmul.mubr.bf16.gmra.mrb[0].mxu0 %v1531
  %v1567 = vpop.f32.mrb[0].mxu0
  %v1568 = vadd.f32 0.0, %v1567
  %v1569 = vpop.f32.mrb[0].mxu0
  %v1570 = vpop.f32.mrb[0].mxu0
  %v1571 = vadd.f32 0.0, %v1570
  %v1572 = vpop.f32.mrb[0].mxu0
  %1573 = vdwg.mxu0
  %v1574 = vld [vmem:[%s1173] sm:$0xf]
  %v1575 = vld [vmem:[%s1173 + $0x4] sm:$0xf]
  %v1578 = vunpack.c.l.b16 %v1574
  %v1579 = vunpack.c.l.b16 %v1575
  %v1580 = vpack.c.b16 %v1579, %v1578
  %1581 = vrot.lane.b32.xlu0 %v1580, 104
  %v1582 = vpop.permute.xlu0 %1581
  %1583 = vrot.lane.b32.xlu0 %v1580, 72
  %v1584 = vpop.permute.xlu0 %1583
  %v1586 = vsel %vm24, %v1582, 0
  %v1589 = vsel %vm24, %v1584, 0
  %1591 = vmatprep.subr.bf16.mxu0 0
  %1592 = vmatpush1.bf16.xpose.msra.mxu0 %v1589
  %1593 = vmatprep.subr.bf16.mxu0 0
  %1594 = vmatpush1.bf16.xpose.msra.mxu0 0
  %1595 = vmatprep.subr.bf16.mxu0 0
  %1596 = vmatpush1.bf16.xpose.msra.mxu0 0
  %1597 = vmatprep.subr.bf16.mxu0 0
  %1598 = vmatpush1.bf16.xpose.msra.mxu0 0
  %1599 = vmatprep.subr.bf16.mxu0 0
  %1600 = vmatpush1.bf16.xpose.msra.mxu0 0
  %1601 = vmatprep.subr.bf16.mxu0 0
  %1602 = vmatpush1.bf16.xpose.msra.mxu0 0
  %1603 = vmatprep.subr.bf16.mxu0 0
  %1604 = vmatpush1.bf16.xpose.msra.mxu0 0
  %1605 = vmatprep.subr.bf16.mxu0 0
  %1606 = vmatpush1.bf16.xpose.msra.mxu0 0
  %1607 = vmatprep.subr.bf16.mxu0 0
  %1608 = vmatpush1.bf16.xpose.msra.mxu0 0
  %1609 = vmatprep.subr.bf16.mxu0 0
  %1610 = vmatpush1.bf16.xpose.msra.mxu0 0
  %1611 = vmatprep.subr.bf16.mxu0 0
  %1612 = vmatpush1.bf16.xpose.msra.mxu0 0
  %1613 = vmatprep.subr.bf16.mxu0 0
  %1614 = vmatpush1.bf16.xpose.msra.mxu0 0
  %1615 = vmatprep.subr.bf16.mxu0 0
  %1616 = vmatpush1.bf16.xpose.msra.mxu0 0
  %1617 = vmatprep.subr.bf16.mxu0 0
  %1618 = vmatpush1.bf16.xpose.msra.mxu0 0
  %1619 = vmatprep.subr.bf16.mxu0 0
  %1620 = vmatpush1.bf16.xpose.msra.mxu0 0
  %1621 = vmatprep.subr.bf16.mxu0 0
  %1622 = vmatpush1.bf16.xpose.msra.mxu0 0
  %1623 = vmatprep.mubr.bf16.mxu0 0
  %1624 = vmatmul.mubr.bf16.gmra.mrb[0].mxu0 %v1586
  %v1625 = vpop.f32.mrb[0].mxu0
  %v1626 = vadd.f32 0.0, %v1625
  %v1627 = vpop.f32.mrb[0].mxu0
  %v1628 = vpop.f32.mrb[0].mxu0
  %v1629 = vadd.f32 0.0, %v1628
  %v1630 = vpop.f32.mrb[0].mxu0
  %1631 = vdwg.mxu0
  %v1632 = vmul.f32 %v1626, 0.35355338
  %v1633 = vmul.f32 %v1629, 0.35355338
  %v1634 = vadd.f32 %v1632, %v1236
  %v1635 = vadd.f32 %v1633, %v1236
  %v1636 = vsel %vm82, %v1634, -inf
  %1637 = vmax.xlane.f32.xlu0 %v1636
  %v1638 = vpop.xlane.xlu0 %1637
  %v1639 = vsel %vm82, %v1635, -inf
  %1640 = vmax.xlane.f32.xlu0 %v1639
  %v1641 = vpop.xlane.xlu0 %1640
  %v1642 = vsub.f32 %v1634, %v1638
  %v1643 = vsub.f32 %v1635, %v1641
  %v1644 = vmul.f32 %v1642, 1.442695
  %v1645 = vpow.pop %v1644
  %v1646 = vmul.f32 %v1643, 1.442695
  %v1647 = vpow.pop %v1646
  %v1648 = vsel %vm82, %v1645, 0.0
  %1649 = vadd.xlane.f32.xlu0 %v1648
  %v1650 = vpop.xlane.xlu0 %1649
  %v1651 = vsel %vm82, %v1647, 0.0
  %1652 = vadd.xlane.f32.xlu0 %v1651
  %v1653 = vpop.xlane.xlu0 %1652
  %v1654 = vrcp.pop %v1650
  %v1655 = vrcp.pop %v1653
  %v1656 = vmul.f32 %v1645, %v1654
  %v1657 = vmul.f32 %v1647, %v1655
  %v1658 = vpack.c.bf16 %v1657, %v1656
  %1659 = vrot.lane.b32.xlu0 %v1580, 40
  %v1660 = vpop.permute.xlu0 %1659
  %v1663 = vsel %vm82, %v1658, 0
  %1665 = vmatprep.subr.bf16.mxu0 0
  %1666 = vmatpush1.bf16.msra.mxu0 %v1660
  %1667 = vmatprep.subr.bf16.mxu0 0
  %1668 = vmatpush1.bf16.msra.mxu0 0
  %1669 = vmatprep.subr.bf16.mxu0 0
  %1670 = vmatpush1.bf16.msra.mxu0 0
  %1671 = vmatprep.subr.bf16.mxu0 0
  %1672 = vmatpush1.bf16.msra.mxu0 0
  %1673 = vmatprep.subr.bf16.mxu0 0
  %1674 = vmatpush1.bf16.msra.mxu0 0
  %1675 = vmatprep.subr.bf16.mxu0 0
  %1676 = vmatpush1.bf16.msra.mxu0 0
  %1677 = vmatprep.subr.bf16.mxu0 0
  %1678 = vmatpush1.bf16.msra.mxu0 0
  %1679 = vmatprep.subr.bf16.mxu0 0
  %1680 = vmatpush1.bf16.msra.mxu0 0
  %1681 = vmatprep.subr.bf16.mxu0 0
  %1682 = vmatpush1.bf16.msra.mxu0 0
  %1683 = vmatprep.subr.bf16.mxu0 0
  %1684 = vmatpush1.bf16.msra.mxu0 0
  %1685 = vmatprep.subr.bf16.mxu0 0
  %1686 = vmatpush1.bf16.msra.mxu0 0
  %1687 = vmatprep.subr.bf16.mxu0 0
  %1688 = vmatpush1.bf16.msra.mxu0 0
  %1689 = vmatprep.subr.bf16.mxu0 0
  %1690 = vmatpush1.bf16.msra.mxu0 0
  %1691 = vmatprep.subr.bf16.mxu0 0
  %1692 = vmatpush1.bf16.msra.mxu0 0
  %1693 = vmatprep.subr.bf16.mxu0 0
  %1694 = vmatpush1.bf16.msra.mxu0 0
  %1695 = vmatprep.subr.bf16.mxu0 0
  %1696 = vmatpush1.bf16.msra.mxu0 0
  %1697 = vmatprep.mubr.bf16.mxu0 0
  %1698 = vmatmul.mubr.bf16.gmra.mrb[0].mxu0 %v1663
  %v1699 = vpop.f32.mrb[0].mxu0
  %v1700 = vadd.f32 0.0, %v1699
  %v1701 = vpop.f32.mrb[0].mxu0
  %v1702 = vpop.f32.mrb[0].mxu0
  %v1703 = vadd.f32 0.0, %v1702
  %v1704 = vpop.f32.mrb[0].mxu0
  %1705 = vdwg.mxu0
  %1708 = vrot.lane.b32.xlu0 %v1436, 8
  %v1709 = vpop.permute.xlu0 %1708
  %1710 = vrot.lane.b32.xlu0 %v1439, 8
  %v1711 = vpop.permute.xlu0 %1710
  %1716 = vrot.lane.b32.xlu0 %v1568, 16
  %v1717 = vpop.permute.xlu0 %1716
  %1718 = vrot.lane.b32.xlu0 %v1571, 16
  %v1719 = vpop.permute.xlu0 %1718
  %1724 = vrot.lane.b32.xlu0 %v1700, 24
  %v1725 = vpop.permute.xlu0 %1724
  %1726 = vrot.lane.b32.xlu0 %v1703, 24
  %v1727 = vpop.permute.xlu0 %1726
  %v1730 = vsel %vm24, %v1304, %v1709
  %v1731 = vsel %vm24, %v1307, %v1711
  %v1732 = vsel %vm82, %v1730, %v1717
  %v1733 = vsel %vm82, %v1731, %v1719
  %v1734 = vsel %vm577, %v1732, %v1725
  %v1735 = vsel %vm577, %v1733, %v1727
  %v1736 = vpack.c.bf16 %v1735, %v1734
  %v1738 = vunpack.c.l.b16 %v1736
  %v1739 = vunpack.c.h.b16 %v1736
  %v1740 = vpack.c.b16 %v1738, %v1738
  %v1741 = vpack.c.b16 %v1739, %v1739
  %s1744 = scalar_lea.vmem %s2, 16
  %1745 = vst.msk [vmem:[%s1744] sm:$0xf] %vm588, %v1740
  %1746 = vst.msk [vmem:[%s1744 + $0x4] sm:$0xf] %vm588, %v1741
  %s1747 = scalar_lea.vmem %s1, 3
  %v1748 = vld [vmem:[%s1747] sm:$0x1]
  %v1749 = vsub.f32 1.0, %v1748
  %v1750 = vmul.f32 %v1749, -1e+09
  %s1751 = scalar_lea.vmem %s0, 24
  %v1752 = vld [vmem:[%s1751] sm:$0xf]
  %v1753 = vld [vmem:[%s1751 + $0x4] sm:$0xf]
  %v1756 = vunpack.c.l.b16 %v1752
  %v1757 = vunpack.c.l.b16 %v1753
  %v1758 = vpack.c.b16 %v1757, %v1756
  %1759 = vrot.lane.b32.xlu0 %v1758, 96
  %v1760 = vpop.permute.xlu0 %1759
  %v1762 = vsel %vm24, %v1758, 0
  %v1765 = vsel %vm24, %v1760, 0
  %1767 = vmatprep.subr.bf16.mxu0 0
  %1768 = vmatpush1.bf16.xpose.msra.mxu0 %v1765
  %1769 = vmatprep.subr.bf16.mxu0 0
  %1770 = vmatpush1.bf16.xpose.msra.mxu0 0
  %1771 = vmatprep.subr.bf16.mxu0 0
  %1772 = vmatpush1.bf16.xpose.msra.mxu0 0
  %1773 = vmatprep.subr.bf16.mxu0 0
  %1774 = vmatpush1.bf16.xpose.msra.mxu0 0
  %1775 = vmatprep.subr.bf16.mxu0 0
  %1776 = vmatpush1.bf16.xpose.msra.mxu0 0
  %1777 = vmatprep.subr.bf16.mxu0 0
  %1778 = vmatpush1.bf16.xpose.msra.mxu0 0
  %1779 = vmatprep.subr.bf16.mxu0 0
  %1780 = vmatpush1.bf16.xpose.msra.mxu0 0
  %1781 = vmatprep.subr.bf16.mxu0 0
  %1782 = vmatpush1.bf16.xpose.msra.mxu0 0
  %1783 = vmatprep.subr.bf16.mxu0 0
  %1784 = vmatpush1.bf16.xpose.msra.mxu0 0
  %1785 = vmatprep.subr.bf16.mxu0 0
  %1786 = vmatpush1.bf16.xpose.msra.mxu0 0
  %1787 = vmatprep.subr.bf16.mxu0 0
  %1788 = vmatpush1.bf16.xpose.msra.mxu0 0
  %1789 = vmatprep.subr.bf16.mxu0 0
  %1790 = vmatpush1.bf16.xpose.msra.mxu0 0
  %1791 = vmatprep.subr.bf16.mxu0 0
  %1792 = vmatpush1.bf16.xpose.msra.mxu0 0
  %1793 = vmatprep.subr.bf16.mxu0 0
  %1794 = vmatpush1.bf16.xpose.msra.mxu0 0
  %1795 = vmatprep.subr.bf16.mxu0 0
  %1796 = vmatpush1.bf16.xpose.msra.mxu0 0
  %1797 = vmatprep.subr.bf16.mxu0 0
  %1798 = vmatpush1.bf16.xpose.msra.mxu0 0
  %1799 = vmatprep.mubr.bf16.mxu0 0
  %1800 = vmatmul.mubr.bf16.gmra.mrb[0].mxu0 %v1762
  %v1801 = vpop.f32.mrb[0].mxu0
  %v1802 = vadd.f32 0.0, %v1801
  %v1803 = vpop.f32.mrb[0].mxu0
  %v1804 = vpop.f32.mrb[0].mxu0
  %v1805 = vadd.f32 0.0, %v1804
  %v1806 = vpop.f32.mrb[0].mxu0
  %1807 = vdwg.mxu0
  %v1808 = vmul.f32 %v1802, 0.35355338
  %v1809 = vmul.f32 %v1805, 0.35355338
  %v1811 = vlaneseq
  %v1812 = vshrl.u32 %v1811, 7
  %v1813 = vsub.s32 0, %v1812
  %v1814 = vrot.slane %v1750, %v1813
  %v1816 = vadd.f32 %v1808, %v1814
  %v1817 = vadd.f32 %v1809, %v1814
  %v1818 = vsel %vm82, %v1816, -inf
  %1819 = vmax.xlane.f32.xlu0 %v1818
  %v1820 = vpop.xlane.xlu0 %1819
  %v1821 = vsel %vm82, %v1817, -inf
  %1822 = vmax.xlane.f32.xlu0 %v1821
  %v1823 = vpop.xlane.xlu0 %1822
  %v1824 = vsub.f32 %v1816, %v1820
  %v1825 = vsub.f32 %v1817, %v1823
  %v1826 = vmul.f32 %v1824, 1.442695
  %v1827 = vpow.pop %v1826
  %v1828 = vmul.f32 %v1825, 1.442695
  %v1829 = vpow.pop %v1828
  %v1830 = vsel %vm82, %v1827, 0.0
  %1831 = vadd.xlane.f32.xlu0 %v1830
  %v1832 = vpop.xlane.xlu0 %1831
  %v1833 = vsel %vm82, %v1829, 0.0
  %1834 = vadd.xlane.f32.xlu0 %v1833
  %v1835 = vpop.xlane.xlu0 %1834
  %v1836 = vrcp.pop %v1832
  %v1837 = vrcp.pop %v1835
  %v1838 = vmul.f32 %v1827, %v1836
  %v1839 = vmul.f32 %v1829, %v1837
  %v1840 = vpack.c.bf16 %v1839, %v1838
  %1841 = vrot.lane.b32.xlu0 %v1758, 64
  %v1842 = vpop.permute.xlu0 %1841
  %v1845 = vsel %vm82, %v1840, 0
  %1847 = vmatprep.subr.bf16.mxu0 0
  %1848 = vmatpush1.bf16.msra.mxu0 %v1842
  %1849 = vmatprep.subr.bf16.mxu0 0
  %1850 = vmatpush1.bf16.msra.mxu0 0
  %1851 = vmatprep.subr.bf16.mxu0 0
  %1852 = vmatpush1.bf16.msra.mxu0 0
  %1853 = vmatprep.subr.bf16.mxu0 0
  %1854 = vmatpush1.bf16.msra.mxu0 0
  %1855 = vmatprep.subr.bf16.mxu0 0
  %1856 = vmatpush1.bf16.msra.mxu0 0
  %1857 = vmatprep.subr.bf16.mxu0 0
  %1858 = vmatpush1.bf16.msra.mxu0 0
  %1859 = vmatprep.subr.bf16.mxu0 0
  %1860 = vmatpush1.bf16.msra.mxu0 0
  %1861 = vmatprep.subr.bf16.mxu0 0
  %1862 = vmatpush1.bf16.msra.mxu0 0
  %1863 = vmatprep.subr.bf16.mxu0 0
  %1864 = vmatpush1.bf16.msra.mxu0 0
  %1865 = vmatprep.subr.bf16.mxu0 0
  %1866 = vmatpush1.bf16.msra.mxu0 0
  %1867 = vmatprep.subr.bf16.mxu0 0
  %1868 = vmatpush1.bf16.msra.mxu0 0
  %1869 = vmatprep.subr.bf16.mxu0 0
  %1870 = vmatpush1.bf16.msra.mxu0 0
  %1871 = vmatprep.subr.bf16.mxu0 0
  %1872 = vmatpush1.bf16.msra.mxu0 0
  %1873 = vmatprep.subr.bf16.mxu0 0
  %1874 = vmatpush1.bf16.msra.mxu0 0
  %1875 = vmatprep.subr.bf16.mxu0 0
  %1876 = vmatpush1.bf16.msra.mxu0 0
  %1877 = vmatprep.subr.bf16.mxu0 0
  %1878 = vmatpush1.bf16.msra.mxu0 0
  %1879 = vmatprep.mubr.bf16.mxu0 0
  %1880 = vmatmul.mubr.bf16.gmra.mrb[0].mxu0 %v1845
  %v1881 = vpop.f32.mrb[0].mxu0
  %v1882 = vadd.f32 0.0, %v1881
  %v1883 = vpop.f32.mrb[0].mxu0
  %v1884 = vpop.f32.mrb[0].mxu0
  %v1885 = vadd.f32 0.0, %v1884
  %v1886 = vpop.f32.mrb[0].mxu0
  %1887 = vdwg.mxu0
  %v1888 = vld [vmem:[%s1751] sm:$0xf]
  %v1889 = vld [vmem:[%s1751 + $0x4] sm:$0xf]
  %v1892 = vunpack.c.l.b16 %v1888
  %v1893 = vunpack.c.l.b16 %v1889
  %v1894 = vpack.c.b16 %v1893, %v1892
  %1895 = vrot.lane.b32.xlu0 %v1894, 120
  %v1896 = vpop.permute.xlu0 %1895
  %1897 = vrot.lane.b32.xlu0 %v1894, 88
  %v1898 = vpop.permute.xlu0 %1897
  %v1900 = vsel %vm24, %v1896, 0
  %v1903 = vsel %vm24, %v1898, 0
  %1905 = vmatprep.subr.bf16.mxu0 0
  %1906 = vmatpush1.bf16.xpose.msra.mxu0 %v1903
  %1907 = vmatprep.subr.bf16.mxu0 0
  %1908 = vmatpush1.bf16.xpose.msra.mxu0 0
  %1909 = vmatprep.subr.bf16.mxu0 0
  %1910 = vmatpush1.bf16.xpose.msra.mxu0 0
  %1911 = vmatprep.subr.bf16.mxu0 0
  %1912 = vmatpush1.bf16.xpose.msra.mxu0 0
  %1913 = vmatprep.subr.bf16.mxu0 0
  %1914 = vmatpush1.bf16.xpose.msra.mxu0 0
  %1915 = vmatprep.subr.bf16.mxu0 0
  %1916 = vmatpush1.bf16.xpose.msra.mxu0 0
  %1917 = vmatprep.subr.bf16.mxu0 0
  %1918 = vmatpush1.bf16.xpose.msra.mxu0 0
  %1919 = vmatprep.subr.bf16.mxu0 0
  %1920 = vmatpush1.bf16.xpose.msra.mxu0 0
  %1921 = vmatprep.subr.bf16.mxu0 0
  %1922 = vmatpush1.bf16.xpose.msra.mxu0 0
  %1923 = vmatprep.subr.bf16.mxu0 0
  %1924 = vmatpush1.bf16.xpose.msra.mxu0 0
  %1925 = vmatprep.subr.bf16.mxu0 0
  %1926 = vmatpush1.bf16.xpose.msra.mxu0 0
  %1927 = vmatprep.subr.bf16.mxu0 0
  %1928 = vmatpush1.bf16.xpose.msra.mxu0 0
  %1929 = vmatprep.subr.bf16.mxu0 0
  %1930 = vmatpush1.bf16.xpose.msra.mxu0 0
  %1931 = vmatprep.subr.bf16.mxu0 0
  %1932 = vmatpush1.bf16.xpose.msra.mxu0 0
  %1933 = vmatprep.subr.bf16.mxu0 0
  %1934 = vmatpush1.bf16.xpose.msra.mxu0 0
  %1935 = vmatprep.subr.bf16.mxu0 0
  %1936 = vmatpush1.bf16.xpose.msra.mxu0 0
  %1937 = vmatprep.mubr.bf16.mxu0 0
  %1938 = vmatmul.mubr.bf16.gmra.mrb[0].mxu0 %v1900
  %v1939 = vpop.f32.mrb[0].mxu0
  %v1940 = vadd.f32 0.0, %v1939
  %v1941 = vpop.f32.mrb[0].mxu0
  %v1942 = vpop.f32.mrb[0].mxu0
  %v1943 = vadd.f32 0.0, %v1942
  %v1944 = vpop.f32.mrb[0].mxu0
  %1945 = vdwg.mxu0
  %v1946 = vmul.f32 %v1940, 0.35355338
  %v1947 = vmul.f32 %v1943, 0.35355338
  %v1948 = vadd.f32 %v1946, %v1814
  %v1949 = vadd.f32 %v1947, %v1814
  %v1950 = vsel %vm82, %v1948, -inf
  %1951 = vmax.xlane.f32.xlu0 %v1950
  %v1952 = vpop.xlane.xlu0 %1951
  %v1953 = vsel %vm82, %v1949, -inf
  %1954 = vmax.xlane.f32.xlu0 %v1953
  %v1955 = vpop.xlane.xlu0 %1954
  %v1956 = vsub.f32 %v1948, %v1952
  %v1957 = vsub.f32 %v1949, %v1955
  %v1958 = vmul.f32 %v1956, 1.442695
  %v1959 = vpow.pop %v1958
  %v1960 = vmul.f32 %v1957, 1.442695
  %v1961 = vpow.pop %v1960
  %v1962 = vsel %vm82, %v1959, 0.0
  %1963 = vadd.xlane.f32.xlu0 %v1962
  %v1964 = vpop.xlane.xlu0 %1963
  %v1965 = vsel %vm82, %v1961, 0.0
  %1966 = vadd.xlane.f32.xlu0 %v1965
  %v1967 = vpop.xlane.xlu0 %1966
  %v1968 = vrcp.pop %v1964
  %v1969 = vrcp.pop %v1967
  %v1970 = vmul.f32 %v1959, %v1968
  %v1971 = vmul.f32 %v1961, %v1969
  %v1972 = vpack.c.bf16 %v1971, %v1970
  %1973 = vrot.lane.b32.xlu0 %v1894, 56
  %v1974 = vpop.permute.xlu0 %1973
  %v1977 = vsel %vm82, %v1972, 0
  %1979 = vmatprep.subr.bf16.mxu0 0
  %1980 = vmatpush1.bf16.msra.mxu0 %v1974
  %1981 = vmatprep.subr.bf16.mxu0 0
  %1982 = vmatpush1.bf16.msra.mxu0 0
  %1983 = vmatprep.subr.bf16.mxu0 0
  %1984 = vmatpush1.bf16.msra.mxu0 0
  %1985 = vmatprep.subr.bf16.mxu0 0
  %1986 = vmatpush1.bf16.msra.mxu0 0
  %1987 = vmatprep.subr.bf16.mxu0 0
  %1988 = vmatpush1.bf16.msra.mxu0 0
  %1989 = vmatprep.subr.bf16.mxu0 0
  %1990 = vmatpush1.bf16.msra.mxu0 0
  %1991 = vmatprep.subr.bf16.mxu0 0
  %1992 = vmatpush1.bf16.msra.mxu0 0
  %1993 = vmatprep.subr.bf16.mxu0 0
  %1994 = vmatpush1.bf16.msra.mxu0 0
  %1995 = vmatprep.subr.bf16.mxu0 0
  %1996 = vmatpush1.bf16.msra.mxu0 0
  %1997 = vmatprep.subr.bf16.mxu0 0
  %1998 = vmatpush1.bf16.msra.mxu0 0
  %1999 = vmatprep.subr.bf16.mxu0 0
  %2000 = vmatpush1.bf16.msra.mxu0 0
  %2001 = vmatprep.subr.bf16.mxu0 0
  %2002 = vmatpush1.bf16.msra.mxu0 0
  %2003 = vmatprep.subr.bf16.mxu0 0
  %2004 = vmatpush1.bf16.msra.mxu0 0
  %2005 = vmatprep.subr.bf16.mxu0 0
  %2006 = vmatpush1.bf16.msra.mxu0 0
  %2007 = vmatprep.subr.bf16.mxu0 0
  %2008 = vmatpush1.bf16.msra.mxu0 0
  %2009 = vmatprep.subr.bf16.mxu0 0
  %2010 = vmatpush1.bf16.msra.mxu0 0
  %2011 = vmatprep.mubr.bf16.mxu0 0
  %2012 = vmatmul.mubr.bf16.gmra.mrb[0].mxu0 %v1977
  %v2013 = vpop.f32.mrb[0].mxu0
  %v2014 = vadd.f32 0.0, %v2013
  %v2015 = vpop.f32.mrb[0].mxu0
  %v2016 = vpop.f32.mrb[0].mxu0
  %v2017 = vadd.f32 0.0, %v2016
  %v2018 = vpop.f32.mrb[0].mxu0
  %2019 = vdwg.mxu0
  %v2020 = vld [vmem:[%s1751] sm:$0xf]
  %v2021 = vld [vmem:[%s1751 + $0x4] sm:$0xf]
  %v2024 = vunpack.c.l.b16 %v2020
  %v2025 = vunpack.c.l.b16 %v2021
  %v2026 = vpack.c.b16 %v2025, %v2024
  %2027 = vrot.lane.b32.xlu0 %v2026, 112
  %v2028 = vpop.permute.xlu0 %2027
  %2029 = vrot.lane.b32.xlu0 %v2026, 80
  %v2030 = vpop.permute.xlu0 %2029
  %v2032 = vsel %vm24, %v2028, 0
  %v2035 = vsel %vm24, %v2030, 0
  %2037 = vmatprep.subr.bf16.mxu0 0
  %2038 = vmatpush1.bf16.xpose.msra.mxu0 %v2035
  %2039 = vmatprep.subr.bf16.mxu0 0
  %2040 = vmatpush1.bf16.xpose.msra.mxu0 0
  %2041 = vmatprep.subr.bf16.mxu0 0
  %2042 = vmatpush1.bf16.xpose.msra.mxu0 0
  %2043 = vmatprep.subr.bf16.mxu0 0
  %2044 = vmatpush1.bf16.xpose.msra.mxu0 0
  %2045 = vmatprep.subr.bf16.mxu0 0
  %2046 = vmatpush1.bf16.xpose.msra.mxu0 0
  %2047 = vmatprep.subr.bf16.mxu0 0
  %2048 = vmatpush1.bf16.xpose.msra.mxu0 0
  %2049 = vmatprep.subr.bf16.mxu0 0
  %2050 = vmatpush1.bf16.xpose.msra.mxu0 0
  %2051 = vmatprep.subr.bf16.mxu0 0
  %2052 = vmatpush1.bf16.xpose.msra.mxu0 0
  %2053 = vmatprep.subr.bf16.mxu0 0
  %2054 = vmatpush1.bf16.xpose.msra.mxu0 0
  %2055 = vmatprep.subr.bf16.mxu0 0
  %2056 = vmatpush1.bf16.xpose.msra.mxu0 0
  %2057 = vmatprep.subr.bf16.mxu0 0
  %2058 = vmatpush1.bf16.xpose.msra.mxu0 0
  %2059 = vmatprep.subr.bf16.mxu0 0
  %2060 = vmatpush1.bf16.xpose.msra.mxu0 0
  %2061 = vmatprep.subr.bf16.mxu0 0
  %2062 = vmatpush1.bf16.xpose.msra.mxu0 0
  %2063 = vmatprep.subr.bf16.mxu0 0
  %2064 = vmatpush1.bf16.xpose.msra.mxu0 0
  %2065 = vmatprep.subr.bf16.mxu0 0
  %2066 = vmatpush1.bf16.xpose.msra.mxu0 0
  %2067 = vmatprep.subr.bf16.mxu0 0
  %2068 = vmatpush1.bf16.xpose.msra.mxu0 0
  %2069 = vmatprep.mubr.bf16.mxu0 0
  %2070 = vmatmul.mubr.bf16.gmra.mrb[0].mxu0 %v2032
  %v2071 = vpop.f32.mrb[0].mxu0
  %v2072 = vadd.f32 0.0, %v2071
  %v2073 = vpop.f32.mrb[0].mxu0
  %v2074 = vpop.f32.mrb[0].mxu0
  %v2075 = vadd.f32 0.0, %v2074
  %v2076 = vpop.f32.mrb[0].mxu0
  %2077 = vdwg.mxu0
  %v2078 = vmul.f32 %v2072, 0.35355338
  %v2079 = vmul.f32 %v2075, 0.35355338
  %v2080 = vadd.f32 %v2078, %v1814
  %v2081 = vadd.f32 %v2079, %v1814
  %v2082 = vsel %vm82, %v2080, -inf
  %2083 = vmax.xlane.f32.xlu0 %v2082
  %v2084 = vpop.xlane.xlu0 %2083
  %v2085 = vsel %vm82, %v2081, -inf
  %2086 = vmax.xlane.f32.xlu0 %v2085
  %v2087 = vpop.xlane.xlu0 %2086
  %v2088 = vsub.f32 %v2080, %v2084
  %v2089 = vsub.f32 %v2081, %v2087
  %v2090 = vmul.f32 %v2088, 1.442695
  %v2091 = vpow.pop %v2090
  %v2092 = vmul.f32 %v2089, 1.442695
  %v2093 = vpow.pop %v2092
  %v2094 = vsel %vm82, %v2091, 0.0
  %2095 = vadd.xlane.f32.xlu0 %v2094
  %v2096 = vpop.xlane.xlu0 %2095
  %v2097 = vsel %vm82, %v2093, 0.0
  %2098 = vadd.xlane.f32.xlu0 %v2097
  %v2099 = vpop.xlane.xlu0 %2098
  %v2100 = vrcp.pop %v2096
  %v2101 = vrcp.pop %v2099
  %v2102 = vmul.f32 %v2091, %v2100
  %v2103 = vmul.f32 %v2093, %v2101
  %v2104 = vpack.c.bf16 %v2103, %v2102
  %2105 = vrot.lane.b32.xlu0 %v2026, 48
  %v2106 = vpop.permute.xlu0 %2105
  %v2109 = vsel %vm82, %v2104, 0
  %2111 = vmatprep.subr.bf16.mxu0 0
  %2112 = vmatpush1.bf16.msra.mxu0 %v2106
  %2113 = vmatprep.subr.bf16.mxu0 0
  %2114 = vmatpush1.bf16.msra.mxu0 0
  %2115 = vmatprep.subr.bf16.mxu0 0
  %2116 = vmatpush1.bf16.msra.mxu0 0
  %2117 = vmatprep.subr.bf16.mxu0 0
  %2118 = vmatpush1.bf16.msra.mxu0 0
  %2119 = vmatprep.subr.bf16.mxu0 0
  %2120 = vmatpush1.bf16.msra.mxu0 0
  %2121 = vmatprep.subr.bf16.mxu0 0
  %2122 = vmatpush1.bf16.msra.mxu0 0
  %2123 = vmatprep.subr.bf16.mxu0 0
  %2124 = vmatpush1.bf16.msra.mxu0 0
  %2125 = vmatprep.subr.bf16.mxu0 0
  %2126 = vmatpush1.bf16.msra.mxu0 0
  %2127 = vmatprep.subr.bf16.mxu0 0
  %2128 = vmatpush1.bf16.msra.mxu0 0
  %2129 = vmatprep.subr.bf16.mxu0 0
  %2130 = vmatpush1.bf16.msra.mxu0 0
  %2131 = vmatprep.subr.bf16.mxu0 0
  %2132 = vmatpush1.bf16.msra.mxu0 0
  %2133 = vmatprep.subr.bf16.mxu0 0
  %2134 = vmatpush1.bf16.msra.mxu0 0
  %2135 = vmatprep.subr.bf16.mxu0 0
  %2136 = vmatpush1.bf16.msra.mxu0 0
  %2137 = vmatprep.subr.bf16.mxu0 0
  %2138 = vmatpush1.bf16.msra.mxu0 0
  %2139 = vmatprep.subr.bf16.mxu0 0
  %2140 = vmatpush1.bf16.msra.mxu0 0
  %2141 = vmatprep.subr.bf16.mxu0 0
  %2142 = vmatpush1.bf16.msra.mxu0 0
  %2143 = vmatprep.mubr.bf16.mxu0 0
  %2144 = vmatmul.mubr.bf16.gmra.mrb[0].mxu0 %v2109
  %v2145 = vpop.f32.mrb[0].mxu0
  %v2146 = vadd.f32 0.0, %v2145
  %v2147 = vpop.f32.mrb[0].mxu0
  %v2148 = vpop.f32.mrb[0].mxu0
  %v2149 = vadd.f32 0.0, %v2148
  %v2150 = vpop.f32.mrb[0].mxu0
  %2151 = vdwg.mxu0
  %v2152 = vld [vmem:[%s1751] sm:$0xf]
  %v2153 = vld [vmem:[%s1751 + $0x4] sm:$0xf]
  %v2156 = vunpack.c.l.b16 %v2152
  %v2157 = vunpack.c.l.b16 %v2153
  %v2158 = vpack.c.b16 %v2157, %v2156
  %2159 = vrot.lane.b32.xlu0 %v2158, 104
  %v2160 = vpop.permute.xlu0 %2159
  %2161 = vrot.lane.b32.xlu0 %v2158, 72
  %v2162 = vpop.permute.xlu0 %2161
  %v2164 = vsel %vm24, %v2160, 0
  %v2167 = vsel %vm24, %v2162, 0
  %2169 = vmatprep.subr.bf16.mxu0 0
  %2170 = vmatpush1.bf16.xpose.msra.mxu0 %v2167
  %2171 = vmatprep.subr.bf16.mxu0 0
  %2172 = vmatpush1.bf16.xpose.msra.mxu0 0
  %2173 = vmatprep.subr.bf16.mxu0 0
  %2174 = vmatpush1.bf16.xpose.msra.mxu0 0
  %2175 = vmatprep.subr.bf16.mxu0 0
  %2176 = vmatpush1.bf16.xpose.msra.mxu0 0
  %2177 = vmatprep.subr.bf16.mxu0 0
  %2178 = vmatpush1.bf16.xpose.msra.mxu0 0
  %2179 = vmatprep.subr.bf16.mxu0 0
  %2180 = vmatpush1.bf16.xpose.msra.mxu0 0
  %2181 = vmatprep.subr.bf16.mxu0 0
  %2182 = vmatpush1.bf16.xpose.msra.mxu0 0
  %2183 = vmatprep.subr.bf16.mxu0 0
  %2184 = vmatpush1.bf16.xpose.msra.mxu0 0
  %2185 = vmatprep.subr.bf16.mxu0 0
  %2186 = vmatpush1.bf16.xpose.msra.mxu0 0
  %2187 = vmatprep.subr.bf16.mxu0 0
  %2188 = vmatpush1.bf16.xpose.msra.mxu0 0
  %2189 = vmatprep.subr.bf16.mxu0 0
  %2190 = vmatpush1.bf16.xpose.msra.mxu0 0
  %2191 = vmatprep.subr.bf16.mxu0 0
  %2192 = vmatpush1.bf16.xpose.msra.mxu0 0
  %2193 = vmatprep.subr.bf16.mxu0 0
  %2194 = vmatpush1.bf16.xpose.msra.mxu0 0
  %2195 = vmatprep.subr.bf16.mxu0 0
  %2196 = vmatpush1.bf16.xpose.msra.mxu0 0
  %2197 = vmatprep.subr.bf16.mxu0 0
  %2198 = vmatpush1.bf16.xpose.msra.mxu0 0
  %2199 = vmatprep.subr.bf16.mxu0 0
  %2200 = vmatpush1.bf16.xpose.msra.mxu0 0
  %2201 = vmatprep.mubr.bf16.mxu0 0
  %2202 = vmatmul.mubr.bf16.gmra.mrb[0].mxu0 %v2164
  %v2203 = vpop.f32.mrb[0].mxu0
  %v2204 = vadd.f32 0.0, %v2203
  %v2205 = vpop.f32.mrb[0].mxu0
  %v2206 = vpop.f32.mrb[0].mxu0
  %v2207 = vadd.f32 0.0, %v2206
  %v2208 = vpop.f32.mrb[0].mxu0
  %2209 = vdwg.mxu0
  %v2210 = vmul.f32 %v2204, 0.35355338
  %v2211 = vmul.f32 %v2207, 0.35355338
  %v2212 = vadd.f32 %v2210, %v1814
  %v2213 = vadd.f32 %v2211, %v1814
  %v2214 = vsel %vm82, %v2212, -inf
  %2215 = vmax.xlane.f32.xlu0 %v2214
  %v2216 = vpop.xlane.xlu0 %2215
  %v2217 = vsel %vm82, %v2213, -inf
  %2218 = vmax.xlane.f32.xlu0 %v2217
  %v2219 = vpop.xlane.xlu0 %2218
  %v2220 = vsub.f32 %v2212, %v2216
  %v2221 = vsub.f32 %v2213, %v2219
  %v2222 = vmul.f32 %v2220, 1.442695
  %v2223 = vpow.pop %v2222
  %v2224 = vmul.f32 %v2221, 1.442695
  %v2225 = vpow.pop %v2224
  %v2226 = vsel %vm82, %v2223, 0.0
  %2227 = vadd.xlane.f32.xlu0 %v2226
  %v2228 = vpop.xlane.xlu0 %2227
  %v2229 = vsel %vm82, %v2225, 0.0
  %2230 = vadd.xlane.f32.xlu0 %v2229
  %v2231 = vpop.xlane.xlu0 %2230
  %v2232 = vrcp.pop %v2228
  %v2233 = vrcp.pop %v2231
  %v2234 = vmul.f32 %v2223, %v2232
  %v2235 = vmul.f32 %v2225, %v2233
  %v2236 = vpack.c.bf16 %v2235, %v2234
  %2237 = vrot.lane.b32.xlu0 %v2158, 40
  %v2238 = vpop.permute.xlu0 %2237
  %v2241 = vsel %vm82, %v2236, 0
  %2243 = vmatprep.subr.bf16.mxu0 0
  %2244 = vmatpush1.bf16.msra.mxu0 %v2238
  %2245 = vmatprep.subr.bf16.mxu0 0
  %2246 = vmatpush1.bf16.msra.mxu0 0
  %2247 = vmatprep.subr.bf16.mxu0 0
  %2248 = vmatpush1.bf16.msra.mxu0 0
  %2249 = vmatprep.subr.bf16.mxu0 0
  %2250 = vmatpush1.bf16.msra.mxu0 0
  %2251 = vmatprep.subr.bf16.mxu0 0
  %2252 = vmatpush1.bf16.msra.mxu0 0
  %2253 = vmatprep.subr.bf16.mxu0 0
  %2254 = vmatpush1.bf16.msra.mxu0 0
  %2255 = vmatprep.subr.bf16.mxu0 0
  %2256 = vmatpush1.bf16.msra.mxu0 0
  %2257 = vmatprep.subr.bf16.mxu0 0
  %2258 = vmatpush1.bf16.msra.mxu0 0
  %2259 = vmatprep.subr.bf16.mxu0 0
  %2260 = vmatpush1.bf16.msra.mxu0 0
  %2261 = vmatprep.subr.bf16.mxu0 0
  %2262 = vmatpush1.bf16.msra.mxu0 0
  %2263 = vmatprep.subr.bf16.mxu0 0
  %2264 = vmatpush1.bf16.msra.mxu0 0
  %2265 = vmatprep.subr.bf16.mxu0 0
  %2266 = vmatpush1.bf16.msra.mxu0 0
  %2267 = vmatprep.subr.bf16.mxu0 0
  %2268 = vmatpush1.bf16.msra.mxu0 0
  %2269 = vmatprep.subr.bf16.mxu0 0
  %2270 = vmatpush1.bf16.msra.mxu0 0
  %2271 = vmatprep.subr.bf16.mxu0 0
  %2272 = vmatpush1.bf16.msra.mxu0 0
  %2273 = vmatprep.subr.bf16.mxu0 0
  %2274 = vmatpush1.bf16.msra.mxu0 0
  %2275 = vmatprep.mubr.bf16.mxu0 0
  %2276 = vmatmul.mubr.bf16.gmra.mrb[0].mxu0 %v2241
  %v2277 = vpop.f32.mrb[0].mxu0
  %v2278 = vadd.f32 0.0, %v2277
  %v2279 = vpop.f32.mrb[0].mxu0
  %v2280 = vpop.f32.mrb[0].mxu0
  %v2281 = vadd.f32 0.0, %v2280
  %v2282 = vpop.f32.mrb[0].mxu0
  %2283 = vdwg.mxu0
  %2286 = vrot.lane.b32.xlu0 %v2014, 8
  %v2287 = vpop.permute.xlu0 %2286
  %2288 = vrot.lane.b32.xlu0 %v2017, 8
  %v2289 = vpop.permute.xlu0 %2288
  %2294 = vrot.lane.b32.xlu0 %v2146, 16
  %v2295 = vpop.permute.xlu0 %2294
  %2296 = vrot.lane.b32.xlu0 %v2149, 16
  %v2297 = vpop.permute.xlu0 %2296
  %2302 = vrot.lane.b32.xlu0 %v2278, 24
  %v2303 = vpop.permute.xlu0 %2302
  %2304 = vrot.lane.b32.xlu0 %v2281, 24
  %v2305 = vpop.permute.xlu0 %2304
  %v2308 = vsel %vm24, %v1882, %v2287
  %v2309 = vsel %vm24, %v1885, %v2289
  %v2310 = vsel %vm82, %v2308, %v2295
  %v2311 = vsel %vm82, %v2309, %v2297
  %v2312 = vsel %vm577, %v2310, %v2303
  %v2313 = vsel %vm577, %v2311, %v2305
  %v2314 = vpack.c.bf16 %v2313, %v2312
  %v2316 = vunpack.c.l.b16 %v2314
  %v2317 = vunpack.c.h.b16 %v2314
  %v2318 = vpack.c.b16 %v2316, %v2316
  %v2319 = vpack.c.b16 %v2317, %v2317
  %s2322 = scalar_lea.vmem %s2, 24
  %2323 = vst.msk [vmem:[%s2322] sm:$0xf] %vm588, %v2318
  %2324 = vst.msk [vmem:[%s2322 + $0x4] sm:$0xf] %vm588, %v2319
  %s2325 = scalar_lea.vmem %s1, 4
  %v2326 = vld [vmem:[%s2325] sm:$0x1]
  %v2327 = vsub.f32 1.0, %v2326
  %v2328 = vmul.f32 %v2327, -1e+09
  %s2329 = scalar_lea.vmem %s0, 32
  %v2330 = vld [vmem:[%s2329] sm:$0xf]
  %v2331 = vld [vmem:[%s2329 + $0x4] sm:$0xf]
  %v2334 = vunpack.c.l.b16 %v2330
  %v2335 = vunpack.c.l.b16 %v2331
  %v2336 = vpack.c.b16 %v2335, %v2334
  %2337 = vrot.lane.b32.xlu0 %v2336, 96
  %v2338 = vpop.permute.xlu0 %2337
  %v2340 = vsel %vm24, %v2336, 0
  %v2343 = vsel %vm24, %v2338, 0
  %2345 = vmatprep.subr.bf16.mxu0 0
  %2346 = vmatpush1.bf16.xpose.msra.mxu0 %v2343
  %2347 = vmatprep.subr.bf16.mxu0 0
  %2348 = vmatpush1.bf16.xpose.msra.mxu0 0
  %2349 = vmatprep.subr.bf16.mxu0 0
  %2350 = vmatpush1.bf16.xpose.msra.mxu0 0
  %2351 = vmatprep.subr.bf16.mxu0 0
  %2352 = vmatpush1.bf16.xpose.msra.mxu0 0
  %2353 = vmatprep.subr.bf16.mxu0 0
  %2354 = vmatpush1.bf16.xpose.msra.mxu0 0
  %2355 = vmatprep.subr.bf16.mxu0 0
  %2356 = vmatpush1.bf16.xpose.msra.mxu0 0
  %2357 = vmatprep.subr.bf16.mxu0 0
  %2358 = vmatpush1.bf16.xpose.msra.mxu0 0
  %2359 = vmatprep.subr.bf16.mxu0 0
  %2360 = vmatpush1.bf16.xpose.msra.mxu0 0
  %2361 = vmatprep.subr.bf16.mxu0 0
  %2362 = vmatpush1.bf16.xpose.msra.mxu0 0
  %2363 = vmatprep.subr.bf16.mxu0 0
  %2364 = vmatpush1.bf16.xpose.msra.mxu0 0
  %2365 = vmatprep.subr.bf16.mxu0 0
  %2366 = vmatpush1.bf16.xpose.msra.mxu0 0
  %2367 = vmatprep.subr.bf16.mxu0 0
  %2368 = vmatpush1.bf16.xpose.msra.mxu0 0
  %2369 = vmatprep.subr.bf16.mxu0 0
  %2370 = vmatpush1.bf16.xpose.msra.mxu0 0
  %2371 = vmatprep.subr.bf16.mxu0 0
  %2372 = vmatpush1.bf16.xpose.msra.mxu0 0
  %2373 = vmatprep.subr.bf16.mxu0 0
  %2374 = vmatpush1.bf16.xpose.msra.mxu0 0
  %2375 = vmatprep.subr.bf16.mxu0 0
  %2376 = vmatpush1.bf16.xpose.msra.mxu0 0
  %2377 = vmatprep.mubr.bf16.mxu0 0
  %2378 = vmatmul.mubr.bf16.gmra.mrb[0].mxu0 %v2340
  %v2379 = vpop.f32.mrb[0].mxu0
  %v2380 = vadd.f32 0.0, %v2379
  %v2381 = vpop.f32.mrb[0].mxu0
  %v2382 = vpop.f32.mrb[0].mxu0
  %v2383 = vadd.f32 0.0, %v2382
  %v2384 = vpop.f32.mrb[0].mxu0
  %2385 = vdwg.mxu0
  %v2386 = vmul.f32 %v2380, 0.35355338
  %v2387 = vmul.f32 %v2383, 0.35355338
  %v2389 = vlaneseq
  %v2390 = vshrl.u32 %v2389, 7
  %v2391 = vsub.s32 0, %v2390
  %v2392 = vrot.slane %v2328, %v2391
  %v2394 = vadd.f32 %v2386, %v2392
  %v2395 = vadd.f32 %v2387, %v2392
  %v2396 = vsel %vm82, %v2394, -inf
  %2397 = vmax.xlane.f32.xlu0 %v2396
  %v2398 = vpop.xlane.xlu0 %2397
  %v2399 = vsel %vm82, %v2395, -inf
  %2400 = vmax.xlane.f32.xlu0 %v2399
  %v2401 = vpop.xlane.xlu0 %2400
  %v2402 = vsub.f32 %v2394, %v2398
  %v2403 = vsub.f32 %v2395, %v2401
  %v2404 = vmul.f32 %v2402, 1.442695
  %v2405 = vpow.pop %v2404
  %v2406 = vmul.f32 %v2403, 1.442695
  %v2407 = vpow.pop %v2406
  %v2408 = vsel %vm82, %v2405, 0.0
  %2409 = vadd.xlane.f32.xlu0 %v2408
  %v2410 = vpop.xlane.xlu0 %2409
  %v2411 = vsel %vm82, %v2407, 0.0
  %2412 = vadd.xlane.f32.xlu0 %v2411
  %v2413 = vpop.xlane.xlu0 %2412
  %v2414 = vrcp.pop %v2410
  %v2415 = vrcp.pop %v2413
  %v2416 = vmul.f32 %v2405, %v2414
  %v2417 = vmul.f32 %v2407, %v2415
  %v2418 = vpack.c.bf16 %v2417, %v2416
  %2419 = vrot.lane.b32.xlu0 %v2336, 64
  %v2420 = vpop.permute.xlu0 %2419
  %v2423 = vsel %vm82, %v2418, 0
  %2425 = vmatprep.subr.bf16.mxu0 0
  %2426 = vmatpush1.bf16.msra.mxu0 %v2420
  %2427 = vmatprep.subr.bf16.mxu0 0
  %2428 = vmatpush1.bf16.msra.mxu0 0
  %2429 = vmatprep.subr.bf16.mxu0 0
  %2430 = vmatpush1.bf16.msra.mxu0 0
  %2431 = vmatprep.subr.bf16.mxu0 0
  %2432 = vmatpush1.bf16.msra.mxu0 0
  %2433 = vmatprep.subr.bf16.mxu0 0
  %2434 = vmatpush1.bf16.msra.mxu0 0
  %2435 = vmatprep.subr.bf16.mxu0 0
  %2436 = vmatpush1.bf16.msra.mxu0 0
  %2437 = vmatprep.subr.bf16.mxu0 0
  %2438 = vmatpush1.bf16.msra.mxu0 0
  %2439 = vmatprep.subr.bf16.mxu0 0
  %2440 = vmatpush1.bf16.msra.mxu0 0
  %2441 = vmatprep.subr.bf16.mxu0 0
  %2442 = vmatpush1.bf16.msra.mxu0 0
  %2443 = vmatprep.subr.bf16.mxu0 0
  %2444 = vmatpush1.bf16.msra.mxu0 0
  %2445 = vmatprep.subr.bf16.mxu0 0
  %2446 = vmatpush1.bf16.msra.mxu0 0
  %2447 = vmatprep.subr.bf16.mxu0 0
  %2448 = vmatpush1.bf16.msra.mxu0 0
  %2449 = vmatprep.subr.bf16.mxu0 0
  %2450 = vmatpush1.bf16.msra.mxu0 0
  %2451 = vmatprep.subr.bf16.mxu0 0
  %2452 = vmatpush1.bf16.msra.mxu0 0
  %2453 = vmatprep.subr.bf16.mxu0 0
  %2454 = vmatpush1.bf16.msra.mxu0 0
  %2455 = vmatprep.subr.bf16.mxu0 0
  %2456 = vmatpush1.bf16.msra.mxu0 0
  %2457 = vmatprep.mubr.bf16.mxu0 0
  %2458 = vmatmul.mubr.bf16.gmra.mrb[0].mxu0 %v2423
  %v2459 = vpop.f32.mrb[0].mxu0
  %v2460 = vadd.f32 0.0, %v2459
  %v2461 = vpop.f32.mrb[0].mxu0
  %v2462 = vpop.f32.mrb[0].mxu0
  %v2463 = vadd.f32 0.0, %v2462
  %v2464 = vpop.f32.mrb[0].mxu0
  %2465 = vdwg.mxu0
  %v2466 = vld [vmem:[%s2329] sm:$0xf]
  %v2467 = vld [vmem:[%s2329 + $0x4] sm:$0xf]
  %v2470 = vunpack.c.l.b16 %v2466
  %v2471 = vunpack.c.l.b16 %v2467
  %v2472 = vpack.c.b16 %v2471, %v2470
  %2473 = vrot.lane.b32.xlu0 %v2472, 120
  %v2474 = vpop.permute.xlu0 %2473
  %2475 = vrot.lane.b32.xlu0 %v2472, 88
  %v2476 = vpop.permute.xlu0 %2475
  %v2478 = vsel %vm24, %v2474, 0
  %v2481 = vsel %vm24, %v2476, 0
  %2483 = vmatprep.subr.bf16.mxu0 0
  %2484 = vmatpush1.bf16.xpose.msra.mxu0 %v2481
  %2485 = vmatprep.subr.bf16.mxu0 0
  %2486 = vmatpush1.bf16.xpose.msra.mxu0 0
  %2487 = vmatprep.subr.bf16.mxu0 0
  %2488 = vmatpush1.bf16.xpose.msra.mxu0 0
  %2489 = vmatprep.subr.bf16.mxu0 0
  %2490 = vmatpush1.bf16.xpose.msra.mxu0 0
  %2491 = vmatprep.subr.bf16.mxu0 0
  %2492 = vmatpush1.bf16.xpose.msra.mxu0 0
  %2493 = vmatprep.subr.bf16.mxu0 0
  %2494 = vmatpush1.bf16.xpose.msra.mxu0 0
  %2495 = vmatprep.subr.bf16.mxu0 0
  %2496 = vmatpush1.bf16.xpose.msra.mxu0 0
  %2497 = vmatprep.subr.bf16.mxu0 0
  %2498 = vmatpush1.bf16.xpose.msra.mxu0 0
  %2499 = vmatprep.subr.bf16.mxu0 0
  %2500 = vmatpush1.bf16.xpose.msra.mxu0 0
  %2501 = vmatprep.subr.bf16.mxu0 0
  %2502 = vmatpush1.bf16.xpose.msra.mxu0 0
  %2503 = vmatprep.subr.bf16.mxu0 0
  %2504 = vmatpush1.bf16.xpose.msra.mxu0 0
  %2505 = vmatprep.subr.bf16.mxu0 0
  %2506 = vmatpush1.bf16.xpose.msra.mxu0 0
  %2507 = vmatprep.subr.bf16.mxu0 0
  %2508 = vmatpush1.bf16.xpose.msra.mxu0 0
  %2509 = vmatprep.subr.bf16.mxu0 0
  %2510 = vmatpush1.bf16.xpose.msra.mxu0 0
  %2511 = vmatprep.subr.bf16.mxu0 0
  %2512 = vmatpush1.bf16.xpose.msra.mxu0 0
  %2513 = vmatprep.subr.bf16.mxu0 0
  %2514 = vmatpush1.bf16.xpose.msra.mxu0 0
  %2515 = vmatprep.mubr.bf16.mxu0 0
  %2516 = vmatmul.mubr.bf16.gmra.mrb[0].mxu0 %v2478
  %v2517 = vpop.f32.mrb[0].mxu0
  %v2518 = vadd.f32 0.0, %v2517
  %v2519 = vpop.f32.mrb[0].mxu0
  %v2520 = vpop.f32.mrb[0].mxu0
  %v2521 = vadd.f32 0.0, %v2520
  %v2522 = vpop.f32.mrb[0].mxu0
  %2523 = vdwg.mxu0
  %v2524 = vmul.f32 %v2518, 0.35355338
  %v2525 = vmul.f32 %v2521, 0.35355338
  %v2526 = vadd.f32 %v2524, %v2392
  %v2527 = vadd.f32 %v2525, %v2392
  %v2528 = vsel %vm82, %v2526, -inf
  %2529 = vmax.xlane.f32.xlu0 %v2528
  %v2530 = vpop.xlane.xlu0 %2529
  %v2531 = vsel %vm82, %v2527, -inf
  %2532 = vmax.xlane.f32.xlu0 %v2531
  %v2533 = vpop.xlane.xlu0 %2532
  %v2534 = vsub.f32 %v2526, %v2530
  %v2535 = vsub.f32 %v2527, %v2533
  %v2536 = vmul.f32 %v2534, 1.442695
  %v2537 = vpow.pop %v2536
  %v2538 = vmul.f32 %v2535, 1.442695
  %v2539 = vpow.pop %v2538
  %v2540 = vsel %vm82, %v2537, 0.0
  %2541 = vadd.xlane.f32.xlu0 %v2540
  %v2542 = vpop.xlane.xlu0 %2541
  %v2543 = vsel %vm82, %v2539, 0.0
  %2544 = vadd.xlane.f32.xlu0 %v2543
  %v2545 = vpop.xlane.xlu0 %2544
  %v2546 = vrcp.pop %v2542
  %v2547 = vrcp.pop %v2545
  %v2548 = vmul.f32 %v2537, %v2546
  %v2549 = vmul.f32 %v2539, %v2547
  %v2550 = vpack.c.bf16 %v2549, %v2548
  %2551 = vrot.lane.b32.xlu0 %v2472, 56
  %v2552 = vpop.permute.xlu0 %2551
  %v2555 = vsel %vm82, %v2550, 0
  %2557 = vmatprep.subr.bf16.mxu0 0
  %2558 = vmatpush1.bf16.msra.mxu0 %v2552
  %2559 = vmatprep.subr.bf16.mxu0 0
  %2560 = vmatpush1.bf16.msra.mxu0 0
  %2561 = vmatprep.subr.bf16.mxu0 0
  %2562 = vmatpush1.bf16.msra.mxu0 0
  %2563 = vmatprep.subr.bf16.mxu0 0
  %2564 = vmatpush1.bf16.msra.mxu0 0
  %2565 = vmatprep.subr.bf16.mxu0 0
  %2566 = vmatpush1.bf16.msra.mxu0 0
  %2567 = vmatprep.subr.bf16.mxu0 0
  %2568 = vmatpush1.bf16.msra.mxu0 0
  %2569 = vmatprep.subr.bf16.mxu0 0
  %2570 = vmatpush1.bf16.msra.mxu0 0
  %2571 = vmatprep.subr.bf16.mxu0 0
  %2572 = vmatpush1.bf16.msra.mxu0 0
  %2573 = vmatprep.subr.bf16.mxu0 0
  %2574 = vmatpush1.bf16.msra.mxu0 0
  %2575 = vmatprep.subr.bf16.mxu0 0
  %2576 = vmatpush1.bf16.msra.mxu0 0
  %2577 = vmatprep.subr.bf16.mxu0 0
  %2578 = vmatpush1.bf16.msra.mxu0 0
  %2579 = vmatprep.subr.bf16.mxu0 0
  %2580 = vmatpush1.bf16.msra.mxu0 0
  %2581 = vmatprep.subr.bf16.mxu0 0
  %2582 = vmatpush1.bf16.msra.mxu0 0
  %2583 = vmatprep.subr.bf16.mxu0 0
  %2584 = vmatpush1.bf16.msra.mxu0 0
  %2585 = vmatprep.subr.bf16.mxu0 0
  %2586 = vmatpush1.bf16.msra.mxu0 0
  %2587 = vmatprep.subr.bf16.mxu0 0
  %2588 = vmatpush1.bf16.msra.mxu0 0
  %2589 = vmatprep.mubr.bf16.mxu0 0
  %2590 = vmatmul.mubr.bf16.gmra.mrb[0].mxu0 %v2555
  %v2591 = vpop.f32.mrb[0].mxu0
  %v2592 = vadd.f32 0.0, %v2591
  %v2593 = vpop.f32.mrb[0].mxu0
  %v2594 = vpop.f32.mrb[0].mxu0
  %v2595 = vadd.f32 0.0, %v2594
  %v2596 = vpop.f32.mrb[0].mxu0
  %2597 = vdwg.mxu0
  %v2598 = vld [vmem:[%s2329] sm:$0xf]
  %v2599 = vld [vmem:[%s2329 + $0x4] sm:$0xf]
  %v2602 = vunpack.c.l.b16 %v2598
  %v2603 = vunpack.c.l.b16 %v2599
  %v2604 = vpack.c.b16 %v2603, %v2602
  %2605 = vrot.lane.b32.xlu0 %v2604, 112
  %v2606 = vpop.permute.xlu0 %2605
  %2607 = vrot.lane.b32.xlu0 %v2604, 80
  %v2608 = vpop.permute.xlu0 %2607
  %v2610 = vsel %vm24, %v2606, 0
  %v2613 = vsel %vm24, %v2608, 0
  %2615 = vmatprep.subr.bf16.mxu0 0
  %2616 = vmatpush1.bf16.xpose.msra.mxu0 %v2613
  %2617 = vmatprep.subr.bf16.mxu0 0
  %2618 = vmatpush1.bf16.xpose.msra.mxu0 0
  %2619 = vmatprep.subr.bf16.mxu0 0
  %2620 = vmatpush1.bf16.xpose.msra.mxu0 0
  %2621 = vmatprep.subr.bf16.mxu0 0
  %2622 = vmatpush1.bf16.xpose.msra.mxu0 0
  %2623 = vmatprep.subr.bf16.mxu0 0
  %2624 = vmatpush1.bf16.xpose.msra.mxu0 0
  %2625 = vmatprep.subr.bf16.mxu0 0
  %2626 = vmatpush1.bf16.xpose.msra.mxu0 0
  %2627 = vmatprep.subr.bf16.mxu0 0
  %2628 = vmatpush1.bf16.xpose.msra.mxu0 0
  %2629 = vmatprep.subr.bf16.mxu0 0
  %2630 = vmatpush1.bf16.xpose.msra.mxu0 0
  %2631 = vmatprep.subr.bf16.mxu0 0
  %2632 = vmatpush1.bf16.xpose.msra.mxu0 0
  %2633 = vmatprep.subr.bf16.mxu0 0
  %2634 = vmatpush1.bf16.xpose.msra.mxu0 0
  %2635 = vmatprep.subr.bf16.mxu0 0
  %2636 = vmatpush1.bf16.xpose.msra.mxu0 0
  %2637 = vmatprep.subr.bf16.mxu0 0
  %2638 = vmatpush1.bf16.xpose.msra.mxu0 0
  %2639 = vmatprep.subr.bf16.mxu0 0
  %2640 = vmatpush1.bf16.xpose.msra.mxu0 0
  %2641 = vmatprep.subr.bf16.mxu0 0
  %2642 = vmatpush1.bf16.xpose.msra.mxu0 0
  %2643 = vmatprep.subr.bf16.mxu0 0
  %2644 = vmatpush1.bf16.xpose.msra.mxu0 0
  %2645 = vmatprep.subr.bf16.mxu0 0
  %2646 = vmatpush1.bf16.xpose.msra.mxu0 0
  %2647 = vmatprep.mubr.bf16.mxu0 0
  %2648 = vmatmul.mubr.bf16.gmra.mrb[0].mxu0 %v2610
  %v2649 = vpop.f32.mrb[0].mxu0
  %v2650 = vadd.f32 0.0, %v2649
  %v2651 = vpop.f32.mrb[0].mxu0
  %v2652 = vpop.f32.mrb[0].mxu0
  %v2653 = vadd.f32 0.0, %v2652
  %v2654 = vpop.f32.mrb[0].mxu0
  %2655 = vdwg.mxu0
  %v2656 = vmul.f32 %v2650, 0.35355338
  %v2657 = vmul.f32 %v2653, 0.35355338
  %v2658 = vadd.f32 %v2656, %v2392
  %v2659 = vadd.f32 %v2657, %v2392
  %v2660 = vsel %vm82, %v2658, -inf
  %2661 = vmax.xlane.f32.xlu0 %v2660
  %v2662 = vpop.xlane.xlu0 %2661
  %v2663 = vsel %vm82, %v2659, -inf
  %2664 = vmax.xlane.f32.xlu0 %v2663
  %v2665 = vpop.xlane.xlu0 %2664
  %v2666 = vsub.f32 %v2658, %v2662
  %v2667 = vsub.f32 %v2659, %v2665
  %v2668 = vmul.f32 %v2666, 1.442695
  %v2669 = vpow.pop %v2668
  %v2670 = vmul.f32 %v2667, 1.442695
  %v2671 = vpow.pop %v2670
  %v2672 = vsel %vm82, %v2669, 0.0
  %2673 = vadd.xlane.f32.xlu0 %v2672
  %v2674 = vpop.xlane.xlu0 %2673
  %v2675 = vsel %vm82, %v2671, 0.0
  %2676 = vadd.xlane.f32.xlu0 %v2675
  %v2677 = vpop.xlane.xlu0 %2676
  %v2678 = vrcp.pop %v2674
  %v2679 = vrcp.pop %v2677
  %v2680 = vmul.f32 %v2669, %v2678
  %v2681 = vmul.f32 %v2671, %v2679
  %v2682 = vpack.c.bf16 %v2681, %v2680
  %2683 = vrot.lane.b32.xlu0 %v2604, 48
  %v2684 = vpop.permute.xlu0 %2683
  %v2687 = vsel %vm82, %v2682, 0
  %2689 = vmatprep.subr.bf16.mxu0 0
  %2690 = vmatpush1.bf16.msra.mxu0 %v2684
  %2691 = vmatprep.subr.bf16.mxu0 0
  %2692 = vmatpush1.bf16.msra.mxu0 0
  %2693 = vmatprep.subr.bf16.mxu0 0
  %2694 = vmatpush1.bf16.msra.mxu0 0
  %2695 = vmatprep.subr.bf16.mxu0 0
  %2696 = vmatpush1.bf16.msra.mxu0 0
  %2697 = vmatprep.subr.bf16.mxu0 0
  %2698 = vmatpush1.bf16.msra.mxu0 0
  %2699 = vmatprep.subr.bf16.mxu0 0
  %2700 = vmatpush1.bf16.msra.mxu0 0
  %2701 = vmatprep.subr.bf16.mxu0 0
  %2702 = vmatpush1.bf16.msra.mxu0 0
  %2703 = vmatprep.subr.bf16.mxu0 0
  %2704 = vmatpush1.bf16.msra.mxu0 0
  %2705 = vmatprep.subr.bf16.mxu0 0
  %2706 = vmatpush1.bf16.msra.mxu0 0
  %2707 = vmatprep.subr.bf16.mxu0 0
  %2708 = vmatpush1.bf16.msra.mxu0 0
  %2709 = vmatprep.subr.bf16.mxu0 0
  %2710 = vmatpush1.bf16.msra.mxu0 0
  %2711 = vmatprep.subr.bf16.mxu0 0
  %2712 = vmatpush1.bf16.msra.mxu0 0
  %2713 = vmatprep.subr.bf16.mxu0 0
  %2714 = vmatpush1.bf16.msra.mxu0 0
  %2715 = vmatprep.subr.bf16.mxu0 0
  %2716 = vmatpush1.bf16.msra.mxu0 0
  %2717 = vmatprep.subr.bf16.mxu0 0
  %2718 = vmatpush1.bf16.msra.mxu0 0
  %2719 = vmatprep.subr.bf16.mxu0 0
  %2720 = vmatpush1.bf16.msra.mxu0 0
  %2721 = vmatprep.mubr.bf16.mxu0 0
  %2722 = vmatmul.mubr.bf16.gmra.mrb[0].mxu0 %v2687
  %v2723 = vpop.f32.mrb[0].mxu0
  %v2724 = vadd.f32 0.0, %v2723
  %v2725 = vpop.f32.mrb[0].mxu0
  %v2726 = vpop.f32.mrb[0].mxu0
  %v2727 = vadd.f32 0.0, %v2726
  %v2728 = vpop.f32.mrb[0].mxu0
  %2729 = vdwg.mxu0
  %v2730 = vld [vmem:[%s2329] sm:$0xf]
  %v2731 = vld [vmem:[%s2329 + $0x4] sm:$0xf]
  %v2734 = vunpack.c.l.b16 %v2730
  %v2735 = vunpack.c.l.b16 %v2731
  %v2736 = vpack.c.b16 %v2735, %v2734
  %2737 = vrot.lane.b32.xlu0 %v2736, 104
  %v2738 = vpop.permute.xlu0 %2737
  %2739 = vrot.lane.b32.xlu0 %v2736, 72
  %v2740 = vpop.permute.xlu0 %2739
  %v2742 = vsel %vm24, %v2738, 0
  %v2745 = vsel %vm24, %v2740, 0
  %2747 = vmatprep.subr.bf16.mxu0 0
  %2748 = vmatpush1.bf16.xpose.msra.mxu0 %v2745
  %2749 = vmatprep.subr.bf16.mxu0 0
  %2750 = vmatpush1.bf16.xpose.msra.mxu0 0
  %2751 = vmatprep.subr.bf16.mxu0 0
  %2752 = vmatpush1.bf16.xpose.msra.mxu0 0
  %2753 = vmatprep.subr.bf16.mxu0 0
  %2754 = vmatpush1.bf16.xpose.msra.mxu0 0
  %2755 = vmatprep.subr.bf16.mxu0 0
  %2756 = vmatpush1.bf16.xpose.msra.mxu0 0
  %2757 = vmatprep.subr.bf16.mxu0 0
  %2758 = vmatpush1.bf16.xpose.msra.mxu0 0
  %2759 = vmatprep.subr.bf16.mxu0 0
  %2760 = vmatpush1.bf16.xpose.msra.mxu0 0
  %2761 = vmatprep.subr.bf16.mxu0 0
  %2762 = vmatpush1.bf16.xpose.msra.mxu0 0
  %2763 = vmatprep.subr.bf16.mxu0 0
  %2764 = vmatpush1.bf16.xpose.msra.mxu0 0
  %2765 = vmatprep.subr.bf16.mxu0 0
  %2766 = vmatpush1.bf16.xpose.msra.mxu0 0
  %2767 = vmatprep.subr.bf16.mxu0 0
  %2768 = vmatpush1.bf16.xpose.msra.mxu0 0
  %2769 = vmatprep.subr.bf16.mxu0 0
  %2770 = vmatpush1.bf16.xpose.msra.mxu0 0
  %2771 = vmatprep.subr.bf16.mxu0 0
  %2772 = vmatpush1.bf16.xpose.msra.mxu0 0
  %2773 = vmatprep.subr.bf16.mxu0 0
  %2774 = vmatpush1.bf16.xpose.msra.mxu0 0
  %2775 = vmatprep.subr.bf16.mxu0 0
  %2776 = vmatpush1.bf16.xpose.msra.mxu0 0
  %2777 = vmatprep.subr.bf16.mxu0 0
  %2778 = vmatpush1.bf16.xpose.msra.mxu0 0
  %2779 = vmatprep.mubr.bf16.mxu0 0
  %2780 = vmatmul.mubr.bf16.gmra.mrb[0].mxu0 %v2742
  %v2781 = vpop.f32.mrb[0].mxu0
  %v2782 = vadd.f32 0.0, %v2781
  %v2783 = vpop.f32.mrb[0].mxu0
  %v2784 = vpop.f32.mrb[0].mxu0
  %v2785 = vadd.f32 0.0, %v2784
  %v2786 = vpop.f32.mrb[0].mxu0
  %2787 = vdwg.mxu0
  %v2788 = vmul.f32 %v2782, 0.35355338
  %v2789 = vmul.f32 %v2785, 0.35355338
  %v2790 = vadd.f32 %v2788, %v2392
  %v2791 = vadd.f32 %v2789, %v2392
  %v2792 = vsel %vm82, %v2790, -inf
  %2793 = vmax.xlane.f32.xlu0 %v2792
  %v2794 = vpop.xlane.xlu0 %2793
  %v2795 = vsel %vm82, %v2791, -inf
  %2796 = vmax.xlane.f32.xlu0 %v2795
  %v2797 = vpop.xlane.xlu0 %2796
  %v2798 = vsub.f32 %v2790, %v2794
  %v2799 = vsub.f32 %v2791, %v2797
  %v2800 = vmul.f32 %v2798, 1.442695
  %v2801 = vpow.pop %v2800
  %v2802 = vmul.f32 %v2799, 1.442695
  %v2803 = vpow.pop %v2802
  %v2804 = vsel %vm82, %v2801, 0.0
  %2805 = vadd.xlane.f32.xlu0 %v2804
  %v2806 = vpop.xlane.xlu0 %2805
  %v2807 = vsel %vm82, %v2803, 0.0
  %2808 = vadd.xlane.f32.xlu0 %v2807
  %v2809 = vpop.xlane.xlu0 %2808
  %v2810 = vrcp.pop %v2806
  %v2811 = vrcp.pop %v2809
  %v2812 = vmul.f32 %v2801, %v2810
  %v2813 = vmul.f32 %v2803, %v2811
  %v2814 = vpack.c.bf16 %v2813, %v2812
  %2815 = vrot.lane.b32.xlu0 %v2736, 40
  %v2816 = vpop.permute.xlu0 %2815
  %v2819 = vsel %vm82, %v2814, 0
  %2821 = vmatprep.subr.bf16.mxu0 0
  %2822 = vmatpush1.bf16.msra.mxu0 %v2816
  %2823 = vmatprep.subr.bf16.mxu0 0
  %2824 = vmatpush1.bf16.msra.mxu0 0
  %2825 = vmatprep.subr.bf16.mxu0 0
  %2826 = vmatpush1.bf16.msra.mxu0 0
  %2827 = vmatprep.subr.bf16.mxu0 0
  %2828 = vmatpush1.bf16.msra.mxu0 0
  %2829 = vmatprep.subr.bf16.mxu0 0
  %2830 = vmatpush1.bf16.msra.mxu0 0
  %2831 = vmatprep.subr.bf16.mxu0 0
  %2832 = vmatpush1.bf16.msra.mxu0 0
  %2833 = vmatprep.subr.bf16.mxu0 0
  %2834 = vmatpush1.bf16.msra.mxu0 0
  %2835 = vmatprep.subr.bf16.mxu0 0
  %2836 = vmatpush1.bf16.msra.mxu0 0
  %2837 = vmatprep.subr.bf16.mxu0 0
  %2838 = vmatpush1.bf16.msra.mxu0 0
  %2839 = vmatprep.subr.bf16.mxu0 0
  %2840 = vmatpush1.bf16.msra.mxu0 0
  %2841 = vmatprep.subr.bf16.mxu0 0
  %2842 = vmatpush1.bf16.msra.mxu0 0
  %2843 = vmatprep.subr.bf16.mxu0 0
  %2844 = vmatpush1.bf16.msra.mxu0 0
  %2845 = vmatprep.subr.bf16.mxu0 0
  %2846 = vmatpush1.bf16.msra.mxu0 0
  %2847 = vmatprep.subr.bf16.mxu0 0
  %2848 = vmatpush1.bf16.msra.mxu0 0
  %2849 = vmatprep.subr.bf16.mxu0 0
  %2850 = vmatpush1.bf16.msra.mxu0 0
  %2851 = vmatprep.subr.bf16.mxu0 0
  %2852 = vmatpush1.bf16.msra.mxu0 0
  %2853 = vmatprep.mubr.bf16.mxu0 0
  %2854 = vmatmul.mubr.bf16.gmra.mrb[0].mxu0 %v2819
  %v2855 = vpop.f32.mrb[0].mxu0
  %v2856 = vadd.f32 0.0, %v2855
  %v2857 = vpop.f32.mrb[0].mxu0
  %v2858 = vpop.f32.mrb[0].mxu0
  %v2859 = vadd.f32 0.0, %v2858
  %v2860 = vpop.f32.mrb[0].mxu0
  %2861 = vdwg.mxu0
  %2864 = vrot.lane.b32.xlu0 %v2592, 8
  %v2865 = vpop.permute.xlu0 %2864
  %2866 = vrot.lane.b32.xlu0 %v2595, 8
  %v2867 = vpop.permute.xlu0 %2866
  %2872 = vrot.lane.b32.xlu0 %v2724, 16
  %v2873 = vpop.permute.xlu0 %2872
  %2874 = vrot.lane.b32.xlu0 %v2727, 16
  %v2875 = vpop.permute.xlu0 %2874
  %2880 = vrot.lane.b32.xlu0 %v2856, 24
  %v2881 = vpop.permute.xlu0 %2880
  %2882 = vrot.lane.b32.xlu0 %v2859, 24
  %v2883 = vpop.permute.xlu0 %2882
  %v2886 = vsel %vm24, %v2460, %v2865
  %v2887 = vsel %vm24, %v2463, %v2867
  %v2888 = vsel %vm82, %v2886, %v2873
  %v2889 = vsel %vm82, %v2887, %v2875
  %v2890 = vsel %vm577, %v2888, %v2881
  %v2891 = vsel %vm577, %v2889, %v2883
  %v2892 = vpack.c.bf16 %v2891, %v2890
  %v2894 = vunpack.c.l.b16 %v2892
  %v2895 = vunpack.c.h.b16 %v2892
  %v2896 = vpack.c.b16 %v2894, %v2894
  %v2897 = vpack.c.b16 %v2895, %v2895
  %s2900 = scalar_lea.vmem %s2, 32
  %2901 = vst.msk [vmem:[%s2900] sm:$0xf] %vm588, %v2896
  %2902 = vst.msk [vmem:[%s2900 + $0x4] sm:$0xf] %vm588, %v2897
  %s2903 = scalar_lea.vmem %s1, 5
  %v2904 = vld [vmem:[%s2903] sm:$0x1]
  %v2905 = vsub.f32 1.0, %v2904
  %v2906 = vmul.f32 %v2905, -1e+09
  %s2907 = scalar_lea.vmem %s0, 40
  %v2908 = vld [vmem:[%s2907] sm:$0xf]
  %v2909 = vld [vmem:[%s2907 + $0x4] sm:$0xf]
  %v2912 = vunpack.c.l.b16 %v2908
  %v2913 = vunpack.c.l.b16 %v2909
  %v2914 = vpack.c.b16 %v2913, %v2912
  %2915 = vrot.lane.b32.xlu0 %v2914, 96
  %v2916 = vpop.permute.xlu0 %2915
  %v2918 = vsel %vm24, %v2914, 0
  %v2921 = vsel %vm24, %v2916, 0
  %2923 = vmatprep.subr.bf16.mxu0 0
  %2924 = vmatpush1.bf16.xpose.msra.mxu0 %v2921
  %2925 = vmatprep.subr.bf16.mxu0 0
  %2926 = vmatpush1.bf16.xpose.msra.mxu0 0
  %2927 = vmatprep.subr.bf16.mxu0 0
  %2928 = vmatpush1.bf16.xpose.msra.mxu0 0
  %2929 = vmatprep.subr.bf16.mxu0 0
  %2930 = vmatpush1.bf16.xpose.msra.mxu0 0
  %2931 = vmatprep.subr.bf16.mxu0 0
  %2932 = vmatpush1.bf16.xpose.msra.mxu0 0
  %2933 = vmatprep.subr.bf16.mxu0 0
  %2934 = vmatpush1.bf16.xpose.msra.mxu0 0
  %2935 = vmatprep.subr.bf16.mxu0 0
  %2936 = vmatpush1.bf16.xpose.msra.mxu0 0
  %2937 = vmatprep.subr.bf16.mxu0 0
  %2938 = vmatpush1.bf16.xpose.msra.mxu0 0
  %2939 = vmatprep.subr.bf16.mxu0 0
  %2940 = vmatpush1.bf16.xpose.msra.mxu0 0
  %2941 = vmatprep.subr.bf16.mxu0 0
  %2942 = vmatpush1.bf16.xpose.msra.mxu0 0
  %2943 = vmatprep.subr.bf16.mxu0 0
  %2944 = vmatpush1.bf16.xpose.msra.mxu0 0
  %2945 = vmatprep.subr.bf16.mxu0 0
  %2946 = vmatpush1.bf16.xpose.msra.mxu0 0
  %2947 = vmatprep.subr.bf16.mxu0 0
  %2948 = vmatpush1.bf16.xpose.msra.mxu0 0
  %2949 = vmatprep.subr.bf16.mxu0 0
  %2950 = vmatpush1.bf16.xpose.msra.mxu0 0
  %2951 = vmatprep.subr.bf16.mxu0 0
  %2952 = vmatpush1.bf16.xpose.msra.mxu0 0
  %2953 = vmatprep.subr.bf16.mxu0 0
  %2954 = vmatpush1.bf16.xpose.msra.mxu0 0
  %2955 = vmatprep.mubr.bf16.mxu0 0
  %2956 = vmatmul.mubr.bf16.gmra.mrb[0].mxu0 %v2918
  %v2957 = vpop.f32.mrb[0].mxu0
  %v2958 = vadd.f32 0.0, %v2957
  %v2959 = vpop.f32.mrb[0].mxu0
  %v2960 = vpop.f32.mrb[0].mxu0
  %v2961 = vadd.f32 0.0, %v2960
  %v2962 = vpop.f32.mrb[0].mxu0
  %2963 = vdwg.mxu0
  %v2964 = vmul.f32 %v2958, 0.35355338
  %v2965 = vmul.f32 %v2961, 0.35355338
  %v2967 = vlaneseq
  %v2968 = vshrl.u32 %v2967, 7
  %v2969 = vsub.s32 0, %v2968
  %v2970 = vrot.slane %v2906, %v2969
  %v2972 = vadd.f32 %v2964, %v2970
  %v2973 = vadd.f32 %v2965, %v2970
  %v2974 = vsel %vm82, %v2972, -inf
  %2975 = vmax.xlane.f32.xlu0 %v2974
  %v2976 = vpop.xlane.xlu0 %2975
  %v2977 = vsel %vm82, %v2973, -inf
  %2978 = vmax.xlane.f32.xlu0 %v2977
  %v2979 = vpop.xlane.xlu0 %2978
  %v2980 = vsub.f32 %v2972, %v2976
  %v2981 = vsub.f32 %v2973, %v2979
  %v2982 = vmul.f32 %v2980, 1.442695
  %v2983 = vpow.pop %v2982
  %v2984 = vmul.f32 %v2981, 1.442695
  %v2985 = vpow.pop %v2984
  %v2986 = vsel %vm82, %v2983, 0.0
  %2987 = vadd.xlane.f32.xlu0 %v2986
  %v2988 = vpop.xlane.xlu0 %2987
  %v2989 = vsel %vm82, %v2985, 0.0
  %2990 = vadd.xlane.f32.xlu0 %v2989
  %v2991 = vpop.xlane.xlu0 %2990
  %v2992 = vrcp.pop %v2988
  %v2993 = vrcp.pop %v2991
  %v2994 = vmul.f32 %v2983, %v2992
  %v2995 = vmul.f32 %v2985, %v2993
  %v2996 = vpack.c.bf16 %v2995, %v2994
  %2997 = vrot.lane.b32.xlu0 %v2914, 64
  %v2998 = vpop.permute.xlu0 %2997
  %v3001 = vsel %vm82, %v2996, 0
  %3003 = vmatprep.subr.bf16.mxu0 0
  %3004 = vmatpush1.bf16.msra.mxu0 %v2998
  %3005 = vmatprep.subr.bf16.mxu0 0
  %3006 = vmatpush1.bf16.msra.mxu0 0
  %3007 = vmatprep.subr.bf16.mxu0 0
  %3008 = vmatpush1.bf16.msra.mxu0 0
  %3009 = vmatprep.subr.bf16.mxu0 0
  %3010 = vmatpush1.bf16.msra.mxu0 0
  %3011 = vmatprep.subr.bf16.mxu0 0
  %3012 = vmatpush1.bf16.msra.mxu0 0
  %3013 = vmatprep.subr.bf16.mxu0 0
  %3014 = vmatpush1.bf16.msra.mxu0 0
  %3015 = vmatprep.subr.bf16.mxu0 0
  %3016 = vmatpush1.bf16.msra.mxu0 0
  %3017 = vmatprep.subr.bf16.mxu0 0
  %3018 = vmatpush1.bf16.msra.mxu0 0
  %3019 = vmatprep.subr.bf16.mxu0 0
  %3020 = vmatpush1.bf16.msra.mxu0 0
  %3021 = vmatprep.subr.bf16.mxu0 0
  %3022 = vmatpush1.bf16.msra.mxu0 0
  %3023 = vmatprep.subr.bf16.mxu0 0
  %3024 = vmatpush1.bf16.msra.mxu0 0
  %3025 = vmatprep.subr.bf16.mxu0 0
  %3026 = vmatpush1.bf16.msra.mxu0 0
  %3027 = vmatprep.subr.bf16.mxu0 0
  %3028 = vmatpush1.bf16.msra.mxu0 0
  %3029 = vmatprep.subr.bf16.mxu0 0
  %3030 = vmatpush1.bf16.msra.mxu0 0
  %3031 = vmatprep.subr.bf16.mxu0 0
  %3032 = vmatpush1.bf16.msra.mxu0 0
  %3033 = vmatprep.subr.bf16.mxu0 0
  %3034 = vmatpush1.bf16.msra.mxu0 0
  %3035 = vmatprep.mubr.bf16.mxu0 0
  %3036 = vmatmul.mubr.bf16.gmra.mrb[0].mxu0 %v3001
  %v3037 = vpop.f32.mrb[0].mxu0
  %v3038 = vadd.f32 0.0, %v3037
  %v3039 = vpop.f32.mrb[0].mxu0
  %v3040 = vpop.f32.mrb[0].mxu0
  %v3041 = vadd.f32 0.0, %v3040
  %v3042 = vpop.f32.mrb[0].mxu0
  %3043 = vdwg.mxu0
  %v3044 = vld [vmem:[%s2907] sm:$0xf]
  %v3045 = vld [vmem:[%s2907 + $0x4] sm:$0xf]
  %v3048 = vunpack.c.l.b16 %v3044
  %v3049 = vunpack.c.l.b16 %v3045
  %v3050 = vpack.c.b16 %v3049, %v3048
  %3051 = vrot.lane.b32.xlu0 %v3050, 120
  %v3052 = vpop.permute.xlu0 %3051
  %3053 = vrot.lane.b32.xlu0 %v3050, 88
  %v3054 = vpop.permute.xlu0 %3053
  %v3056 = vsel %vm24, %v3052, 0
  %v3059 = vsel %vm24, %v3054, 0
  %3061 = vmatprep.subr.bf16.mxu0 0
  %3062 = vmatpush1.bf16.xpose.msra.mxu0 %v3059
  %3063 = vmatprep.subr.bf16.mxu0 0
  %3064 = vmatpush1.bf16.xpose.msra.mxu0 0
  %3065 = vmatprep.subr.bf16.mxu0 0
  %3066 = vmatpush1.bf16.xpose.msra.mxu0 0
  %3067 = vmatprep.subr.bf16.mxu0 0
  %3068 = vmatpush1.bf16.xpose.msra.mxu0 0
  %3069 = vmatprep.subr.bf16.mxu0 0
  %3070 = vmatpush1.bf16.xpose.msra.mxu0 0
  %3071 = vmatprep.subr.bf16.mxu0 0
  %3072 = vmatpush1.bf16.xpose.msra.mxu0 0
  %3073 = vmatprep.subr.bf16.mxu0 0
  %3074 = vmatpush1.bf16.xpose.msra.mxu0 0
  %3075 = vmatprep.subr.bf16.mxu0 0
  %3076 = vmatpush1.bf16.xpose.msra.mxu0 0
  %3077 = vmatprep.subr.bf16.mxu0 0
  %3078 = vmatpush1.bf16.xpose.msra.mxu0 0
  %3079 = vmatprep.subr.bf16.mxu0 0
  %3080 = vmatpush1.bf16.xpose.msra.mxu0 0
  %3081 = vmatprep.subr.bf16.mxu0 0
  %3082 = vmatpush1.bf16.xpose.msra.mxu0 0
  %3083 = vmatprep.subr.bf16.mxu0 0
  %3084 = vmatpush1.bf16.xpose.msra.mxu0 0
  %3085 = vmatprep.subr.bf16.mxu0 0
  %3086 = vmatpush1.bf16.xpose.msra.mxu0 0
  %3087 = vmatprep.subr.bf16.mxu0 0
  %3088 = vmatpush1.bf16.xpose.msra.mxu0 0
  %3089 = vmatprep.subr.bf16.mxu0 0
  %3090 = vmatpush1.bf16.xpose.msra.mxu0 0
  %3091 = vmatprep.subr.bf16.mxu0 0
  %3092 = vmatpush1.bf16.xpose.msra.mxu0 0
  %3093 = vmatprep.mubr.bf16.mxu0 0
  %3094 = vmatmul.mubr.bf16.gmra.mrb[0].mxu0 %v3056
  %v3095 = vpop.f32.mrb[0].mxu0
  %v3096 = vadd.f32 0.0, %v3095
  %v3097 = vpop.f32.mrb[0].mxu0
  %v3098 = vpop.f32.mrb[0].mxu0
  %v3099 = vadd.f32 0.0, %v3098
  %v3100 = vpop.f32.mrb[0].mxu0
  %3101 = vdwg.mxu0
  %v3102 = vmul.f32 %v3096, 0.35355338
  %v3103 = vmul.f32 %v3099, 0.35355338
  %v3104 = vadd.f32 %v3102, %v2970
  %v3105 = vadd.f32 %v3103, %v2970
  %v3106 = vsel %vm82, %v3104, -inf
  %3107 = vmax.xlane.f32.xlu0 %v3106
  %v3108 = vpop.xlane.xlu0 %3107
  %v3109 = vsel %vm82, %v3105, -inf
  %3110 = vmax.xlane.f32.xlu0 %v3109
  %v3111 = vpop.xlane.xlu0 %3110
  %v3112 = vsub.f32 %v3104, %v3108
  %v3113 = vsub.f32 %v3105, %v3111
  %v3114 = vmul.f32 %v3112, 1.442695
  %v3115 = vpow.pop %v3114
  %v3116 = vmul.f32 %v3113, 1.442695
  %v3117 = vpow.pop %v3116
  %v3118 = vsel %vm82, %v3115, 0.0
  %3119 = vadd.xlane.f32.xlu0 %v3118
  %v3120 = vpop.xlane.xlu0 %3119
  %v3121 = vsel %vm82, %v3117, 0.0
  %3122 = vadd.xlane.f32.xlu0 %v3121
  %v3123 = vpop.xlane.xlu0 %3122
  %v3124 = vrcp.pop %v3120
  %v3125 = vrcp.pop %v3123
  %v3126 = vmul.f32 %v3115, %v3124
  %v3127 = vmul.f32 %v3117, %v3125
  %v3128 = vpack.c.bf16 %v3127, %v3126
  %3129 = vrot.lane.b32.xlu0 %v3050, 56
  %v3130 = vpop.permute.xlu0 %3129
  %v3133 = vsel %vm82, %v3128, 0
  %3135 = vmatprep.subr.bf16.mxu0 0
  %3136 = vmatpush1.bf16.msra.mxu0 %v3130
  %3137 = vmatprep.subr.bf16.mxu0 0
  %3138 = vmatpush1.bf16.msra.mxu0 0
  %3139 = vmatprep.subr.bf16.mxu0 0
  %3140 = vmatpush1.bf16.msra.mxu0 0
  %3141 = vmatprep.subr.bf16.mxu0 0
  %3142 = vmatpush1.bf16.msra.mxu0 0
  %3143 = vmatprep.subr.bf16.mxu0 0
  %3144 = vmatpush1.bf16.msra.mxu0 0
  %3145 = vmatprep.subr.bf16.mxu0 0
  %3146 = vmatpush1.bf16.msra.mxu0 0
  %3147 = vmatprep.subr.bf16.mxu0 0
  %3148 = vmatpush1.bf16.msra.mxu0 0
  %3149 = vmatprep.subr.bf16.mxu0 0
  %3150 = vmatpush1.bf16.msra.mxu0 0
  %3151 = vmatprep.subr.bf16.mxu0 0
  %3152 = vmatpush1.bf16.msra.mxu0 0
  %3153 = vmatprep.subr.bf16.mxu0 0
  %3154 = vmatpush1.bf16.msra.mxu0 0
  %3155 = vmatprep.subr.bf16.mxu0 0
  %3156 = vmatpush1.bf16.msra.mxu0 0
  %3157 = vmatprep.subr.bf16.mxu0 0
  %3158 = vmatpush1.bf16.msra.mxu0 0
  %3159 = vmatprep.subr.bf16.mxu0 0
  %3160 = vmatpush1.bf16.msra.mxu0 0
  %3161 = vmatprep.subr.bf16.mxu0 0
  %3162 = vmatpush1.bf16.msra.mxu0 0
  %3163 = vmatprep.subr.bf16.mxu0 0
  %3164 = vmatpush1.bf16.msra.mxu0 0
  %3165 = vmatprep.subr.bf16.mxu0 0
  %3166 = vmatpush1.bf16.msra.mxu0 0
  %3167 = vmatprep.mubr.bf16.mxu0 0
  %3168 = vmatmul.mubr.bf16.gmra.mrb[0].mxu0 %v3133
  %v3169 = vpop.f32.mrb[0].mxu0
  %v3170 = vadd.f32 0.0, %v3169
  %v3171 = vpop.f32.mrb[0].mxu0
  %v3172 = vpop.f32.mrb[0].mxu0
  %v3173 = vadd.f32 0.0, %v3172
  %v3174 = vpop.f32.mrb[0].mxu0
  %3175 = vdwg.mxu0
  %v3176 = vld [vmem:[%s2907] sm:$0xf]
  %v3177 = vld [vmem:[%s2907 + $0x4] sm:$0xf]
  %v3180 = vunpack.c.l.b16 %v3176
  %v3181 = vunpack.c.l.b16 %v3177
  %v3182 = vpack.c.b16 %v3181, %v3180
  %3183 = vrot.lane.b32.xlu0 %v3182, 112
  %v3184 = vpop.permute.xlu0 %3183
  %3185 = vrot.lane.b32.xlu0 %v3182, 80
  %v3186 = vpop.permute.xlu0 %3185
  %v3188 = vsel %vm24, %v3184, 0
  %v3191 = vsel %vm24, %v3186, 0
  %3193 = vmatprep.subr.bf16.mxu0 0
  %3194 = vmatpush1.bf16.xpose.msra.mxu0 %v3191
  %3195 = vmatprep.subr.bf16.mxu0 0
  %3196 = vmatpush1.bf16.xpose.msra.mxu0 0
  %3197 = vmatprep.subr.bf16.mxu0 0
  %3198 = vmatpush1.bf16.xpose.msra.mxu0 0
  %3199 = vmatprep.subr.bf16.mxu0 0
  %3200 = vmatpush1.bf16.xpose.msra.mxu0 0
  %3201 = vmatprep.subr.bf16.mxu0 0
  %3202 = vmatpush1.bf16.xpose.msra.mxu0 0
  %3203 = vmatprep.subr.bf16.mxu0 0
  %3204 = vmatpush1.bf16.xpose.msra.mxu0 0
  %3205 = vmatprep.subr.bf16.mxu0 0
  %3206 = vmatpush1.bf16.xpose.msra.mxu0 0
  %3207 = vmatprep.subr.bf16.mxu0 0
  %3208 = vmatpush1.bf16.xpose.msra.mxu0 0
  %3209 = vmatprep.subr.bf16.mxu0 0
  %3210 = vmatpush1.bf16.xpose.msra.mxu0 0
  %3211 = vmatprep.subr.bf16.mxu0 0
  %3212 = vmatpush1.bf16.xpose.msra.mxu0 0
  %3213 = vmatprep.subr.bf16.mxu0 0
  %3214 = vmatpush1.bf16.xpose.msra.mxu0 0
  %3215 = vmatprep.subr.bf16.mxu0 0
  %3216 = vmatpush1.bf16.xpose.msra.mxu0 0
  %3217 = vmatprep.subr.bf16.mxu0 0
  %3218 = vmatpush1.bf16.xpose.msra.mxu0 0
  %3219 = vmatprep.subr.bf16.mxu0 0
  %3220 = vmatpush1.bf16.xpose.msra.mxu0 0
  %3221 = vmatprep.subr.bf16.mxu0 0
  %3222 = vmatpush1.bf16.xpose.msra.mxu0 0
  %3223 = vmatprep.subr.bf16.mxu0 0
  %3224 = vmatpush1.bf16.xpose.msra.mxu0 0
  %3225 = vmatprep.mubr.bf16.mxu0 0
  %3226 = vmatmul.mubr.bf16.gmra.mrb[0].mxu0 %v3188
  %v3227 = vpop.f32.mrb[0].mxu0
  %v3228 = vadd.f32 0.0, %v3227
  %v3229 = vpop.f32.mrb[0].mxu0
  %v3230 = vpop.f32.mrb[0].mxu0
  %v3231 = vadd.f32 0.0, %v3230
  %v3232 = vpop.f32.mrb[0].mxu0
  %3233 = vdwg.mxu0
  %v3234 = vmul.f32 %v3228, 0.35355338
  %v3235 = vmul.f32 %v3231, 0.35355338
  %v3236 = vadd.f32 %v3234, %v2970
  %v3237 = vadd.f32 %v3235, %v2970
  %v3238 = vsel %vm82, %v3236, -inf
  %3239 = vmax.xlane.f32.xlu0 %v3238
  %v3240 = vpop.xlane.xlu0 %3239
  %v3241 = vsel %vm82, %v3237, -inf
  %3242 = vmax.xlane.f32.xlu0 %v3241
  %v3243 = vpop.xlane.xlu0 %3242
  %v3244 = vsub.f32 %v3236, %v3240
  %v3245 = vsub.f32 %v3237, %v3243
  %v3246 = vmul.f32 %v3244, 1.442695
  %v3247 = vpow.pop %v3246
  %v3248 = vmul.f32 %v3245, 1.442695
  %v3249 = vpow.pop %v3248
  %v3250 = vsel %vm82, %v3247, 0.0
  %3251 = vadd.xlane.f32.xlu0 %v3250
  %v3252 = vpop.xlane.xlu0 %3251
  %v3253 = vsel %vm82, %v3249, 0.0
  %3254 = vadd.xlane.f32.xlu0 %v3253
  %v3255 = vpop.xlane.xlu0 %3254
  %v3256 = vrcp.pop %v3252
  %v3257 = vrcp.pop %v3255
  %v3258 = vmul.f32 %v3247, %v3256
  %v3259 = vmul.f32 %v3249, %v3257
  %v3260 = vpack.c.bf16 %v3259, %v3258
  %3261 = vrot.lane.b32.xlu0 %v3182, 48
  %v3262 = vpop.permute.xlu0 %3261
  %v3265 = vsel %vm82, %v3260, 0
  %3267 = vmatprep.subr.bf16.mxu0 0
  %3268 = vmatpush1.bf16.msra.mxu0 %v3262
  %3269 = vmatprep.subr.bf16.mxu0 0
  %3270 = vmatpush1.bf16.msra.mxu0 0
  %3271 = vmatprep.subr.bf16.mxu0 0
  %3272 = vmatpush1.bf16.msra.mxu0 0
  %3273 = vmatprep.subr.bf16.mxu0 0
  %3274 = vmatpush1.bf16.msra.mxu0 0
  %3275 = vmatprep.subr.bf16.mxu0 0
  %3276 = vmatpush1.bf16.msra.mxu0 0
  %3277 = vmatprep.subr.bf16.mxu0 0
  %3278 = vmatpush1.bf16.msra.mxu0 0
  %3279 = vmatprep.subr.bf16.mxu0 0
  %3280 = vmatpush1.bf16.msra.mxu0 0
  %3281 = vmatprep.subr.bf16.mxu0 0
  %3282 = vmatpush1.bf16.msra.mxu0 0
  %3283 = vmatprep.subr.bf16.mxu0 0
  %3284 = vmatpush1.bf16.msra.mxu0 0
  %3285 = vmatprep.subr.bf16.mxu0 0
  %3286 = vmatpush1.bf16.msra.mxu0 0
  %3287 = vmatprep.subr.bf16.mxu0 0
  %3288 = vmatpush1.bf16.msra.mxu0 0
  %3289 = vmatprep.subr.bf16.mxu0 0
  %3290 = vmatpush1.bf16.msra.mxu0 0
  %3291 = vmatprep.subr.bf16.mxu0 0
  %3292 = vmatpush1.bf16.msra.mxu0 0
  %3293 = vmatprep.subr.bf16.mxu0 0
  %3294 = vmatpush1.bf16.msra.mxu0 0
  %3295 = vmatprep.subr.bf16.mxu0 0
  %3296 = vmatpush1.bf16.msra.mxu0 0
  %3297 = vmatprep.subr.bf16.mxu0 0
  %3298 = vmatpush1.bf16.msra.mxu0 0
  %3299 = vmatprep.mubr.bf16.mxu0 0
  %3300 = vmatmul.mubr.bf16.gmra.mrb[0].mxu0 %v3265
  %v3301 = vpop.f32.mrb[0].mxu0
  %v3302 = vadd.f32 0.0, %v3301
  %v3303 = vpop.f32.mrb[0].mxu0
  %v3304 = vpop.f32.mrb[0].mxu0
  %v3305 = vadd.f32 0.0, %v3304
  %v3306 = vpop.f32.mrb[0].mxu0
  %3307 = vdwg.mxu0
  %v3308 = vld [vmem:[%s2907] sm:$0xf]
  %v3309 = vld [vmem:[%s2907 + $0x4] sm:$0xf]
  %v3312 = vunpack.c.l.b16 %v3308
  %v3313 = vunpack.c.l.b16 %v3309
  %v3314 = vpack.c.b16 %v3313, %v3312
  %3315 = vrot.lane.b32.xlu0 %v3314, 104
  %v3316 = vpop.permute.xlu0 %3315
  %3317 = vrot.lane.b32.xlu0 %v3314, 72
  %v3318 = vpop.permute.xlu0 %3317
  %v3320 = vsel %vm24, %v3316, 0
  %v3323 = vsel %vm24, %v3318, 0
  %3325 = vmatprep.subr.bf16.mxu0 0
  %3326 = vmatpush1.bf16.xpose.msra.mxu0 %v3323
  %3327 = vmatprep.subr.bf16.mxu0 0
  %3328 = vmatpush1.bf16.xpose.msra.mxu0 0
  %3329 = vmatprep.subr.bf16.mxu0 0
  %3330 = vmatpush1.bf16.xpose.msra.mxu0 0
  %3331 = vmatprep.subr.bf16.mxu0 0
  %3332 = vmatpush1.bf16.xpose.msra.mxu0 0
  %3333 = vmatprep.subr.bf16.mxu0 0
  %3334 = vmatpush1.bf16.xpose.msra.mxu0 0
  %3335 = vmatprep.subr.bf16.mxu0 0
  %3336 = vmatpush1.bf16.xpose.msra.mxu0 0
  %3337 = vmatprep.subr.bf16.mxu0 0
  %3338 = vmatpush1.bf16.xpose.msra.mxu0 0
  %3339 = vmatprep.subr.bf16.mxu0 0
  %3340 = vmatpush1.bf16.xpose.msra.mxu0 0
  %3341 = vmatprep.subr.bf16.mxu0 0
  %3342 = vmatpush1.bf16.xpose.msra.mxu0 0
  %3343 = vmatprep.subr.bf16.mxu0 0
  %3344 = vmatpush1.bf16.xpose.msra.mxu0 0
  %3345 = vmatprep.subr.bf16.mxu0 0
  %3346 = vmatpush1.bf16.xpose.msra.mxu0 0
  %3347 = vmatprep.subr.bf16.mxu0 0
  %3348 = vmatpush1.bf16.xpose.msra.mxu0 0
  %3349 = vmatprep.subr.bf16.mxu0 0
  %3350 = vmatpush1.bf16.xpose.msra.mxu0 0
  %3351 = vmatprep.subr.bf16.mxu0 0
  %3352 = vmatpush1.bf16.xpose.msra.mxu0 0
  %3353 = vmatprep.subr.bf16.mxu0 0
  %3354 = vmatpush1.bf16.xpose.msra.mxu0 0
  %3355 = vmatprep.subr.bf16.mxu0 0
  %3356 = vmatpush1.bf16.xpose.msra.mxu0 0
  %3357 = vmatprep.mubr.bf16.mxu0 0
  %3358 = vmatmul.mubr.bf16.gmra.mrb[0].mxu0 %v3320
  %v3359 = vpop.f32.mrb[0].mxu0
  %v3360 = vadd.f32 0.0, %v3359
  %v3361 = vpop.f32.mrb[0].mxu0
  %v3362 = vpop.f32.mrb[0].mxu0
  %v3363 = vadd.f32 0.0, %v3362
  %v3364 = vpop.f32.mrb[0].mxu0
  %3365 = vdwg.mxu0
  %v3366 = vmul.f32 %v3360, 0.35355338
  %v3367 = vmul.f32 %v3363, 0.35355338
  %v3368 = vadd.f32 %v3366, %v2970
  %v3369 = vadd.f32 %v3367, %v2970
  %v3370 = vsel %vm82, %v3368, -inf
  %3371 = vmax.xlane.f32.xlu0 %v3370
  %v3372 = vpop.xlane.xlu0 %3371
  %v3373 = vsel %vm82, %v3369, -inf
  %3374 = vmax.xlane.f32.xlu0 %v3373
  %v3375 = vpop.xlane.xlu0 %3374
  %v3376 = vsub.f32 %v3368, %v3372
  %v3377 = vsub.f32 %v3369, %v3375
  %v3378 = vmul.f32 %v3376, 1.442695
  %v3379 = vpow.pop %v3378
  %v3380 = vmul.f32 %v3377, 1.442695
  %v3381 = vpow.pop %v3380
  %v3382 = vsel %vm82, %v3379, 0.0
  %3383 = vadd.xlane.f32.xlu0 %v3382
  %v3384 = vpop.xlane.xlu0 %3383
  %v3385 = vsel %vm82, %v3381, 0.0
  %3386 = vadd.xlane.f32.xlu0 %v3385
  %v3387 = vpop.xlane.xlu0 %3386
  %v3388 = vrcp.pop %v3384
  %v3389 = vrcp.pop %v3387
  %v3390 = vmul.f32 %v3379, %v3388
  %v3391 = vmul.f32 %v3381, %v3389
  %v3392 = vpack.c.bf16 %v3391, %v3390
  %3393 = vrot.lane.b32.xlu0 %v3314, 40
  %v3394 = vpop.permute.xlu0 %3393
  %v3397 = vsel %vm82, %v3392, 0
  %3399 = vmatprep.subr.bf16.mxu0 0
  %3400 = vmatpush1.bf16.msra.mxu0 %v3394
  %3401 = vmatprep.subr.bf16.mxu0 0
  %3402 = vmatpush1.bf16.msra.mxu0 0
  %3403 = vmatprep.subr.bf16.mxu0 0
  %3404 = vmatpush1.bf16.msra.mxu0 0
  %3405 = vmatprep.subr.bf16.mxu0 0
  %3406 = vmatpush1.bf16.msra.mxu0 0
  %3407 = vmatprep.subr.bf16.mxu0 0
  %3408 = vmatpush1.bf16.msra.mxu0 0
  %3409 = vmatprep.subr.bf16.mxu0 0
  %3410 = vmatpush1.bf16.msra.mxu0 0
  %3411 = vmatprep.subr.bf16.mxu0 0
  %3412 = vmatpush1.bf16.msra.mxu0 0
  %3413 = vmatprep.subr.bf16.mxu0 0
  %3414 = vmatpush1.bf16.msra.mxu0 0
  %3415 = vmatprep.subr.bf16.mxu0 0
  %3416 = vmatpush1.bf16.msra.mxu0 0
  %3417 = vmatprep.subr.bf16.mxu0 0
  %3418 = vmatpush1.bf16.msra.mxu0 0
  %3419 = vmatprep.subr.bf16.mxu0 0
  %3420 = vmatpush1.bf16.msra.mxu0 0
  %3421 = vmatprep.subr.bf16.mxu0 0
  %3422 = vmatpush1.bf16.msra.mxu0 0
  %3423 = vmatprep.subr.bf16.mxu0 0
  %3424 = vmatpush1.bf16.msra.mxu0 0
  %3425 = vmatprep.subr.bf16.mxu0 0
  %3426 = vmatpush1.bf16.msra.mxu0 0
  %3427 = vmatprep.subr.bf16.mxu0 0
  %3428 = vmatpush1.bf16.msra.mxu0 0
  %3429 = vmatprep.subr.bf16.mxu0 0
  %3430 = vmatpush1.bf16.msra.mxu0 0
  %3431 = vmatprep.mubr.bf16.mxu0 0
  %3432 = vmatmul.mubr.bf16.gmra.mrb[0].mxu0 %v3397
  %v3433 = vpop.f32.mrb[0].mxu0
  %v3434 = vadd.f32 0.0, %v3433
  %v3435 = vpop.f32.mrb[0].mxu0
  %v3436 = vpop.f32.mrb[0].mxu0
  %v3437 = vadd.f32 0.0, %v3436
  %v3438 = vpop.f32.mrb[0].mxu0
  %3439 = vdwg.mxu0
  %3442 = vrot.lane.b32.xlu0 %v3170, 8
  %v3443 = vpop.permute.xlu0 %3442
  %3444 = vrot.lane.b32.xlu0 %v3173, 8
  %v3445 = vpop.permute.xlu0 %3444
  %3450 = vrot.lane.b32.xlu0 %v3302, 16
  %v3451 = vpop.permute.xlu0 %3450
  %3452 = vrot.lane.b32.xlu0 %v3305, 16
  %v3453 = vpop.permute.xlu0 %3452
  %3458 = vrot.lane.b32.xlu0 %v3434, 24
  %v3459 = vpop.permute.xlu0 %3458
  %3460 = vrot.lane.b32.xlu0 %v3437, 24
  %v3461 = vpop.permute.xlu0 %3460
  %v3464 = vsel %vm24, %v3038, %v3443
  %v3465 = vsel %vm24, %v3041, %v3445
  %v3466 = vsel %vm82, %v3464, %v3451
  %v3467 = vsel %vm82, %v3465, %v3453
  %v3468 = vsel %vm577, %v3466, %v3459
  %v3469 = vsel %vm577, %v3467, %v3461
  %v3470 = vpack.c.bf16 %v3469, %v3468
  %v3472 = vunpack.c.l.b16 %v3470
  %v3473 = vunpack.c.h.b16 %v3470
  %v3474 = vpack.c.b16 %v3472, %v3472
  %v3475 = vpack.c.b16 %v3473, %v3473
  %s3478 = scalar_lea.vmem %s2, 40
  %3479 = vst.msk [vmem:[%s3478] sm:$0xf] %vm588, %v3474
  %3480 = vst.msk [vmem:[%s3478 + $0x4] sm:$0xf] %vm588, %v3475
  // Predicated region
  $region10: #{reranker_forward.12} parent=0 // pred_check
    _
  $region11: #{reranker_forward.12} parent=0 // pred_check_branch
    %3482 = sbr.rel (0) target = $region13
  $region12: #{reranker_forward.12} parent=0 // pred_region
    _
  $region13: #{reranker_forward.12} parent=0 // pred_fallthru
    _
  // Predicated region
  $region14: #{reranker_forward.12} parent=0 // pred_check
    _
  $region15: #{reranker_forward.12} parent=0 // pred_check_branch
    %3484 = sbr.rel (0) target = $region17
  $region16: #{reranker_forward.12} parent=0 // pred_region
    _
  $region17: #{reranker_forward.12} parent=0 // pred_fallthru
    _

</llo_original>
